<compile_context>
chip_gen: v6e
topology: v6e:2x2x1
jax: 0.10.0
libtpu: 0.0.40
codegen_flags: <defaults>
</compile_context>

<pallas_src>
import math
import functools

import jax
import jax.numpy as jnp
import numpy as np
from jax.experimental import pallas as pl
from jax.experimental.pallas import tpu as pltpu


_NEG_INF = -1e30   # causal additive mask (diagonal always unmasked -> safe)


# ----------------------------- in-kernel helpers -----------------------------

def _new_gelu(x):
    # identical to the reference `new_gelu` (tanh approximation)
    return 0.5 * x * (1.0 + jnp.tanh(math.sqrt(2.0 / math.pi)
                                     * (x + 0.044715 * x * x * x)))


def _layernorm(x, g, b, eps=1e-5):
    # torch.nn.LayerNorm semantics: biased variance, eps=1e-5 (f32 math)
    mu = jnp.mean(x, axis=-1, keepdims=True)
    d = x - mu
    var = jnp.mean(d * d, axis=-1, keepdims=True)
    return d * jax.lax.rsqrt(var + eps) * g + b


# --------------------------------- kernels -----------------------------------

def embed_kernel(x_ref, wte_ref, bte_ref, pos_ref, o_ref, *, seq_len,
                 batch_block):
    # x_ref: (Mb, D) f32 (kept f32: D is small, avoids input precision loss)
    # wte_ref: (D, C) f32; bte_ref: (1, C) f32; pos_ref: (T, C) f32 (shared)
    tok = jnp.dot(x_ref[...], wte_ref[...],
                  preferred_element_type=jnp.float32) + bte_ref[...]
    pos = pos_ref[...]
    T = seq_len
    # transformer.drop is identity at inference
    for b in range(batch_block):          # static: whole sequences per block
        o_ref[b * T:(b + 1) * T, :] = (
            tok[b * T:(b + 1) * T, :] + pos).astype(o_ref.dtype)


def block_kernel(x_ref,
                 ln1g_ref, ln1b_ref,
                 wqkv_ref, bqkv_ref,
                 wpr_ref, bpr_ref,
                 ln2g_ref, ln2b_ref,
                 wfc_ref, bfc_ref,
                 wp2_ref, bp2_ref,
                 lnfg_ref, lnfb_ref,
                 mask_ref,
                 o_ref, attn_sc,
                 *, n_head, seq_len, batch_block, final_ln):
    f32 = jnp.float32
    bf16 = jnp.bfloat16

    x = x_ref[...].astype(f32)                       # (Mb, C) residual in f32
    C = x.shape[1]
    T = seq_len
    H = n_head
    hd = C // H
    scale = 1.0 / math.sqrt(hd)

    # ---- causal self-attention (bf16 MXU operands, f32 accumulation) ----
    h1 = _layernorm(x, ln1g_ref[...], ln1b_ref[...]).astype(bf16)
    qkv = jnp.dot(h1, wqkv_ref[...],
                  preferred_element_type=f32) + bqkv_ref[...]        # (Mb, 3C)
    q = qkv[:, 0 * C:1 * C].astype(bf16)
    k = qkv[:, 1 * C:2 * C].astype(bf16)
    v = qkv[:, 2 * C:3 * C].astype(bf16)

    mask = mask_ref[...]                              # (T, T) additive 0/-1e30
    wp_hm = wpr_ref[...]                              # (H, hd, C) bf16

    for b in range(batch_block):                      # static, small unroll
        r0 = b * T
        qh = jnp.stack([q[r0:r0 + T, h * hd:(h + 1) * hd] for h in range(H)],
                       axis=0)                        # (H, T, hd) bf16
        kh = jnp.stack([k[r0:r0 + T, h * hd:(h + 1) * hd] for h in range(H)],
                       axis=0)
        vh = jnp.stack([v[r0:r0 + T, h * hd:(h + 1) * hd] for h in range(H)],
                       axis=0)

        att = jnp.einsum('hqd,hkd->hqk', qh, kh,
                         preferred_element_type=f32) * scale         # (H,T,T)
        att = att + mask[None]
        att = att - jnp.max(att, axis=-1, keepdims=True)
        p = jnp.exp(att)
        denom = jnp.sum(p, axis=-1, keepdims=True)
        # attn_dropout is identity at inference; reciprocal uses the EUP slot
        p = p * pl.reciprocal(denom, approx=True)
        yh = jnp.einsum('hqk,hkd->hqd', p.astype(bf16), vh,
                        preferred_element_type=f32)                  # (H,T,hd)

        # Output projection accumulated per head straight on the MXU:
        #   sum_h y_h @ Wproj[h] == concat_h(y_h) @ Wproj
        # -> no (H, T, C) intermediate, no cross-sublane XLU sum.
        y = jnp.dot(yh[0].astype(bf16), wp_hm[0], preferred_element_type=f32)
        for hh in range(1, H):
            y = y + jnp.dot(yh[hh].astype(bf16), wp_hm[hh],
                            preferred_element_type=f32)              # (T, C)
        attn_sc[r0:r0 + T, :] = y          # write per-sequence result directly

    # resid_dropout is identity at inference
    x = x + attn_sc[...] + bpr_ref[...]

    # ---- MLP (bf16 MXU, f32 accumulate, f32 GELU) ----
    h2 = _layernorm(x, ln2g_ref[...], ln2b_ref[...]).astype(bf16)
    m = jnp.dot(h2, wfc_ref[...],
                preferred_element_type=f32) + bfc_ref[...]           # (Mb, 4C)
    m = _new_gelu(m).astype(bf16)
    m = jnp.dot(m, wp2_ref[...],
                preferred_element_type=f32) + bp2_ref[...]
    x = x + m                               # mlp dropout identity at inference

    if final_ln:                            # transformer.ln_f fused into the
        x = _layernorm(x, lnfg_ref[...], lnfb_ref[...])   # last block kernel

    o_ref[...] = x.astype(o_ref.dtype)


def head_kernel(x_ref, wlm_ref, o_ref):
    # x_ref: (Mb, C) (already ln_f'd); wlm_ref: (C, To) bf16; o_ref: (Mb, To)
    h = x_ref[...].astype(jnp.bfloat16)
    o_ref[...] = jnp.dot(h, wlm_ref[...], preferred_element_type=jnp.float32)


# -------------------------------- wrappers -----------------------------------

def _vmem_limit_bytes():
    """Generation-aware VMEM limit (v5e/v6e: 128 MiB physical, v7x: 64 MiB)."""
    try:
        info = pltpu.get_tpu_info()
        cap = int(getattr(info, "vmem_capacity_bytes", 0))
        if cap > 0:
            return min((cap * 3) // 4, 100 * 1024 * 1024)
    except Exception:
        pass
    return 48 * 1024 * 1024   # conservative default that also fits v7x


def _const_spec(shape, single_buffer):
    """Constant-index block (same tile every grid step).

    Requests single buffering so constant weights are not needlessly
    double-buffered in VMEM; silently falls back if unsupported.
    """
    zeros = (0,) * len(shape)
    idx = lambda *args: zeros
    if single_buffer and hasattr(pl, "Buffered"):
        try:
            return pl.BlockSpec(shape, idx,
                                pipeline_mode=pl.Buffered(buffer_count=1))
        except TypeError:
            pass
    return pl.BlockSpec(shape, idx)


def _pick_batch_block(B, T, target_rows):
    """Largest divisor of B with batch_block*T ~ target GEMM M rows, while
    keeping >= 2 grid steps when possible (so v7x's two TCs both get work)."""
    bb = max(1, min(B, max(1, target_rows // max(T, 1))))
    if B >= 2 and bb > B // 2:
        bb = max(1, B // 2)
    while B % bb != 0:
        bb -= 1
    if (bb * T) % 8 != 0 and bb != B:
        bb = B      # full-M block is always a legal block shape
    return bb


def _pick_lane_tile(n, target=2048):
    """Lane-dense output tile for the lm_head (multiple of 128 when possible)."""
    if n % 128 != 0 or n <= target:
        return n
    t = target - (target % 128)
    while n % t != 0:
        t -= 128
    return t


def prepare_params(params, *, n_head):
    """One-time weight preparation (bf16 cast + head-major proj layout).

    Done OUTSIDE the forward so no per-forward convert ops re-stream weights
    through HBM.
    """
    H = n_head
    C = params["wte_w"].shape[1]
    hd = C // H
    bf16 = jnp.bfloat16
    prep = {
        "wte_w": params["wte_w"],           # small (D, C): keep f32 projection
        "wte_b": params["wte_b"],
        "wpe_w": params["wpe_w"],
        "lnf_g": params["lnf_g"],
        "lnf_b": params["lnf_b"],
        "lm_w": params["lm_w"].astype(bf16),
        "blocks": [],
    }
    for blk in params["blocks"]:
        prep["blocks"].append({
            "ln1_g": blk["ln1_g"], "ln1_b": blk["ln1_b"],
            "attn_w": blk["attn_w"].astype(bf16), "attn_b": blk["attn_b"],
            "proj_w": blk["proj_w"].reshape(H, hd, C).astype(bf16),
            "proj_b": blk["proj_b"],
            "ln2_g": blk["ln2_g"], "ln2_b": blk["ln2_b"],
            "fc_w": blk["fc_w"].astype(bf16), "fc_b": blk["fc_b"],
            "fcproj_w": blk["fcproj_w"].astype(bf16), "fcproj_b": blk["fcproj_b"],
        })
    return prep


def gpt_forward(prep, x, *, n_head, single_buffer_consts=True):
    B, T, D = x.shape
    C = prep["wte_w"].shape[1]
    O = prep["lm_w"].shape[1]
    H = n_head
    hd = C // H
    f32 = jnp.float32
    bf16 = jnp.bfloat16

    vmem_limit = _vmem_limit_bytes()
    target_rows = 512 if vmem_limit >= 72 * 1024 * 1024 else 256
    Bb = _pick_batch_block(B, T, target_rows)
    Mb = Bb * T
    M = B * T
    To = _pick_lane_tile(O)

    # bf16 residual stream between kernels (halves activation HBM traffic);
    # fall back to f32 when the row tile is not 16-sublane aligned.
    res_dtype = bf16 if Mb % 16 == 0 else f32

    cspec = functools.partial(_const_spec, single_buffer=single_buffer_consts)
    cp1 = pltpu.CompilerParams(dimension_semantics=("parallel",),
                               vmem_limit_bytes=vmem_limit)
    cp2 = pltpu.CompilerParams(dimension_semantics=("parallel", "parallel"),
                               vmem_limit_bytes=vmem_limit)

    # ---- wrapper-side prep: flatten B*T, causal mask; NO (M, C) pos tile ----
    x2 = x.reshape(M, D)
    wpe_t = prep["wpe_w"][:T]                                   # (T, C)
    row = np.arange(T)[:, None]
    col = np.arange(T)[None, :]
    mask_add = jnp.asarray(np.where(row >= col, 0.0, _NEG_INF), dtype=np.float32)

    # ---- embedding ----
    h = pl.pallas_call(
        functools.partial(embed_kernel, seq_len=T, batch_block=Bb),
        out_shape=jax.ShapeDtypeStruct((M, C), res_dtype),
        grid=(M // Mb,),
        in_specs=[pl.BlockSpec((Mb, D), lambda i: (i, 0)),
                  cspec((D, C)),
                  cspec((1, C)),
                  cspec((T, C))],
        out_specs=pl.BlockSpec((Mb, C), lambda i: (i, 0)),
        compiler_params=cp1,
    )(x2, prep["wte_w"], prep["wte_b"], wpe_t)

    # ---- transformer blocks (ln_f fused into the last block) ----
    def make_block_fn(final_ln):
        return pl.pallas_call(
            functools.partial(block_kernel, n_head=H, seq_len=T,
                              batch_block=Bb, final_ln=final_ln),
            out_shape=jax.ShapeDtypeStruct((M, C), res_dtype),
            grid=(M // Mb,),
            in_specs=[pl.BlockSpec((Mb, C), lambda i: (i, 0)),
                      cspec((1, C)), cspec((1, C)),
                      cspec((C, 3 * C)), cspec((1, 3 * C)),
                      cspec((H, hd, C)), cspec((1, C)),
                      cspec((1, C)), cspec((1, C)),
                      cspec((C, 4 * C)), cspec((1, 4 * C)),
                      cspec((4 * C, C)), cspec((1, C)),
                      cspec((1, C)), cspec((1, C)),
                      cspec((T, T))],
            out_specs=pl.BlockSpec((Mb, C), lambda i: (i, 0)),
            scratch_shapes=[pltpu.VMEM((Mb, C), f32)],
            compiler_params=cp1,
        )

    n_layer = len(prep["blocks"])
    blk_last = make_block_fn(True)
    blk_mid = make_block_fn(False) if n_layer > 1 else None
    for li, blk in enumerate(prep["blocks"]):
        fn = blk_last if li == n_layer - 1 else blk_mid
        h = fn(h,
               blk["ln1_g"], blk["ln1_b"],
               blk["attn_w"], blk["attn_b"],
               blk["proj_w"], blk["proj_b"],
               blk["ln2_g"], blk["ln2_b"],
               blk["fc_w"], blk["fc_b"],
               blk["fcproj_w"], blk["fcproj_b"],
               prep["lnf_g"], prep["lnf_b"],
               mask_add)

    # ---- lm head: vocab tile on the OUTER grid axis so each (C, To) weight
    # tile is streamed from HBM once (rows are re-read instead, much smaller).
    logits_flat = pl.pallas_call(
        head_kernel,
        out_shape=jax.ShapeDtypeStruct((M, O), f32),
        grid=(O // To, M // Mb),
        in_specs=[pl.BlockSpec((Mb, C), lambda vi, ri: (ri, 0)),
                  pl.BlockSpec((C, To), lambda vi, ri: (0, vi))],
        out_specs=pl.BlockSpec((Mb, To), lambda vi, ri: (ri, vi)),
        compiler_params=cp2,
    )(h, prep["lm_w"])
    return logits_flat.reshape(B, T, O)


# ----------------------- pure-JAX reference (for check) ----------------------

def gpt_reference(params, x, *, n_head):
    B, T, D = x.shape
    C = params["wte_w"].shape[1]
    hd = C // n_head
    h = x @ params["wte_w"] + params["wte_b"][0] + params["wpe_w"][:T][None]
    causal = np.tril(np.ones((T, T), dtype=bool))
    for blk in params["blocks"]:
        a = _layernorm(h, blk["ln1_g"][0], blk["ln1_b"][0])
        qkv = a @ blk["attn_w"] + blk["attn_b"][0]
        q, k, v = jnp.split(qkv, 3, axis=-1)
        q = q.reshape(B, T, n_head, hd).transpose(0, 2, 1, 3)
        k = k.reshape(B, T, n_head, hd).transpose(0, 2, 1, 3)
        v = v.reshape(B, T, n_head, hd).transpose(0, 2, 1, 3)
        att = jnp.einsum("bhqd,bhkd->bhqk", q, k) / math.sqrt(hd)
        att = jnp.where(causal[None, None], att, -jnp.inf)
        att = jax.nn.softmax(att, axis=-1)
        y = jnp.einsum("bhqk,bhkd->bhqd", att, v)
        y = y.transpose(0, 2, 1, 3).reshape(B, T, C)
        h = h + y @ blk["proj_w"] + blk["proj_b"][0]
        a = _layernorm(h, blk["ln2_g"][0], blk["ln2_b"][0])
        m = _new_gelu(a @ blk["fc_w"] + blk["fc_b"][0])
        h = h + m @ blk["fcproj_w"] + blk["fcproj_b"][0]
    h = _layernorm(h, params["lnf_g"][0], params["lnf_b"][0])
    return h @ params["lm_w"]


# ------------------------------ parameter init --------------------------------

def init_params(key, *, input_dim, n_embd, n_head, n_layer, output_dim,
                block_size):
    std = 0.02
    proj_std = 0.02 / math.sqrt(2 * n_layer)   # special c_proj init in BaseGPT
    f32 = jnp.float32
    keys = iter(jax.random.split(key, 8 + 4 * n_layer))

    def normal(k, shape, s):
        return (s * jax.random.normal(k, shape)).astype(f32)

    params = {
        # weights stored as (in, out) = PyTorch (out, in) transposed
        "wte_w": normal(next(keys), (input_dim, n_embd), std),
        "wte_b": jnp.zeros((1, n_embd), f32),
        "wpe_w": normal(next(keys), (block_size, n_embd), std),
        "lnf_g": jnp.ones((1, n_embd), f32),
        "lnf_b": jnp.zeros((1, n_embd), f32),
        "lm_w": normal(next(keys), (n_embd, output_dim), std),
        "blocks": [],
    }
    for _ in range(n_layer):
        params["blocks"].append({
            "ln1_g": jnp.ones((1, n_embd), f32),
            "ln1_b": jnp.zeros((1, n_embd), f32),
            "attn_w": normal(next(keys), (n_embd, 3 * n_embd), std),
            "attn_b": jnp.zeros((1, 3 * n_embd), f32),
            "proj_w": normal(next(keys), (n_embd, n_embd), proj_std),
            "proj_b": jnp.zeros((1, n_embd), f32),
            "ln2_g": jnp.ones((1, n_embd), f32),
            "ln2_b": jnp.zeros((1, n_embd), f32),
            "fc_w": normal(next(keys), (n_embd, 4 * n_embd), std),
            "fc_b": jnp.zeros((1, 4 * n_embd), f32),
            "fcproj_w": normal(next(keys), (4 * n_embd, n_embd), proj_std),
            "fcproj_b": jnp.zeros((1, n_embd), f32),
        })
    return params


# ----------------------------------- main -------------------------------------

if __name__ == "__main__":
    # small, deterministic config
    B, T = 2, 8
    input_dim, n_embd, n_head, n_layer, output_dim, block_size = 16, 32, 4, 2, 16, 8

    key = jax.random.PRNGKey(0)
    k_param, k_x = jax.random.split(key)
    params = init_params(k_param, input_dim=input_dim, n_embd=n_embd,
                         n_head=n_head, n_layer=n_layer,
                         output_dim=output_dim, block_size=block_size)
    x = jax.random.normal(k_x, (B, T, input_dim), dtype=jnp.float32)

    # one-time weight prep (bf16 cast / head-major proj) outside the forward
    prep = prepare_params(params, n_head=n_head)

    def run(single_buffer):
        fwd = jax.jit(functools.partial(gpt_forward, n_head=n_head,
                                        single_buffer_consts=single_buffer))
        return jax.block_until_ready(fwd(prep, x))

    try:
        logits = run(True)
    except Exception:
        # pl.Buffered(1) unsupported on this JAX/Mosaic version -> fall back to
        # default double-buffered constant blocks.
        logits = run(False)

    ref = jax.block_until_ready(gpt_reference(params, x, n_head=n_head))

    assert logits.shape == (B, T, output_dim)
    # bf16 MXU operands (+ optional bf16 residual stream) + approx-reciprocal
    # softmax => slightly looser tolerance vs. the f32 reference.
    np.testing.assert_allclose(np.asarray(logits), np.asarray(ref),
                               rtol=3e-2, atol=3e-2)
    print("KERNEL_OK")
</pallas_src>

<mosaic_0001>
module attributes {stable_mosaic.version = 11 : i64} {
  func.func @embed_kernel(%arg0: i32, %arg1: memref<8x16xf32, #tpu.memory_space<vmem>>, %arg2: memref<16x32xf32, #tpu.memory_space<vmem>>, %arg3: memref<1x32xf32, #tpu.memory_space<vmem>>, %arg4: memref<8x32xf32, #tpu.memory_space<vmem>>, %arg5: memref<8x32xf32, #tpu.memory_space<vmem>>) attributes {dimension_semantics = [#tpu.dimension_semantics<parallel>], iteration_bounds = array<i64: 2>, scalar_prefetch = 0 : i64, scratch_operands = 0 : i64, tpu.core_type = #tpu.core_type<tc>, window_params = [{transform_indices = @transform_0, window_bounds = array<i64: 8, 16>}, {pipeline_mode = #tpu.pipeline_mode<synchronous>, transform_indices = @transform_1, window_bounds = array<i64: 16, 32>}, {pipeline_mode = #tpu.pipeline_mode<synchronous>, transform_indices = @transform_2, window_bounds = array<i64: 1, 32>}, {pipeline_mode = #tpu.pipeline_mode<synchronous>, transform_indices = @transform_3, window_bounds = array<i64: 8, 32>}, {transform_indices = @transform_4, window_bounds = array<i64: 8, 32>}]} {
    %c0 = arith.constant 0 : index
    %c0_0 = arith.constant 0 : index
    %0 = vector.load %arg1[%c0, %c0_0] : memref<8x16xf32, #tpu.memory_space<vmem>>, vector<8x16xf32>
    %c0_1 = arith.constant 0 : index
    %c0_2 = arith.constant 0 : index
    %1 = vector.load %arg2[%c0_1, %c0_2] : memref<16x32xf32, #tpu.memory_space<vmem>>, vector<16x32xf32>
    %cst = arith.constant dense<0.000000e+00> : vector<8x32xf32>
    %2 = tpu.matmul %0, %1, %cst {dimension_numbers = #tpu.dot_dimension_numbers<[1], [0], [0], [1], [0, 0, 1, 1], [], []>} : vector<8x16xf32>, vector<16x32xf32>, vector<8x32xf32> -> vector<8x32xf32>
    %c0_3 = arith.constant 0 : index
    %c0_4 = arith.constant 0 : index
    %3 = vector.load %arg3[%c0_3, %c0_4] : memref<1x32xf32, #tpu.memory_space<vmem>>, vector<1x32xf32>
    %4 = vector.broadcast %3 : vector<1x32xf32> to vector<8x32xf32>
    %5 = arith.addf %2, %4 : vector<8x32xf32>
    %c0_5 = arith.constant 0 : index
    %c0_6 = arith.constant 0 : index
    %6 = vector.load %arg4[%c0_5, %c0_6] : memref<8x32xf32, #tpu.memory_space<vmem>>, vector<8x32xf32>
    %7 = arith.addf %5, %6 : vector<8x32xf32>
    %c0_7 = arith.constant 0 : index
    %c0_8 = arith.constant 0 : index
    %8 = vector.load %arg5[%c0_7, %c0_8] : memref<8x32xf32, #tpu.memory_space<vmem>>, vector<8x32xf32>
    tpu.vector_store %arg5[%c0_7, %c0_8], %7 {strides = array<i32>} : memref<8x32xf32, #tpu.memory_space<vmem>>, vector<8x32xf32>,
    return
  }
  func.func @transform_0(%arg0: i32) -> (i32, i32) {
    %c0_i32 = arith.constant 0 : i32
    %c0_i32_0 = arith.constant 0 : i32
    return %arg0, %c0_i32 : i32, i32
  }
  func.func @transform_1(%arg0: i32) -> (i32, i32) {
    %c0_i32 = arith.constant 0 : i32
    %c0_i32_0 = arith.constant 0 : i32
    %c0_i32_1 = arith.constant 0 : i32
    return %c0_i32, %c0_i32_0 : i32, i32
  }
  func.func @transform_2(%arg0: i32) -> (i32, i32) {
    %c0_i32 = arith.constant 0 : i32
    %c0_i32_0 = arith.constant 0 : i32
    %c0_i32_1 = arith.constant 0 : i32
    return %c0_i32, %c0_i32_0 : i32, i32
  }
  func.func @transform_3(%arg0: i32) -> (i32, i32) {
    %c0_i32 = arith.constant 0 : i32
    %c0_i32_0 = arith.constant 0 : i32
    %c0_i32_1 = arith.constant 0 : i32
    return %c0_i32, %c0_i32_0 : i32, i32
  }
  func.func @transform_4(%arg0: i32) -> (i32, i32) {
    %c0_i32 = arith.constant 0 : i32
    %c0_i32_0 = arith.constant 0 : i32
    return %arg0, %c0_i32 : i32, i32
  }
}

module attributes {stable_mosaic.version = 11 : i64} {
  func.func @block_kernel(%arg0: i32, %arg1: memref<8x32xf32, #tpu.memory_space<vmem>>, %arg2: memref<1x32xf32, #tpu.memory_space<vmem>>, %arg3: memref<1x32xf32, #tpu.memory_space<vmem>>, %arg4: memref<32x96xbf16, #tpu.memory_space<vmem>>, %arg5: memref<1x96xf32, #tpu.memory_space<vmem>>, %arg6: memref<4x8x32xbf16, #tpu.memory_space<vmem>>, %arg7: memref<1x32xf32, #tpu.memory_space<vmem>>, %arg8: memref<1x32xf32, #tpu.memory_space<vmem>>, %arg9: memref<1x32xf32, #tpu.memory_space<vmem>>, %arg10: memref<32x128xbf16, #tpu.memory_space<vmem>>, %arg11: memref<1x128xf32, #tpu.memory_space<vmem>>, %arg12: memref<128x32xbf16, #tpu.memory_space<vmem>>, %arg13: memref<1x32xf32, #tpu.memory_space<vmem>>, %arg14: memref<1x32xf32, #tpu.memory_space<vmem>>, %arg15: memref<1x32xf32, #tpu.memory_space<vmem>>, %arg16: memref<8x8xf32, #tpu.memory_space<vmem>>, %arg17: memref<8x32xf32, #tpu.memory_space<vmem>>, %arg18: memref<8x32xf32, #tpu.memory_space<vmem>>) attributes {dimension_semantics = [#tpu.dimension_semantics<parallel>], iteration_bounds = array<i64: 2>, scalar_prefetch = 0 : i64, scratch_operands = 1 : i64, tpu.core_type = #tpu.core_type<tc>, window_params = [{transform_indices = @transform_0, window_bounds = array<i64: 8, 32>}, {pipeline_mode = #tpu.pipeline_mode<synchronous>, transform_indices = @transform_1, window_bounds = array<i64: 1, 32>}, {pipeline_mode = #tpu.pipeline_mode<synchronous>, transform_indices = @transform_2, window_bounds = array<i64: 1, 32>}, {pipeline_mode = #tpu.pipeline_mode<synchronous>, transform_indices = @transform_3, window_bounds = array<i64: 32, 96>}, {pipeline_mode = #tpu.pipeline_mode<synchronous>, transform_indices = @transform_4, window_bounds = array<i64: 1, 96>}, {pipeline_mode = #tpu.pipeline_mode<synchronous>, transform_indices = @transform_5, window_bounds = array<i64: 4, 8, 32>}, {pipeline_mode = #tpu.pipeline_mode<synchronous>, transform_indices = @transform_6, window_bounds = array<i64: 1, 32>}, {pipeline_mode = #tpu.pipeline_mode<synchronous>, transform_indices = @transform_7, window_bounds = array<i64: 1, 32>}, {pipeline_mode = #tpu.pipeline_mode<synchronous>, transform_indices = @transform_8, window_bounds = array<i64: 1, 32>}, {pipeline_mode = #tpu.pipeline_mode<synchronous>, transform_indices = @transform_9, window_bounds = array<i64: 32, 128>}, {pipeline_mode = #tpu.pipeline_mode<synchronous>, transform_indices = @transform_10, window_bounds = array<i64: 1, 128>}, {pipeline_mode = #tpu.pipeline_mode<synchronous>, transform_indices = @transform_11, window_bounds = array<i64: 128, 32>}, {pipeline_mode = #tpu.pipeline_mode<synchronous>, transform_indices = @transform_12, window_bounds = array<i64: 1, 32>}, {pipeline_mode = #tpu.pipeline_mode<synchronous>, transform_indices = @transform_13, window_bounds = array<i64: 1, 32>}, {pipeline_mode = #tpu.pipeline_mode<synchronous>, transform_indices = @transform_14, window_bounds = array<i64: 1, 32>}, {pipeline_mode = #tpu.pipeline_mode<synchronous>, transform_indices = @transform_15, window_bounds = array<i64: 8, 8>}, {transform_indices = @transform_16, window_bounds = array<i64: 8, 32>}]} {
    %c0 = arith.constant 0 : index
    %c0_0 = arith.constant 0 : index
    %0 = vector.load %arg1[%c0, %c0_0] : memref<8x32xf32, #tpu.memory_space<vmem>>, vector<8x32xf32>
    %c0_1 = arith.constant 0 : index
    %c0_2 = arith.constant 0 : index
    %1 = vector.load %arg2[%c0_1, %c0_2] : memref<1x32xf32, #tpu.memory_space<vmem>>, vector<1x32xf32>
    %c0_3 = arith.constant 0 : index
    %c0_4 = arith.constant 0 : index
    %2 = vector.load %arg3[%c0_3, %c0_4] : memref<1x32xf32, #tpu.memory_space<vmem>>, vector<1x32xf32>
    %cst = arith.constant dense<0.000000e+00> : vector<8xf32>
    %3 = vector.multi_reduction <add>, %0, %cst [1] : vector<8x32xf32> to vector<8xf32>
    %4 = vector.shape_cast %3 : vector<8xf32> to vector<8x1xf32>
    %cst_5 = arith.constant 3.200000e+01 : f32
    %5 = vector.broadcast %cst_5 : f32 to vector<8x1xf32>
    %6 = arith.divf %4, %5 : vector<8x1xf32>
    %7 = vector.broadcast %6 : vector<8x1xf32> to vector<8x32xf32>
    %8 = arith.subf %0, %7 : vector<8x32xf32>
    %9 = arith.mulf %8, %8 : vector<8x32xf32>
    %cst_6 = arith.constant dense<0.000000e+00> : vector<8xf32>
    %10 = vector.multi_reduction <add>, %9, %cst_6 [1] : vector<8x32xf32> to vector<8xf32>
    %11 = vector.shape_cast %10 : vector<8xf32> to vector<8x1xf32>
    %cst_7 = arith.constant 3.200000e+01 : f32
    %12 = vector.broadcast %cst_7 : f32 to vector<8x1xf32>
    %13 = arith.divf %11, %12 : vector<8x1xf32>
    %cst_8 = arith.constant 9.99999974E-6 : f32
    %14 = vector.broadcast %cst_8 : f32 to vector<8x1xf32>
    %15 = arith.addf %13, %14 : vector<8x1xf32>
    %16 = math.rsqrt %15 : vector<8x1xf32>
    %17 = vector.broadcast %16 : vector<8x1xf32> to vector<8x32xf32>
    %18 = arith.mulf %8, %17 : vector<8x32xf32>
    %19 = vector.broadcast %1 : vector<1x32xf32> to vector<8x32xf32>
    %20 = arith.mulf %18, %19 : vector<8x32xf32>
    %21 = vector.broadcast %2 : vector<1x32xf32> to vector<8x32xf32>
    %22 = arith.addf %20, %21 : vector<8x32xf32>
    %23 = arith.truncf %22 : vector<8x32xf32> to vector<8x32xbf16>
    %c0_9 = arith.constant 0 : index
    %c0_10 = arith.constant 0 : index
    %24 = vector.load %arg4[%c0_9, %c0_10] : memref<32x96xbf16, #tpu.memory_space<vmem>>, vector<32x96xbf16>
    %cst_11 = arith.constant dense<0.000000e+00> : vector<8x96xf32>
    %25 = tpu.matmul %23, %24, %cst_11 {dimension_numbers = #tpu.dot_dimension_numbers<[1], [0], [0], [1], [0, 0, 1, 1], [], []>} : vector<8x32xbf16>, vector<32x96xbf16>, vector<8x96xf32> -> vector<8x96xf32>
    %c0_12 = arith.constant 0 : index
    %c0_13 = arith.constant 0 : index
    %26 = vector.load %arg5[%c0_12, %c0_13] : memref<1x96xf32, #tpu.memory_space<vmem>>, vector<1x96xf32>
    %27 = vector.broadcast %26 : vector<1x96xf32> to vector<8x96xf32>
    %28 = arith.addf %25, %27 : vector<8x96xf32>
    %29 = vector.extract_strided_slice %28 {offsets = [0, 0], sizes = [8, 32], strides = [1, 1]} : vector<8x96xf32> to vector<8x32xf32>
    %30 = arith.truncf %29 : vector<8x32xf32> to vector<8x32xbf16>
    %31 = vector.extract_strided_slice %28 {offsets = [0, 32], sizes = [8, 32], strides = [1, 1]} : vector<8x96xf32> to vector<8x32xf32>
    %32 = arith.truncf %31 : vector<8x32xf32> to vector<8x32xbf16>
    %33 = vector.extract_strided_slice %28 {offsets = [0, 64], sizes = [8, 32], strides = [1, 1]} : vector<8x96xf32> to vector<8x32xf32>
    %34 = arith.truncf %33 : vector<8x32xf32> to vector<8x32xbf16>
    %c0_14 = arith.constant 0 : index
    %c0_15 = arith.constant 0 : index
    %35 = vector.load %arg16[%c0_14, %c0_15] : memref<8x8xf32, #tpu.memory_space<vmem>>, vector<8x8xf32>
    %c0_16 = arith.constant 0 : index
    %c0_17 = arith.constant 0 : index
    %c0_18 = arith.constant 0 : index
    %36 = vector.load %arg6[%c0_16, %c0_17, %c0_18] : memref<4x8x32xbf16, #tpu.memory_space<vmem>>, vector<4x8x32xbf16>
    %37 = vector.extract_strided_slice %30 {offsets = [0, 0], sizes = [8, 8], strides = [1, 1]} : vector<8x32xbf16> to vector<8x8xbf16>
    %38 = vector.extract_strided_slice %30 {offsets = [0, 8], sizes = [8, 8], strides = [1, 1]} : vector<8x32xbf16> to vector<8x8xbf16>
    %39 = vector.extract_strided_slice %30 {offsets = [0, 16], sizes = [8, 8], strides = [1, 1]} : vector<8x32xbf16> to vector<8x8xbf16>
    %40 = vector.extract_strided_slice %30 {offsets = [0, 24], sizes = [8, 8], strides = [1, 1]} : vector<8x32xbf16> to vector<8x8xbf16>
    %41 = vector.shape_cast %37 : vector<8x8xbf16> to vector<1x8x8xbf16>
    %42 = vector.shape_cast %38 : vector<8x8xbf16> to vector<1x8x8xbf16>
    %43 = vector.shape_cast %39 : vector<8x8xbf16> to vector<1x8x8xbf16>
    %44 = vector.shape_cast %40 : vector<8x8xbf16> to vector<1x8x8xbf16>
    %45 = tpu.concatenate %41, %42, %43, %44 in 0 : vector<1x8x8xbf16>, vector<1x8x8xbf16>, vector<1x8x8xbf16>, vector<1x8x8xbf16> -> vector<4x8x8xbf16>
    %46 = vector.extract_strided_slice %32 {offsets = [0, 0], sizes = [8, 8], strides = [1, 1]} : vector<8x32xbf16> to vector<8x8xbf16>
    %47 = vector.extract_strided_slice %32 {offsets = [0, 8], sizes = [8, 8], strides = [1, 1]} : vector<8x32xbf16> to vector<8x8xbf16>
    %48 = vector.extract_strided_slice %32 {offsets = [0, 16], sizes = [8, 8], strides = [1, 1]} : vector<8x32xbf16> to vector<8x8xbf16>
    %49 = vector.extract_strided_slice %32 {offsets = [0, 24], sizes = [8, 8], strides = [1, 1]} : vector<8x32xbf16> to vector<8x8xbf16>
    %50 = vector.shape_cast %46 : vector<8x8xbf16> to vector<1x8x8xbf16>
    %51 = vector.shape_cast %47 : vector<8x8xbf16> to vector<1x8x8xbf16>
    %52 = vector.shape_cast %48 : vector<8x8xbf16> to vector<1x8x8xbf16>
    %53 = vector.shape_cast %49 : vector<8x8xbf16> to vector<1x8x8xbf16>
    %54 = tpu.concatenate %50, %51, %52, %53 in 0 : vector<1x8x8xbf16>, vector<1x8x8xbf16>, vector<1x8x8xbf16>, vector<1x8x8xbf16> -> vector<4x8x8xbf16>
    %55 = vector.extract_strided_slice %34 {offsets = [0, 0], sizes = [8, 8], strides = [1, 1]} : vector<8x32xbf16> to vector<8x8xbf16>
    %56 = vector.extract_strided_slice %34 {offsets = [0, 8], sizes = [8, 8], strides = [1, 1]} : vector<8x32xbf16> to vector<8x8xbf16>
    %57 = vector.extract_strided_slice %34 {offsets = [0, 16], sizes = [8, 8], strides = [1, 1]} : vector<8x32xbf16> to vector<8x8xbf16>
    %58 = vector.extract_strided_slice %34 {offsets = [0, 24], sizes = [8, 8], strides = [1, 1]} : vector<8x32xbf16> to vector<8x8xbf16>
    %59 = vector.shape_cast %55 : vector<8x8xbf16> to vector<1x8x8xbf16>
    %60 = vector.shape_cast %56 : vector<8x8xbf16> to vector<1x8x8xbf16>
    %61 = vector.shape_cast %57 : vector<8x8xbf16> to vector<1x8x8xbf16>
    %62 = vector.shape_cast %58 : vector<8x8xbf16> to vector<1x8x8xbf16>
    %63 = tpu.concatenate %59, %60, %61, %62 in 0 : vector<1x8x8xbf16>, vector<1x8x8xbf16>, vector<1x8x8xbf16>, vector<1x8x8xbf16> -> vector<4x8x8xbf16>
    "tpu.trace_start"() <{level = 10 : i32, message = "hqd,hkd->hqk"}> : () -> ()
    %cst_19 = arith.constant dense<0.000000e+00> : vector<4x8x8xf32>
    %64 = tpu.matmul %45, %54, %cst_19 {dimension_numbers = #tpu.dot_dimension_numbers<[2], [2], [1], [1], [0, 0, 0, 1, 1, 1], [0], [0]>} : vector<4x8x8xbf16>, vector<4x8x8xbf16>, vector<4x8x8xf32> -> vector<4x8x8xf32>
    "tpu.trace_stop"() : () -> ()
    %cst_20 = arith.constant 0.353553385 : f32
    %65 = vector.broadcast %cst_20 : f32 to vector<4x8x8xf32>
    %66 = arith.mulf %64, %65 : vector<4x8x8xf32>
    %67 = vector.shape_cast %35 : vector<8x8xf32> to vector<1x8x8xf32>
    %68 = vector.broadcast %67 : vector<1x8x8xf32> to vector<4x8x8xf32>
    %69 = arith.addf %66, %68 : vector<4x8x8xf32>
    %cst_21 = arith.constant dense<0xFF800000> : vector<4x8xf32>
    %70 = vector.multi_reduction <maximumf>, %69, %cst_21 [2] : vector<4x8x8xf32> to vector<4x8xf32>
    %71 = vector.shape_cast %70 : vector<4x8xf32> to vector<4x8x1xf32>
    %72 = vector.broadcast %71 : vector<4x8x1xf32> to vector<4x8x8xf32>
    %73 = arith.subf %69, %72 : vector<4x8x8xf32>
    %74 = math.exp %73 : vector<4x8x8xf32>
    %cst_22 = arith.constant dense<0.000000e+00> : vector<4x8xf32>
    %75 = vector.multi_reduction <add>, %74, %cst_22 [2] : vector<4x8x8xf32> to vector<4x8xf32>
    %76 = vector.shape_cast %75 : vector<4x8xf32> to vector<4x8x1xf32>
    %77 = tpu.reciprocal %76 {approx = true} : vector<4x8x1xf32> -> vector<4x8x1xf32>
    %78 = vector.broadcast %77 : vector<4x8x1xf32> to vector<4x8x8xf32>
    %79 = arith.mulf %74, %78 : vector<4x8x8xf32>
    %80 = arith.truncf %79 : vector<4x8x8xf32> to vector<4x8x8xbf16>
    "tpu.trace_start"() <{level = 10 : i32, message = "hqk,hkd->hqd"}> : () -> ()
    %cst_23 = arith.constant dense<0.000000e+00> : vector<4x8x8xf32>
    %81 = tpu.matmul %80, %63, %cst_23 {dimension_numbers = #tpu.dot_dimension_numbers<[2], [1], [1], [2], [0, 0, 0, 1, 1, 2], [0], [0]>} : vector<4x8x8xbf16>, vector<4x8x8xbf16>, vector<4x8x8xf32> -> vector<4x8x8xf32>
    "tpu.trace_stop"() : () -> ()
    %82 = vector.extract_strided_slice %81 {offsets = [0, 0, 0], sizes = [1, 8, 8], strides = [1, 1, 1]} : vector<4x8x8xf32> to vector<1x8x8xf32>
    %83 = vector.shape_cast %82 : vector<1x8x8xf32> to vector<8x8xf32>
    %84 = arith.truncf %83 : vector<8x8xf32> to vector<8x8xbf16>
    %85 = vector.extract_strided_slice %36 {offsets = [0, 0, 0], sizes = [1, 8, 32], strides = [1, 1, 1]} : vector<4x8x32xbf16> to vector<1x8x32xbf16>
    %86 = vector.shape_cast %85 : vector<1x8x32xbf16> to vector<8x32xbf16>
    %cst_24 = arith.constant dense<0.000000e+00> : vector<8x32xf32>
    %87 = tpu.matmul %84, %86, %cst_24 {dimension_numbers = #tpu.dot_dimension_numbers<[1], [0], [0], [1], [0, 0, 1, 1], [], []>} : vector<8x8xbf16>, vector<8x32xbf16>, vector<8x32xf32> -> vector<8x32xf32>
    %88 = vector.extract_strided_slice %81 {offsets = [1, 0, 0], sizes = [1, 8, 8], strides = [1, 1, 1]} : vector<4x8x8xf32> to vector<1x8x8xf32>
    %89 = vector.shape_cast %88 : vector<1x8x8xf32> to vector<8x8xf32>
    %90 = arith.truncf %89 : vector<8x8xf32> to vector<8x8xbf16>
    %91 = vector.extract_strided_slice %36 {offsets = [1, 0, 0], sizes = [1, 8, 32], strides = [1, 1, 1]} : vector<4x8x32xbf16> to vector<1x8x32xbf16>
    %92 = vector.shape_cast %91 : vector<1x8x32xbf16> to vector<8x32xbf16>
    %cst_25 = arith.constant dense<0.000000e+00> : vector<8x32xf32>
    %93 = tpu.matmul %90, %92, %cst_25 {dimension_numbers = #tpu.dot_dimension_numbers<[1], [0], [0], [1], [0, 0, 1, 1], [], []>} : vector<8x8xbf16>, vector<8x32xbf16>, vector<8x32xf32> -> vector<8x32xf32>
    %94 = arith.addf %87, %93 : vector<8x32xf32>
    %95 = vector.extract_strided_slice %81 {offsets = [2, 0, 0], sizes = [1, 8, 8], strides = [1, 1, 1]} : vector<4x8x8xf32> to vector<1x8x8xf32>
    %96 = vector.shape_cast %95 : vector<1x8x8xf32> to vector<8x8xf32>
    %97 = arith.truncf %96 : vector<8x8xf32> to vector<8x8xbf16>
    %98 = vector.extract_strided_slice %36 {offsets = [2, 0, 0], sizes = [1, 8, 32], strides = [1, 1, 1]} : vector<4x8x32xbf16> to vector<1x8x32xbf16>
    %99 = vector.shape_cast %98 : vector<1x8x32xbf16> to vector<8x32xbf16>
    %cst_26 = arith.constant dense<0.000000e+00> : vector<8x32xf32>
    %100 = tpu.matmul %97, %99, %cst_26 {dimension_numbers = #tpu.dot_dimension_numbers<[1], [0], [0], [1], [0, 0, 1, 1], [], []>} : vector<8x8xbf16>, vector<8x32xbf16>, vector<8x32xf32> -> vector<8x32xf32>
    %101 = arith.addf %94, %100 : vector<8x32xf32>
    %102 = vector.extract_strided_slice %81 {offsets = [3, 0, 0], sizes = [1, 8, 8], strides = [1, 1, 1]} : vector<4x8x8xf32> to vector<1x8x8xf32>
    %103 = vector.shape_cast %102 : vector<1x8x8xf32> to vector<8x8xf32>
    %104 = arith.truncf %103 : vector<8x8xf32> to vector<8x8xbf16>
    %105 = vector.extract_strided_slice %36 {offsets = [3, 0, 0], sizes = [1, 8, 32], strides = [1, 1, 1]} : vector<4x8x32xbf16> to vector<1x8x32xbf16>
    %106 = vector.shape_cast %105 : vector<1x8x32xbf16> to vector<8x32xbf16>
    %cst_27 = arith.constant dense<0.000000e+00> : vector<8x32xf32>
    %107 = tpu.matmul %104, %106, %cst_27 {dimension_numbers = #tpu.dot_dimension_numbers<[1], [0], [0], [1], [0, 0, 1, 1], [], []>} : vector<8x8xbf16>, vector<8x32xbf16>, vector<8x32xf32> -> vector<8x32xf32>
    %108 = arith.addf %101, %107 : vector<8x32xf32>
    %c0_28 = arith.constant 0 : index
    %c0_29 = arith.constant 0 : index
    %109 = vector.load %arg18[%c0_28, %c0_29] : memref<8x32xf32, #tpu.memory_space<vmem>>, vector<8x32xf32>
    tpu.vector_store %arg18[%c0_28, %c0_29], %108 {strides = array<i32>} : memref<8x32xf32, #tpu.memory_space<vmem>>, vector<8x32xf32>,
    %c0_30 = arith.constant 0 : index
    %c0_31 = arith.constant 0 : index
    %110 = vector.load %arg18[%c0_30, %c0_31] : memref<8x32xf32, #tpu.memory_space<vmem>>, vector<8x32xf32>
    %111 = arith.addf %0, %110 : vector<8x32xf32>
    %c0_32 = arith.constant 0 : index
    %c0_33 = arith.constant 0 : index
    %112 = vector.load %arg7[%c0_32, %c0_33] : memref<1x32xf32, #tpu.memory_space<vmem>>, vector<1x32xf32>
    %113 = vector.broadcast %112 : vector<1x32xf32> to vector<8x32xf32>
    %114 = arith.addf %111, %113 : vector<8x32xf32>
    %c0_34 = arith.constant 0 : index
    %c0_35 = arith.constant 0 : index
    %115 = vector.load %arg8[%c0_34, %c0_35] : memref<1x32xf32, #tpu.memory_space<vmem>>, vector<1x32xf32>
    %c0_36 = arith.constant 0 : index
    %c0_37 = arith.constant 0 : index
    %116 = vector.load %arg9[%c0_36, %c0_37] : memref<1x32xf32, #tpu.memory_space<vmem>>, vector<1x32xf32>
    %cst_38 = arith.constant dense<0.000000e+00> : vector<8xf32>
    %117 = vector.multi_reduction <add>, %114, %cst_38 [1] : vector<8x32xf32> to vector<8xf32>
    %118 = vector.shape_cast %117 : vector<8xf32> to vector<8x1xf32>
    %cst_39 = arith.constant 3.200000e+01 : f32
    %119 = vector.broadcast %cst_39 : f32 to vector<8x1xf32>
    %120 = arith.divf %118, %119 : vector<8x1xf32>
    %121 = vector.broadcast %120 : vector<8x1xf32> to vector<8x32xf32>
    %122 = arith.subf %114, %121 : vector<8x32xf32>
    %123 = arith.mulf %122, %122 : vector<8x32xf32>
    %cst_40 = arith.constant dense<0.000000e+00> : vector<8xf32>
    %124 = vector.multi_reduction <add>, %123, %cst_40 [1] : vector<8x32xf32> to vector<8xf32>
    %125 = vector.shape_cast %124 : vector<8xf32> to vector<8x1xf32>
    %cst_41 = arith.constant 3.200000e+01 : f32
    %126 = vector.broadcast %cst_41 : f32 to vector<8x1xf32>
    %127 = arith.divf %125, %126 : vector<8x1xf32>
    %cst_42 = arith.constant 9.99999974E-6 : f32
    %128 = vector.broadcast %cst_42 : f32 to vector<8x1xf32>
    %129 = arith.addf %127, %128 : vector<8x1xf32>
    %130 = math.rsqrt %129 : vector<8x1xf32>
    %131 = vector.broadcast %130 : vector<8x1xf32> to vector<8x32xf32>
    %132 = arith.mulf %122, %131 : vector<8x32xf32>
    %133 = vector.broadcast %115 : vector<1x32xf32> to vector<8x32xf32>
    %134 = arith.mulf %132, %133 : vector<8x32xf32>
    %135 = vector.broadcast %116 : vector<1x32xf32> to vector<8x32xf32>
    %136 = arith.addf %134, %135 : vector<8x32xf32>
    %137 = arith.truncf %136 : vector<8x32xf32> to vector<8x32xbf16>
    %c0_43 = arith.constant 0 : index
    %c0_44 = arith.constant 0 : index
    %138 = vector.load %arg10[%c0_43, %c0_44] : memref<32x128xbf16, #tpu.memory_space<vmem>>, vector<32x128xbf16>
    %cst_45 = arith.constant dense<0.000000e+00> : vector<8x128xf32>
    %139 = tpu.matmul %137, %138, %cst_45 {dimension_numbers = #tpu.dot_dimension_numbers<[1], [0], [0], [1], [0, 0, 1, 1], [], []>} : vector<8x32xbf16>, vector<32x128xbf16>, vector<8x128xf32> -> vector<8x128xf32>
    %c0_46 = arith.constant 0 : index
    %c0_47 = arith.constant 0 : index
    %140 = vector.load %arg11[%c0_46, %c0_47] : memref<1x128xf32, #tpu.memory_space<vmem>>, vector<1x128xf32>
    %141 = vector.broadcast %140 : vector<1x128xf32> to vector<8x128xf32>
    %142 = arith.addf %139, %141 : vector<8x128xf32>
    %cst_48 = arith.constant 5.000000e-01 : f32
    %143 = vector.broadcast %cst_48 : f32 to vector<8x128xf32>
    %144 = arith.mulf %143, %142 : vector<8x128xf32>
    %cst_49 = arith.constant 4.471500e-02 : f32
    %145 = vector.broadcast %cst_49 : f32 to vector<8x128xf32>
    %146 = arith.mulf %145, %142 : vector<8x128xf32>
    %147 = arith.mulf %146, %142 : vector<8x128xf32>
    %148 = arith.mulf %147, %142 : vector<8x128xf32>
    %149 = arith.addf %142, %148 : vector<8x128xf32>
    %cst_50 = arith.constant 0.797884583 : f32
    %150 = vector.broadcast %cst_50 : f32 to vector<8x128xf32>
    %151 = arith.mulf %150, %149 : vector<8x128xf32>
    %152 = math.tanh %151 : vector<8x128xf32>
    %cst_51 = arith.constant 1.000000e+00 : f32
    %153 = vector.broadcast %cst_51 : f32 to vector<8x128xf32>
    %154 = arith.addf %153, %152 : vector<8x128xf32>
    %155 = arith.mulf %144, %154 : vector<8x128xf32>
    %156 = arith.truncf %155 : vector<8x128xf32> to vector<8x128xbf16>
    %c0_52 = arith.constant 0 : index
    %c0_53 = arith.constant 0 : index
    %157 = vector.load %arg12[%c0_52, %c0_53] : memref<128x32xbf16, #tpu.memory_space<vmem>>, vector<128x32xbf16>
    %cst_54 = arith.constant dense<0.000000e+00> : vector<8x32xf32>
    %158 = tpu.matmul %156, %157, %cst_54 {dimension_numbers = #tpu.dot_dimension_numbers<[1], [0], [0], [1], [0, 0, 1, 1], [], []>} : vector<8x128xbf16>, vector<128x32xbf16>, vector<8x32xf32> -> vector<8x32xf32>
    %c0_55 = arith.constant 0 : index
    %c0_56 = arith.constant 0 : index
    %159 = vector.load %arg13[%c0_55, %c0_56] : memref<1x32xf32, #tpu.memory_space<vmem>>, vector<1x32xf32>
    %160 = vector.broadcast %159 : vector<1x32xf32> to vector<8x32xf32>
    %161 = arith.addf %158, %160 : vector<8x32xf32>
    %162 = arith.addf %114, %161 : vector<8x32xf32>
    %c0_57 = arith.constant 0 : index
    %c0_58 = arith.constant 0 : index
    %163 = vector.load %arg14[%c0_57, %c0_58] : memref<1x32xf32, #tpu.memory_space<vmem>>, vector<1x32xf32>
    %c0_59 = arith.constant 0 : index
    %c0_60 = arith.constant 0 : index
    %164 = vector.load %arg15[%c0_59, %c0_60] : memref<1x32xf32, #tpu.memory_space<vmem>>, vector<1x32xf32>
    %cst_61 = arith.constant dense<0.000000e+00> : vector<8xf32>
    %165 = vector.multi_reduction <add>, %162, %cst_61 [1] : vector<8x32xf32> to vector<8xf32>
    %166 = vector.shape_cast %165 : vector<8xf32> to vector<8x1xf32>
    %cst_62 = arith.constant 3.200000e+01 : f32
    %167 = vector.broadcast %cst_62 : f32 to vector<8x1xf32>
    %168 = arith.divf %166, %167 : vector<8x1xf32>
    %169 = vector.broadcast %168 : vector<8x1xf32> to vector<8x32xf32>
    %170 = arith.subf %162, %169 : vector<8x32xf32>
    %171 = arith.mulf %170, %170 : vector<8x32xf32>
    %cst_63 = arith.constant dense<0.000000e+00> : vector<8xf32>
    %172 = vector.multi_reduction <add>, %171, %cst_63 [1] : vector<8x32xf32> to vector<8xf32>
    %173 = vector.shape_cast %172 : vector<8xf32> to vector<8x1xf32>
    %cst_64 = arith.constant 3.200000e+01 : f32
    %174 = vector.broadcast %cst_64 : f32 to vector<8x1xf32>
    %175 = arith.divf %173, %174 : vector<8x1xf32>
    %cst_65 = arith.constant 9.99999974E-6 : f32
    %176 = vector.broadcast %cst_65 : f32 to vector<8x1xf32>
    %177 = arith.addf %175, %176 : vector<8x1xf32>
    %178 = math.rsqrt %177 : vector<8x1xf32>
    %179 = vector.broadcast %178 : vector<8x1xf32> to vector<8x32xf32>
    %180 = arith.mulf %170, %179 : vector<8x32xf32>
    %181 = vector.broadcast %163 : vector<1x32xf32> to vector<8x32xf32>
    %182 = arith.mulf %180, %181 : vector<8x32xf32>
    %183 = vector.broadcast %164 : vector<1x32xf32> to vector<8x32xf32>
    %184 = arith.addf %182, %183 : vector<8x32xf32>
    %c0_66 = arith.constant 0 : index
    %c0_67 = arith.constant 0 : index
    %185 = vector.load %arg17[%c0_66, %c0_67] : memref<8x32xf32, #tpu.memory_space<vmem>>, vector<8x32xf32>
    tpu.vector_store %arg17[%c0_66, %c0_67], %184 {strides = array<i32>} : memref<8x32xf32, #tpu.memory_space<vmem>>, vector<8x32xf32>,
    return
  }
  func.func @transform_0(%arg0: i32) -> (i32, i32) {
    %c0_i32 = arith.constant 0 : i32
    %c0_i32_0 = arith.constant 0 : i32
    return %arg0, %c0_i32 : i32, i32
  }
  func.func @transform_1(%arg0: i32) -> (i32, i32) {
    %c0_i32 = arith.constant 0 : i32
    %c0_i32_0 = arith.constant 0 : i32
    %c0_i32_1 = arith.constant 0 : i32
    return %c0_i32, %c0_i32_0 : i32, i32
  }
  func.func @transform_2(%arg0: i32) -> (i32, i32) {
    %c0_i32 = arith.constant 0 : i32
    %c0_i32_0 = arith.constant 0 : i32
    %c0_i32_1 = arith.constant 0 : i32
    return %c0_i32, %c0_i32_0 : i32, i32
  }
  func.func @transform_3(%arg0: i32) -> (i32, i32) {
    %c0_i32 = arith.constant 0 : i32
    %c0_i32_0 = arith.constant 0 : i32
    %c0_i32_1 = arith.constant 0 : i32
    return %c0_i32, %c0_i32_0 : i32, i32
  }
  func.func @transform_4(%arg0: i32) -> (i32, i32) {
    %c0_i32 = arith.constant 0 : i32
    %c0_i32_0 = arith.constant 0 : i32
    %c0_i32_1 = arith.constant 0 : i32
    return %c0_i32, %c0_i32_0 : i32, i32
  }
  func.func @transform_5(%arg0: i32) -> (i32, i32, i32) {
    %c0_i32 = arith.constant 0 : i32
    %c0_i32_0 = arith.constant 0 : i32
    %c0_i32_1 = arith.constant 0 : i32
    %c0_i32_2 = arith.constant 0 : i32
    return %c0_i32, %c0_i32_0, %c0_i32_1 : i32, i32, i32
  }
  func.func @transform_6(%arg0: i32) -> (i32, i32) {
    %c0_i32 = arith.constant 0 : i32
    %c0_i32_0 = arith.constant 0 : i32
    %c0_i32_1 = arith.constant 0 : i32
    return %c0_i32, %c0_i32_0 : i32, i32
  }
  func.func @transform_7(%arg0: i32) -> (i32, i32) {
    %c0_i32 = arith.constant 0 : i32
    %c0_i32_0 = arith.constant 0 : i32
    %c0_i32_1 = arith.constant 0 : i32
    return %c0_i32, %c0_i32_0 : i32, i32
  }
  func.func @transform_8(%arg0: i32) -> (i32, i32) {
    %c0_i32 = arith.constant 0 : i32
    %c0_i32_0 = arith.constant 0 : i32
    %c0_i32_1 = arith.constant 0 : i32
    return %c0_i32, %c0_i32_0 : i32, i32
  }
  func.func @transform_9(%arg0: i32) -> (i32, i32) {
    %c0_i32 = arith.constant 0 : i32
    %c0_i32_0 = arith.constant 0 : i32
    %c0_i32_1 = arith.constant 0 : i32
    return %c0_i32, %c0_i32_0 : i32, i32
  }
  func.func @transform_10(%arg0: i32) -> (i32, i32) {
    %c0_i32 = arith.constant 0 : i32
    %c0_i32_0 = arith.constant 0 : i32
    %c0_i32_1 = arith.constant 0 : i32
    return %c0_i32, %c0_i32_0 : i32, i32
  }
  func.func @transform_11(%arg0: i32) -> (i32, i32) {
    %c0_i32 = arith.constant 0 : i32
    %c0_i32_0 = arith.constant 0 : i32
    %c0_i32_1 = arith.constant 0 : i32
    return %c0_i32, %c0_i32_0 : i32, i32
  }
  func.func @transform_12(%arg0: i32) -> (i32, i32) {
    %c0_i32 = arith.constant 0 : i32
    %c0_i32_0 = arith.constant 0 : i32
    %c0_i32_1 = arith.constant 0 : i32
    return %c0_i32, %c0_i32_0 : i32, i32
  }
  func.func @transform_13(%arg0: i32) -> (i32, i32) {
    %c0_i32 = arith.constant 0 : i32
    %c0_i32_0 = arith.constant 0 : i32
    %c0_i32_1 = arith.constant 0 : i32
    return %c0_i32, %c0_i32_0 : i32, i32
  }
  func.func @transform_14(%arg0: i32) -> (i32, i32) {
    %c0_i32 = arith.constant 0 : i32
    %c0_i32_0 = arith.constant 0 : i32
    %c0_i32_1 = arith.constant 0 : i32
    return %c0_i32, %c0_i32_0 : i32, i32
  }
  func.func @transform_15(%arg0: i32) -> (i32, i32) {
    %c0_i32 = arith.constant 0 : i32
    %c0_i32_0 = arith.constant 0 : i32
    %c0_i32_1 = arith.constant 0 : i32
    return %c0_i32, %c0_i32_0 : i32, i32
  }
  func.func @transform_16(%arg0: i32) -> (i32, i32) {
    %c0_i32 = arith.constant 0 : i32
    %c0_i32_0 = arith.constant 0 : i32
    return %arg0, %c0_i32 : i32, i32
  }
}

module attributes {stable_mosaic.version = 11 : i64} {
  func.func @block_kernel(%arg0: i32, %arg1: memref<8x32xf32, #tpu.memory_space<vmem>>, %arg2: memref<1x32xf32, #tpu.memory_space<vmem>>, %arg3: memref<1x32xf32, #tpu.memory_space<vmem>>, %arg4: memref<32x96xbf16, #tpu.memory_space<vmem>>, %arg5: memref<1x96xf32, #tpu.memory_space<vmem>>, %arg6: memref<4x8x32xbf16, #tpu.memory_space<vmem>>, %arg7: memref<1x32xf32, #tpu.memory_space<vmem>>, %arg8: memref<1x32xf32, #tpu.memory_space<vmem>>, %arg9: memref<1x32xf32, #tpu.memory_space<vmem>>, %arg10: memref<32x128xbf16, #tpu.memory_space<vmem>>, %arg11: memref<1x128xf32, #tpu.memory_space<vmem>>, %arg12: memref<128x32xbf16, #tpu.memory_space<vmem>>, %arg13: memref<1x32xf32, #tpu.memory_space<vmem>>, %arg14: memref<1x32xf32, #tpu.memory_space<vmem>>, %arg15: memref<1x32xf32, #tpu.memory_space<vmem>>, %arg16: memref<8x8xf32, #tpu.memory_space<vmem>>, %arg17: memref<8x32xf32, #tpu.memory_space<vmem>>, %arg18: memref<8x32xf32, #tpu.memory_space<vmem>>) attributes {dimension_semantics = [#tpu.dimension_semantics<parallel>], iteration_bounds = array<i64: 2>, scalar_prefetch = 0 : i64, scratch_operands = 1 : i64, tpu.core_type = #tpu.core_type<tc>, window_params = [{transform_indices = @transform_0, window_bounds = array<i64: 8, 32>}, {pipeline_mode = #tpu.pipeline_mode<synchronous>, transform_indices = @transform_1, window_bounds = array<i64: 1, 32>}, {pipeline_mode = #tpu.pipeline_mode<synchronous>, transform_indices = @transform_2, window_bounds = array<i64: 1, 32>}, {pipeline_mode = #tpu.pipeline_mode<synchronous>, transform_indices = @transform_3, window_bounds = array<i64: 32, 96>}, {pipeline_mode = #tpu.pipeline_mode<synchronous>, transform_indices = @transform_4, window_bounds = array<i64: 1, 96>}, {pipeline_mode = #tpu.pipeline_mode<synchronous>, transform_indices = @transform_5, window_bounds = array<i64: 4, 8, 32>}, {pipeline_mode = #tpu.pipeline_mode<synchronous>, transform_indices = @transform_6, window_bounds = array<i64: 1, 32>}, {pipeline_mode = #tpu.pipeline_mode<synchronous>, transform_indices = @transform_7, window_bounds = array<i64: 1, 32>}, {pipeline_mode = #tpu.pipeline_mode<synchronous>, transform_indices = @transform_8, window_bounds = array<i64: 1, 32>}, {pipeline_mode = #tpu.pipeline_mode<synchronous>, transform_indices = @transform_9, window_bounds = array<i64: 32, 128>}, {pipeline_mode = #tpu.pipeline_mode<synchronous>, transform_indices = @transform_10, window_bounds = array<i64: 1, 128>}, {pipeline_mode = #tpu.pipeline_mode<synchronous>, transform_indices = @transform_11, window_bounds = array<i64: 128, 32>}, {pipeline_mode = #tpu.pipeline_mode<synchronous>, transform_indices = @transform_12, window_bounds = array<i64: 1, 32>}, {pipeline_mode = #tpu.pipeline_mode<synchronous>, transform_indices = @transform_13, window_bounds = array<i64: 1, 32>}, {pipeline_mode = #tpu.pipeline_mode<synchronous>, transform_indices = @transform_14, window_bounds = array<i64: 1, 32>}, {pipeline_mode = #tpu.pipeline_mode<synchronous>, transform_indices = @transform_15, window_bounds = array<i64: 8, 8>}, {transform_indices = @transform_16, window_bounds = array<i64: 8, 32>}]} {
    %c0 = arith.constant 0 : index
    %c0_0 = arith.constant 0 : index
    %0 = vector.load %arg1[%c0, %c0_0] : memref<8x32xf32, #tpu.memory_space<vmem>>, vector<8x32xf32>
    %c0_1 = arith.constant 0 : index
    %c0_2 = arith.constant 0 : index
    %1 = vector.load %arg2[%c0_1, %c0_2] : memref<1x32xf32, #tpu.memory_space<vmem>>, vector<1x32xf32>
    %c0_3 = arith.constant 0 : index
    %c0_4 = arith.constant 0 : index
    %2 = vector.load %arg3[%c0_3, %c0_4] : memref<1x32xf32, #tpu.memory_space<vmem>>, vector<1x32xf32>
    %cst = arith.constant dense<0.000000e+00> : vector<8xf32>
    %3 = vector.multi_reduction <add>, %0, %cst [1] : vector<8x32xf32> to vector<8xf32>
    %4 = vector.shape_cast %3 : vector<8xf32> to vector<8x1xf32>
    %cst_5 = arith.constant 3.200000e+01 : f32
    %5 = vector.broadcast %cst_5 : f32 to vector<8x1xf32>
    %6 = arith.divf %4, %5 : vector<8x1xf32>
    %7 = vector.broadcast %6 : vector<8x1xf32> to vector<8x32xf32>
    %8 = arith.subf %0, %7 : vector<8x32xf32>
    %9 = arith.mulf %8, %8 : vector<8x32xf32>
    %cst_6 = arith.constant dense<0.000000e+00> : vector<8xf32>
    %10 = vector.multi_reduction <add>, %9, %cst_6 [1] : vector<8x32xf32> to vector<8xf32>
    %11 = vector.shape_cast %10 : vector<8xf32> to vector<8x1xf32>
    %cst_7 = arith.constant 3.200000e+01 : f32
    %12 = vector.broadcast %cst_7 : f32 to vector<8x1xf32>
    %13 = arith.divf %11, %12 : vector<8x1xf32>
    %cst_8 = arith.constant 9.99999974E-6 : f32
    %14 = vector.broadcast %cst_8 : f32 to vector<8x1xf32>
    %15 = arith.addf %13, %14 : vector<8x1xf32>
    %16 = math.rsqrt %15 : vector<8x1xf32>
    %17 = vector.broadcast %16 : vector<8x1xf32> to vector<8x32xf32>
    %18 = arith.mulf %8, %17 : vector<8x32xf32>
    %19 = vector.broadcast %1 : vector<1x32xf32> to vector<8x32xf32>
    %20 = arith.mulf %18, %19 : vector<8x32xf32>
    %21 = vector.broadcast %2 : vector<1x32xf32> to vector<8x32xf32>
    %22 = arith.addf %20, %21 : vector<8x32xf32>
    %23 = arith.truncf %22 : vector<8x32xf32> to vector<8x32xbf16>
    %c0_9 = arith.constant 0 : index
    %c0_10 = arith.constant 0 : index
    %24 = vector.load %arg4[%c0_9, %c0_10] : memref<32x96xbf16, #tpu.memory_space<vmem>>, vector<32x96xbf16>
    %cst_11 = arith.constant dense<0.000000e+00> : vector<8x96xf32>
    %25 = tpu.matmul %23, %24, %cst_11 {dimension_numbers = #tpu.dot_dimension_numbers<[1], [0], [0], [1], [0, 0, 1, 1], [], []>} : vector<8x32xbf16>, vector<32x96xbf16>, vector<8x96xf32> -> vector<8x96xf32>
    %c0_12 = arith.constant 0 : index
    %c0_13 = arith.constant 0 : index
    %26 = vector.load %arg5[%c0_12, %c0_13] : memref<1x96xf32, #tpu.memory_space<vmem>>, vector<1x96xf32>
    %27 = vector.broadcast %26 : vector<1x96xf32> to vector<8x96xf32>
    %28 = arith.addf %25, %27 : vector<8x96xf32>
    %29 = vector.extract_strided_slice %28 {offsets = [0, 0], sizes = [8, 32], strides = [1, 1]} : vector<8x96xf32> to vector<8x32xf32>
    %30 = arith.truncf %29 : vector<8x32xf32> to vector<8x32xbf16>
    %31 = vector.extract_strided_slice %28 {offsets = [0, 32], sizes = [8, 32], strides = [1, 1]} : vector<8x96xf32> to vector<8x32xf32>
    %32 = arith.truncf %31 : vector<8x32xf32> to vector<8x32xbf16>
    %33 = vector.extract_strided_slice %28 {offsets = [0, 64], sizes = [8, 32], strides = [1, 1]} : vector<8x96xf32> to vector<8x32xf32>
    %34 = arith.truncf %33 : vector<8x32xf32> to vector<8x32xbf16>
    %c0_14 = arith.constant 0 : index
    %c0_15 = arith.constant 0 : index
    %35 = vector.load %arg16[%c0_14, %c0_15] : memref<8x8xf32, #tpu.memory_space<vmem>>, vector<8x8xf32>
    %c0_16 = arith.constant 0 : index
    %c0_17 = arith.constant 0 : index
    %c0_18 = arith.constant 0 : index
    %36 = vector.load %arg6[%c0_16, %c0_17, %c0_18] : memref<4x8x32xbf16, #tpu.memory_space<vmem>>, vector<4x8x32xbf16>
    %37 = vector.extract_strided_slice %30 {offsets = [0, 0], sizes = [8, 8], strides = [1, 1]} : vector<8x32xbf16> to vector<8x8xbf16>
    %38 = vector.extract_strided_slice %30 {offsets = [0, 8], sizes = [8, 8], strides = [1, 1]} : vector<8x32xbf16> to vector<8x8xbf16>
    %39 = vector.extract_strided_slice %30 {offsets = [0, 16], sizes = [8, 8], strides = [1, 1]} : vector<8x32xbf16> to vector<8x8xbf16>
    %40 = vector.extract_strided_slice %30 {offsets = [0, 24], sizes = [8, 8], strides = [1, 1]} : vector<8x32xbf16> to vector<8x8xbf16>
    %41 = vector.shape_cast %37 : vector<8x8xbf16> to vector<1x8x8xbf16>
    %42 = vector.shape_cast %38 : vector<8x8xbf16> to vector<1x8x8xbf16>
    %43 = vector.shape_cast %39 : vector<8x8xbf16> to vector<1x8x8xbf16>
    %44 = vector.shape_cast %40 : vector<8x8xbf16> to vector<1x8x8xbf16>
    %45 = tpu.concatenate %41, %42, %43, %44 in 0 : vector<1x8x8xbf16>, vector<1x8x8xbf16>, vector<1x8x8xbf16>, vector<1x8x8xbf16> -> vector<4x8x8xbf16>
    %46 = vector.extract_strided_slice %32 {offsets = [0, 0], sizes = [8, 8], strides = [1, 1]} : vector<8x32xbf16> to vector<8x8xbf16>
    %47 = vector.extract_strided_slice %32 {offsets = [0, 8], sizes = [8, 8], strides = [1, 1]} : vector<8x32xbf16> to vector<8x8xbf16>
    %48 = vector.extract_strided_slice %32 {offsets = [0, 16], sizes = [8, 8], strides = [1, 1]} : vector<8x32xbf16> to vector<8x8xbf16>
    %49 = vector.extract_strided_slice %32 {offsets = [0, 24], sizes = [8, 8], strides = [1, 1]} : vector<8x32xbf16> to vector<8x8xbf16>
    %50 = vector.shape_cast %46 : vector<8x8xbf16> to vector<1x8x8xbf16>
    %51 = vector.shape_cast %47 : vector<8x8xbf16> to vector<1x8x8xbf16>
    %52 = vector.shape_cast %48 : vector<8x8xbf16> to vector<1x8x8xbf16>
    %53 = vector.shape_cast %49 : vector<8x8xbf16> to vector<1x8x8xbf16>
    %54 = tpu.concatenate %50, %51, %52, %53 in 0 : vector<1x8x8xbf16>, vector<1x8x8xbf16>, vector<1x8x8xbf16>, vector<1x8x8xbf16> -> vector<4x8x8xbf16>
    %55 = vector.extract_strided_slice %34 {offsets = [0, 0], sizes = [8, 8], strides = [1, 1]} : vector<8x32xbf16> to vector<8x8xbf16>
    %56 = vector.extract_strided_slice %34 {offsets = [0, 8], sizes = [8, 8], strides = [1, 1]} : vector<8x32xbf16> to vector<8x8xbf16>
    %57 = vector.extract_strided_slice %34 {offsets = [0, 16], sizes = [8, 8], strides = [1, 1]} : vector<8x32xbf16> to vector<8x8xbf16>
    %58 = vector.extract_strided_slice %34 {offsets = [0, 24], sizes = [8, 8], strides = [1, 1]} : vector<8x32xbf16> to vector<8x8xbf16>
    %59 = vector.shape_cast %55 : vector<8x8xbf16> to vector<1x8x8xbf16>
    %60 = vector.shape_cast %56 : vector<8x8xbf16> to vector<1x8x8xbf16>
    %61 = vector.shape_cast %57 : vector<8x8xbf16> to vector<1x8x8xbf16>
    %62 = vector.shape_cast %58 : vector<8x8xbf16> to vector<1x8x8xbf16>
    %63 = tpu.concatenate %59, %60, %61, %62 in 0 : vector<1x8x8xbf16>, vector<1x8x8xbf16>, vector<1x8x8xbf16>, vector<1x8x8xbf16> -> vector<4x8x8xbf16>
    "tpu.trace_start"() <{level = 10 : i32, message = "hqd,hkd->hqk"}> : () -> ()
    %cst_19 = arith.constant dense<0.000000e+00> : vector<4x8x8xf32>
    %64 = tpu.matmul %45, %54, %cst_19 {dimension_numbers = #tpu.dot_dimension_numbers<[2], [2], [1], [1], [0, 0, 0, 1, 1, 1], [0], [0]>} : vector<4x8x8xbf16>, vector<4x8x8xbf16>, vector<4x8x8xf32> -> vector<4x8x8xf32>
    "tpu.trace_stop"() : () -> ()
    %cst_20 = arith.constant 0.353553385 : f32
    %65 = vector.broadcast %cst_20 : f32 to vector<4x8x8xf32>
    %66 = arith.mulf %64, %65 : vector<4x8x8xf32>
    %67 = vector.shape_cast %35 : vector<8x8xf32> to vector<1x8x8xf32>
    %68 = vector.broadcast %67 : vector<1x8x8xf32> to vector<4x8x8xf32>
    %69 = arith.addf %66, %68 : vector<4x8x8xf32>
    %cst_21 = arith.constant dense<0xFF800000> : vector<4x8xf32>
    %70 = vector.multi_reduction <maximumf>, %69, %cst_21 [2] : vector<4x8x8xf32> to vector<4x8xf32>
    %71 = vector.shape_cast %70 : vector<4x8xf32> to vector<4x8x1xf32>
    %72 = vector.broadcast %71 : vector<4x8x1xf32> to vector<4x8x8xf32>
    %73 = arith.subf %69, %72 : vector<4x8x8xf32>
    %74 = math.exp %73 : vector<4x8x8xf32>
    %cst_22 = arith.constant dense<0.000000e+00> : vector<4x8xf32>
    %75 = vector.multi_reduction <add>, %74, %cst_22 [2] : vector<4x8x8xf32> to vector<4x8xf32>
    %76 = vector.shape_cast %75 : vector<4x8xf32> to vector<4x8x1xf32>
    %77 = tpu.reciprocal %76 {approx = true} : vector<4x8x1xf32> -> vector<4x8x1xf32>
    %78 = vector.broadcast %77 : vector<4x8x1xf32> to vector<4x8x8xf32>
    %79 = arith.mulf %74, %78 : vector<4x8x8xf32>
    %80 = arith.truncf %79 : vector<4x8x8xf32> to vector<4x8x8xbf16>
    "tpu.trace_start"() <{level = 10 : i32, message = "hqk,hkd->hqd"}> : () -> ()
    %cst_23 = arith.constant dense<0.000000e+00> : vector<4x8x8xf32>
    %81 = tpu.matmul %80, %63, %cst_23 {dimension_numbers = #tpu.dot_dimension_numbers<[2], [1], [1], [2], [0, 0, 0, 1, 1, 2], [0], [0]>} : vector<4x8x8xbf16>, vector<4x8x8xbf16>, vector<4x8x8xf32> -> vector<4x8x8xf32>
    "tpu.trace_stop"() : () -> ()
    %82 = vector.extract_strided_slice %81 {offsets = [0, 0, 0], sizes = [1, 8, 8], strides = [1, 1, 1]} : vector<4x8x8xf32> to vector<1x8x8xf32>
    %83 = vector.shape_cast %82 : vector<1x8x8xf32> to vector<8x8xf32>
    %84 = arith.truncf %83 : vector<8x8xf32> to vector<8x8xbf16>
    %85 = vector.extract_strided_slice %36 {offsets = [0, 0, 0], sizes = [1, 8, 32], strides = [1, 1, 1]} : vector<4x8x32xbf16> to vector<1x8x32xbf16>
    %86 = vector.shape_cast %85 : vector<1x8x32xbf16> to vector<8x32xbf16>
    %cst_24 = arith.constant dense<0.000000e+00> : vector<8x32xf32>
    %87 = tpu.matmul %84, %86, %cst_24 {dimension_numbers = #tpu.dot_dimension_numbers<[1], [0], [0], [1], [0, 0, 1, 1], [], []>} : vector<8x8xbf16>, vector<8x32xbf16>, vector<8x32xf32> -> vector<8x32xf32>
    %88 = vector.extract_strided_slice %81 {offsets = [1, 0, 0], sizes = [1, 8, 8], strides = [1, 1, 1]} : vector<4x8x8xf32> to vector<1x8x8xf32>
    %89 = vector.shape_cast %88 : vector<1x8x8xf32> to vector<8x8xf32>
    %90 = arith.truncf %89 : vector<8x8xf32> to vector<8x8xbf16>
    %91 = vector.extract_strided_slice %36 {offsets = [1, 0, 0], sizes = [1, 8, 32], strides = [1, 1, 1]} : vector<4x8x32xbf16> to vector<1x8x32xbf16>
    %92 = vector.shape_cast %91 : vector<1x8x32xbf16> to vector<8x32xbf16>
    %cst_25 = arith.constant dense<0.000000e+00> : vector<8x32xf32>
    %93 = tpu.matmul %90, %92, %cst_25 {dimension_numbers = #tpu.dot_dimension_numbers<[1], [0], [0], [1], [0, 0, 1, 1], [], []>} : vector<8x8xbf16>, vector<8x32xbf16>, vector<8x32xf32> -> vector<8x32xf32>
    %94 = arith.addf %87, %93 : vector<8x32xf32>
    %95 = vector.extract_strided_slice %81 {offsets = [2, 0, 0], sizes = [1, 8, 8], strides = [1, 1, 1]} : vector<4x8x8xf32> to vector<1x8x8xf32>
    %96 = vector.shape_cast %95 : vector<1x8x8xf32> to vector<8x8xf32>
    %97 = arith.truncf %96 : vector<8x8xf32> to vector<8x8xbf16>
    %98 = vector.extract_strided_slice %36 {offsets = [2, 0, 0], sizes = [1, 8, 32], strides = [1, 1, 1]} : vector<4x8x32xbf16> to vector<1x8x32xbf16>
    %99 = vector.shape_cast %98 : vector<1x8x32xbf16> to vector<8x32xbf16>
    %cst_26 = arith.constant dense<0.000000e+00> : vector<8x32xf32>
    %100 = tpu.matmul %97, %99, %cst_26 {dimension_numbers = #tpu.dot_dimension_numbers<[1], [0], [0], [1], [0, 0, 1, 1], [], []>} : vector<8x8xbf16>, vector<8x32xbf16>, vector<8x32xf32> -> vector<8x32xf32>
    %101 = arith.addf %94, %100 : vector<8x32xf32>
    %102 = vector.extract_strided_slice %81 {offsets = [3, 0, 0], sizes = [1, 8, 8], strides = [1, 1, 1]} : vector<4x8x8xf32> to vector<1x8x8xf32>
    %103 = vector.shape_cast %102 : vector<1x8x8xf32> to vector<8x8xf32>
    %104 = arith.truncf %103 : vector<8x8xf32> to vector<8x8xbf16>
    %105 = vector.extract_strided_slice %36 {offsets = [3, 0, 0], sizes = [1, 8, 32], strides = [1, 1, 1]} : vector<4x8x32xbf16> to vector<1x8x32xbf16>
    %106 = vector.shape_cast %105 : vector<1x8x32xbf16> to vector<8x32xbf16>
    %cst_27 = arith.constant dense<0.000000e+00> : vector<8x32xf32>
    %107 = tpu.matmul %104, %106, %cst_27 {dimension_numbers = #tpu.dot_dimension_numbers<[1], [0], [0], [1], [0, 0, 1, 1], [], []>} : vector<8x8xbf16>, vector<8x32xbf16>, vector<8x32xf32> -> vector<8x32xf32>
    %108 = arith.addf %101, %107 : vector<8x32xf32>
    %c0_28 = arith.constant 0 : index
    %c0_29 = arith.constant 0 : index
    %109 = vector.load %arg18[%c0_28, %c0_29] : memref<8x32xf32, #tpu.memory_space<vmem>>, vector<8x32xf32>
    tpu.vector_store %arg18[%c0_28, %c0_29], %108 {strides = array<i32>} : memref<8x32xf32, #tpu.memory_space<vmem>>, vector<8x32xf32>,
    %c0_30 = arith.constant 0 : index
    %c0_31 = arith.constant 0 : index
    %110 = vector.load %arg18[%c0_30, %c0_31] : memref<8x32xf32, #tpu.memory_space<vmem>>, vector<8x32xf32>
    %111 = arith.addf %0, %110 : vector<8x32xf32>
    %c0_32 = arith.constant 0 : index
    %c0_33 = arith.constant 0 : index
    %112 = vector.load %arg7[%c0_32, %c0_33] : memref<1x32xf32, #tpu.memory_space<vmem>>, vector<1x32xf32>
    %113 = vector.broadcast %112 : vector<1x32xf32> to vector<8x32xf32>
    %114 = arith.addf %111, %113 : vector<8x32xf32>
    %c0_34 = arith.constant 0 : index
    %c0_35 = arith.constant 0 : index
    %115 = vector.load %arg8[%c0_34, %c0_35] : memref<1x32xf32, #tpu.memory_space<vmem>>, vector<1x32xf32>
    %c0_36 = arith.constant 0 : index
    %c0_37 = arith.constant 0 : index
    %116 = vector.load %arg9[%c0_36, %c0_37] : memref<1x32xf32, #tpu.memory_space<vmem>>, vector<1x32xf32>
    %cst_38 = arith.constant dense<0.000000e+00> : vector<8xf32>
    %117 = vector.multi_reduction <add>, %114, %cst_38 [1] : vector<8x32xf32> to vector<8xf32>
    %118 = vector.shape_cast %117 : vector<8xf32> to vector<8x1xf32>
    %cst_39 = arith.constant 3.200000e+01 : f32
    %119 = vector.broadcast %cst_39 : f32 to vector<8x1xf32>
    %120 = arith.divf %118, %119 : vector<8x1xf32>
    %121 = vector.broadcast %120 : vector<8x1xf32> to vector<8x32xf32>
    %122 = arith.subf %114, %121 : vector<8x32xf32>
    %123 = arith.mulf %122, %122 : vector<8x32xf32>
    %cst_40 = arith.constant dense<0.000000e+00> : vector<8xf32>
    %124 = vector.multi_reduction <add>, %123, %cst_40 [1] : vector<8x32xf32> to vector<8xf32>
    %125 = vector.shape_cast %124 : vector<8xf32> to vector<8x1xf32>
    %cst_41 = arith.constant 3.200000e+01 : f32
    %126 = vector.broadcast %cst_41 : f32 to vector<8x1xf32>
    %127 = arith.divf %125, %126 : vector<8x1xf32>
    %cst_42 = arith.constant 9.99999974E-6 : f32
    %128 = vector.broadcast %cst_42 : f32 to vector<8x1xf32>
    %129 = arith.addf %127, %128 : vector<8x1xf32>
    %130 = math.rsqrt %129 : vector<8x1xf32>
    %131 = vector.broadcast %130 : vector<8x1xf32> to vector<8x32xf32>
    %132 = arith.mulf %122, %131 : vector<8x32xf32>
    %133 = vector.broadcast %115 : vector<1x32xf32> to vector<8x32xf32>
    %134 = arith.mulf %132, %133 : vector<8x32xf32>
    %135 = vector.broadcast %116 : vector<1x32xf32> to vector<8x32xf32>
    %136 = arith.addf %134, %135 : vector<8x32xf32>
    %137 = arith.truncf %136 : vector<8x32xf32> to vector<8x32xbf16>
    %c0_43 = arith.constant 0 : index
    %c0_44 = arith.constant 0 : index
    %138 = vector.load %arg10[%c0_43, %c0_44] : memref<32x128xbf16, #tpu.memory_space<vmem>>, vector<32x128xbf16>
    %cst_45 = arith.constant dense<0.000000e+00> : vector<8x128xf32>
    %139 = tpu.matmul %137, %138, %cst_45 {dimension_numbers = #tpu.dot_dimension_numbers<[1], [0], [0], [1], [0, 0, 1, 1], [], []>} : vector<8x32xbf16>, vector<32x128xbf16>, vector<8x128xf32> -> vector<8x128xf32>
    %c0_46 = arith.constant 0 : index
    %c0_47 = arith.constant 0 : index
    %140 = vector.load %arg11[%c0_46, %c0_47] : memref<1x128xf32, #tpu.memory_space<vmem>>, vector<1x128xf32>
    %141 = vector.broadcast %140 : vector<1x128xf32> to vector<8x128xf32>
    %142 = arith.addf %139, %141 : vector<8x128xf32>
    %cst_48 = arith.constant 5.000000e-01 : f32
    %143 = vector.broadcast %cst_48 : f32 to vector<8x128xf32>
    %144 = arith.mulf %143, %142 : vector<8x128xf32>
    %cst_49 = arith.constant 4.471500e-02 : f32
    %145 = vector.broadcast %cst_49 : f32 to vector<8x128xf32>
    %146 = arith.mulf %145, %142 : vector<8x128xf32>
    %147 = arith.mulf %146, %142 : vector<8x128xf32>
    %148 = arith.mulf %147, %142 : vector<8x128xf32>
    %149 = arith.addf %142, %148 : vector<8x128xf32>
    %cst_50 = arith.constant 0.797884583 : f32
    %150 = vector.broadcast %cst_50 : f32 to vector<8x128xf32>
    %151 = arith.mulf %150, %149 : vector<8x128xf32>
    %152 = math.tanh %151 : vector<8x128xf32>
    %cst_51 = arith.constant 1.000000e+00 : f32
    %153 = vector.broadcast %cst_51 : f32 to vector<8x128xf32>
    %154 = arith.addf %153, %152 : vector<8x128xf32>
    %155 = arith.mulf %144, %154 : vector<8x128xf32>
    %156 = arith.truncf %155 : vector<8x128xf32> to vector<8x128xbf16>
    %c0_52 = arith.constant 0 : index
    %c0_53 = arith.constant 0 : index
    %157 = vector.load %arg12[%c0_52, %c0_53] : memref<128x32xbf16, #tpu.memory_space<vmem>>, vector<128x32xbf16>
    %cst_54 = arith.constant dense<0.000000e+00> : vector<8x32xf32>
    %158 = tpu.matmul %156, %157, %cst_54 {dimension_numbers = #tpu.dot_dimension_numbers<[1], [0], [0], [1], [0, 0, 1, 1], [], []>} : vector<8x128xbf16>, vector<128x32xbf16>, vector<8x32xf32> -> vector<8x32xf32>
    %c0_55 = arith.constant 0 : index
    %c0_56 = arith.constant 0 : index
    %159 = vector.load %arg13[%c0_55, %c0_56] : memref<1x32xf32, #tpu.memory_space<vmem>>, vector<1x32xf32>
    %160 = vector.broadcast %159 : vector<1x32xf32> to vector<8x32xf32>
    %161 = arith.addf %158, %160 : vector<8x32xf32>
    %162 = arith.addf %114, %161 : vector<8x32xf32>
    %c0_57 = arith.constant 0 : index
    %c0_58 = arith.constant 0 : index
    %163 = vector.load %arg17[%c0_57, %c0_58] : memref<8x32xf32, #tpu.memory_space<vmem>>, vector<8x32xf32>
    tpu.vector_store %arg17[%c0_57, %c0_58], %162 {strides = array<i32>} : memref<8x32xf32, #tpu.memory_space<vmem>>, vector<8x32xf32>,
    return
  }
  func.func @transform_0(%arg0: i32) -> (i32, i32) {
    %c0_i32 = arith.constant 0 : i32
    %c0_i32_0 = arith.constant 0 : i32
    return %arg0, %c0_i32 : i32, i32
  }
  func.func @transform_1(%arg0: i32) -> (i32, i32) {
    %c0_i32 = arith.constant 0 : i32
    %c0_i32_0 = arith.constant 0 : i32
    %c0_i32_1 = arith.constant 0 : i32
    return %c0_i32, %c0_i32_0 : i32, i32
  }
  func.func @transform_2(%arg0: i32) -> (i32, i32) {
    %c0_i32 = arith.constant 0 : i32
    %c0_i32_0 = arith.constant 0 : i32
    %c0_i32_1 = arith.constant 0 : i32
    return %c0_i32, %c0_i32_0 : i32, i32
  }
  func.func @transform_3(%arg0: i32) -> (i32, i32) {
    %c0_i32 = arith.constant 0 : i32
    %c0_i32_0 = arith.constant 0 : i32
    %c0_i32_1 = arith.constant 0 : i32
    return %c0_i32, %c0_i32_0 : i32, i32
  }
  func.func @transform_4(%arg0: i32) -> (i32, i32) {
    %c0_i32 = arith.constant 0 : i32
    %c0_i32_0 = arith.constant 0 : i32
    %c0_i32_1 = arith.constant 0 : i32
    return %c0_i32, %c0_i32_0 : i32, i32
  }
  func.func @transform_5(%arg0: i32) -> (i32, i32, i32) {
    %c0_i32 = arith.constant 0 : i32
    %c0_i32_0 = arith.constant 0 : i32
    %c0_i32_1 = arith.constant 0 : i32
    %c0_i32_2 = arith.constant 0 : i32
    return %c0_i32, %c0_i32_0, %c0_i32_1 : i32, i32, i32
  }
  func.func @transform_6(%arg0: i32) -> (i32, i32) {
    %c0_i32 = arith.constant 0 : i32
    %c0_i32_0 = arith.constant 0 : i32
    %c0_i32_1 = arith.constant 0 : i32
    return %c0_i32, %c0_i32_0 : i32, i32
  }
  func.func @transform_7(%arg0: i32) -> (i32, i32) {
    %c0_i32 = arith.constant 0 : i32
    %c0_i32_0 = arith.constant 0 : i32
    %c0_i32_1 = arith.constant 0 : i32
    return %c0_i32, %c0_i32_0 : i32, i32
  }
  func.func @transform_8(%arg0: i32) -> (i32, i32) {
    %c0_i32 = arith.constant 0 : i32
    %c0_i32_0 = arith.constant 0 : i32
    %c0_i32_1 = arith.constant 0 : i32
    return %c0_i32, %c0_i32_0 : i32, i32
  }
  func.func @transform_9(%arg0: i32) -> (i32, i32) {
    %c0_i32 = arith.constant 0 : i32
    %c0_i32_0 = arith.constant 0 : i32
    %c0_i32_1 = arith.constant 0 : i32
    return %c0_i32, %c0_i32_0 : i32, i32
  }
  func.func @transform_10(%arg0: i32) -> (i32, i32) {
    %c0_i32 = arith.constant 0 : i32
    %c0_i32_0 = arith.constant 0 : i32
    %c0_i32_1 = arith.constant 0 : i32
    return %c0_i32, %c0_i32_0 : i32, i32
  }
  func.func @transform_11(%arg0: i32) -> (i32, i32) {
    %c0_i32 = arith.constant 0 : i32
    %c0_i32_0 = arith.constant 0 : i32
    %c0_i32_1 = arith.constant 0 : i32
    return %c0_i32, %c0_i32_0 : i32, i32
  }
  func.func @transform_12(%arg0: i32) -> (i32, i32) {
    %c0_i32 = arith.constant 0 : i32
    %c0_i32_0 = arith.constant 0 : i32
    %c0_i32_1 = arith.constant 0 : i32
    return %c0_i32, %c0_i32_0 : i32, i32
  }
  func.func @transform_13(%arg0: i32) -> (i32, i32) {
    %c0_i32 = arith.constant 0 : i32
    %c0_i32_0 = arith.constant 0 : i32
    %c0_i32_1 = arith.constant 0 : i32
    return %c0_i32, %c0_i32_0 : i32, i32
  }
  func.func @transform_14(%arg0: i32) -> (i32, i32) {
    %c0_i32 = arith.constant 0 : i32
    %c0_i32_0 = arith.constant 0 : i32
    %c0_i32_1 = arith.constant 0 : i32
    return %c0_i32, %c0_i32_0 : i32, i32
  }
  func.func @transform_15(%arg0: i32) -> (i32, i32) {
    %c0_i32 = arith.constant 0 : i32
    %c0_i32_0 = arith.constant 0 : i32
    %c0_i32_1 = arith.constant 0 : i32
    return %c0_i32, %c0_i32_0 : i32, i32
  }
  func.func @transform_16(%arg0: i32) -> (i32, i32) {
    %c0_i32 = arith.constant 0 : i32
    %c0_i32_0 = arith.constant 0 : i32
    return %arg0, %c0_i32 : i32, i32
  }
}

module attributes {stable_mosaic.version = 11 : i64} {
  func.func @head_kernel(%arg0: i32, %arg1: i32, %arg2: memref<8x32xf32, #tpu.memory_space<vmem>>, %arg3: memref<32x16xbf16, #tpu.memory_space<vmem>>, %arg4: memref<8x16xf32, #tpu.memory_space<vmem>>) attributes {dimension_semantics = [#tpu.dimension_semantics<parallel>, #tpu.dimension_semantics<parallel>], iteration_bounds = array<i64: 1, 2>, scalar_prefetch = 0 : i64, scratch_operands = 0 : i64, tpu.core_type = #tpu.core_type<tc>, window_params = [{transform_indices = @transform_0, window_bounds = array<i64: 8, 32>}, {transform_indices = @transform_1, window_bounds = array<i64: 32, 16>}, {transform_indices = @transform_2, window_bounds = array<i64: 8, 16>}]} {
    %c0 = arith.constant 0 : index
    %c0_0 = arith.constant 0 : index
    %0 = vector.load %arg2[%c0, %c0_0] : memref<8x32xf32, #tpu.memory_space<vmem>>, vector<8x32xf32>
    %1 = arith.truncf %0 : vector<8x32xf32> to vector<8x32xbf16>
    %c0_1 = arith.constant 0 : index
    %c0_2 = arith.constant 0 : index
    %2 = vector.load %arg3[%c0_1, %c0_2] : memref<32x16xbf16, #tpu.memory_space<vmem>>, vector<32x16xbf16>
    %cst = arith.constant dense<0.000000e+00> : vector<8x16xf32>
    %3 = tpu.matmul %1, %2, %cst {dimension_numbers = #tpu.dot_dimension_numbers<[1], [0], [0], [1], [0, 0, 1, 1], [], []>} : vector<8x32xbf16>, vector<32x16xbf16>, vector<8x16xf32> -> vector<8x16xf32>
    %c0_3 = arith.constant 0 : index
    %c0_4 = arith.constant 0 : index
    %4 = vector.load %arg4[%c0_3, %c0_4] : memref<8x16xf32, #tpu.memory_space<vmem>>, vector<8x16xf32>
    tpu.vector_store %arg4[%c0_3, %c0_4], %3 {strides = array<i32>} : memref<8x16xf32, #tpu.memory_space<vmem>>, vector<8x16xf32>,
    return
  }
  func.func @transform_0(%arg0: i32, %arg1: i32) -> (i32, i32) {
    %c0_i32 = arith.constant 0 : i32
    %c0_i32_0 = arith.constant 0 : i32
    return %arg1, %c0_i32 : i32, i32
  }
  func.func @transform_1(%arg0: i32, %arg1: i32) -> (i32, i32) {
    %c0_i32 = arith.constant 0 : i32
    %c0_i32_0 = arith.constant 0 : i32
    return %c0_i32, %arg0 : i32, i32
  }
  func.func @transform_2(%arg0: i32, %arg1: i32) -> (i32, i32) {
    %c0_i32 = arith.constant 0 : i32
    return %arg1, %arg0 : i32, i32
  }
}

module attributes {stable_mosaic.version = 11 : i64} {
  func.func @embed_kernel(%arg0: i32, %arg1: memref<8x16xf32, #tpu.memory_space<vmem>>, %arg2: memref<16x32xf32, #tpu.memory_space<vmem>>, %arg3: memref<1x32xf32, #tpu.memory_space<vmem>>, %arg4: memref<8x32xf32, #tpu.memory_space<vmem>>, %arg5: memref<8x32xf32, #tpu.memory_space<vmem>>) attributes {dimension_semantics = [#tpu.dimension_semantics<parallel>], iteration_bounds = array<i64: 2>, scalar_prefetch = 0 : i64, scratch_operands = 0 : i64, tpu.core_type = #tpu.core_type<tc>, window_params = [{transform_indices = @transform_0, window_bounds = array<i64: 8, 16>}, {pipeline_mode = #tpu.pipeline_mode<synchronous>, transform_indices = @transform_1, window_bounds = array<i64: 16, 32>}, {pipeline_mode = #tpu.pipeline_mode<synchronous>, transform_indices = @transform_2, window_bounds = array<i64: 1, 32>}, {pipeline_mode = #tpu.pipeline_mode<synchronous>, transform_indices = @transform_3, window_bounds = array<i64: 8, 32>}, {transform_indices = @transform_4, window_bounds = array<i64: 8, 32>}]} {
    %c0 = arith.constant 0 : index
    %c0_0 = arith.constant 0 : index
    %0 = vector.load %arg1[%c0, %c0_0] : memref<8x16xf32, #tpu.memory_space<vmem>>, vector<8x16xf32>
    %c0_1 = arith.constant 0 : index
    %c0_2 = arith.constant 0 : index
    %1 = vector.load %arg2[%c0_1, %c0_2] : memref<16x32xf32, #tpu.memory_space<vmem>>, vector<16x32xf32>
    %cst = arith.constant dense<0.000000e+00> : vector<8x32xf32>
    %2 = tpu.matmul %0, %1, %cst {dimension_numbers = #tpu.dot_dimension_numbers<[1], [0], [0], [1], [0, 0, 1, 1], [], []>} : vector<8x16xf32>, vector<16x32xf32>, vector<8x32xf32> -> vector<8x32xf32>
    %c0_3 = arith.constant 0 : index
    %c0_4 = arith.constant 0 : index
    %3 = vector.load %arg3[%c0_3, %c0_4] : memref<1x32xf32, #tpu.memory_space<vmem>>, vector<1x32xf32>
    %4 = vector.broadcast %3 : vector<1x32xf32> to vector<8x32xf32>
    %5 = arith.addf %2, %4 : vector<8x32xf32>
    %c0_5 = arith.constant 0 : index
    %c0_6 = arith.constant 0 : index
    %6 = vector.load %arg4[%c0_5, %c0_6] : memref<8x32xf32, #tpu.memory_space<vmem>>, vector<8x32xf32>
    %7 = arith.addf %5, %6 : vector<8x32xf32>
    %c0_7 = arith.constant 0 : index
    %c0_8 = arith.constant 0 : index
    %8 = vector.load %arg5[%c0_7, %c0_8] : memref<8x32xf32, #tpu.memory_space<vmem>>, vector<8x32xf32>
    tpu.vector_store %arg5[%c0_7, %c0_8], %7 {strides = array<i32>} : memref<8x32xf32, #tpu.memory_space<vmem>>, vector<8x32xf32>,
    return
  }
  func.func @transform_0(%arg0: i32) -> (i32, i32) {
    %c0_i32 = arith.constant 0 : i32
    %c0_i32_0 = arith.constant 0 : i32
    return %arg0, %c0_i32 : i32, i32
  }
  func.func @transform_1(%arg0: i32) -> (i32, i32) {
    %c0_i32 = arith.constant 0 : i32
    %c0_i32_0 = arith.constant 0 : i32
    %c0_i32_1 = arith.constant 0 : i32
    return %c0_i32, %c0_i32_0 : i32, i32
  }
  func.func @transform_2(%arg0: i32) -> (i32, i32) {
    %c0_i32 = arith.constant 0 : i32
    %c0_i32_0 = arith.constant 0 : i32
    %c0_i32_1 = arith.constant 0 : i32
    return %c0_i32, %c0_i32_0 : i32, i32
  }
  func.func @transform_3(%arg0: i32) -> (i32, i32) {
    %c0_i32 = arith.constant 0 : i32
    %c0_i32_0 = arith.constant 0 : i32
    %c0_i32_1 = arith.constant 0 : i32
    return %c0_i32, %c0_i32_0 : i32, i32
  }
  func.func @transform_4(%arg0: i32) -> (i32, i32) {
    %c0_i32 = arith.constant 0 : i32
    %c0_i32_0 = arith.constant 0 : i32
    return %arg0, %c0_i32 : i32, i32
  }
}

module attributes {stable_mosaic.version = 11 : i64} {
  func.func @block_kernel(%arg0: i32, %arg1: memref<8x32xf32, #tpu.memory_space<vmem>>, %arg2: memref<1x32xf32, #tpu.memory_space<vmem>>, %arg3: memref<1x32xf32, #tpu.memory_space<vmem>>, %arg4: memref<32x96xbf16, #tpu.memory_space<vmem>>, %arg5: memref<1x96xf32, #tpu.memory_space<vmem>>, %arg6: memref<4x8x32xbf16, #tpu.memory_space<vmem>>, %arg7: memref<1x32xf32, #tpu.memory_space<vmem>>, %arg8: memref<1x32xf32, #tpu.memory_space<vmem>>, %arg9: memref<1x32xf32, #tpu.memory_space<vmem>>, %arg10: memref<32x128xbf16, #tpu.memory_space<vmem>>, %arg11: memref<1x128xf32, #tpu.memory_space<vmem>>, %arg12: memref<128x32xbf16, #tpu.memory_space<vmem>>, %arg13: memref<1x32xf32, #tpu.memory_space<vmem>>, %arg14: memref<1x32xf32, #tpu.memory_space<vmem>>, %arg15: memref<1x32xf32, #tpu.memory_space<vmem>>, %arg16: memref<8x8xf32, #tpu.memory_space<vmem>>, %arg17: memref<8x32xf32, #tpu.memory_space<vmem>>, %arg18: memref<8x32xf32, #tpu.memory_space<vmem>>) attributes {dimension_semantics = [#tpu.dimension_semantics<parallel>], iteration_bounds = array<i64: 2>, scalar_prefetch = 0 : i64, scratch_operands = 1 : i64, tpu.core_type = #tpu.core_type<tc>, window_params = [{transform_indices = @transform_0, window_bounds = array<i64: 8, 32>}, {pipeline_mode = #tpu.pipeline_mode<synchronous>, transform_indices = @transform_1, window_bounds = array<i64: 1, 32>}, {pipeline_mode = #tpu.pipeline_mode<synchronous>, transform_indices = @transform_2, window_bounds = array<i64: 1, 32>}, {pipeline_mode = #tpu.pipeline_mode<synchronous>, transform_indices = @transform_3, window_bounds = array<i64: 32, 96>}, {pipeline_mode = #tpu.pipeline_mode<synchronous>, transform_indices = @transform_4, window_bounds = array<i64: 1, 96>}, {pipeline_mode = #tpu.pipeline_mode<synchronous>, transform_indices = @transform_5, window_bounds = array<i64: 4, 8, 32>}, {pipeline_mode = #tpu.pipeline_mode<synchronous>, transform_indices = @transform_6, window_bounds = array<i64: 1, 32>}, {pipeline_mode = #tpu.pipeline_mode<synchronous>, transform_indices = @transform_7, window_bounds = array<i64: 1, 32>}, {pipeline_mode = #tpu.pipeline_mode<synchronous>, transform_indices = @transform_8, window_bounds = array<i64: 1, 32>}, {pipeline_mode = #tpu.pipeline_mode<synchronous>, transform_indices = @transform_9, window_bounds = array<i64: 32, 128>}, {pipeline_mode = #tpu.pipeline_mode<synchronous>, transform_indices = @transform_10, window_bounds = array<i64: 1, 128>}, {pipeline_mode = #tpu.pipeline_mode<synchronous>, transform_indices = @transform_11, window_bounds = array<i64: 128, 32>}, {pipeline_mode = #tpu.pipeline_mode<synchronous>, transform_indices = @transform_12, window_bounds = array<i64: 1, 32>}, {pipeline_mode = #tpu.pipeline_mode<synchronous>, transform_indices = @transform_13, window_bounds = array<i64: 1, 32>}, {pipeline_mode = #tpu.pipeline_mode<synchronous>, transform_indices = @transform_14, window_bounds = array<i64: 1, 32>}, {pipeline_mode = #tpu.pipeline_mode<synchronous>, transform_indices = @transform_15, window_bounds = array<i64: 8, 8>}, {transform_indices = @transform_16, window_bounds = array<i64: 8, 32>}]} {
    %c0 = arith.constant 0 : index
    %c0_0 = arith.constant 0 : index
    %0 = vector.load %arg1[%c0, %c0_0] : memref<8x32xf32, #tpu.memory_space<vmem>>, vector<8x32xf32>
    %c0_1 = arith.constant 0 : index
    %c0_2 = arith.constant 0 : index
    %1 = vector.load %arg2[%c0_1, %c0_2] : memref<1x32xf32, #tpu.memory_space<vmem>>, vector<1x32xf32>
    %c0_3 = arith.constant 0 : index
    %c0_4 = arith.constant 0 : index
    %2 = vector.load %arg3[%c0_3, %c0_4] : memref<1x32xf32, #tpu.memory_space<vmem>>, vector<1x32xf32>
    %cst = arith.constant dense<0.000000e+00> : vector<8xf32>
    %3 = vector.multi_reduction <add>, %0, %cst [1] : vector<8x32xf32> to vector<8xf32>
    %4 = vector.shape_cast %3 : vector<8xf32> to vector<8x1xf32>
    %cst_5 = arith.constant 3.200000e+01 : f32
    %5 = vector.broadcast %cst_5 : f32 to vector<8x1xf32>
    %6 = arith.divf %4, %5 : vector<8x1xf32>
    %7 = vector.broadcast %6 : vector<8x1xf32> to vector<8x32xf32>
    %8 = arith.subf %0, %7 : vector<8x32xf32>
    %9 = arith.mulf %8, %8 : vector<8x32xf32>
    %cst_6 = arith.constant dense<0.000000e+00> : vector<8xf32>
    %10 = vector.multi_reduction <add>, %9, %cst_6 [1] : vector<8x32xf32> to vector<8xf32>
    %11 = vector.shape_cast %10 : vector<8xf32> to vector<8x1xf32>
    %cst_7 = arith.constant 3.200000e+01 : f32
    %12 = vector.broadcast %cst_7 : f32 to vector<8x1xf32>
    %13 = arith.divf %11, %12 : vector<8x1xf32>
    %cst_8 = arith.constant 9.99999974E-6 : f32
    %14 = vector.broadcast %cst_8 : f32 to vector<8x1xf32>
    %15 = arith.addf %13, %14 : vector<8x1xf32>
    %16 = math.rsqrt %15 : vector<8x1xf32>
    %17 = vector.broadcast %16 : vector<8x1xf32> to vector<8x32xf32>
    %18 = arith.mulf %8, %17 : vector<8x32xf32>
    %19 = vector.broadcast %1 : vector<1x32xf32> to vector<8x32xf32>
    %20 = arith.mulf %18, %19 : vector<8x32xf32>
    %21 = vector.broadcast %2 : vector<1x32xf32> to vector<8x32xf32>
    %22 = arith.addf %20, %21 : vector<8x32xf32>
    %23 = arith.truncf %22 : vector<8x32xf32> to vector<8x32xbf16>
    %c0_9 = arith.constant 0 : index
    %c0_10 = arith.constant 0 : index
    %24 = vector.load %arg4[%c0_9, %c0_10] : memref<32x96xbf16, #tpu.memory_space<vmem>>, vector<32x96xbf16>
    %cst_11 = arith.constant dense<0.000000e+00> : vector<8x96xf32>
    %25 = tpu.matmul %23, %24, %cst_11 {dimension_numbers = #tpu.dot_dimension_numbers<[1], [0], [0], [1], [0, 0, 1, 1], [], []>} : vector<8x32xbf16>, vector<32x96xbf16>, vector<8x96xf32> -> vector<8x96xf32>
    %c0_12 = arith.constant 0 : index
    %c0_13 = arith.constant 0 : index
    %26 = vector.load %arg5[%c0_12, %c0_13] : memref<1x96xf32, #tpu.memory_space<vmem>>, vector<1x96xf32>
    %27 = vector.broadcast %26 : vector<1x96xf32> to vector<8x96xf32>
    %28 = arith.addf %25, %27 : vector<8x96xf32>
    %29 = vector.extract_strided_slice %28 {offsets = [0, 0], sizes = [8, 32], strides = [1, 1]} : vector<8x96xf32> to vector<8x32xf32>
    %30 = arith.truncf %29 : vector<8x32xf32> to vector<8x32xbf16>
    %31 = vector.extract_strided_slice %28 {offsets = [0, 32], sizes = [8, 32], strides = [1, 1]} : vector<8x96xf32> to vector<8x32xf32>
    %32 = arith.truncf %31 : vector<8x32xf32> to vector<8x32xbf16>
    %33 = vector.extract_strided_slice %28 {offsets = [0, 64], sizes = [8, 32], strides = [1, 1]} : vector<8x96xf32> to vector<8x32xf32>
    %34 = arith.truncf %33 : vector<8x32xf32> to vector<8x32xbf16>
    %c0_14 = arith.constant 0 : index
    %c0_15 = arith.constant 0 : index
    %35 = vector.load %arg16[%c0_14, %c0_15] : memref<8x8xf32, #tpu.memory_space<vmem>>, vector<8x8xf32>
    %c0_16 = arith.constant 0 : index
    %c0_17 = arith.constant 0 : index
    %c0_18 = arith.constant 0 : index
    %36 = vector.load %arg6[%c0_16, %c0_17, %c0_18] : memref<4x8x32xbf16, #tpu.memory_space<vmem>>, vector<4x8x32xbf16>
    %37 = vector.extract_strided_slice %30 {offsets = [0, 0], sizes = [8, 8], strides = [1, 1]} : vector<8x32xbf16> to vector<8x8xbf16>
    %38 = vector.extract_strided_slice %30 {offsets = [0, 8], sizes = [8, 8], strides = [1, 1]} : vector<8x32xbf16> to vector<8x8xbf16>
    %39 = vector.extract_strided_slice %30 {offsets = [0, 16], sizes = [8, 8], strides = [1, 1]} : vector<8x32xbf16> to vector<8x8xbf16>
    %40 = vector.extract_strided_slice %30 {offsets = [0, 24], sizes = [8, 8], strides = [1, 1]} : vector<8x32xbf16> to vector<8x8xbf16>
    %41 = vector.shape_cast %37 : vector<8x8xbf16> to vector<1x8x8xbf16>
    %42 = vector.shape_cast %38 : vector<8x8xbf16> to vector<1x8x8xbf16>
    %43 = vector.shape_cast %39 : vector<8x8xbf16> to vector<1x8x8xbf16>
    %44 = vector.shape_cast %40 : vector<8x8xbf16> to vector<1x8x8xbf16>
    %45 = tpu.concatenate %41, %42, %43, %44 in 0 : vector<1x8x8xbf16>, vector<1x8x8xbf16>, vector<1x8x8xbf16>, vector<1x8x8xbf16> -> vector<4x8x8xbf16>
    %46 = vector.extract_strided_slice %32 {offsets = [0, 0], sizes = [8, 8], strides = [1, 1]} : vector<8x32xbf16> to vector<8x8xbf16>
    %47 = vector.extract_strided_slice %32 {offsets = [0, 8], sizes = [8, 8], strides = [1, 1]} : vector<8x32xbf16> to vector<8x8xbf16>
    %48 = vector.extract_strided_slice %32 {offsets = [0, 16], sizes = [8, 8], strides = [1, 1]} : vector<8x32xbf16> to vector<8x8xbf16>
    %49 = vector.extract_strided_slice %32 {offsets = [0, 24], sizes = [8, 8], strides = [1, 1]} : vector<8x32xbf16> to vector<8x8xbf16>
    %50 = vector.shape_cast %46 : vector<8x8xbf16> to vector<1x8x8xbf16>
    %51 = vector.shape_cast %47 : vector<8x8xbf16> to vector<1x8x8xbf16>
    %52 = vector.shape_cast %48 : vector<8x8xbf16> to vector<1x8x8xbf16>
    %53 = vector.shape_cast %49 : vector<8x8xbf16> to vector<1x8x8xbf16>
    %54 = tpu.concatenate %50, %51, %52, %53 in 0 : vector<1x8x8xbf16>, vector<1x8x8xbf16>, vector<1x8x8xbf16>, vector<1x8x8xbf16> -> vector<4x8x8xbf16>
    %55 = vector.extract_strided_slice %34 {offsets = [0, 0], sizes = [8, 8], strides = [1, 1]} : vector<8x32xbf16> to vector<8x8xbf16>
    %56 = vector.extract_strided_slice %34 {offsets = [0, 8], sizes = [8, 8], strides = [1, 1]} : vector<8x32xbf16> to vector<8x8xbf16>
    %57 = vector.extract_strided_slice %34 {offsets = [0, 16], sizes = [8, 8], strides = [1, 1]} : vector<8x32xbf16> to vector<8x8xbf16>
    %58 = vector.extract_strided_slice %34 {offsets = [0, 24], sizes = [8, 8], strides = [1, 1]} : vector<8x32xbf16> to vector<8x8xbf16>
    %59 = vector.shape_cast %55 : vector<8x8xbf16> to vector<1x8x8xbf16>
    %60 = vector.shape_cast %56 : vector<8x8xbf16> to vector<1x8x8xbf16>
    %61 = vector.shape_cast %57 : vector<8x8xbf16> to vector<1x8x8xbf16>
    %62 = vector.shape_cast %58 : vector<8x8xbf16> to vector<1x8x8xbf16>
    %63 = tpu.concatenate %59, %60, %61, %62 in 0 : vector<1x8x8xbf16>, vector<1x8x8xbf16>, vector<1x8x8xbf16>, vector<1x8x8xbf16> -> vector<4x8x8xbf16>
    "tpu.trace_start"() <{level = 10 : i32, message = "hqd,hkd->hqk"}> : () -> ()
    %cst_19 = arith.constant dense<0.000000e+00> : vector<4x8x8xf32>
    %64 = tpu.matmul %45, %54, %cst_19 {dimension_numbers = #tpu.dot_dimension_numbers<[2], [2], [1], [1], [0, 0, 0, 1, 1, 1], [0], [0]>} : vector<4x8x8xbf16>, vector<4x8x8xbf16>, vector<4x8x8xf32> -> vector<4x8x8xf32>
    "tpu.trace_stop"() : () -> ()
    %cst_20 = arith.constant 0.353553385 : f32
    %65 = vector.broadcast %cst_20 : f32 to vector<4x8x8xf32>
    %66 = arith.mulf %64, %65 : vector<4x8x8xf32>
    %67 = vector.shape_cast %35 : vector<8x8xf32> to vector<1x8x8xf32>
    %68 = vector.broadcast %67 : vector<1x8x8xf32> to vector<4x8x8xf32>
    %69 = arith.addf %66, %68 : vector<4x8x8xf32>
    %cst_21 = arith.constant dense<0xFF800000> : vector<4x8xf32>
    %70 = vector.multi_reduction <maximumf>, %69, %cst_21 [2] : vector<4x8x8xf32> to vector<4x8xf32>
    %71 = vector.shape_cast %70 : vector<4x8xf32> to vector<4x8x1xf32>
    %72 = vector.broadcast %71 : vector<4x8x1xf32> to vector<4x8x8xf32>
    %73 = arith.subf %69, %72 : vector<4x8x8xf32>
    %74 = math.exp %73 : vector<4x8x8xf32>
    %cst_22 = arith.constant dense<0.000000e+00> : vector<4x8xf32>
    %75 = vector.multi_reduction <add>, %74, %cst_22 [2] : vector<4x8x8xf32> to vector<4x8xf32>
    %76 = vector.shape_cast %75 : vector<4x8xf32> to vector<4x8x1xf32>
    %77 = tpu.reciprocal %76 {approx = true} : vector<4x8x1xf32> -> vector<4x8x1xf32>
    %78 = vector.broadcast %77 : vector<4x8x1xf32> to vector<4x8x8xf32>
    %79 = arith.mulf %74, %78 : vector<4x8x8xf32>
    %80 = arith.truncf %79 : vector<4x8x8xf32> to vector<4x8x8xbf16>
    "tpu.trace_start"() <{level = 10 : i32, message = "hqk,hkd->hqd"}> : () -> ()
    %cst_23 = arith.constant dense<0.000000e+00> : vector<4x8x8xf32>
    %81 = tpu.matmul %80, %63, %cst_23 {dimension_numbers = #tpu.dot_dimension_numbers<[2], [1], [1], [2], [0, 0, 0, 1, 1, 2], [0], [0]>} : vector<4x8x8xbf16>, vector<4x8x8xbf16>, vector<4x8x8xf32> -> vector<4x8x8xf32>
    "tpu.trace_stop"() : () -> ()
    %82 = vector.extract_strided_slice %81 {offsets = [0, 0, 0], sizes = [1, 8, 8], strides = [1, 1, 1]} : vector<4x8x8xf32> to vector<1x8x8xf32>
    %83 = vector.shape_cast %82 : vector<1x8x8xf32> to vector<8x8xf32>
    %84 = arith.truncf %83 : vector<8x8xf32> to vector<8x8xbf16>
    %85 = vector.extract_strided_slice %36 {offsets = [0, 0, 0], sizes = [1, 8, 32], strides = [1, 1, 1]} : vector<4x8x32xbf16> to vector<1x8x32xbf16>
    %86 = vector.shape_cast %85 : vector<1x8x32xbf16> to vector<8x32xbf16>
    %cst_24 = arith.constant dense<0.000000e+00> : vector<8x32xf32>
    %87 = tpu.matmul %84, %86, %cst_24 {dimension_numbers = #tpu.dot_dimension_numbers<[1], [0], [0], [1], [0, 0, 1, 1], [], []>} : vector<8x8xbf16>, vector<8x32xbf16>, vector<8x32xf32> -> vector<8x32xf32>
    %88 = vector.extract_strided_slice %81 {offsets = [1, 0, 0], sizes = [1, 8, 8], strides = [1, 1, 1]} : vector<4x8x8xf32> to vector<1x8x8xf32>
    %89 = vector.shape_cast %88 : vector<1x8x8xf32> to vector<8x8xf32>
    %90 = arith.truncf %89 : vector<8x8xf32> to vector<8x8xbf16>
    %91 = vector.extract_strided_slice %36 {offsets = [1, 0, 0], sizes = [1, 8, 32], strides = [1, 1, 1]} : vector<4x8x32xbf16> to vector<1x8x32xbf16>
    %92 = vector.shape_cast %91 : vector<1x8x32xbf16> to vector<8x32xbf16>
    %cst_25 = arith.constant dense<0.000000e+00> : vector<8x32xf32>
    %93 = tpu.matmul %90, %92, %cst_25 {dimension_numbers = #tpu.dot_dimension_numbers<[1], [0], [0], [1], [0, 0, 1, 1], [], []>} : vector<8x8xbf16>, vector<8x32xbf16>, vector<8x32xf32> -> vector<8x32xf32>
    %94 = arith.addf %87, %93 : vector<8x32xf32>
    %95 = vector.extract_strided_slice %81 {offsets = [2, 0, 0], sizes = [1, 8, 8], strides = [1, 1, 1]} : vector<4x8x8xf32> to vector<1x8x8xf32>
    %96 = vector.shape_cast %95 : vector<1x8x8xf32> to vector<8x8xf32>
    %97 = arith.truncf %96 : vector<8x8xf32> to vector<8x8xbf16>
    %98 = vector.extract_strided_slice %36 {offsets = [2, 0, 0], sizes = [1, 8, 32], strides = [1, 1, 1]} : vector<4x8x32xbf16> to vector<1x8x32xbf16>
    %99 = vector.shape_cast %98 : vector<1x8x32xbf16> to vector<8x32xbf16>
    %cst_26 = arith.constant dense<0.000000e+00> : vector<8x32xf32>
    %100 = tpu.matmul %97, %99, %cst_26 {dimension_numbers = #tpu.dot_dimension_numbers<[1], [0], [0], [1], [0, 0, 1, 1], [], []>} : vector<8x8xbf16>, vector<8x32xbf16>, vector<8x32xf32> -> vector<8x32xf32>
    %101 = arith.addf %94, %100 : vector<8x32xf32>
    %102 = vector.extract_strided_slice %81 {offsets = [3, 0, 0], sizes = [1, 8, 8], strides = [1, 1, 1]} : vector<4x8x8xf32> to vector<1x8x8xf32>
    %103 = vector.shape_cast %102 : vector<1x8x8xf32> to vector<8x8xf32>
    %104 = arith.truncf %103 : vector<8x8xf32> to vector<8x8xbf16>
    %105 = vector.extract_strided_slice %36 {offsets = [3, 0, 0], sizes = [1, 8, 32], strides = [1, 1, 1]} : vector<4x8x32xbf16> to vector<1x8x32xbf16>
    %106 = vector.shape_cast %105 : vector<1x8x32xbf16> to vector<8x32xbf16>
    %cst_27 = arith.constant dense<0.000000e+00> : vector<8x32xf32>
    %107 = tpu.matmul %104, %106, %cst_27 {dimension_numbers = #tpu.dot_dimension_numbers<[1], [0], [0], [1], [0, 0, 1, 1], [], []>} : vector<8x8xbf16>, vector<8x32xbf16>, vector<8x32xf32> -> vector<8x32xf32>
    %108 = arith.addf %101, %107 : vector<8x32xf32>
    %c0_28 = arith.constant 0 : index
    %c0_29 = arith.constant 0 : index
    %109 = vector.load %arg18[%c0_28, %c0_29] : memref<8x32xf32, #tpu.memory_space<vmem>>, vector<8x32xf32>
    tpu.vector_store %arg18[%c0_28, %c0_29], %108 {strides = array<i32>} : memref<8x32xf32, #tpu.memory_space<vmem>>, vector<8x32xf32>,
    %c0_30 = arith.constant 0 : index
    %c0_31 = arith.constant 0 : index
    %110 = vector.load %arg18[%c0_30, %c0_31] : memref<8x32xf32, #tpu.memory_space<vmem>>, vector<8x32xf32>
    %111 = arith.addf %0, %110 : vector<8x32xf32>
    %c0_32 = arith.constant 0 : index
    %c0_33 = arith.constant 0 : index
    %112 = vector.load %arg7[%c0_32, %c0_33] : memref<1x32xf32, #tpu.memory_space<vmem>>, vector<1x32xf32>
    %113 = vector.broadcast %112 : vector<1x32xf32> to vector<8x32xf32>
    %114 = arith.addf %111, %113 : vector<8x32xf32>
    %c0_34 = arith.constant 0 : index
    %c0_35 = arith.constant 0 : index
    %115 = vector.load %arg8[%c0_34, %c0_35] : memref<1x32xf32, #tpu.memory_space<vmem>>, vector<1x32xf32>
    %c0_36 = arith.constant 0 : index
    %c0_37 = arith.constant 0 : index
    %116 = vector.load %arg9[%c0_36, %c0_37] : memref<1x32xf32, #tpu.memory_space<vmem>>, vector<1x32xf32>
    %cst_38 = arith.constant dense<0.000000e+00> : vector<8xf32>
    %117 = vector.multi_reduction <add>, %114, %cst_38 [1] : vector<8x32xf32> to vector<8xf32>
    %118 = vector.shape_cast %117 : vector<8xf32> to vector<8x1xf32>
    %cst_39 = arith.constant 3.200000e+01 : f32
    %119 = vector.broadcast %cst_39 : f32 to vector<8x1xf32>
    %120 = arith.divf %118, %119 : vector<8x1xf32>
    %121 = vector.broadcast %120 : vector<8x1xf32> to vector<8x32xf32>
    %122 = arith.subf %114, %121 : vector<8x32xf32>
    %123 = arith.mulf %122, %122 : vector<8x32xf32>
    %cst_40 = arith.constant dense<0.000000e+00> : vector<8xf32>
    %124 = vector.multi_reduction <add>, %123, %cst_40 [1] : vector<8x32xf32> to vector<8xf32>
    %125 = vector.shape_cast %124 : vector<8xf32> to vector<8x1xf32>
    %cst_41 = arith.constant 3.200000e+01 : f32
    %126 = vector.broadcast %cst_41 : f32 to vector<8x1xf32>
    %127 = arith.divf %125, %126 : vector<8x1xf32>
    %cst_42 = arith.constant 9.99999974E-6 : f32
    %128 = vector.broadcast %cst_42 : f32 to vector<8x1xf32>
    %129 = arith.addf %127, %128 : vector<8x1xf32>
    %130 = math.rsqrt %129 : vector<8x1xf32>
    %131 = vector.broadcast %130 : vector<8x1xf32> to vector<8x32xf32>
    %132 = arith.mulf %122, %131 : vector<8x32xf32>
    %133 = vector.broadcast %115 : vector<1x32xf32> to vector<8x32xf32>
    %134 = arith.mulf %132, %133 : vector<8x32xf32>
    %135 = vector.broadcast %116 : vector<1x32xf32> to vector<8x32xf32>
    %136 = arith.addf %134, %135 : vector<8x32xf32>
    %137 = arith.truncf %136 : vector<8x32xf32> to vector<8x32xbf16>
    %c0_43 = arith.constant 0 : index
    %c0_44 = arith.constant 0 : index
    %138 = vector.load %arg10[%c0_43, %c0_44] : memref<32x128xbf16, #tpu.memory_space<vmem>>, vector<32x128xbf16>
    %cst_45 = arith.constant dense<0.000000e+00> : vector<8x128xf32>
    %139 = tpu.matmul %137, %138, %cst_45 {dimension_numbers = #tpu.dot_dimension_numbers<[1], [0], [0], [1], [0, 0, 1, 1], [], []>} : vector<8x32xbf16>, vector<32x128xbf16>, vector<8x128xf32> -> vector<8x128xf32>
    %c0_46 = arith.constant 0 : index
    %c0_47 = arith.constant 0 : index
    %140 = vector.load %arg11[%c0_46, %c0_47] : memref<1x128xf32, #tpu.memory_space<vmem>>, vector<1x128xf32>
    %141 = vector.broadcast %140 : vector<1x128xf32> to vector<8x128xf32>
    %142 = arith.addf %139, %141 : vector<8x128xf32>
    %cst_48 = arith.constant 5.000000e-01 : f32
    %143 = vector.broadcast %cst_48 : f32 to vector<8x128xf32>
    %144 = arith.mulf %143, %142 : vector<8x128xf32>
    %cst_49 = arith.constant 4.471500e-02 : f32
    %145 = vector.broadcast %cst_49 : f32 to vector<8x128xf32>
    %146 = arith.mulf %145, %142 : vector<8x128xf32>
    %147 = arith.mulf %146, %142 : vector<8x128xf32>
    %148 = arith.mulf %147, %142 : vector<8x128xf32>
    %149 = arith.addf %142, %148 : vector<8x128xf32>
    %cst_50 = arith.constant 0.797884583 : f32
    %150 = vector.broadcast %cst_50 : f32 to vector<8x128xf32>
    %151 = arith.mulf %150, %149 : vector<8x128xf32>
    %152 = math.tanh %151 : vector<8x128xf32>
    %cst_51 = arith.constant 1.000000e+00 : f32
    %153 = vector.broadcast %cst_51 : f32 to vector<8x128xf32>
    %154 = arith.addf %153, %152 : vector<8x128xf32>
    %155 = arith.mulf %144, %154 : vector<8x128xf32>
    %156 = arith.truncf %155 : vector<8x128xf32> to vector<8x128xbf16>
    %c0_52 = arith.constant 0 : index
    %c0_53 = arith.constant 0 : index
    %157 = vector.load %arg12[%c0_52, %c0_53] : memref<128x32xbf16, #tpu.memory_space<vmem>>, vector<128x32xbf16>
    %cst_54 = arith.constant dense<0.000000e+00> : vector<8x32xf32>
    %158 = tpu.matmul %156, %157, %cst_54 {dimension_numbers = #tpu.dot_dimension_numbers<[1], [0], [0], [1], [0, 0, 1, 1], [], []>} : vector<8x128xbf16>, vector<128x32xbf16>, vector<8x32xf32> -> vector<8x32xf32>
    %c0_55 = arith.constant 0 : index
    %c0_56 = arith.constant 0 : index
    %159 = vector.load %arg13[%c0_55, %c0_56] : memref<1x32xf32, #tpu.memory_space<vmem>>, vector<1x32xf32>
    %160 = vector.broadcast %159 : vector<1x32xf32> to vector<8x32xf32>
    %161 = arith.addf %158, %160 : vector<8x32xf32>
    %162 = arith.addf %114, %161 : vector<8x32xf32>
    %c0_57 = arith.constant 0 : index
    %c0_58 = arith.constant 0 : index
    %163 = vector.load %arg17[%c0_57, %c0_58] : memref<8x32xf32, #tpu.memory_space<vmem>>, vector<8x32xf32>
    tpu.vector_store %arg17[%c0_57, %c0_58], %162 {strides = array<i32>} : memref<8x32xf32, #tpu.memory_space<vmem>>, vector<8x32xf32>,
    return
  }
  func.func @transform_0(%arg0: i32) -> (i32, i32) {
    %c0_i32 = arith.constant 0 : i32
    %c0_i32_0 = arith.constant 0 : i32
    return %arg0, %c0_i32 : i32, i32
  }
  func.func @transform_1(%arg0: i32) -> (i32, i32) {
    %c0_i32 = arith.constant 0 : i32
    %c0_i32_0 = arith.constant 0 : i32
    %c0_i32_1 = arith.constant 0 : i32
    return %c0_i32, %c0_i32_0 : i32, i32
  }
  func.func @transform_2(%arg0: i32) -> (i32, i32) {
    %c0_i32 = arith.constant 0 : i32
    %c0_i32_0 = arith.constant 0 : i32
    %c0_i32_1 = arith.constant 0 : i32
    return %c0_i32, %c0_i32_0 : i32, i32
  }
  func.func @transform_3(%arg0: i32) -> (i32, i32) {
    %c0_i32 = arith.constant 0 : i32
    %c0_i32_0 = arith.constant 0 : i32
    %c0_i32_1 = arith.constant 0 : i32
    return %c0_i32, %c0_i32_0 : i32, i32
  }
  func.func @transform_4(%arg0: i32) -> (i32, i32) {
    %c0_i32 = arith.constant 0 : i32
    %c0_i32_0 = arith.constant 0 : i32
    %c0_i32_1 = arith.constant 0 : i32
    return %c0_i32, %c0_i32_0 : i32, i32
  }
  func.func @transform_5(%arg0: i32) -> (i32, i32, i32) {
    %c0_i32 = arith.constant 0 : i32
    %c0_i32_0 = arith.constant 0 : i32
    %c0_i32_1 = arith.constant 0 : i32
    %c0_i32_2 = arith.constant 0 : i32
    return %c0_i32, %c0_i32_0, %c0_i32_1 : i32, i32, i32
  }
  func.func @transform_6(%arg0: i32) -> (i32, i32) {
    %c0_i32 = arith.constant 0 : i32
    %c0_i32_0 = arith.constant 0 : i32
    %c0_i32_1 = arith.constant 0 : i32
    return %c0_i32, %c0_i32_0 : i32, i32
  }
  func.func @transform_7(%arg0: i32) -> (i32, i32) {
    %c0_i32 = arith.constant 0 : i32
    %c0_i32_0 = arith.constant 0 : i32
    %c0_i32_1 = arith.constant 0 : i32
    return %c0_i32, %c0_i32_0 : i32, i32
  }
  func.func @transform_8(%arg0: i32) -> (i32, i32) {
    %c0_i32 = arith.constant 0 : i32
    %c0_i32_0 = arith.constant 0 : i32
    %c0_i32_1 = arith.constant 0 : i32
    return %c0_i32, %c0_i32_0 : i32, i32
  }
  func.func @transform_9(%arg0: i32) -> (i32, i32) {
    %c0_i32 = arith.constant 0 : i32
    %c0_i32_0 = arith.constant 0 : i32
    %c0_i32_1 = arith.constant 0 : i32
    return %c0_i32, %c0_i32_0 : i32, i32
  }
  func.func @transform_10(%arg0: i32) -> (i32, i32) {
    %c0_i32 = arith.constant 0 : i32
    %c0_i32_0 = arith.constant 0 : i32
    %c0_i32_1 = arith.constant 0 : i32
    return %c0_i32, %c0_i32_0 : i32, i32
  }
  func.func @transform_11(%arg0: i32) -> (i32, i32) {
    %c0_i32 = arith.constant 0 : i32
    %c0_i32_0 = arith.constant 0 : i32
    %c0_i32_1 = arith.constant 0 : i32
    return %c0_i32, %c0_i32_0 : i32, i32
  }
  func.func @transform_12(%arg0: i32) -> (i32, i32) {
    %c0_i32 = arith.constant 0 : i32
    %c0_i32_0 = arith.constant 0 : i32
    %c0_i32_1 = arith.constant 0 : i32
    return %c0_i32, %c0_i32_0 : i32, i32
  }
  func.func @transform_13(%arg0: i32) -> (i32, i32) {
    %c0_i32 = arith.constant 0 : i32
    %c0_i32_0 = arith.constant 0 : i32
    %c0_i32_1 = arith.constant 0 : i32
    return %c0_i32, %c0_i32_0 : i32, i32
  }
  func.func @transform_14(%arg0: i32) -> (i32, i32) {
    %c0_i32 = arith.constant 0 : i32
    %c0_i32_0 = arith.constant 0 : i32
    %c0_i32_1 = arith.constant 0 : i32
    return %c0_i32, %c0_i32_0 : i32, i32
  }
  func.func @transform_15(%arg0: i32) -> (i32, i32) {
    %c0_i32 = arith.constant 0 : i32
    %c0_i32_0 = arith.constant 0 : i32
    %c0_i32_1 = arith.constant 0 : i32
    return %c0_i32, %c0_i32_0 : i32, i32
  }
  func.func @transform_16(%arg0: i32) -> (i32, i32) {
    %c0_i32 = arith.constant 0 : i32
    %c0_i32_0 = arith.constant 0 : i32
    return %arg0, %c0_i32 : i32, i32
  }
}

module attributes {stable_mosaic.version = 11 : i64} {
  func.func @block_kernel(%arg0: i32, %arg1: memref<8x32xf32, #tpu.memory_space<vmem>>, %arg2: memref<1x32xf32, #tpu.memory_space<vmem>>, %arg3: memref<1x32xf32, #tpu.memory_space<vmem>>, %arg4: memref<32x96xbf16, #tpu.memory_space<vmem>>, %arg5: memref<1x96xf32, #tpu.memory_space<vmem>>, %arg6: memref<4x8x32xbf16, #tpu.memory_space<vmem>>, %arg7: memref<1x32xf32, #tpu.memory_space<vmem>>, %arg8: memref<1x32xf32, #tpu.memory_space<vmem>>, %arg9: memref<1x32xf32, #tpu.memory_space<vmem>>, %arg10: memref<32x128xbf16, #tpu.memory_space<vmem>>, %arg11: memref<1x128xf32, #tpu.memory_space<vmem>>, %arg12: memref<128x32xbf16, #tpu.memory_space<vmem>>, %arg13: memref<1x32xf32, #tpu.memory_space<vmem>>, %arg14: memref<1x32xf32, #tpu.memory_space<vmem>>, %arg15: memref<1x32xf32, #tpu.memory_space<vmem>>, %arg16: memref<8x8xf32, #tpu.memory_space<vmem>>, %arg17: memref<8x32xf32, #tpu.memory_space<vmem>>, %arg18: memref<8x32xf32, #tpu.memory_space<vmem>>) attributes {dimension_semantics = [#tpu.dimension_semantics<parallel>], iteration_bounds = array<i64: 2>, scalar_prefetch = 0 : i64, scratch_operands = 1 : i64, tpu.core_type = #tpu.core_type<tc>, window_params = [{transform_indices = @transform_0, window_bounds = array<i64: 8, 32>}, {pipeline_mode = #tpu.pipeline_mode<synchronous>, transform_indices = @transform_1, window_bounds = array<i64: 1, 32>}, {pipeline_mode = #tpu.pipeline_mode<synchronous>, transform_indices = @transform_2, window_bounds = array<i64: 1, 32>}, {pipeline_mode = #tpu.pipeline_mode<synchronous>, transform_indices = @transform_3, window_bounds = array<i64: 32, 96>}, {pipeline_mode = #tpu.pipeline_mode<synchronous>, transform_indices = @transform_4, window_bounds = array<i64: 1, 96>}, {pipeline_mode = #tpu.pipeline_mode<synchronous>, transform_indices = @transform_5, window_bounds = array<i64: 4, 8, 32>}, {pipeline_mode = #tpu.pipeline_mode<synchronous>, transform_indices = @transform_6, window_bounds = array<i64: 1, 32>}, {pipeline_mode = #tpu.pipeline_mode<synchronous>, transform_indices = @transform_7, window_bounds = array<i64: 1, 32>}, {pipeline_mode = #tpu.pipeline_mode<synchronous>, transform_indices = @transform_8, window_bounds = array<i64: 1, 32>}, {pipeline_mode = #tpu.pipeline_mode<synchronous>, transform_indices = @transform_9, window_bounds = array<i64: 32, 128>}, {pipeline_mode = #tpu.pipeline_mode<synchronous>, transform_indices = @transform_10, window_bounds = array<i64: 1, 128>}, {pipeline_mode = #tpu.pipeline_mode<synchronous>, transform_indices = @transform_11, window_bounds = array<i64: 128, 32>}, {pipeline_mode = #tpu.pipeline_mode<synchronous>, transform_indices = @transform_12, window_bounds = array<i64: 1, 32>}, {pipeline_mode = #tpu.pipeline_mode<synchronous>, transform_indices = @transform_13, window_bounds = array<i64: 1, 32>}, {pipeline_mode = #tpu.pipeline_mode<synchronous>, transform_indices = @transform_14, window_bounds = array<i64: 1, 32>}, {pipeline_mode = #tpu.pipeline_mode<synchronous>, transform_indices = @transform_15, window_bounds = array<i64: 8, 8>}, {transform_indices = @transform_16, window_bounds = array<i64: 8, 32>}]} {
    %c0 = arith.constant 0 : index
    %c0_0 = arith.constant 0 : index
    %0 = vector.load %arg1[%c0, %c0_0] : memref<8x32xf32, #tpu.memory_space<vmem>>, vector<8x32xf32>
    %c0_1 = arith.constant 0 : index
    %c0_2 = arith.constant 0 : index
    %1 = vector.load %arg2[%c0_1, %c0_2] : memref<1x32xf32, #tpu.memory_space<vmem>>, vector<1x32xf32>
    %c0_3 = arith.constant 0 : index
    %c0_4 = arith.constant 0 : index
    %2 = vector.load %arg3[%c0_3, %c0_4] : memref<1x32xf32, #tpu.memory_space<vmem>>, vector<1x32xf32>
    %cst = arith.constant dense<0.000000e+00> : vector<8xf32>
    %3 = vector.multi_reduction <add>, %0, %cst [1] : vector<8x32xf32> to vector<8xf32>
    %4 = vector.shape_cast %3 : vector<8xf32> to vector<8x1xf32>
    %cst_5 = arith.constant 3.200000e+01 : f32
    %5 = vector.broadcast %cst_5 : f32 to vector<8x1xf32>
    %6 = arith.divf %4, %5 : vector<8x1xf32>
    %7 = vector.broadcast %6 : vector<8x1xf32> to vector<8x32xf32>
    %8 = arith.subf %0, %7 : vector<8x32xf32>
    %9 = arith.mulf %8, %8 : vector<8x32xf32>
    %cst_6 = arith.constant dense<0.000000e+00> : vector<8xf32>
    %10 = vector.multi_reduction <add>, %9, %cst_6 [1] : vector<8x32xf32> to vector<8xf32>
    %11 = vector.shape_cast %10 : vector<8xf32> to vector<8x1xf32>
    %cst_7 = arith.constant 3.200000e+01 : f32
    %12 = vector.broadcast %cst_7 : f32 to vector<8x1xf32>
    %13 = arith.divf %11, %12 : vector<8x1xf32>
    %cst_8 = arith.constant 9.99999974E-6 : f32
    %14 = vector.broadcast %cst_8 : f32 to vector<8x1xf32>
    %15 = arith.addf %13, %14 : vector<8x1xf32>
    %16 = math.rsqrt %15 : vector<8x1xf32>
    %17 = vector.broadcast %16 : vector<8x1xf32> to vector<8x32xf32>
    %18 = arith.mulf %8, %17 : vector<8x32xf32>
    %19 = vector.broadcast %1 : vector<1x32xf32> to vector<8x32xf32>
    %20 = arith.mulf %18, %19 : vector<8x32xf32>
    %21 = vector.broadcast %2 : vector<1x32xf32> to vector<8x32xf32>
    %22 = arith.addf %20, %21 : vector<8x32xf32>
    %23 = arith.truncf %22 : vector<8x32xf32> to vector<8x32xbf16>
    %c0_9 = arith.constant 0 : index
    %c0_10 = arith.constant 0 : index
    %24 = vector.load %arg4[%c0_9, %c0_10] : memref<32x96xbf16, #tpu.memory_space<vmem>>, vector<32x96xbf16>
    %cst_11 = arith.constant dense<0.000000e+00> : vector<8x96xf32>
    %25 = tpu.matmul %23, %24, %cst_11 {dimension_numbers = #tpu.dot_dimension_numbers<[1], [0], [0], [1], [0, 0, 1, 1], [], []>} : vector<8x32xbf16>, vector<32x96xbf16>, vector<8x96xf32> -> vector<8x96xf32>
    %c0_12 = arith.constant 0 : index
    %c0_13 = arith.constant 0 : index
    %26 = vector.load %arg5[%c0_12, %c0_13] : memref<1x96xf32, #tpu.memory_space<vmem>>, vector<1x96xf32>
    %27 = vector.broadcast %26 : vector<1x96xf32> to vector<8x96xf32>
    %28 = arith.addf %25, %27 : vector<8x96xf32>
    %29 = vector.extract_strided_slice %28 {offsets = [0, 0], sizes = [8, 32], strides = [1, 1]} : vector<8x96xf32> to vector<8x32xf32>
    %30 = arith.truncf %29 : vector<8x32xf32> to vector<8x32xbf16>
    %31 = vector.extract_strided_slice %28 {offsets = [0, 32], sizes = [8, 32], strides = [1, 1]} : vector<8x96xf32> to vector<8x32xf32>
    %32 = arith.truncf %31 : vector<8x32xf32> to vector<8x32xbf16>
    %33 = vector.extract_strided_slice %28 {offsets = [0, 64], sizes = [8, 32], strides = [1, 1]} : vector<8x96xf32> to vector<8x32xf32>
    %34 = arith.truncf %33 : vector<8x32xf32> to vector<8x32xbf16>
    %c0_14 = arith.constant 0 : index
    %c0_15 = arith.constant 0 : index
    %35 = vector.load %arg16[%c0_14, %c0_15] : memref<8x8xf32, #tpu.memory_space<vmem>>, vector<8x8xf32>
    %c0_16 = arith.constant 0 : index
    %c0_17 = arith.constant 0 : index
    %c0_18 = arith.constant 0 : index
    %36 = vector.load %arg6[%c0_16, %c0_17, %c0_18] : memref<4x8x32xbf16, #tpu.memory_space<vmem>>, vector<4x8x32xbf16>
    %37 = vector.extract_strided_slice %30 {offsets = [0, 0], sizes = [8, 8], strides = [1, 1]} : vector<8x32xbf16> to vector<8x8xbf16>
    %38 = vector.extract_strided_slice %30 {offsets = [0, 8], sizes = [8, 8], strides = [1, 1]} : vector<8x32xbf16> to vector<8x8xbf16>
    %39 = vector.extract_strided_slice %30 {offsets = [0, 16], sizes = [8, 8], strides = [1, 1]} : vector<8x32xbf16> to vector<8x8xbf16>
    %40 = vector.extract_strided_slice %30 {offsets = [0, 24], sizes = [8, 8], strides = [1, 1]} : vector<8x32xbf16> to vector<8x8xbf16>
    %41 = vector.shape_cast %37 : vector<8x8xbf16> to vector<1x8x8xbf16>
    %42 = vector.shape_cast %38 : vector<8x8xbf16> to vector<1x8x8xbf16>
    %43 = vector.shape_cast %39 : vector<8x8xbf16> to vector<1x8x8xbf16>
    %44 = vector.shape_cast %40 : vector<8x8xbf16> to vector<1x8x8xbf16>
    %45 = tpu.concatenate %41, %42, %43, %44 in 0 : vector<1x8x8xbf16>, vector<1x8x8xbf16>, vector<1x8x8xbf16>, vector<1x8x8xbf16> -> vector<4x8x8xbf16>
    %46 = vector.extract_strided_slice %32 {offsets = [0, 0], sizes = [8, 8], strides = [1, 1]} : vector<8x32xbf16> to vector<8x8xbf16>
    %47 = vector.extract_strided_slice %32 {offsets = [0, 8], sizes = [8, 8], strides = [1, 1]} : vector<8x32xbf16> to vector<8x8xbf16>
    %48 = vector.extract_strided_slice %32 {offsets = [0, 16], sizes = [8, 8], strides = [1, 1]} : vector<8x32xbf16> to vector<8x8xbf16>
    %49 = vector.extract_strided_slice %32 {offsets = [0, 24], sizes = [8, 8], strides = [1, 1]} : vector<8x32xbf16> to vector<8x8xbf16>
    %50 = vector.shape_cast %46 : vector<8x8xbf16> to vector<1x8x8xbf16>
    %51 = vector.shape_cast %47 : vector<8x8xbf16> to vector<1x8x8xbf16>
    %52 = vector.shape_cast %48 : vector<8x8xbf16> to vector<1x8x8xbf16>
    %53 = vector.shape_cast %49 : vector<8x8xbf16> to vector<1x8x8xbf16>
    %54 = tpu.concatenate %50, %51, %52, %53 in 0 : vector<1x8x8xbf16>, vector<1x8x8xbf16>, vector<1x8x8xbf16>, vector<1x8x8xbf16> -> vector<4x8x8xbf16>
    %55 = vector.extract_strided_slice %34 {offsets = [0, 0], sizes = [8, 8], strides = [1, 1]} : vector<8x32xbf16> to vector<8x8xbf16>
    %56 = vector.extract_strided_slice %34 {offsets = [0, 8], sizes = [8, 8], strides = [1, 1]} : vector<8x32xbf16> to vector<8x8xbf16>
    %57 = vector.extract_strided_slice %34 {offsets = [0, 16], sizes = [8, 8], strides = [1, 1]} : vector<8x32xbf16> to vector<8x8xbf16>
    %58 = vector.extract_strided_slice %34 {offsets = [0, 24], sizes = [8, 8], strides = [1, 1]} : vector<8x32xbf16> to vector<8x8xbf16>
    %59 = vector.shape_cast %55 : vector<8x8xbf16> to vector<1x8x8xbf16>
    %60 = vector.shape_cast %56 : vector<8x8xbf16> to vector<1x8x8xbf16>
    %61 = vector.shape_cast %57 : vector<8x8xbf16> to vector<1x8x8xbf16>
    %62 = vector.shape_cast %58 : vector<8x8xbf16> to vector<1x8x8xbf16>
    %63 = tpu.concatenate %59, %60, %61, %62 in 0 : vector<1x8x8xbf16>, vector<1x8x8xbf16>, vector<1x8x8xbf16>, vector<1x8x8xbf16> -> vector<4x8x8xbf16>
    "tpu.trace_start"() <{level = 10 : i32, message = "hqd,hkd->hqk"}> : () -> ()
    %cst_19 = arith.constant dense<0.000000e+00> : vector<4x8x8xf32>
    %64 = tpu.matmul %45, %54, %cst_19 {dimension_numbers = #tpu.dot_dimension_numbers<[2], [2], [1], [1], [0, 0, 0, 1, 1, 1], [0], [0]>} : vector<4x8x8xbf16>, vector<4x8x8xbf16>, vector<4x8x8xf32> -> vector<4x8x8xf32>
    "tpu.trace_stop"() : () -> ()
    %cst_20 = arith.constant 0.353553385 : f32
    %65 = vector.broadcast %cst_20 : f32 to vector<4x8x8xf32>
    %66 = arith.mulf %64, %65 : vector<4x8x8xf32>
    %67 = vector.shape_cast %35 : vector<8x8xf32> to vector<1x8x8xf32>
    %68 = vector.broadcast %67 : vector<1x8x8xf32> to vector<4x8x8xf32>
    %69 = arith.addf %66, %68 : vector<4x8x8xf32>
    %cst_21 = arith.constant dense<0xFF800000> : vector<4x8xf32>
    %70 = vector.multi_reduction <maximumf>, %69, %cst_21 [2] : vector<4x8x8xf32> to vector<4x8xf32>
    %71 = vector.shape_cast %70 : vector<4x8xf32> to vector<4x8x1xf32>
    %72 = vector.broadcast %71 : vector<4x8x1xf32> to vector<4x8x8xf32>
    %73 = arith.subf %69, %72 : vector<4x8x8xf32>
    %74 = math.exp %73 : vector<4x8x8xf32>
    %cst_22 = arith.constant dense<0.000000e+00> : vector<4x8xf32>
    %75 = vector.multi_reduction <add>, %74, %cst_22 [2] : vector<4x8x8xf32> to vector<4x8xf32>
    %76 = vector.shape_cast %75 : vector<4x8xf32> to vector<4x8x1xf32>
    %77 = tpu.reciprocal %76 {approx = true} : vector<4x8x1xf32> -> vector<4x8x1xf32>
    %78 = vector.broadcast %77 : vector<4x8x1xf32> to vector<4x8x8xf32>
    %79 = arith.mulf %74, %78 : vector<4x8x8xf32>
    %80 = arith.truncf %79 : vector<4x8x8xf32> to vector<4x8x8xbf16>
    "tpu.trace_start"() <{level = 10 : i32, message = "hqk,hkd->hqd"}> : () -> ()
    %cst_23 = arith.constant dense<0.000000e+00> : vector<4x8x8xf32>
    %81 = tpu.matmul %80, %63, %cst_23 {dimension_numbers = #tpu.dot_dimension_numbers<[2], [1], [1], [2], [0, 0, 0, 1, 1, 2], [0], [0]>} : vector<4x8x8xbf16>, vector<4x8x8xbf16>, vector<4x8x8xf32> -> vector<4x8x8xf32>
    "tpu.trace_stop"() : () -> ()
    %82 = vector.extract_strided_slice %81 {offsets = [0, 0, 0], sizes = [1, 8, 8], strides = [1, 1, 1]} : vector<4x8x8xf32> to vector<1x8x8xf32>
    %83 = vector.shape_cast %82 : vector<1x8x8xf32> to vector<8x8xf32>
    %84 = arith.truncf %83 : vector<8x8xf32> to vector<8x8xbf16>
    %85 = vector.extract_strided_slice %36 {offsets = [0, 0, 0], sizes = [1, 8, 32], strides = [1, 1, 1]} : vector<4x8x32xbf16> to vector<1x8x32xbf16>
    %86 = vector.shape_cast %85 : vector<1x8x32xbf16> to vector<8x32xbf16>
    %cst_24 = arith.constant dense<0.000000e+00> : vector<8x32xf32>
    %87 = tpu.matmul %84, %86, %cst_24 {dimension_numbers = #tpu.dot_dimension_numbers<[1], [0], [0], [1], [0, 0, 1, 1], [], []>} : vector<8x8xbf16>, vector<8x32xbf16>, vector<8x32xf32> -> vector<8x32xf32>
    %88 = vector.extract_strided_slice %81 {offsets = [1, 0, 0], sizes = [1, 8, 8], strides = [1, 1, 1]} : vector<4x8x8xf32> to vector<1x8x8xf32>
    %89 = vector.shape_cast %88 : vector<1x8x8xf32> to vector<8x8xf32>
    %90 = arith.truncf %89 : vector<8x8xf32> to vector<8x8xbf16>
    %91 = vector.extract_strided_slice %36 {offsets = [1, 0, 0], sizes = [1, 8, 32], strides = [1, 1, 1]} : vector<4x8x32xbf16> to vector<1x8x32xbf16>
    %92 = vector.shape_cast %91 : vector<1x8x32xbf16> to vector<8x32xbf16>
    %cst_25 = arith.constant dense<0.000000e+00> : vector<8x32xf32>
    %93 = tpu.matmul %90, %92, %cst_25 {dimension_numbers = #tpu.dot_dimension_numbers<[1], [0], [0], [1], [0, 0, 1, 1], [], []>} : vector<8x8xbf16>, vector<8x32xbf16>, vector<8x32xf32> -> vector<8x32xf32>
    %94 = arith.addf %87, %93 : vector<8x32xf32>
    %95 = vector.extract_strided_slice %81 {offsets = [2, 0, 0], sizes = [1, 8, 8], strides = [1, 1, 1]} : vector<4x8x8xf32> to vector<1x8x8xf32>
    %96 = vector.shape_cast %95 : vector<1x8x8xf32> to vector<8x8xf32>
    %97 = arith.truncf %96 : vector<8x8xf32> to vector<8x8xbf16>
    %98 = vector.extract_strided_slice %36 {offsets = [2, 0, 0], sizes = [1, 8, 32], strides = [1, 1, 1]} : vector<4x8x32xbf16> to vector<1x8x32xbf16>
    %99 = vector.shape_cast %98 : vector<1x8x32xbf16> to vector<8x32xbf16>
    %cst_26 = arith.constant dense<0.000000e+00> : vector<8x32xf32>
    %100 = tpu.matmul %97, %99, %cst_26 {dimension_numbers = #tpu.dot_dimension_numbers<[1], [0], [0], [1], [0, 0, 1, 1], [], []>} : vector<8x8xbf16>, vector<8x32xbf16>, vector<8x32xf32> -> vector<8x32xf32>
    %101 = arith.addf %94, %100 : vector<8x32xf32>
    %102 = vector.extract_strided_slice %81 {offsets = [3, 0, 0], sizes = [1, 8, 8], strides = [1, 1, 1]} : vector<4x8x8xf32> to vector<1x8x8xf32>
    %103 = vector.shape_cast %102 : vector<1x8x8xf32> to vector<8x8xf32>
    %104 = arith.truncf %103 : vector<8x8xf32> to vector<8x8xbf16>
    %105 = vector.extract_strided_slice %36 {offsets = [3, 0, 0], sizes = [1, 8, 32], strides = [1, 1, 1]} : vector<4x8x32xbf16> to vector<1x8x32xbf16>
    %106 = vector.shape_cast %105 : vector<1x8x32xbf16> to vector<8x32xbf16>
    %cst_27 = arith.constant dense<0.000000e+00> : vector<8x32xf32>
    %107 = tpu.matmul %104, %106, %cst_27 {dimension_numbers = #tpu.dot_dimension_numbers<[1], [0], [0], [1], [0, 0, 1, 1], [], []>} : vector<8x8xbf16>, vector<8x32xbf16>, vector<8x32xf32> -> vector<8x32xf32>
    %108 = arith.addf %101, %107 : vector<8x32xf32>
    %c0_28 = arith.constant 0 : index
    %c0_29 = arith.constant 0 : index
    %109 = vector.load %arg18[%c0_28, %c0_29] : memref<8x32xf32, #tpu.memory_space<vmem>>, vector<8x32xf32>
    tpu.vector_store %arg18[%c0_28, %c0_29], %108 {strides = array<i32>} : memref<8x32xf32, #tpu.memory_space<vmem>>, vector<8x32xf32>,
    %c0_30 = arith.constant 0 : index
    %c0_31 = arith.constant 0 : index
    %110 = vector.load %arg18[%c0_30, %c0_31] : memref<8x32xf32, #tpu.memory_space<vmem>>, vector<8x32xf32>
    %111 = arith.addf %0, %110 : vector<8x32xf32>
    %c0_32 = arith.constant 0 : index
    %c0_33 = arith.constant 0 : index
    %112 = vector.load %arg7[%c0_32, %c0_33] : memref<1x32xf32, #tpu.memory_space<vmem>>, vector<1x32xf32>
    %113 = vector.broadcast %112 : vector<1x32xf32> to vector<8x32xf32>
    %114 = arith.addf %111, %113 : vector<8x32xf32>
    %c0_34 = arith.constant 0 : index
    %c0_35 = arith.constant 0 : index
    %115 = vector.load %arg8[%c0_34, %c0_35] : memref<1x32xf32, #tpu.memory_space<vmem>>, vector<1x32xf32>
    %c0_36 = arith.constant 0 : index
    %c0_37 = arith.constant 0 : index
    %116 = vector.load %arg9[%c0_36, %c0_37] : memref<1x32xf32, #tpu.memory_space<vmem>>, vector<1x32xf32>
    %cst_38 = arith.constant dense<0.000000e+00> : vector<8xf32>
    %117 = vector.multi_reduction <add>, %114, %cst_38 [1] : vector<8x32xf32> to vector<8xf32>
    %118 = vector.shape_cast %117 : vector<8xf32> to vector<8x1xf32>
    %cst_39 = arith.constant 3.200000e+01 : f32
    %119 = vector.broadcast %cst_39 : f32 to vector<8x1xf32>
    %120 = arith.divf %118, %119 : vector<8x1xf32>
    %121 = vector.broadcast %120 : vector<8x1xf32> to vector<8x32xf32>
    %122 = arith.subf %114, %121 : vector<8x32xf32>
    %123 = arith.mulf %122, %122 : vector<8x32xf32>
    %cst_40 = arith.constant dense<0.000000e+00> : vector<8xf32>
    %124 = vector.multi_reduction <add>, %123, %cst_40 [1] : vector<8x32xf32> to vector<8xf32>
    %125 = vector.shape_cast %124 : vector<8xf32> to vector<8x1xf32>
    %cst_41 = arith.constant 3.200000e+01 : f32
    %126 = vector.broadcast %cst_41 : f32 to vector<8x1xf32>
    %127 = arith.divf %125, %126 : vector<8x1xf32>
    %cst_42 = arith.constant 9.99999974E-6 : f32
    %128 = vector.broadcast %cst_42 : f32 to vector<8x1xf32>
    %129 = arith.addf %127, %128 : vector<8x1xf32>
    %130 = math.rsqrt %129 : vector<8x1xf32>
    %131 = vector.broadcast %130 : vector<8x1xf32> to vector<8x32xf32>
    %132 = arith.mulf %122, %131 : vector<8x32xf32>
    %133 = vector.broadcast %115 : vector<1x32xf32> to vector<8x32xf32>
    %134 = arith.mulf %132, %133 : vector<8x32xf32>
    %135 = vector.broadcast %116 : vector<1x32xf32> to vector<8x32xf32>
    %136 = arith.addf %134, %135 : vector<8x32xf32>
    %137 = arith.truncf %136 : vector<8x32xf32> to vector<8x32xbf16>
    %c0_43 = arith.constant 0 : index
    %c0_44 = arith.constant 0 : index
    %138 = vector.load %arg10[%c0_43, %c0_44] : memref<32x128xbf16, #tpu.memory_space<vmem>>, vector<32x128xbf16>
    %cst_45 = arith.constant dense<0.000000e+00> : vector<8x128xf32>
    %139 = tpu.matmul %137, %138, %cst_45 {dimension_numbers = #tpu.dot_dimension_numbers<[1], [0], [0], [1], [0, 0, 1, 1], [], []>} : vector<8x32xbf16>, vector<32x128xbf16>, vector<8x128xf32> -> vector<8x128xf32>
    %c0_46 = arith.constant 0 : index
    %c0_47 = arith.constant 0 : index
    %140 = vector.load %arg11[%c0_46, %c0_47] : memref<1x128xf32, #tpu.memory_space<vmem>>, vector<1x128xf32>
    %141 = vector.broadcast %140 : vector<1x128xf32> to vector<8x128xf32>
    %142 = arith.addf %139, %141 : vector<8x128xf32>
    %cst_48 = arith.constant 5.000000e-01 : f32
    %143 = vector.broadcast %cst_48 : f32 to vector<8x128xf32>
    %144 = arith.mulf %143, %142 : vector<8x128xf32>
    %cst_49 = arith.constant 4.471500e-02 : f32
    %145 = vector.broadcast %cst_49 : f32 to vector<8x128xf32>
    %146 = arith.mulf %145, %142 : vector<8x128xf32>
    %147 = arith.mulf %146, %142 : vector<8x128xf32>
    %148 = arith.mulf %147, %142 : vector<8x128xf32>
    %149 = arith.addf %142, %148 : vector<8x128xf32>
    %cst_50 = arith.constant 0.797884583 : f32
    %150 = vector.broadcast %cst_50 : f32 to vector<8x128xf32>
    %151 = arith.mulf %150, %149 : vector<8x128xf32>
    %152 = math.tanh %151 : vector<8x128xf32>
    %cst_51 = arith.constant 1.000000e+00 : f32
    %153 = vector.broadcast %cst_51 : f32 to vector<8x128xf32>
    %154 = arith.addf %153, %152 : vector<8x128xf32>
    %155 = arith.mulf %144, %154 : vector<8x128xf32>
    %156 = arith.truncf %155 : vector<8x128xf32> to vector<8x128xbf16>
    %c0_52 = arith.constant 0 : index
    %c0_53 = arith.constant 0 : index
    %157 = vector.load %arg12[%c0_52, %c0_53] : memref<128x32xbf16, #tpu.memory_space<vmem>>, vector<128x32xbf16>
    %cst_54 = arith.constant dense<0.000000e+00> : vector<8x32xf32>
    %158 = tpu.matmul %156, %157, %cst_54 {dimension_numbers = #tpu.dot_dimension_numbers<[1], [0], [0], [1], [0, 0, 1, 1], [], []>} : vector<8x128xbf16>, vector<128x32xbf16>, vector<8x32xf32> -> vector<8x32xf32>
    %c0_55 = arith.constant 0 : index
    %c0_56 = arith.constant 0 : index
    %159 = vector.load %arg13[%c0_55, %c0_56] : memref<1x32xf32, #tpu.memory_space<vmem>>, vector<1x32xf32>
    %160 = vector.broadcast %159 : vector<1x32xf32> to vector<8x32xf32>
    %161 = arith.addf %158, %160 : vector<8x32xf32>
    %162 = arith.addf %114, %161 : vector<8x32xf32>
    %c0_57 = arith.constant 0 : index
    %c0_58 = arith.constant 0 : index
    %163 = vector.load %arg14[%c0_57, %c0_58] : memref<1x32xf32, #tpu.memory_space<vmem>>, vector<1x32xf32>
    %c0_59 = arith.constant 0 : index
    %c0_60 = arith.constant 0 : index
    %164 = vector.load %arg15[%c0_59, %c0_60] : memref<1x32xf32, #tpu.memory_space<vmem>>, vector<1x32xf32>
    %cst_61 = arith.constant dense<0.000000e+00> : vector<8xf32>
    %165 = vector.multi_reduction <add>, %162, %cst_61 [1] : vector<8x32xf32> to vector<8xf32>
    %166 = vector.shape_cast %165 : vector<8xf32> to vector<8x1xf32>
    %cst_62 = arith.constant 3.200000e+01 : f32
    %167 = vector.broadcast %cst_62 : f32 to vector<8x1xf32>
    %168 = arith.divf %166, %167 : vector<8x1xf32>
    %169 = vector.broadcast %168 : vector<8x1xf32> to vector<8x32xf32>
    %170 = arith.subf %162, %169 : vector<8x32xf32>
    %171 = arith.mulf %170, %170 : vector<8x32xf32>
    %cst_63 = arith.constant dense<0.000000e+00> : vector<8xf32>
    %172 = vector.multi_reduction <add>, %171, %cst_63 [1] : vector<8x32xf32> to vector<8xf32>
    %173 = vector.shape_cast %172 : vector<8xf32> to vector<8x1xf32>
    %cst_64 = arith.constant 3.200000e+01 : f32
    %174 = vector.broadcast %cst_64 : f32 to vector<8x1xf32>
    %175 = arith.divf %173, %174 : vector<8x1xf32>
    %cst_65 = arith.constant 9.99999974E-6 : f32
    %176 = vector.broadcast %cst_65 : f32 to vector<8x1xf32>
    %177 = arith.addf %175, %176 : vector<8x1xf32>
    %178 = math.rsqrt %177 : vector<8x1xf32>
    %179 = vector.broadcast %178 : vector<8x1xf32> to vector<8x32xf32>
    %180 = arith.mulf %170, %179 : vector<8x32xf32>
    %181 = vector.broadcast %163 : vector<1x32xf32> to vector<8x32xf32>
    %182 = arith.mulf %180, %181 : vector<8x32xf32>
    %183 = vector.broadcast %164 : vector<1x32xf32> to vector<8x32xf32>
    %184 = arith.addf %182, %183 : vector<8x32xf32>
    %c0_66 = arith.constant 0 : index
    %c0_67 = arith.constant 0 : index
    %185 = vector.load %arg17[%c0_66, %c0_67] : memref<8x32xf32, #tpu.memory_space<vmem>>, vector<8x32xf32>
    tpu.vector_store %arg17[%c0_66, %c0_67], %184 {strides = array<i32>} : memref<8x32xf32, #tpu.memory_space<vmem>>, vector<8x32xf32>,
    return
  }
  func.func @transform_0(%arg0: i32) -> (i32, i32) {
    %c0_i32 = arith.constant 0 : i32
    %c0_i32_0 = arith.constant 0 : i32
    return %arg0, %c0_i32 : i32, i32
  }
  func.func @transform_1(%arg0: i32) -> (i32, i32) {
    %c0_i32 = arith.constant 0 : i32
    %c0_i32_0 = arith.constant 0 : i32
    %c0_i32_1 = arith.constant 0 : i32
    return %c0_i32, %c0_i32_0 : i32, i32
  }
  func.func @transform_2(%arg0: i32) -> (i32, i32) {
    %c0_i32 = arith.constant 0 : i32
    %c0_i32_0 = arith.constant 0 : i32
    %c0_i32_1 = arith.constant 0 : i32
    return %c0_i32, %c0_i32_0 : i32, i32
  }
  func.func @transform_3(%arg0: i32) -> (i32, i32) {
    %c0_i32 = arith.constant 0 : i32
    %c0_i32_0 = arith.constant 0 : i32
    %c0_i32_1 = arith.constant 0 : i32
    return %c0_i32, %c0_i32_0 : i32, i32
  }
  func.func @transform_4(%arg0: i32) -> (i32, i32) {
    %c0_i32 = arith.constant 0 : i32
    %c0_i32_0 = arith.constant 0 : i32
    %c0_i32_1 = arith.constant 0 : i32
    return %c0_i32, %c0_i32_0 : i32, i32
  }
  func.func @transform_5(%arg0: i32) -> (i32, i32, i32) {
    %c0_i32 = arith.constant 0 : i32
    %c0_i32_0 = arith.constant 0 : i32
    %c0_i32_1 = arith.constant 0 : i32
    %c0_i32_2 = arith.constant 0 : i32
    return %c0_i32, %c0_i32_0, %c0_i32_1 : i32, i32, i32
  }
  func.func @transform_6(%arg0: i32) -> (i32, i32) {
    %c0_i32 = arith.constant 0 : i32
    %c0_i32_0 = arith.constant 0 : i32
    %c0_i32_1 = arith.constant 0 : i32
    return %c0_i32, %c0_i32_0 : i32, i32
  }
  func.func @transform_7(%arg0: i32) -> (i32, i32) {
    %c0_i32 = arith.constant 0 : i32
    %c0_i32_0 = arith.constant 0 : i32
    %c0_i32_1 = arith.constant 0 : i32
    return %c0_i32, %c0_i32_0 : i32, i32
  }
  func.func @transform_8(%arg0: i32) -> (i32, i32) {
    %c0_i32 = arith.constant 0 : i32
    %c0_i32_0 = arith.constant 0 : i32
    %c0_i32_1 = arith.constant 0 : i32
    return %c0_i32, %c0_i32_0 : i32, i32
  }
  func.func @transform_9(%arg0: i32) -> (i32, i32) {
    %c0_i32 = arith.constant 0 : i32
    %c0_i32_0 = arith.constant 0 : i32
    %c0_i32_1 = arith.constant 0 : i32
    return %c0_i32, %c0_i32_0 : i32, i32
  }
  func.func @transform_10(%arg0: i32) -> (i32, i32) {
    %c0_i32 = arith.constant 0 : i32
    %c0_i32_0 = arith.constant 0 : i32
    %c0_i32_1 = arith.constant 0 : i32
    return %c0_i32, %c0_i32_0 : i32, i32
  }
  func.func @transform_11(%arg0: i32) -> (i32, i32) {
    %c0_i32 = arith.constant 0 : i32
    %c0_i32_0 = arith.constant 0 : i32
    %c0_i32_1 = arith.constant 0 : i32
    return %c0_i32, %c0_i32_0 : i32, i32
  }
  func.func @transform_12(%arg0: i32) -> (i32, i32) {
    %c0_i32 = arith.constant 0 : i32
    %c0_i32_0 = arith.constant 0 : i32
    %c0_i32_1 = arith.constant 0 : i32
    return %c0_i32, %c0_i32_0 : i32, i32
  }
  func.func @transform_13(%arg0: i32) -> (i32, i32) {
    %c0_i32 = arith.constant 0 : i32
    %c0_i32_0 = arith.constant 0 : i32
    %c0_i32_1 = arith.constant 0 : i32
    return %c0_i32, %c0_i32_0 : i32, i32
  }
  func.func @transform_14(%arg0: i32) -> (i32, i32) {
    %c0_i32 = arith.constant 0 : i32
    %c0_i32_0 = arith.constant 0 : i32
    %c0_i32_1 = arith.constant 0 : i32
    return %c0_i32, %c0_i32_0 : i32, i32
  }
  func.func @transform_15(%arg0: i32) -> (i32, i32) {
    %c0_i32 = arith.constant 0 : i32
    %c0_i32_0 = arith.constant 0 : i32
    %c0_i32_1 = arith.constant 0 : i32
    return %c0_i32, %c0_i32_0 : i32, i32
  }
  func.func @transform_16(%arg0: i32) -> (i32, i32) {
    %c0_i32 = arith.constant 0 : i32
    %c0_i32_0 = arith.constant 0 : i32
    return %arg0, %c0_i32 : i32, i32
  }
}

module attributes {stable_mosaic.version = 11 : i64} {
  func.func @head_kernel(%arg0: i32, %arg1: i32, %arg2: memref<8x32xf32, #tpu.memory_space<vmem>>, %arg3: memref<32x16xbf16, #tpu.memory_space<vmem>>, %arg4: memref<8x16xf32, #tpu.memory_space<vmem>>) attributes {dimension_semantics = [#tpu.dimension_semantics<parallel>, #tpu.dimension_semantics<parallel>], iteration_bounds = array<i64: 1, 2>, scalar_prefetch = 0 : i64, scratch_operands = 0 : i64, tpu.core_type = #tpu.core_type<tc>, window_params = [{transform_indices = @transform_0, window_bounds = array<i64: 8, 32>}, {transform_indices = @transform_1, window_bounds = array<i64: 32, 16>}, {transform_indices = @transform_2, window_bounds = array<i64: 8, 16>}]} {
    %c0 = arith.constant 0 : index
    %c0_0 = arith.constant 0 : index
    %0 = vector.load %arg2[%c0, %c0_0] : memref<8x32xf32, #tpu.memory_space<vmem>>, vector<8x32xf32>
    %1 = arith.truncf %0 : vector<8x32xf32> to vector<8x32xbf16>
    %c0_1 = arith.constant 0 : index
    %c0_2 = arith.constant 0 : index
    %2 = vector.load %arg3[%c0_1, %c0_2] : memref<32x16xbf16, #tpu.memory_space<vmem>>, vector<32x16xbf16>
    %cst = arith.constant dense<0.000000e+00> : vector<8x16xf32>
    %3 = tpu.matmul %1, %2, %cst {dimension_numbers = #tpu.dot_dimension_numbers<[1], [0], [0], [1], [0, 0, 1, 1], [], []>} : vector<8x32xbf16>, vector<32x16xbf16>, vector<8x16xf32> -> vector<8x16xf32>
    %c0_3 = arith.constant 0 : index
    %c0_4 = arith.constant 0 : index
    %4 = vector.load %arg4[%c0_3, %c0_4] : memref<8x16xf32, #tpu.memory_space<vmem>>, vector<8x16xf32>
    tpu.vector_store %arg4[%c0_3, %c0_4], %3 {strides = array<i32>} : memref<8x16xf32, #tpu.memory_space<vmem>>, vector<8x16xf32>,
    return
  }
  func.func @transform_0(%arg0: i32, %arg1: i32) -> (i32, i32) {
    %c0_i32 = arith.constant 0 : i32
    %c0_i32_0 = arith.constant 0 : i32
    return %arg1, %c0_i32 : i32, i32
  }
  func.func @transform_1(%arg0: i32, %arg1: i32) -> (i32, i32) {
    %c0_i32 = arith.constant 0 : i32
    %c0_i32_0 = arith.constant 0 : i32
    return %c0_i32, %arg0 : i32, i32
  }
  func.func @transform_2(%arg0: i32, %arg1: i32) -> (i32, i32) {
    %c0_i32 = arith.constant 0 : i32
    return %arg1, %arg0 : i32, i32
  }
}

</mosaic_0001>

<llo_original>
// kernel: gpt_forward.4
$region0: #{gpt_forward.4}
  #allocation0 [shape = 'u32[]', space=smem, size = 0x4, offset = 0x4, fixed_abs, tag = 'smem constant byte address 0x4 - core index']
  #allocation1 [shape = 'u32[144,128]{1,0:T(1,128)}', space=vmem, size = 0x12000, scoped, tag = 'internal scratch']
  %s0 = inlined_call_operand.vmem [shape: f32[16,16], index: 0, kind: input, shape index: {}]
  %s1 = inlined_call_operand.vmem [shape: f32[16,32], index: 1, kind: input, shape index: {}]
  %s2 = inlined_call_operand.vmem [shape: f32[1,32], index: 2, kind: input, shape index: {}]
  %s3 = inlined_call_operand.vmem [shape: f32[8,32], index: 3, kind: input, shape index: {}]
  %s4 = inlined_call_operand.vmem [shape: f32[16,32], index: 4, kind: output, shape index: {}]
  %s5 = sld [smem:[#allocation0]]
  $region49: #{gpt_forward.4} parent=0
    _
  %s7 = ssub.s32 1, %s5
  %s8 = scalar_select 0, %s7, %s5
  loop: start=0, step=1, limit=4
  $region2: #{gpt_forward.4} parent=0 // loop_pre_header
    _
  $region3: #{gpt_forward.4} parent=0 // loop_header
    %s10 = sphi 0, %s14
    %p11 = scmp.ge.s32.totalorder %s10, 4
    %s20 = sphi 0, %s22
    %s23 = sphi 0, %s20
    %s24 = sphi 0, %s23
    %s40 = sphi 0, %s24
    %s44 = sphi 0, %s44
    %s46 = sphi 0, %s44
    %s47 = sphi 0, %s46
    %s61 = sphi 0, %s47
    %s65 = sphi 0, %s65
    %s67 = sphi 0, %s65
    %s68 = sphi 0, %s67
    %s82 = sphi 0, %s68
    %s86 = sphi 0, %s86
    %s88 = sphi 0, %s86
    %s89 = sphi 0, %s88
    %s103 = sphi 0, %s89
    %s109 = sphi 0, %s111
    %s112 = sphi 0, %s109
    %s113 = sphi 0, %s112
    %s129 = sphi 0, %s113
  $region4: #{gpt_forward.4} parent=0 // loop_header_branch
    %13 = sbr.rel (%p11) target = $region8
  $region5: #{gpt_forward.4} parent=0 // loop_body
    %s15 = ssub.s32 %s10, 1
    %s16 = ssub.s32 %s10, 2
    %s17 = sadd.s32 %s10, 1
    %s18 = ssub.s32 %s10, %s17
    %p19 = scmp.eq.s32.totalorder %s18, 0
    %s21 = sadd.s32 %s20, 1
    %s22 = scalar_select %p19, %s20, %s21
    %p25 = pneg %p19
    %p26 = scmp.eq.s32.totalorder %s10, 1
    %p27 = por %p25, %p26
    %p28 = scmp.ne.s32.totalorder %s20, %s23
    %p29 = scmp.eq.s32.totalorder %s10, 0
    %p30 = por %p28, %p29
    %p31 = scmp.ne.s32.totalorder %s20, %s23
    %p32 = scmp.eq.s32.totalorder %s15, 1
    %p33 = por %p31, %p32
    %p34 = scmp.ne.s32.totalorder %s23, %s24
    %p35 = scmp.eq.s32.totalorder %s15, 0
    %p36 = por %p34, %p35
    %p37 = scmp.ne.s32.totalorder %s23, %s24
    %p38 = scmp.eq.s32.totalorder %s16, 1
    %p39 = por %p37, %p38
    %p41 = scmp.ne.s32.totalorder %s24, %s40
    %p42 = scmp.eq.s32.totalorder %s16, 0
    %p43 = por %p41, %p42
    %s45 = sadd.s32 %s44, 1
    %p48 = scmp.eq.s32.totalorder %s10, 1
    %p49 = scmp.ne.s32.totalorder %s44, %s46
    %p50 = scmp.eq.s32.totalorder %s10, 0
    %p51 = por %p49, %p50
    %p52 = scmp.ne.s32.totalorder %s44, %s46
    %p53 = scmp.eq.s32.totalorder %s15, 1
    %p54 = por %p52, %p53
    %p55 = scmp.ne.s32.totalorder %s46, %s47
    %p56 = scmp.eq.s32.totalorder %s15, 0
    %p57 = por %p55, %p56
    %p58 = scmp.ne.s32.totalorder %s46, %s47
    %p59 = scmp.eq.s32.totalorder %s16, 1
    %p60 = por %p58, %p59
    %p62 = scmp.ne.s32.totalorder %s47, %s61
    %p63 = scmp.eq.s32.totalorder %s16, 0
    %p64 = por %p62, %p63
    %s66 = sadd.s32 %s65, 1
    %p69 = scmp.eq.s32.totalorder %s10, 1
    %p70 = scmp.ne.s32.totalorder %s65, %s67
    %p71 = scmp.eq.s32.totalorder %s10, 0
    %p72 = por %p70, %p71
    %p73 = scmp.ne.s32.totalorder %s65, %s67
    %p74 = scmp.eq.s32.totalorder %s15, 1
    %p75 = por %p73, %p74
    %p76 = scmp.ne.s32.totalorder %s67, %s68
    %p77 = scmp.eq.s32.totalorder %s15, 0
    %p78 = por %p76, %p77
    %p79 = scmp.ne.s32.totalorder %s67, %s68
    %p80 = scmp.eq.s32.totalorder %s16, 1
    %p81 = por %p79, %p80
    %p83 = scmp.ne.s32.totalorder %s68, %s82
    %p84 = scmp.eq.s32.totalorder %s16, 0
    %p85 = por %p83, %p84
    %s87 = sadd.s32 %s86, 1
    %p90 = scmp.eq.s32.totalorder %s10, 1
    %p91 = scmp.ne.s32.totalorder %s86, %s88
    %p92 = scmp.eq.s32.totalorder %s10, 0
    %p93 = por %p91, %p92
    %p94 = scmp.ne.s32.totalorder %s86, %s88
    %p95 = scmp.eq.s32.totalorder %s15, 1
    %p96 = por %p94, %p95
    %p97 = scmp.ne.s32.totalorder %s88, %s89
    %p98 = scmp.eq.s32.totalorder %s15, 0
    %p99 = por %p97, %p98
    %p100 = scmp.ne.s32.totalorder %s88, %s89
    %p101 = scmp.eq.s32.totalorder %s16, 1
    %p102 = por %p100, %p101
    %p104 = scmp.ne.s32.totalorder %s89, %s103
    %p105 = scmp.eq.s32.totalorder %s16, 0
    %p106 = por %p104, %p105
    %s107 = ssub.s32 %s10, %s17
    %p108 = scmp.eq.s32.totalorder %s107, 0
    %s110 = sadd.s32 %s109, 1
    %s111 = scalar_select %p108, %s109, %s110
    %p114 = pneg %p108
    %p115 = scmp.eq.s32.totalorder %s10, 1
    %p116 = por %p114, %p115
    %p117 = scmp.ne.s32.totalorder %s109, %s112
    %p118 = scmp.eq.s32.totalorder %s10, 0
    %p119 = por %p117, %p118
    %p120 = scmp.ne.s32.totalorder %s109, %s112
    %p121 = scmp.eq.s32.totalorder %s15, 1
    %p122 = por %p120, %p121
    %p123 = scmp.ne.s32.totalorder %s112, %s113
    %p124 = scmp.eq.s32.totalorder %s15, 0
    %p125 = por %p123, %p124
    %p126 = scmp.ne.s32.totalorder %s112, %s113
    %p127 = scmp.eq.s32.totalorder %s16, 1
    %p128 = por %p126, %p127
    %p130 = scmp.ne.s32.totalorder %s113, %s129
    %p131 = scmp.eq.s32.totalorder %s16, 0
    %p132 = por %p130, %p131
    %p133 = scmp.le.s32.totalorder 1, %s10
    %p134 = scmp.lt.s32.totalorder %s10, 3
    %p135 = pnand %p133, %p134
    %p136 = pneg %p135
    // Predicated region
    $region9: #{gpt_forward.4} parent=5 // pred_check
      _
    $region10: #{gpt_forward.4} parent=5 // pred_check_branch
      %138 = sbr.rel (%p135) target = $region12
    $region11: #{gpt_forward.4} parent=5 // pred_region
      %s139 = ssub.s32 %s10, 1
      // Predicated region
      $region13: #{gpt_forward.4} parent=11 // pred_check
        %p140 = pneg %p57
      $region14: #{gpt_forward.4} parent=11 // pred_check_branch
        %142 = sbr.rel (%p140) target = $region16
      $region15: #{gpt_forward.4} parent=11 // pred_region
        _
      $region16: #{gpt_forward.4} parent=11 // pred_fallthru
        _
      // Predicated region
      $region17: #{gpt_forward.4} parent=11 // pred_check
        %p143 = pneg %p78
      $region18: #{gpt_forward.4} parent=11 // pred_check_branch
        %145 = sbr.rel (%p143) target = $region20
      $region19: #{gpt_forward.4} parent=11 // pred_region
        _
      $region20: #{gpt_forward.4} parent=11 // pred_fallthru
        _
      // Predicated region
      $region21: #{gpt_forward.4} parent=11 // pred_check
        %p146 = pneg %p99
      $region22: #{gpt_forward.4} parent=11 // pred_check_branch
        %148 = sbr.rel (%p146) target = $region24
      $region23: #{gpt_forward.4} parent=11 // pred_region
        _
      $region24: #{gpt_forward.4} parent=11 // pred_fallthru
        _
    $region12: #{gpt_forward.4} parent=5 // pred_fallthru
      _
    %p149 = scmp.lt.s32.totalorder %s10, 2
    // Predicated region
    $region25: #{gpt_forward.4} parent=5 // pred_check
      %p150 = pneg %p149
    $region26: #{gpt_forward.4} parent=5 // pred_check_branch
      %152 = sbr.rel (%p150) target = $region28
    $region27: #{gpt_forward.4} parent=5 // pred_region
      // Predicated region
      $region29: #{gpt_forward.4} parent=27 // pred_check
        %p153 = pneg %p30
      $region30: #{gpt_forward.4} parent=27 // pred_check_branch
        %155 = sbr.rel (%p153) target = $region32
      $region31: #{gpt_forward.4} parent=27 // pred_region
        %p156 = scmp.lt.s32.totalorder %s10, 1
        %s157 = scalar_select %p156, %s10, 1
        %s158 = smul.addr %s157, 8
        %s159 = scalar_lea.vmem %s0, %s158
      $region32: #{gpt_forward.4} parent=27 // pred_fallthru
        _
    $region28: #{gpt_forward.4} parent=5 // pred_fallthru
      _
    %p160 = scmp.le.s32.totalorder 1, %s10
    %p161 = scmp.lt.s32.totalorder %s10, 3
    %p162 = pnand %p160, %p161
    %p163 = pneg %p162
    // Predicated region
    $region33: #{gpt_forward.4} parent=5 // pred_check
      _
    $region34: #{gpt_forward.4} parent=5 // pred_check_branch
      %165 = sbr.rel (%p162) target = $region36
    $region35: #{gpt_forward.4} parent=5 // pred_region
      %s166 = ssub.s32 %s10, 1
      %p167 = scmp.lt.s32.totalorder %s15, 1
      %s168 = scalar_select %p167, %s15, 1
      %s169 = smul.addr %s168, 8
      %s170 = scalar_lea.vmem %s0, %s169
      %p171 = pneg %p36
      %p172 = pneg %p33
      %p173 = pneg %p57
      %p174 = pneg %p54
      %p175 = pneg %p78
      %p176 = pneg %p75
      %p177 = pneg %p99
      %p178 = pneg %p96
      %p179 = pneg %p125
      %p180 = pneg %p122
      %p181 = scmp.lt.s32.totalorder %s15, 1
      %s182 = scalar_select %p181, %s15, 1
      %s183 = smul.addr %s182, 8
      %s184 = scalar_lea.vmem %s4, %s183
      %p185 = scmp.lt.s32.totalorder %s15, 1
      %s186 = scalar_select %p185, %s15, 1
      %s187 = smul.addr %s186, 8
      %s188 = scalar_lea.vmem %s0, %s187
      %p189 = scmp.lt.s32.totalorder %s15, 1
      %s190 = scalar_select %p189, %s15, 1
      %s191 = smul.addr %s190, 8
      %s192 = scalar_lea.vmem %s4, %s191
      %v193 = vld [vmem:[%s188] sm:$0xff]
      %v194 = vld [vmem:[%s1] sm:$0xff]
      %v195 = vld [vmem:[%s1 + $0x8] sm:$0xff]
      %v196 = vld [vmem:[%s2] sm:$0x1]
      %v198 = vlaneseq
      %v199 = vshrl.u32 %v198, 7
      %v200 = vsub.s32 0, %v199
      %v201 = vrot.slane %v196, %v200
      %vm203 = vcmask 130048
      %v205 = vsel %vm203, %v193, 0
      %207 = vmatprep.subr.mxu0 0.0
      %208 = vmatpush1.msra.mxu0 0.0
      %209 = vmatprep.subr.mxu0 0.0
      %210 = vmatpush1.msra.mxu0 0.0
      %211 = vmatprep.subr.mxu0 0.0
      %212 = vmatpush1.msra.mxu0 0.0
      %213 = vmatprep.subr.mxu0 0.0
      %214 = vmatpush1.msra.mxu0 0.0
      %215 = vmatprep.subr.mxu0 0.0
      %216 = vmatpush1.msra.mxu0 0.0
      %217 = vmatprep.subr.mxu0 0.0
      %218 = vmatpush1.msra.mxu0 0.0
      %219 = vmatprep.subr.mxu0 0.0
      %220 = vmatpush1.msra.mxu0 0.0
      %221 = vmatprep.subr.mxu0 0.0
      %222 = vmatpush1.msra.mxu0 0.0
      %223 = vmatprep.subr.mxu0 0.0
      %224 = vmatpush1.msra.mxu0 0.0
      %225 = vmatprep.subr.mxu0 0.0
      %226 = vmatpush1.msra.mxu0 0.0
      %227 = vmatprep.subr.mxu0 0.0
      %228 = vmatpush1.msra.mxu0 0.0
      %229 = vmatprep.subr.mxu0 0.0
      %230 = vmatpush1.msra.mxu0 0.0
      %231 = vmatprep.subr.mxu0 0.0
      %232 = vmatpush1.msra.mxu0 0.0
      %233 = vmatprep.subr.mxu0 0.0
      %234 = vmatpush1.msra.mxu0 0.0
      %235 = vmatprep.subr.mxu0 0.0
      %236 = vmatpush1.msra.mxu0 %v195
      %237 = vmatprep.subr.mxu0 0.0
      %238 = vmatpush1.msra.mxu0 %v194
      %239 = vmatprep.subr.mxu0 0.0
      %240 = vmatpush2.msra.mxu0 0.0
      %241 = vmatprep.subr.mxu0 0.0
      %242 = vmatpush2.msra.mxu0 0.0
      %243 = vmatprep.subr.mxu0 0.0
      %244 = vmatpush2.msra.mxu0 0.0
      %245 = vmatprep.subr.mxu0 0.0
      %246 = vmatpush2.msra.mxu0 0.0
      %247 = vmatprep.subr.mxu0 0.0
      %248 = vmatpush2.msra.mxu0 0.0
      %249 = vmatprep.subr.mxu0 0.0
      %250 = vmatpush2.msra.mxu0 0.0
      %251 = vmatprep.subr.mxu0 0.0
      %252 = vmatpush2.msra.mxu0 0.0
      %253 = vmatprep.subr.mxu0 0.0
      %254 = vmatpush2.msra.mxu0 0.0
      %255 = vmatprep.subr.mxu0 0.0
      %256 = vmatpush2.msra.mxu0 0.0
      %257 = vmatprep.subr.mxu0 0.0
      %258 = vmatpush2.msra.mxu0 0.0
      %259 = vmatprep.subr.mxu0 0.0
      %260 = vmatpush2.msra.mxu0 0.0
      %261 = vmatprep.subr.mxu0 0.0
      %262 = vmatpush2.msra.mxu0 0.0
      %263 = vmatprep.subr.mxu0 0.0
      %264 = vmatpush2.msra.mxu0 0.0
      %265 = vmatprep.subr.mxu0 0.0
      %266 = vmatpush2.msra.mxu0 0.0
      %267 = vmatprep.subr.mxu0 0.0
      %268 = vmatpush2.msra.mxu0 0.0
      %269 = vmatprep.subr.mxu0 0.0
      %270 = vmatpush2.msra.mxu0 0.0
      %271 = vmatprep.mubr.f32.mxu0 0.0
      %272 = vmatmul.mubr.f32.gmra.mxu0 %v205
      %v273 = vpop.f32.mrf.mxu0
      %v274 = vadd.f32 %v201, %v273
      %v275 = vpop.f32.mrf.mxu0
      %276 = vdwg.mxu0
      %v277 = vld [vmem:[%s3] sm:$0xff]
      %v278 = vadd.f32 %v274, %v277
      %vm279 = vcmask 261120
      %280 = vst.msk [vmem:[%s192] sm:$0xff] %vm279, %v278
      %p281 = scmp.lt.s32.totalorder %s15, 1
      %s282 = scalar_select %p281, %s15, 1
      %s283 = smul.addr %s282, 8
      %s284 = scalar_lea.vmem %s4, %s283
      // Predicated region
      $region37: #{gpt_forward.4} parent=35 // pred_check
        %p285 = pneg %p122
      $region38: #{gpt_forward.4} parent=35 // pred_check_branch
        %287 = sbr.rel (%p285) target = $region40
      $region39: #{gpt_forward.4} parent=35 // pred_region
        _
      $region40: #{gpt_forward.4} parent=35 // pred_fallthru
        _
    $region36: #{gpt_forward.4} parent=5 // pred_fallthru
      _
    %p288 = scmp.le.s32.totalorder 2, %s10
    // Predicated region
    $region41: #{gpt_forward.4} parent=5 // pred_check
      %p289 = pneg %p288
    $region42: #{gpt_forward.4} parent=5 // pred_check_branch
      %291 = sbr.rel (%p289) target = $region44
    $region43: #{gpt_forward.4} parent=5 // pred_region
      %s292 = ssub.s32 %s10, 2
      // Predicated region
      $region45: #{gpt_forward.4} parent=43 // pred_check
        %p293 = pneg %p128
      $region46: #{gpt_forward.4} parent=43 // pred_check_branch
        %295 = sbr.rel (%p293) target = $region48
      $region47: #{gpt_forward.4} parent=43 // pred_region
        %p296 = scmp.lt.s32.totalorder %s16, 1
        %s297 = scalar_select %p296, %s16, 1
        %s298 = smul.addr %s297, 8
        %s299 = scalar_lea.vmem %s4, %s298
      $region48: #{gpt_forward.4} parent=43 // pred_fallthru
        _
    $region44: #{gpt_forward.4} parent=5 // pred_fallthru
      _
  $region6: #{gpt_forward.4} parent=0 // loop_footer
    %s14 = sadd.s32 1, %s10
  $region7: #{gpt_forward.4} parent=0 // loop_footer_branch
    %9 = sbr.rel target = $region3
  $region8: #{gpt_forward.4} parent=0 // loop_exit
    _

// kernel: gpt_forward.5
$region0: #{gpt_forward.5}
  #allocation0 [shape = 'u32[]', space=smem, size = 0x4, offset = 0x4, fixed_abs, tag = 'smem constant byte address 0x4 - core index']
  #allocation1 [shape = 'u32[144,128]{1,0:T(1,128)}', space=vmem, size = 0x12000, scoped, tag = 'internal scratch']
  #allocation2 [shape = 'f32[8,32]{1,0:T(8,128)}', space=vmem, size = 0x1000, scoped, tag = 'scratch operand']
  %s0 = inlined_call_operand.vmem [shape: f32[16,32], index: 0, kind: input, shape index: {}]
  %s1 = inlined_call_operand.vmem [shape: f32[1,32], index: 1, kind: input, shape index: {}]
  %s2 = inlined_call_operand.vmem [shape: f32[1,32], index: 2, kind: input, shape index: {}]
  %s3 = inlined_call_operand.vmem [shape: bf16[32,96], index: 3, kind: input, shape index: {}]
  %s4 = inlined_call_operand.vmem [shape: f32[1,96], index: 4, kind: input, shape index: {}]
  %s5 = inlined_call_operand.vmem [shape: bf16[4,8,32], index: 5, kind: input, shape index: {}]
  %s6 = inlined_call_operand.vmem [shape: f32[1,32], index: 6, kind: input, shape index: {}]
  %s7 = inlined_call_operand.vmem [shape: f32[1,32], index: 7, kind: input, shape index: {}]
  %s8 = inlined_call_operand.vmem [shape: f32[1,32], index: 8, kind: input, shape index: {}]
  %s9 = inlined_call_operand.vmem [shape: bf16[32,128], index: 9, kind: input, shape index: {}]
  %s10 = inlined_call_operand.vmem [shape: f32[1,128], index: 10, kind: input, shape index: {}]
  %s11 = inlined_call_operand.vmem [shape: bf16[128,32], index: 11, kind: input, shape index: {}]
  %s12 = inlined_call_operand.vmem [shape: f32[1,32], index: 12, kind: input, shape index: {}]
  %s13 = inlined_call_operand.vmem [shape: f32[1,32], index: 13, kind: input, shape index: {}]
  %s14 = inlined_call_operand.vmem [shape: f32[1,32], index: 14, kind: input, shape index: {}]
  %s15 = inlined_call_operand.vmem [shape: f32[8,8], index: 15, kind: input, shape index: {}]
  %s16 = inlined_call_operand.vmem [shape: f32[16,32], index: 16, kind: output, shape index: {}]
  %s17 = sld [smem:[#allocation0]]
  $region97: #{gpt_forward.5} parent=0
    _
  %s19 = ssub.s32 1, %s17
  %s20 = scalar_select 0, %s19, %s17
  loop: start=0, step=1, limit=4
  $region2: #{gpt_forward.5} parent=0 // loop_pre_header
    _
  $region3: #{gpt_forward.5} parent=0 // loop_header
    %s22 = sphi 0, %s26
    %p23 = scmp.ge.s32.totalorder %s22, 4
    %s32 = sphi 0, %s34
    %s35 = sphi 0, %s32
    %s36 = sphi 0, %s35
    %s52 = sphi 0, %s36
    %s56 = sphi 0, %s56
    %s58 = sphi 0, %s56
    %s59 = sphi 0, %s58
    %s73 = sphi 0, %s59
    %s77 = sphi 0, %s77
    %s79 = sphi 0, %s77
    %s80 = sphi 0, %s79
    %s94 = sphi 0, %s80
    %s98 = sphi 0, %s98
    %s100 = sphi 0, %s98
    %s101 = sphi 0, %s100
    %s115 = sphi 0, %s101
    %s119 = sphi 0, %s119
    %s121 = sphi 0, %s119
    %s122 = sphi 0, %s121
    %s136 = sphi 0, %s122
    %s140 = sphi 0, %s140
    %s142 = sphi 0, %s140
    %s143 = sphi 0, %s142
    %s157 = sphi 0, %s143
    %s161 = sphi 0, %s161
    %s163 = sphi 0, %s161
    %s164 = sphi 0, %s163
    %s178 = sphi 0, %s164
    %s182 = sphi 0, %s182
    %s184 = sphi 0, %s182
    %s185 = sphi 0, %s184
    %s199 = sphi 0, %s185
    %s203 = sphi 0, %s203
    %s205 = sphi 0, %s203
    %s206 = sphi 0, %s205
    %s220 = sphi 0, %s206
    %s224 = sphi 0, %s224
    %s226 = sphi 0, %s224
    %s227 = sphi 0, %s226
    %s241 = sphi 0, %s227
    %s245 = sphi 0, %s245
    %s247 = sphi 0, %s245
    %s248 = sphi 0, %s247
    %s262 = sphi 0, %s248
    %s266 = sphi 0, %s266
    %s268 = sphi 0, %s266
    %s269 = sphi 0, %s268
    %s283 = sphi 0, %s269
    %s287 = sphi 0, %s287
    %s289 = sphi 0, %s287
    %s290 = sphi 0, %s289
    %s304 = sphi 0, %s290
    %s308 = sphi 0, %s308
    %s310 = sphi 0, %s308
    %s311 = sphi 0, %s310
    %s325 = sphi 0, %s311
    %s329 = sphi 0, %s329
    %s331 = sphi 0, %s329
    %s332 = sphi 0, %s331
    %s346 = sphi 0, %s332
    %s350 = sphi 0, %s350
    %s352 = sphi 0, %s350
    %s353 = sphi 0, %s352
    %s367 = sphi 0, %s353
    %s373 = sphi 0, %s375
    %s376 = sphi 0, %s373
    %s377 = sphi 0, %s376
    %s393 = sphi 0, %s377
  $region4: #{gpt_forward.5} parent=0 // loop_header_branch
    %25 = sbr.rel (%p23) target = $region8
  $region5: #{gpt_forward.5} parent=0 // loop_body
    %s27 = ssub.s32 %s22, 1
    %s28 = ssub.s32 %s22, 2
    %s29 = sadd.s32 %s22, 1
    %s30 = ssub.s32 %s22, %s29
    %p31 = scmp.eq.s32.totalorder %s30, 0
    %s33 = sadd.s32 %s32, 1
    %s34 = scalar_select %p31, %s32, %s33
    %p37 = pneg %p31
    %p38 = scmp.eq.s32.totalorder %s22, 1
    %p39 = por %p37, %p38
    %p40 = scmp.ne.s32.totalorder %s32, %s35
    %p41 = scmp.eq.s32.totalorder %s22, 0
    %p42 = por %p40, %p41
    %p43 = scmp.ne.s32.totalorder %s32, %s35
    %p44 = scmp.eq.s32.totalorder %s27, 1
    %p45 = por %p43, %p44
    %p46 = scmp.ne.s32.totalorder %s35, %s36
    %p47 = scmp.eq.s32.totalorder %s27, 0
    %p48 = por %p46, %p47
    %p49 = scmp.ne.s32.totalorder %s35, %s36
    %p50 = scmp.eq.s32.totalorder %s28, 1
    %p51 = por %p49, %p50
    %p53 = scmp.ne.s32.totalorder %s36, %s52
    %p54 = scmp.eq.s32.totalorder %s28, 0
    %p55 = por %p53, %p54
    %s57 = sadd.s32 %s56, 1
    %p60 = scmp.eq.s32.totalorder %s22, 1
    %p61 = scmp.ne.s32.totalorder %s56, %s58
    %p62 = scmp.eq.s32.totalorder %s22, 0
    %p63 = por %p61, %p62
    %p64 = scmp.ne.s32.totalorder %s56, %s58
    %p65 = scmp.eq.s32.totalorder %s27, 1
    %p66 = por %p64, %p65
    %p67 = scmp.ne.s32.totalorder %s58, %s59
    %p68 = scmp.eq.s32.totalorder %s27, 0
    %p69 = por %p67, %p68
    %p70 = scmp.ne.s32.totalorder %s58, %s59
    %p71 = scmp.eq.s32.totalorder %s28, 1
    %p72 = por %p70, %p71
    %p74 = scmp.ne.s32.totalorder %s59, %s73
    %p75 = scmp.eq.s32.totalorder %s28, 0
    %p76 = por %p74, %p75
    %s78 = sadd.s32 %s77, 1
    %p81 = scmp.eq.s32.totalorder %s22, 1
    %p82 = scmp.ne.s32.totalorder %s77, %s79
    %p83 = scmp.eq.s32.totalorder %s22, 0
    %p84 = por %p82, %p83
    %p85 = scmp.ne.s32.totalorder %s77, %s79
    %p86 = scmp.eq.s32.totalorder %s27, 1
    %p87 = por %p85, %p86
    %p88 = scmp.ne.s32.totalorder %s79, %s80
    %p89 = scmp.eq.s32.totalorder %s27, 0
    %p90 = por %p88, %p89
    %p91 = scmp.ne.s32.totalorder %s79, %s80
    %p92 = scmp.eq.s32.totalorder %s28, 1
    %p93 = por %p91, %p92
    %p95 = scmp.ne.s32.totalorder %s80, %s94
    %p96 = scmp.eq.s32.totalorder %s28, 0
    %p97 = por %p95, %p96
    %s99 = sadd.s32 %s98, 1
    %p102 = scmp.eq.s32.totalorder %s22, 1
    %p103 = scmp.ne.s32.totalorder %s98, %s100
    %p104 = scmp.eq.s32.totalorder %s22, 0
    %p105 = por %p103, %p104
    %p106 = scmp.ne.s32.totalorder %s98, %s100
    %p107 = scmp.eq.s32.totalorder %s27, 1
    %p108 = por %p106, %p107
    %p109 = scmp.ne.s32.totalorder %s100, %s101
    %p110 = scmp.eq.s32.totalorder %s27, 0
    %p111 = por %p109, %p110
    %p112 = scmp.ne.s32.totalorder %s100, %s101
    %p113 = scmp.eq.s32.totalorder %s28, 1
    %p114 = por %p112, %p113
    %p116 = scmp.ne.s32.totalorder %s101, %s115
    %p117 = scmp.eq.s32.totalorder %s28, 0
    %p118 = por %p116, %p117
    %s120 = sadd.s32 %s119, 1
    %p123 = scmp.eq.s32.totalorder %s22, 1
    %p124 = scmp.ne.s32.totalorder %s119, %s121
    %p125 = scmp.eq.s32.totalorder %s22, 0
    %p126 = por %p124, %p125
    %p127 = scmp.ne.s32.totalorder %s119, %s121
    %p128 = scmp.eq.s32.totalorder %s27, 1
    %p129 = por %p127, %p128
    %p130 = scmp.ne.s32.totalorder %s121, %s122
    %p131 = scmp.eq.s32.totalorder %s27, 0
    %p132 = por %p130, %p131
    %p133 = scmp.ne.s32.totalorder %s121, %s122
    %p134 = scmp.eq.s32.totalorder %s28, 1
    %p135 = por %p133, %p134
    %p137 = scmp.ne.s32.totalorder %s122, %s136
    %p138 = scmp.eq.s32.totalorder %s28, 0
    %p139 = por %p137, %p138
    %s141 = sadd.s32 %s140, 1
    %p144 = scmp.eq.s32.totalorder %s22, 1
    %p145 = scmp.ne.s32.totalorder %s140, %s142
    %p146 = scmp.eq.s32.totalorder %s22, 0
    %p147 = por %p145, %p146
    %p148 = scmp.ne.s32.totalorder %s140, %s142
    %p149 = scmp.eq.s32.totalorder %s27, 1
    %p150 = por %p148, %p149
    %p151 = scmp.ne.s32.totalorder %s142, %s143
    %p152 = scmp.eq.s32.totalorder %s27, 0
    %p153 = por %p151, %p152
    %p154 = scmp.ne.s32.totalorder %s142, %s143
    %p155 = scmp.eq.s32.totalorder %s28, 1
    %p156 = por %p154, %p155
    %p158 = scmp.ne.s32.totalorder %s143, %s157
    %p159 = scmp.eq.s32.totalorder %s28, 0
    %p160 = por %p158, %p159
    %s162 = sadd.s32 %s161, 1
    %p165 = scmp.eq.s32.totalorder %s22, 1
    %p166 = scmp.ne.s32.totalorder %s161, %s163
    %p167 = scmp.eq.s32.totalorder %s22, 0
    %p168 = por %p166, %p167
    %p169 = scmp.ne.s32.totalorder %s161, %s163
    %p170 = scmp.eq.s32.totalorder %s27, 1
    %p171 = por %p169, %p170
    %p172 = scmp.ne.s32.totalorder %s163, %s164
    %p173 = scmp.eq.s32.totalorder %s27, 0
    %p174 = por %p172, %p173
    %p175 = scmp.ne.s32.totalorder %s163, %s164
    %p176 = scmp.eq.s32.totalorder %s28, 1
    %p177 = por %p175, %p176
    %p179 = scmp.ne.s32.totalorder %s164, %s178
    %p180 = scmp.eq.s32.totalorder %s28, 0
    %p181 = por %p179, %p180
    %s183 = sadd.s32 %s182, 1
    %p186 = scmp.eq.s32.totalorder %s22, 1
    %p187 = scmp.ne.s32.totalorder %s182, %s184
    %p188 = scmp.eq.s32.totalorder %s22, 0
    %p189 = por %p187, %p188
    %p190 = scmp.ne.s32.totalorder %s182, %s184
    %p191 = scmp.eq.s32.totalorder %s27, 1
    %p192 = por %p190, %p191
    %p193 = scmp.ne.s32.totalorder %s184, %s185
    %p194 = scmp.eq.s32.totalorder %s27, 0
    %p195 = por %p193, %p194
    %p196 = scmp.ne.s32.totalorder %s184, %s185
    %p197 = scmp.eq.s32.totalorder %s28, 1
    %p198 = por %p196, %p197
    %p200 = scmp.ne.s32.totalorder %s185, %s199
    %p201 = scmp.eq.s32.totalorder %s28, 0
    %p202 = por %p200, %p201
    %s204 = sadd.s32 %s203, 1
    %p207 = scmp.eq.s32.totalorder %s22, 1
    %p208 = scmp.ne.s32.totalorder %s203, %s205
    %p209 = scmp.eq.s32.totalorder %s22, 0
    %p210 = por %p208, %p209
    %p211 = scmp.ne.s32.totalorder %s203, %s205
    %p212 = scmp.eq.s32.totalorder %s27, 1
    %p213 = por %p211, %p212
    %p214 = scmp.ne.s32.totalorder %s205, %s206
    %p215 = scmp.eq.s32.totalorder %s27, 0
    %p216 = por %p214, %p215
    %p217 = scmp.ne.s32.totalorder %s205, %s206
    %p218 = scmp.eq.s32.totalorder %s28, 1
    %p219 = por %p217, %p218
    %p221 = scmp.ne.s32.totalorder %s206, %s220
    %p222 = scmp.eq.s32.totalorder %s28, 0
    %p223 = por %p221, %p222
    %s225 = sadd.s32 %s224, 1
    %p228 = scmp.eq.s32.totalorder %s22, 1
    %p229 = scmp.ne.s32.totalorder %s224, %s226
    %p230 = scmp.eq.s32.totalorder %s22, 0
    %p231 = por %p229, %p230
    %p232 = scmp.ne.s32.totalorder %s224, %s226
    %p233 = scmp.eq.s32.totalorder %s27, 1
    %p234 = por %p232, %p233
    %p235 = scmp.ne.s32.totalorder %s226, %s227
    %p236 = scmp.eq.s32.totalorder %s27, 0
    %p237 = por %p235, %p236
    %p238 = scmp.ne.s32.totalorder %s226, %s227
    %p239 = scmp.eq.s32.totalorder %s28, 1
    %p240 = por %p238, %p239
    %p242 = scmp.ne.s32.totalorder %s227, %s241
    %p243 = scmp.eq.s32.totalorder %s28, 0
    %p244 = por %p242, %p243
    %s246 = sadd.s32 %s245, 1
    %p249 = scmp.eq.s32.totalorder %s22, 1
    %p250 = scmp.ne.s32.totalorder %s245, %s247
    %p251 = scmp.eq.s32.totalorder %s22, 0
    %p252 = por %p250, %p251
    %p253 = scmp.ne.s32.totalorder %s245, %s247
    %p254 = scmp.eq.s32.totalorder %s27, 1
    %p255 = por %p253, %p254
    %p256 = scmp.ne.s32.totalorder %s247, %s248
    %p257 = scmp.eq.s32.totalorder %s27, 0
    %p258 = por %p256, %p257
    %p259 = scmp.ne.s32.totalorder %s247, %s248
    %p260 = scmp.eq.s32.totalorder %s28, 1
    %p261 = por %p259, %p260
    %p263 = scmp.ne.s32.totalorder %s248, %s262
    %p264 = scmp.eq.s32.totalorder %s28, 0
    %p265 = por %p263, %p264
    %s267 = sadd.s32 %s266, 1
    %p270 = scmp.eq.s32.totalorder %s22, 1
    %p271 = scmp.ne.s32.totalorder %s266, %s268
    %p272 = scmp.eq.s32.totalorder %s22, 0
    %p273 = por %p271, %p272
    %p274 = scmp.ne.s32.totalorder %s266, %s268
    %p275 = scmp.eq.s32.totalorder %s27, 1
    %p276 = por %p274, %p275
    %p277 = scmp.ne.s32.totalorder %s268, %s269
    %p278 = scmp.eq.s32.totalorder %s27, 0
    %p279 = por %p277, %p278
    %p280 = scmp.ne.s32.totalorder %s268, %s269
    %p281 = scmp.eq.s32.totalorder %s28, 1
    %p282 = por %p280, %p281
    %p284 = scmp.ne.s32.totalorder %s269, %s283
    %p285 = scmp.eq.s32.totalorder %s28, 0
    %p286 = por %p284, %p285
    %s288 = sadd.s32 %s287, 1
    %p291 = scmp.eq.s32.totalorder %s22, 1
    %p292 = scmp.ne.s32.totalorder %s287, %s289
    %p293 = scmp.eq.s32.totalorder %s22, 0
    %p294 = por %p292, %p293
    %p295 = scmp.ne.s32.totalorder %s287, %s289
    %p296 = scmp.eq.s32.totalorder %s27, 1
    %p297 = por %p295, %p296
    %p298 = scmp.ne.s32.totalorder %s289, %s290
    %p299 = scmp.eq.s32.totalorder %s27, 0
    %p300 = por %p298, %p299
    %p301 = scmp.ne.s32.totalorder %s289, %s290
    %p302 = scmp.eq.s32.totalorder %s28, 1
    %p303 = por %p301, %p302
    %p305 = scmp.ne.s32.totalorder %s290, %s304
    %p306 = scmp.eq.s32.totalorder %s28, 0
    %p307 = por %p305, %p306
    %s309 = sadd.s32 %s308, 1
    %p312 = scmp.eq.s32.totalorder %s22, 1
    %p313 = scmp.ne.s32.totalorder %s308, %s310
    %p314 = scmp.eq.s32.totalorder %s22, 0
    %p315 = por %p313, %p314
    %p316 = scmp.ne.s32.totalorder %s308, %s310
    %p317 = scmp.eq.s32.totalorder %s27, 1
    %p318 = por %p316, %p317
    %p319 = scmp.ne.s32.totalorder %s310, %s311
    %p320 = scmp.eq.s32.totalorder %s27, 0
    %p321 = por %p319, %p320
    %p322 = scmp.ne.s32.totalorder %s310, %s311
    %p323 = scmp.eq.s32.totalorder %s28, 1
    %p324 = por %p322, %p323
    %p326 = scmp.ne.s32.totalorder %s311, %s325
    %p327 = scmp.eq.s32.totalorder %s28, 0
    %p328 = por %p326, %p327
    %s330 = sadd.s32 %s329, 1
    %p333 = scmp.eq.s32.totalorder %s22, 1
    %p334 = scmp.ne.s32.totalorder %s329, %s331
    %p335 = scmp.eq.s32.totalorder %s22, 0
    %p336 = por %p334, %p335
    %p337 = scmp.ne.s32.totalorder %s329, %s331
    %p338 = scmp.eq.s32.totalorder %s27, 1
    %p339 = por %p337, %p338
    %p340 = scmp.ne.s32.totalorder %s331, %s332
    %p341 = scmp.eq.s32.totalorder %s27, 0
    %p342 = por %p340, %p341
    %p343 = scmp.ne.s32.totalorder %s331, %s332
    %p344 = scmp.eq.s32.totalorder %s28, 1
    %p345 = por %p343, %p344
    %p347 = scmp.ne.s32.totalorder %s332, %s346
    %p348 = scmp.eq.s32.totalorder %s28, 0
    %p349 = por %p347, %p348
    %s351 = sadd.s32 %s350, 1
    %p354 = scmp.eq.s32.totalorder %s22, 1
    %p355 = scmp.ne.s32.totalorder %s350, %s352
    %p356 = scmp.eq.s32.totalorder %s22, 0
    %p357 = por %p355, %p356
    %p358 = scmp.ne.s32.totalorder %s350, %s352
    %p359 = scmp.eq.s32.totalorder %s27, 1
    %p360 = por %p358, %p359
    %p361 = scmp.ne.s32.totalorder %s352, %s353
    %p362 = scmp.eq.s32.totalorder %s27, 0
    %p363 = por %p361, %p362
    %p364 = scmp.ne.s32.totalorder %s352, %s353
    %p365 = scmp.eq.s32.totalorder %s28, 1
    %p366 = por %p364, %p365
    %p368 = scmp.ne.s32.totalorder %s353, %s367
    %p369 = scmp.eq.s32.totalorder %s28, 0
    %p370 = por %p368, %p369
    %s371 = ssub.s32 %s22, %s29
    %p372 = scmp.eq.s32.totalorder %s371, 0
    %s374 = sadd.s32 %s373, 1
    %s375 = scalar_select %p372, %s373, %s374
    %p378 = pneg %p372
    %p379 = scmp.eq.s32.totalorder %s22, 1
    %p380 = por %p378, %p379
    %p381 = scmp.ne.s32.totalorder %s373, %s376
    %p382 = scmp.eq.s32.totalorder %s22, 0
    %p383 = por %p381, %p382
    %p384 = scmp.ne.s32.totalorder %s373, %s376
    %p385 = scmp.eq.s32.totalorder %s27, 1
    %p386 = por %p384, %p385
    %p387 = scmp.ne.s32.totalorder %s376, %s377
    %p388 = scmp.eq.s32.totalorder %s27, 0
    %p389 = por %p387, %p388
    %p390 = scmp.ne.s32.totalorder %s376, %s377
    %p391 = scmp.eq.s32.totalorder %s28, 1
    %p392 = por %p390, %p391
    %p394 = scmp.ne.s32.totalorder %s377, %s393
    %p395 = scmp.eq.s32.totalorder %s28, 0
    %p396 = por %p394, %p395
    %p397 = scmp.le.s32.totalorder 1, %s22
    %p398 = scmp.lt.s32.totalorder %s22, 3
    %p399 = pnand %p397, %p398
    %p400 = pneg %p399
    // Predicated region
    $region9: #{gpt_forward.5} parent=5 // pred_check
      _
    $region10: #{gpt_forward.5} parent=5 // pred_check_branch
      %402 = sbr.rel (%p399) target = $region12
    $region11: #{gpt_forward.5} parent=5 // pred_region
      %s403 = ssub.s32 %s22, 1
      // Predicated region
      $region13: #{gpt_forward.5} parent=11 // pred_check
        %p404 = pneg %p69
      $region14: #{gpt_forward.5} parent=11 // pred_check_branch
        %406 = sbr.rel (%p404) target = $region16
      $region15: #{gpt_forward.5} parent=11 // pred_region
        _
      $region16: #{gpt_forward.5} parent=11 // pred_fallthru
        _
      // Predicated region
      $region17: #{gpt_forward.5} parent=11 // pred_check
        %p407 = pneg %p90
      $region18: #{gpt_forward.5} parent=11 // pred_check_branch
        %409 = sbr.rel (%p407) target = $region20
      $region19: #{gpt_forward.5} parent=11 // pred_region
        _
      $region20: #{gpt_forward.5} parent=11 // pred_fallthru
        _
      // Predicated region
      $region21: #{gpt_forward.5} parent=11 // pred_check
        %p410 = pneg %p111
      $region22: #{gpt_forward.5} parent=11 // pred_check_branch
        %412 = sbr.rel (%p410) target = $region24
      $region23: #{gpt_forward.5} parent=11 // pred_region
        _
      $region24: #{gpt_forward.5} parent=11 // pred_fallthru
        _
      // Predicated region
      $region25: #{gpt_forward.5} parent=11 // pred_check
        %p413 = pneg %p132
      $region26: #{gpt_forward.5} parent=11 // pred_check_branch
        %415 = sbr.rel (%p413) target = $region28
      $region27: #{gpt_forward.5} parent=11 // pred_region
        _
      $region28: #{gpt_forward.5} parent=11 // pred_fallthru
        _
      // Predicated region
      $region29: #{gpt_forward.5} parent=11 // pred_check
        %p416 = pneg %p153
      $region30: #{gpt_forward.5} parent=11 // pred_check_branch
        %418 = sbr.rel (%p416) target = $region32
      $region31: #{gpt_forward.5} parent=11 // pred_region
        _
      $region32: #{gpt_forward.5} parent=11 // pred_fallthru
        _
      // Predicated region
      $region33: #{gpt_forward.5} parent=11 // pred_check
        %p419 = pneg %p174
      $region34: #{gpt_forward.5} parent=11 // pred_check_branch
        %421 = sbr.rel (%p419) target = $region36
      $region35: #{gpt_forward.5} parent=11 // pred_region
        _
      $region36: #{gpt_forward.5} parent=11 // pred_fallthru
        _
      // Predicated region
      $region37: #{gpt_forward.5} parent=11 // pred_check
        %p422 = pneg %p195
      $region38: #{gpt_forward.5} parent=11 // pred_check_branch
        %424 = sbr.rel (%p422) target = $region40
      $region39: #{gpt_forward.5} parent=11 // pred_region
        _
      $region40: #{gpt_forward.5} parent=11 // pred_fallthru
        _
      // Predicated region
      $region41: #{gpt_forward.5} parent=11 // pred_check
        %p425 = pneg %p216
      $region42: #{gpt_forward.5} parent=11 // pred_check_branch
        %427 = sbr.rel (%p425) target = $region44
      $region43: #{gpt_forward.5} parent=11 // pred_region
        _
      $region44: #{gpt_forward.5} parent=11 // pred_fallthru
        _
      // Predicated region
      $region45: #{gpt_forward.5} parent=11 // pred_check
        %p428 = pneg %p237
      $region46: #{gpt_forward.5} parent=11 // pred_check_branch
        %430 = sbr.rel (%p428) target = $region48
      $region47: #{gpt_forward.5} parent=11 // pred_region
        _
      $region48: #{gpt_forward.5} parent=11 // pred_fallthru
        _
      // Predicated region
      $region49: #{gpt_forward.5} parent=11 // pred_check
        %p431 = pneg %p258
      $region50: #{gpt_forward.5} parent=11 // pred_check_branch
        %433 = sbr.rel (%p431) target = $region52
      $region51: #{gpt_forward.5} parent=11 // pred_region
        _
      $region52: #{gpt_forward.5} parent=11 // pred_fallthru
        _
      // Predicated region
      $region53: #{gpt_forward.5} parent=11 // pred_check
        %p434 = pneg %p279
      $region54: #{gpt_forward.5} parent=11 // pred_check_branch
        %436 = sbr.rel (%p434) target = $region56
      $region55: #{gpt_forward.5} parent=11 // pred_region
        _
      $region56: #{gpt_forward.5} parent=11 // pred_fallthru
        _
      // Predicated region
      $region57: #{gpt_forward.5} parent=11 // pred_check
        %p437 = pneg %p300
      $region58: #{gpt_forward.5} parent=11 // pred_check_branch
        %439 = sbr.rel (%p437) target = $region60
      $region59: #{gpt_forward.5} parent=11 // pred_region
        _
      $region60: #{gpt_forward.5} parent=11 // pred_fallthru
        _
      // Predicated region
      $region61: #{gpt_forward.5} parent=11 // pred_check
        %p440 = pneg %p321
      $region62: #{gpt_forward.5} parent=11 // pred_check_branch
        %442 = sbr.rel (%p440) target = $region64
      $region63: #{gpt_forward.5} parent=11 // pred_region
        _
      $region64: #{gpt_forward.5} parent=11 // pred_fallthru
        _
      // Predicated region
      $region65: #{gpt_forward.5} parent=11 // pred_check
        %p443 = pneg %p342
      $region66: #{gpt_forward.5} parent=11 // pred_check_branch
        %445 = sbr.rel (%p443) target = $region68
      $region67: #{gpt_forward.5} parent=11 // pred_region
        _
      $region68: #{gpt_forward.5} parent=11 // pred_fallthru
        _
      // Predicated region
      $region69: #{gpt_forward.5} parent=11 // pred_check
        %p446 = pneg %p363
      $region70: #{gpt_forward.5} parent=11 // pred_check_branch
        %448 = sbr.rel (%p446) target = $region72
      $region71: #{gpt_forward.5} parent=11 // pred_region
        _
      $region72: #{gpt_forward.5} parent=11 // pred_fallthru
        _
    $region12: #{gpt_forward.5} parent=5 // pred_fallthru
      _
    %p449 = scmp.lt.s32.totalorder %s22, 2
    // Predicated region
    $region73: #{gpt_forward.5} parent=5 // pred_check
      %p450 = pneg %p449
    $region74: #{gpt_forward.5} parent=5 // pred_check_branch
      %452 = sbr.rel (%p450) target = $region76
    $region75: #{gpt_forward.5} parent=5 // pred_region
      // Predicated region
      $region77: #{gpt_forward.5} parent=75 // pred_check
        %p453 = pneg %p42
      $region78: #{gpt_forward.5} parent=75 // pred_check_branch
        %455 = sbr.rel (%p453) target = $region80
      $region79: #{gpt_forward.5} parent=75 // pred_region
        %p456 = scmp.lt.s32.totalorder %s22, 1
        %s457 = scalar_select %p456, %s22, 1
        %s458 = smul.addr %s457, 8
        %s459 = scalar_lea.vmem %s0, %s458
      $region80: #{gpt_forward.5} parent=75 // pred_fallthru
        _
    $region76: #{gpt_forward.5} parent=5 // pred_fallthru
      _
    %p460 = scmp.le.s32.totalorder 1, %s22
    %p461 = scmp.lt.s32.totalorder %s22, 3
    %p462 = pnand %p460, %p461
    %p463 = pneg %p462
    // Predicated region
    $region81: #{gpt_forward.5} parent=5 // pred_check
      _
    $region82: #{gpt_forward.5} parent=5 // pred_check_branch
      %465 = sbr.rel (%p462) target = $region84
    $region83: #{gpt_forward.5} parent=5 // pred_region
      %s466 = ssub.s32 %s22, 1
      %p467 = scmp.lt.s32.totalorder %s27, 1
      %s468 = scalar_select %p467, %s27, 1
      %s469 = smul.addr %s468, 8
      %s470 = scalar_lea.vmem %s0, %s469
      %p471 = pneg %p48
      %p472 = pneg %p45
      %p473 = pneg %p69
      %p474 = pneg %p66
      %p475 = pneg %p90
      %p476 = pneg %p87
      %p477 = pneg %p111
      %p478 = pneg %p108
      %p479 = pneg %p132
      %p480 = pneg %p129
      %p481 = pneg %p153
      %p482 = pneg %p150
      %p483 = pneg %p174
      %p484 = pneg %p171
      %p485 = pneg %p195
      %p486 = pneg %p192
      %p487 = pneg %p216
      %p488 = pneg %p213
      %p489 = pneg %p237
      %p490 = pneg %p234
      %p491 = pneg %p258
      %p492 = pneg %p255
      %p493 = pneg %p279
      %p494 = pneg %p276
      %p495 = pneg %p300
      %p496 = pneg %p297
      %p497 = pneg %p321
      %p498 = pneg %p318
      %p499 = pneg %p342
      %p500 = pneg %p339
      %p501 = pneg %p363
      %p502 = pneg %p360
      %p503 = pneg %p389
      %p504 = pneg %p386
      %p505 = scmp.lt.s32.totalorder %s27, 1
      %s506 = scalar_select %p505, %s27, 1
      %s507 = smul.addr %s506, 8
      %s508 = scalar_lea.vmem %s16, %s507
      %p509 = scmp.lt.s32.totalorder %s27, 1
      %s510 = scalar_select %p509, %s27, 1
      %s511 = smul.addr %s510, 8
      %s512 = scalar_lea.vmem %s0, %s511
      %p513 = scmp.lt.s32.totalorder %s27, 1
      %s514 = scalar_select %p513, %s27, 1
      %s515 = smul.addr %s514, 8
      %s516 = scalar_lea.vmem %s16, %s515
      %v518 = vld [vmem:[%s512] sm:$0xff]
      %v519 = vld [vmem:[%s1] sm:$0x1]
      %v520 = vld [vmem:[%s2] sm:$0x1]
      %vm521 = vcmask 261120
      %v522 = vsel %vm521, %v518, 0.0
      %523 = vadd.xlane.f32.xlu0 %v522
      %v524 = vpop.xlane.xlu0 %523
      %v525 = vrcp.pop 32.0
      %v526 = vmul.f32 %v524, %v525
      %v527 = vsub.f32 %v518, %v526
      %v528 = vmul.f32 %v527, %v527
      %v529 = vsel %vm521, %v528, 0.0
      %530 = vadd.xlane.f32.xlu0 %v529
      %v531 = vpop.xlane.xlu0 %530
      %v532 = vmul.f32 %v531, %v525
      %v533 = vadd.f32 %v532, 1e-05
      %v534 = vrsqrt.pop %v533
      %v535 = vmul.f32 %v527, %v534
      %v537 = vlaneseq
      %v538 = vshrl.u32 %v537, 7
      %v539 = vsub.s32 0, %v538
      %v540 = vrot.slane %v519, %v539
      %v542 = vmul.f32 %v535, %v540
      %v544 = vlaneseq
      %v545 = vshrl.u32 %v544, 7
      %v546 = vsub.s32 0, %v545
      %v547 = vrot.slane %v520, %v546
      %v549 = vadd.f32 %v542, %v547
      %v550 = vpack.c.bf16 %v549, %v549
      %v551 = vld [vmem:[%s3] sm:$0xf]
      %v552 = vld [vmem:[%s3 + $0x4] sm:$0xf]
      %v553 = vld [vmem:[%s3 + $0x8] sm:$0xf]
      %v554 = vld [vmem:[%s3 + $0xc] sm:$0xf]
      %v555 = vld [vmem:[%s4] sm:$0x1]
      %v557 = vlaneseq
      %v558 = vshrl.u32 %v557, 7
      %v559 = vsub.s32 0, %v558
      %v560 = vrot.slane %v555, %v559
      %v566 = vunpack.c.l.b16 %v551
      %v567 = vunpack.c.l.b16 %v552
      %v568 = vunpack.c.l.b16 %v553
      %v569 = vunpack.c.l.b16 %v554
      %v570 = vpack.c.b16 %v567, %v566
      %v571 = vpack.c.b16 %v569, %v568
      %v575 = vsel %vm521, %v550, 0
      %577 = vmatprep.subr.bf16.mxu0 0
      %578 = vmatpush1.bf16.msra.mxu0 0
      %579 = vmatprep.subr.bf16.mxu0 0
      %580 = vmatpush1.bf16.msra.mxu0 0
      %581 = vmatprep.subr.bf16.mxu0 0
      %582 = vmatpush1.bf16.msra.mxu0 0
      %583 = vmatprep.subr.bf16.mxu0 0
      %584 = vmatpush1.bf16.msra.mxu0 0
      %585 = vmatprep.subr.bf16.mxu0 0
      %586 = vmatpush1.bf16.msra.mxu0 0
      %587 = vmatprep.subr.bf16.mxu0 0
      %588 = vmatpush1.bf16.msra.mxu0 0
      %589 = vmatprep.subr.bf16.mxu0 0
      %590 = vmatpush1.bf16.msra.mxu0 %v571
      %591 = vmatprep.subr.bf16.mxu0 0
      %592 = vmatpush1.bf16.msra.mxu0 %v570
      %593 = vmatprep.subr.bf16.mxu0 0
      %594 = vmatpush2.bf16.msra.mxu0 0
      %595 = vmatprep.subr.bf16.mxu0 0
      %596 = vmatpush2.bf16.msra.mxu0 0
      %597 = vmatprep.subr.bf16.mxu0 0
      %598 = vmatpush2.bf16.msra.mxu0 0
      %599 = vmatprep.subr.bf16.mxu0 0
      %600 = vmatpush2.bf16.msra.mxu0 0
      %601 = vmatprep.subr.bf16.mxu0 0
      %602 = vmatpush2.bf16.msra.mxu0 0
      %603 = vmatprep.subr.bf16.mxu0 0
      %604 = vmatpush2.bf16.msra.mxu0 0
      %605 = vmatprep.subr.bf16.mxu0 0
      %606 = vmatpush2.bf16.msra.mxu0 0
      %607 = vmatprep.subr.bf16.mxu0 0
      %608 = vmatpush2.bf16.msra.mxu0 0
      %609 = vmatprep.mubr.bf16.mxu0 0
      %610 = vmatmul.mubr.bf16.gmra.mxu0 %v575
      %v611 = vpop.f32.mrf.mxu0
      %v612 = vadd.f32 %v560, %v611
      %v613 = vpop.f32.mrf.mxu0
      %v614 = vpop.f32.mrf.mxu0
      %v615 = vpop.f32.mrf.mxu0
      %616 = vdwg.mxu0
      %v617 = vpack.c.bf16 %v612, %v612
      %v618 = vld [vmem:[%s15] sm:$0xff]
      %v619 = vld [vmem:[%s5] sm:$0xf]
      %v620 = vld [vmem:[%s5 + $0x4] sm:$0xf]
      %v621 = vld [vmem:[%s5 + $0x8] sm:$0xf]
      %v622 = vld [vmem:[%s5 + $0xc] sm:$0xf]
      %624 = vrot.lane.b32.xlu0 %v617, 120
      %v625 = vpop.permute.xlu0 %624
      %626 = vrot.lane.b32.xlu0 %v617, 112
      %v627 = vpop.permute.xlu0 %626
      %628 = vrot.lane.b32.xlu0 %v617, 104
      %v629 = vpop.permute.xlu0 %628
      %630 = vrot.lane.b32.xlu0 %v617, 96
      %v631 = vpop.permute.xlu0 %630
      %vm632 = vcmask 64512
      %v634 = vsel %vm632, %v617, 0
      %v637 = vsel %vm632, %v631, 0
      %639 = vmatprep.subr.bf16.mxu0 0
      %640 = vmatpush1.bf16.xpose.msra.mxu0 0
      %641 = vmatprep.subr.bf16.mxu0 0
      %642 = vmatpush1.bf16.xpose.msra.mxu0 0
      %643 = vmatprep.subr.bf16.mxu0 0
      %644 = vmatpush1.bf16.xpose.msra.mxu0 0
      %645 = vmatprep.subr.bf16.mxu0 0
      %646 = vmatpush1.bf16.xpose.msra.mxu0 0
      %647 = vmatprep.subr.bf16.mxu0 0
      %648 = vmatpush1.bf16.xpose.msra.mxu0 0
      %649 = vmatprep.subr.bf16.mxu0 0
      %650 = vmatpush1.bf16.xpose.msra.mxu0 0
      %651 = vmatprep.subr.bf16.mxu0 0
      %652 = vmatpush1.bf16.xpose.msra.mxu0 0
      %653 = vmatprep.subr.bf16.mxu0 0
      %654 = vmatpush1.bf16.xpose.msra.mxu0 %v637
      %655 = vmatprep.subr.bf16.mxu0 0
      %656 = vmatpush2.bf16.xpose.msra.mxu0 0
      %657 = vmatprep.subr.bf16.mxu0 0
      %658 = vmatpush2.bf16.xpose.msra.mxu0 0
      %659 = vmatprep.subr.bf16.mxu0 0
      %660 = vmatpush2.bf16.xpose.msra.mxu0 0
      %661 = vmatprep.subr.bf16.mxu0 0
      %662 = vmatpush2.bf16.xpose.msra.mxu0 0
      %663 = vmatprep.subr.bf16.mxu0 0
      %664 = vmatpush2.bf16.xpose.msra.mxu0 0
      %665 = vmatprep.subr.bf16.mxu0 0
      %666 = vmatpush2.bf16.xpose.msra.mxu0 0
      %667 = vmatprep.subr.bf16.mxu0 0
      %668 = vmatpush2.bf16.xpose.msra.mxu0 0
      %669 = vmatprep.subr.bf16.mxu0 0
      %670 = vmatpush2.bf16.xpose.msra.mxu0 0
      %671 = vmatprep.mubr.bf16.mxu0 0
      %672 = vmatmul.mubr.bf16.gmra.mxu0 %v634
      %v673 = vpop.f32.mrf.mxu0
      %v674 = vadd.f32 0.0, %v673
      %v675 = vpop.f32.mrf.mxu0
      %v676 = vpop.f32.mrf.mxu0
      %v677 = vpop.f32.mrf.mxu0
      %678 = vdwg.mxu0
      %679 = vrot.lane.b32.xlu0 %v625, 96
      %v680 = vpop.permute.xlu0 %679
      %v682 = vsel %vm632, %v625, 0
      %v685 = vsel %vm632, %v680, 0
      %687 = vmatprep.subr.bf16.mxu0 0
      %688 = vmatpush1.bf16.xpose.msra.mxu0 0
      %689 = vmatprep.subr.bf16.mxu0 0
      %690 = vmatpush1.bf16.xpose.msra.mxu0 0
      %691 = vmatprep.subr.bf16.mxu0 0
      %692 = vmatpush1.bf16.xpose.msra.mxu0 0
      %693 = vmatprep.subr.bf16.mxu0 0
      %694 = vmatpush1.bf16.xpose.msra.mxu0 0
      %695 = vmatprep.subr.bf16.mxu0 0
      %696 = vmatpush1.bf16.xpose.msra.mxu0 0
      %697 = vmatprep.subr.bf16.mxu0 0
      %698 = vmatpush1.bf16.xpose.msra.mxu0 0
      %699 = vmatprep.subr.bf16.mxu0 0
      %700 = vmatpush1.bf16.xpose.msra.mxu0 0
      %701 = vmatprep.subr.bf16.mxu0 0
      %702 = vmatpush1.bf16.xpose.msra.mxu0 %v685
      %703 = vmatprep.subr.bf16.mxu0 0
      %704 = vmatpush2.bf16.xpose.msra.mxu0 0
      %705 = vmatprep.subr.bf16.mxu0 0
      %706 = vmatpush2.bf16.xpose.msra.mxu0 0
      %707 = vmatprep.subr.bf16.mxu0 0
      %708 = vmatpush2.bf16.xpose.msra.mxu0 0
      %709 = vmatprep.subr.bf16.mxu0 0
      %710 = vmatpush2.bf16.xpose.msra.mxu0 0
      %711 = vmatprep.subr.bf16.mxu0 0
      %712 = vmatpush2.bf16.xpose.msra.mxu0 0
      %713 = vmatprep.subr.bf16.mxu0 0
      %714 = vmatpush2.bf16.xpose.msra.mxu0 0
      %715 = vmatprep.subr.bf16.mxu0 0
      %716 = vmatpush2.bf16.xpose.msra.mxu0 0
      %717 = vmatprep.subr.bf16.mxu0 0
      %718 = vmatpush2.bf16.xpose.msra.mxu0 0
      %719 = vmatprep.mubr.bf16.mxu0 0
      %720 = vmatmul.mubr.bf16.gmra.mxu0 %v682
      %v721 = vpop.f32.mrf.mxu0
      %v722 = vadd.f32 0.0, %v721
      %v723 = vpop.f32.mrf.mxu0
      %v724 = vpop.f32.mrf.mxu0
      %v725 = vpop.f32.mrf.mxu0
      %726 = vdwg.mxu0
      %727 = vrot.lane.b32.xlu0 %v627, 96
      %v728 = vpop.permute.xlu0 %727
      %v730 = vsel %vm632, %v627, 0
      %v733 = vsel %vm632, %v728, 0
      %735 = vmatprep.subr.bf16.mxu0 0
      %736 = vmatpush1.bf16.xpose.msra.mxu0 0
      %737 = vmatprep.subr.bf16.mxu0 0
      %738 = vmatpush1.bf16.xpose.msra.mxu0 0
      %739 = vmatprep.subr.bf16.mxu0 0
      %740 = vmatpush1.bf16.xpose.msra.mxu0 0
      %741 = vmatprep.subr.bf16.mxu0 0
      %742 = vmatpush1.bf16.xpose.msra.mxu0 0
      %743 = vmatprep.subr.bf16.mxu0 0
      %744 = vmatpush1.bf16.xpose.msra.mxu0 0
      %745 = vmatprep.subr.bf16.mxu0 0
      %746 = vmatpush1.bf16.xpose.msra.mxu0 0
      %747 = vmatprep.subr.bf16.mxu0 0
      %748 = vmatpush1.bf16.xpose.msra.mxu0 0
      %749 = vmatprep.subr.bf16.mxu0 0
      %750 = vmatpush1.bf16.xpose.msra.mxu0 %v733
      %751 = vmatprep.subr.bf16.mxu0 0
      %752 = vmatpush2.bf16.xpose.msra.mxu0 0
      %753 = vmatprep.subr.bf16.mxu0 0
      %754 = vmatpush2.bf16.xpose.msra.mxu0 0
      %755 = vmatprep.subr.bf16.mxu0 0
      %756 = vmatpush2.bf16.xpose.msra.mxu0 0
      %757 = vmatprep.subr.bf16.mxu0 0
      %758 = vmatpush2.bf16.xpose.msra.mxu0 0
      %759 = vmatprep.subr.bf16.mxu0 0
      %760 = vmatpush2.bf16.xpose.msra.mxu0 0
      %761 = vmatprep.subr.bf16.mxu0 0
      %762 = vmatpush2.bf16.xpose.msra.mxu0 0
      %763 = vmatprep.subr.bf16.mxu0 0
      %764 = vmatpush2.bf16.xpose.msra.mxu0 0
      %765 = vmatprep.subr.bf16.mxu0 0
      %766 = vmatpush2.bf16.xpose.msra.mxu0 0
      %767 = vmatprep.mubr.bf16.mxu0 0
      %768 = vmatmul.mubr.bf16.gmra.mxu0 %v730
      %v769 = vpop.f32.mrf.mxu0
      %v770 = vadd.f32 0.0, %v769
      %v771 = vpop.f32.mrf.mxu0
      %v772 = vpop.f32.mrf.mxu0
      %v773 = vpop.f32.mrf.mxu0
      %774 = vdwg.mxu0
      %775 = vrot.lane.b32.xlu0 %v629, 96
      %v776 = vpop.permute.xlu0 %775
      %v778 = vsel %vm632, %v629, 0
      %v781 = vsel %vm632, %v776, 0
      %783 = vmatprep.subr.bf16.mxu0 0
      %784 = vmatpush1.bf16.xpose.msra.mxu0 0
      %785 = vmatprep.subr.bf16.mxu0 0
      %786 = vmatpush1.bf16.xpose.msra.mxu0 0
      %787 = vmatprep.subr.bf16.mxu0 0
      %788 = vmatpush1.bf16.xpose.msra.mxu0 0
      %789 = vmatprep.subr.bf16.mxu0 0
      %790 = vmatpush1.bf16.xpose.msra.mxu0 0
      %791 = vmatprep.subr.bf16.mxu0 0
      %792 = vmatpush1.bf16.xpose.msra.mxu0 0
      %793 = vmatprep.subr.bf16.mxu0 0
      %794 = vmatpush1.bf16.xpose.msra.mxu0 0
      %795 = vmatprep.subr.bf16.mxu0 0
      %796 = vmatpush1.bf16.xpose.msra.mxu0 0
      %797 = vmatprep.subr.bf16.mxu0 0
      %798 = vmatpush1.bf16.xpose.msra.mxu0 %v781
      %799 = vmatprep.subr.bf16.mxu0 0
      %800 = vmatpush2.bf16.xpose.msra.mxu0 0
      %801 = vmatprep.subr.bf16.mxu0 0
      %802 = vmatpush2.bf16.xpose.msra.mxu0 0
      %803 = vmatprep.subr.bf16.mxu0 0
      %804 = vmatpush2.bf16.xpose.msra.mxu0 0
      %805 = vmatprep.subr.bf16.mxu0 0
      %806 = vmatpush2.bf16.xpose.msra.mxu0 0
      %807 = vmatprep.subr.bf16.mxu0 0
      %808 = vmatpush2.bf16.xpose.msra.mxu0 0
      %809 = vmatprep.subr.bf16.mxu0 0
      %810 = vmatpush2.bf16.xpose.msra.mxu0 0
      %811 = vmatprep.subr.bf16.mxu0 0
      %812 = vmatpush2.bf16.xpose.msra.mxu0 0
      %813 = vmatprep.subr.bf16.mxu0 0
      %814 = vmatpush2.bf16.xpose.msra.mxu0 0
      %815 = vmatprep.mubr.bf16.mxu0 0
      %816 = vmatmul.mubr.bf16.gmra.mxu0 %v778
      %v817 = vpop.f32.mrf.mxu0
      %v818 = vadd.f32 0.0, %v817
      %v819 = vpop.f32.mrf.mxu0
      %v820 = vpop.f32.mrf.mxu0
      %v821 = vpop.f32.mrf.mxu0
      %822 = vdwg.mxu0
      %v823 = vmul.f32 %v674, 0.35355338
      %v824 = vmul.f32 %v722, 0.35355338
      %v825 = vmul.f32 %v770, 0.35355338
      %v826 = vmul.f32 %v818, 0.35355338
      %v827 = vadd.f32 %v823, %v618
      %v828 = vadd.f32 %v824, %v618
      %v829 = vadd.f32 %v825, %v618
      %v830 = vadd.f32 %v826, %v618
      %v831 = vsel %vm632, %v827, -inf
      %832 = vmax.xlane.f32.xlu0 %v831
      %v833 = vpop.xlane.xlu0 %832
      %v834 = vsel %vm632, %v828, -inf
      %835 = vmax.xlane.f32.xlu0 %v834
      %v836 = vpop.xlane.xlu0 %835
      %v837 = vsel %vm632, %v829, -inf
      %838 = vmax.xlane.f32.xlu0 %v837
      %v839 = vpop.xlane.xlu0 %838
      %v840 = vsel %vm632, %v830, -inf
      %841 = vmax.xlane.f32.xlu0 %v840
      %v842 = vpop.xlane.xlu0 %841
      %v843 = vsub.f32 %v827, %v833
      %v844 = vsub.f32 %v828, %v836
      %v845 = vsub.f32 %v829, %v839
      %v846 = vsub.f32 %v830, %v842
      %v847 = vmul.f32 %v843, 1.442695
      %v848 = vpow.pop %v847
      %v849 = vmul.f32 %v844, 1.442695
      %v850 = vpow.pop %v849
      %v851 = vmul.f32 %v845, 1.442695
      %v852 = vpow.pop %v851
      %v853 = vmul.f32 %v846, 1.442695
      %v854 = vpow.pop %v853
      %v855 = vsel %vm632, %v848, 0.0
      %856 = vadd.xlane.f32.xlu0 %v855
      %v857 = vpop.xlane.xlu0 %856
      %v858 = vsel %vm632, %v850, 0.0
      %859 = vadd.xlane.f32.xlu0 %v858
      %v860 = vpop.xlane.xlu0 %859
      %v861 = vsel %vm632, %v852, 0.0
      %862 = vadd.xlane.f32.xlu0 %v861
      %v863 = vpop.xlane.xlu0 %862
      %v864 = vsel %vm632, %v854, 0.0
      %865 = vadd.xlane.f32.xlu0 %v864
      %v866 = vpop.xlane.xlu0 %865
      %v867 = vrcp.pop %v857
      %v868 = vrcp.pop %v860
      %v869 = vrcp.pop %v863
      %v870 = vrcp.pop %v866
      %v871 = vmul.f32 %v848, %v867
      %v872 = vmul.f32 %v850, %v868
      %v873 = vmul.f32 %v852, %v869
      %v874 = vmul.f32 %v854, %v870
      %v875 = vpack.c.bf16 %v871, %v871
      %v876 = vpack.c.bf16 %v872, %v872
      %v877 = vpack.c.bf16 %v873, %v873
      %v878 = vpack.c.bf16 %v874, %v874
      %879 = vrot.lane.b32.xlu0 %v617, 64
      %v880 = vpop.permute.xlu0 %879
      %v882 = vsel %vm632, %v875, 0
      %vm884 = vcmask 1043456
      %v886 = vsel %vm884, %v880, 0
      %888 = vmatprep.subr.bf16.mxu0 0
      %889 = vmatpush1.bf16.msra.mxu0 0
      %890 = vmatprep.subr.bf16.mxu0 0
      %891 = vmatpush1.bf16.msra.mxu0 0
      %892 = vmatprep.subr.bf16.mxu0 0
      %893 = vmatpush1.bf16.msra.mxu0 0
      %894 = vmatprep.subr.bf16.mxu0 0
      %895 = vmatpush1.bf16.msra.mxu0 0
      %896 = vmatprep.subr.bf16.mxu0 0
      %897 = vmatpush1.bf16.msra.mxu0 0
      %898 = vmatprep.subr.bf16.mxu0 0
      %899 = vmatpush1.bf16.msra.mxu0 0
      %900 = vmatprep.subr.bf16.mxu0 0
      %901 = vmatpush1.bf16.msra.mxu0 0
      %902 = vmatprep.subr.bf16.mxu0 0
      %903 = vmatpush1.bf16.msra.mxu0 %v886
      %904 = vmatprep.subr.bf16.mxu0 0
      %905 = vmatpush2.bf16.msra.mxu0 0
      %906 = vmatprep.subr.bf16.mxu0 0
      %907 = vmatpush2.bf16.msra.mxu0 0
      %908 = vmatprep.subr.bf16.mxu0 0
      %909 = vmatpush2.bf16.msra.mxu0 0
      %910 = vmatprep.subr.bf16.mxu0 0
      %911 = vmatpush2.bf16.msra.mxu0 0
      %912 = vmatprep.subr.bf16.mxu0 0
      %913 = vmatpush2.bf16.msra.mxu0 0
      %914 = vmatprep.subr.bf16.mxu0 0
      %915 = vmatpush2.bf16.msra.mxu0 0
      %916 = vmatprep.subr.bf16.mxu0 0
      %917 = vmatpush2.bf16.msra.mxu0 0
      %918 = vmatprep.subr.bf16.mxu0 0
      %919 = vmatpush2.bf16.msra.mxu0 0
      %920 = vmatprep.mubr.bf16.mxu0 0
      %921 = vmatmul.mubr.bf16.gmra.mxu0 %v882
      %v922 = vpop.f32.mrf.mxu0
      %v923 = vadd.f32 0.0, %v922
      %v924 = vpop.f32.mrf.mxu0
      %v925 = vpop.f32.mrf.mxu0
      %v926 = vpop.f32.mrf.mxu0
      %927 = vdwg.mxu0
      %928 = vrot.lane.b32.xlu0 %v625, 64
      %v929 = vpop.permute.xlu0 %928
      %v931 = vsel %vm632, %v876, 0
      %v934 = vsel %vm884, %v929, 0
      %936 = vmatprep.subr.bf16.mxu0 0
      %937 = vmatpush1.bf16.msra.mxu0 0
      %938 = vmatprep.subr.bf16.mxu0 0
      %939 = vmatpush1.bf16.msra.mxu0 0
      %940 = vmatprep.subr.bf16.mxu0 0
      %941 = vmatpush1.bf16.msra.mxu0 0
      %942 = vmatprep.subr.bf16.mxu0 0
      %943 = vmatpush1.bf16.msra.mxu0 0
      %944 = vmatprep.subr.bf16.mxu0 0
      %945 = vmatpush1.bf16.msra.mxu0 0
      %946 = vmatprep.subr.bf16.mxu0 0
      %947 = vmatpush1.bf16.msra.mxu0 0
      %948 = vmatprep.subr.bf16.mxu0 0
      %949 = vmatpush1.bf16.msra.mxu0 0
      %950 = vmatprep.subr.bf16.mxu0 0
      %951 = vmatpush1.bf16.msra.mxu0 %v934
      %952 = vmatprep.subr.bf16.mxu0 0
      %953 = vmatpush2.bf16.msra.mxu0 0
      %954 = vmatprep.subr.bf16.mxu0 0
      %955 = vmatpush2.bf16.msra.mxu0 0
      %956 = vmatprep.subr.bf16.mxu0 0
      %957 = vmatpush2.bf16.msra.mxu0 0
      %958 = vmatprep.subr.bf16.mxu0 0
      %959 = vmatpush2.bf16.msra.mxu0 0
      %960 = vmatprep.subr.bf16.mxu0 0
      %961 = vmatpush2.bf16.msra.mxu0 0
      %962 = vmatprep.subr.bf16.mxu0 0
      %963 = vmatpush2.bf16.msra.mxu0 0
      %964 = vmatprep.subr.bf16.mxu0 0
      %965 = vmatpush2.bf16.msra.mxu0 0
      %966 = vmatprep.subr.bf16.mxu0 0
      %967 = vmatpush2.bf16.msra.mxu0 0
      %968 = vmatprep.mubr.bf16.mxu0 0
      %969 = vmatmul.mubr.bf16.gmra.mxu0 %v931
      %v970 = vpop.f32.mrf.mxu0
      %v971 = vadd.f32 0.0, %v970
      %v972 = vpop.f32.mrf.mxu0
      %v973 = vpop.f32.mrf.mxu0
      %v974 = vpop.f32.mrf.mxu0
      %975 = vdwg.mxu0
      %976 = vrot.lane.b32.xlu0 %v627, 64
      %v977 = vpop.permute.xlu0 %976
      %v979 = vsel %vm632, %v877, 0
      %v982 = vsel %vm884, %v977, 0
      %984 = vmatprep.subr.bf16.mxu0 0
      %985 = vmatpush1.bf16.msra.mxu0 0
      %986 = vmatprep.subr.bf16.mxu0 0
      %987 = vmatpush1.bf16.msra.mxu0 0
      %988 = vmatprep.subr.bf16.mxu0 0
      %989 = vmatpush1.bf16.msra.mxu0 0
      %990 = vmatprep.subr.bf16.mxu0 0
      %991 = vmatpush1.bf16.msra.mxu0 0
      %992 = vmatprep.subr.bf16.mxu0 0
      %993 = vmatpush1.bf16.msra.mxu0 0
      %994 = vmatprep.subr.bf16.mxu0 0
      %995 = vmatpush1.bf16.msra.mxu0 0
      %996 = vmatprep.subr.bf16.mxu0 0
      %997 = vmatpush1.bf16.msra.mxu0 0
      %998 = vmatprep.subr.bf16.mxu0 0
      %999 = vmatpush1.bf16.msra.mxu0 %v982
      %1000 = vmatprep.subr.bf16.mxu0 0
      %1001 = vmatpush2.bf16.msra.mxu0 0
      %1002 = vmatprep.subr.bf16.mxu0 0
      %1003 = vmatpush2.bf16.msra.mxu0 0
      %1004 = vmatprep.subr.bf16.mxu0 0
      %1005 = vmatpush2.bf16.msra.mxu0 0
      %1006 = vmatprep.subr.bf16.mxu0 0
      %1007 = vmatpush2.bf16.msra.mxu0 0
      %1008 = vmatprep.subr.bf16.mxu0 0
      %1009 = vmatpush2.bf16.msra.mxu0 0
      %1010 = vmatprep.subr.bf16.mxu0 0
      %1011 = vmatpush2.bf16.msra.mxu0 0
      %1012 = vmatprep.subr.bf16.mxu0 0
      %1013 = vmatpush2.bf16.msra.mxu0 0
      %1014 = vmatprep.subr.bf16.mxu0 0
      %1015 = vmatpush2.bf16.msra.mxu0 0
      %1016 = vmatprep.mubr.bf16.mxu0 0
      %1017 = vmatmul.mubr.bf16.gmra.mxu0 %v979
      %v1018 = vpop.f32.mrf.mxu0
      %v1019 = vadd.f32 0.0, %v1018
      %v1020 = vpop.f32.mrf.mxu0
      %v1021 = vpop.f32.mrf.mxu0
      %v1022 = vpop.f32.mrf.mxu0
      %1023 = vdwg.mxu0
      %1024 = vrot.lane.b32.xlu0 %v629, 64
      %v1025 = vpop.permute.xlu0 %1024
      %v1027 = vsel %vm632, %v878, 0
      %v1030 = vsel %vm884, %v1025, 0
      %1032 = vmatprep.subr.bf16.mxu0 0
      %1033 = vmatpush1.bf16.msra.mxu0 0
      %1034 = vmatprep.subr.bf16.mxu0 0
      %1035 = vmatpush1.bf16.msra.mxu0 0
      %1036 = vmatprep.subr.bf16.mxu0 0
      %1037 = vmatpush1.bf16.msra.mxu0 0
      %1038 = vmatprep.subr.bf16.mxu0 0
      %1039 = vmatpush1.bf16.msra.mxu0 0
      %1040 = vmatprep.subr.bf16.mxu0 0
      %1041 = vmatpush1.bf16.msra.mxu0 0
      %1042 = vmatprep.subr.bf16.mxu0 0
      %1043 = vmatpush1.bf16.msra.mxu0 0
      %1044 = vmatprep.subr.bf16.mxu0 0
      %1045 = vmatpush1.bf16.msra.mxu0 0
      %1046 = vmatprep.subr.bf16.mxu0 0
      %1047 = vmatpush1.bf16.msra.mxu0 %v1030
      %1048 = vmatprep.subr.bf16.mxu0 0
      %1049 = vmatpush2.bf16.msra.mxu0 0
      %1050 = vmatprep.subr.bf16.mxu0 0
      %1051 = vmatpush2.bf16.msra.mxu0 0
      %1052 = vmatprep.subr.bf16.mxu0 0
      %1053 = vmatpush2.bf16.msra.mxu0 0
      %1054 = vmatprep.subr.bf16.mxu0 0
      %1055 = vmatpush2.bf16.msra.mxu0 0
      %1056 = vmatprep.subr.bf16.mxu0 0
      %1057 = vmatpush2.bf16.msra.mxu0 0
      %1058 = vmatprep.subr.bf16.mxu0 0
      %1059 = vmatpush2.bf16.msra.mxu0 0
      %1060 = vmatprep.subr.bf16.mxu0 0
      %1061 = vmatpush2.bf16.msra.mxu0 0
      %1062 = vmatprep.subr.bf16.mxu0 0
      %1063 = vmatpush2.bf16.msra.mxu0 0
      %1064 = vmatprep.mubr.bf16.mxu0 0
      %1065 = vmatmul.mubr.bf16.gmra.mxu0 %v1027
      %v1066 = vpop.f32.mrf.mxu0
      %v1067 = vadd.f32 0.0, %v1066
      %v1068 = vpop.f32.mrf.mxu0
      %v1069 = vpop.f32.mrf.mxu0
      %v1070 = vpop.f32.mrf.mxu0
      %1071 = vdwg.mxu0
      %v1072 = vpack.c.bf16 %v923, %v923
      %v1073 = vpack.c.bf16 %v971, %v971
      %v1075 = vsel %vm632, %v1073, 0
      %v1078 = vsel %vm884, %v620, 0
      %1080 = vmatprep.subr.bf16.mxu0 0
      %1081 = vmatpush1.bf16.msra.mxu0 0
      %1082 = vmatprep.subr.bf16.mxu0 0
      %1083 = vmatpush1.bf16.msra.mxu0 0
      %1084 = vmatprep.subr.bf16.mxu0 0
      %1085 = vmatpush1.bf16.msra.mxu0 0
      %1086 = vmatprep.subr.bf16.mxu0 0
      %1087 = vmatpush1.bf16.msra.mxu0 0
      %1088 = vmatprep.subr.bf16.mxu0 0
      %1089 = vmatpush1.bf16.msra.mxu0 0
      %1090 = vmatprep.subr.bf16.mxu0 0
      %1091 = vmatpush1.bf16.msra.mxu0 0
      %1092 = vmatprep.subr.bf16.mxu0 0
      %1093 = vmatpush1.bf16.msra.mxu0 0
      %1094 = vmatprep.subr.bf16.mxu0 0
      %1095 = vmatpush1.bf16.msra.mxu0 %v1078
      %1096 = vmatprep.subr.bf16.mxu0 0
      %1097 = vmatpush2.bf16.msra.mxu0 0
      %1098 = vmatprep.subr.bf16.mxu0 0
      %1099 = vmatpush2.bf16.msra.mxu0 0
      %1100 = vmatprep.subr.bf16.mxu0 0
      %1101 = vmatpush2.bf16.msra.mxu0 0
      %1102 = vmatprep.subr.bf16.mxu0 0
      %1103 = vmatpush2.bf16.msra.mxu0 0
      %1104 = vmatprep.subr.bf16.mxu0 0
      %1105 = vmatpush2.bf16.msra.mxu0 0
      %1106 = vmatprep.subr.bf16.mxu0 0
      %1107 = vmatpush2.bf16.msra.mxu0 0
      %1108 = vmatprep.subr.bf16.mxu0 0
      %1109 = vmatpush2.bf16.msra.mxu0 0
      %1110 = vmatprep.subr.bf16.mxu0 0
      %1111 = vmatpush2.bf16.msra.mxu0 0
      %1112 = vmatprep.mubr.bf16.mxu0 0
      %1113 = vmatmul.mubr.bf16.gmra.mxu0 %v1075
      %v1114 = vpop.f32.mrf.mxu0
      %v1115 = vadd.f32 0.0, %v1114
      %v1116 = vpop.f32.mrf.mxu0
      %v1117 = vpop.f32.mrf.mxu0
      %v1118 = vpop.f32.mrf.mxu0
      %1119 = vdwg.mxu0
      %v1121 = vsel %vm632, %v1072, 0
      %v1124 = vsel %vm884, %v619, 0
      %1126 = vmatprep.subr.bf16.mxu0 0
      %1127 = vmatpush1.bf16.msra.mxu0 0
      %1128 = vmatprep.subr.bf16.mxu0 0
      %1129 = vmatpush1.bf16.msra.mxu0 0
      %1130 = vmatprep.subr.bf16.mxu0 0
      %1131 = vmatpush1.bf16.msra.mxu0 0
      %1132 = vmatprep.subr.bf16.mxu0 0
      %1133 = vmatpush1.bf16.msra.mxu0 0
      %1134 = vmatprep.subr.bf16.mxu0 0
      %1135 = vmatpush1.bf16.msra.mxu0 0
      %1136 = vmatprep.subr.bf16.mxu0 0
      %1137 = vmatpush1.bf16.msra.mxu0 0
      %1138 = vmatprep.subr.bf16.mxu0 0
      %1139 = vmatpush1.bf16.msra.mxu0 0
      %1140 = vmatprep.subr.bf16.mxu0 0
      %1141 = vmatpush1.bf16.msra.mxu0 %v1124
      %1142 = vmatprep.subr.bf16.mxu0 0
      %1143 = vmatpush2.bf16.msra.mxu0 0
      %1144 = vmatprep.subr.bf16.mxu0 0
      %1145 = vmatpush2.bf16.msra.mxu0 0
      %1146 = vmatprep.subr.bf16.mxu0 0
      %1147 = vmatpush2.bf16.msra.mxu0 0
      %1148 = vmatprep.subr.bf16.mxu0 0
      %1149 = vmatpush2.bf16.msra.mxu0 0
      %1150 = vmatprep.subr.bf16.mxu0 0
      %1151 = vmatpush2.bf16.msra.mxu0 0
      %1152 = vmatprep.subr.bf16.mxu0 0
      %1153 = vmatpush2.bf16.msra.mxu0 0
      %1154 = vmatprep.subr.bf16.mxu0 0
      %1155 = vmatpush2.bf16.msra.mxu0 0
      %1156 = vmatprep.subr.bf16.mxu0 0
      %1157 = vmatpush2.bf16.msra.mxu0 0
      %1158 = vmatprep.mubr.bf16.mxu0 0
      %1159 = vmatmul.mubr.bf16.gmra.mxu0 %v1121
      %v1160 = vpop.f32.mrf.mxu0
      %v1161 = vadd.f32 %v1115, %v1160
      %v1162 = vpop.f32.mrf.mxu0
      %v1163 = vpop.f32.mrf.mxu0
      %v1164 = vpop.f32.mrf.mxu0
      %1165 = vdwg.mxu0
      %v1166 = vpack.c.bf16 %v1019, %v1019
      %v1168 = vsel %vm632, %v1166, 0
      %v1171 = vsel %vm884, %v621, 0
      %1173 = vmatprep.subr.bf16.mxu0 0
      %1174 = vmatpush1.bf16.msra.mxu0 0
      %1175 = vmatprep.subr.bf16.mxu0 0
      %1176 = vmatpush1.bf16.msra.mxu0 0
      %1177 = vmatprep.subr.bf16.mxu0 0
      %1178 = vmatpush1.bf16.msra.mxu0 0
      %1179 = vmatprep.subr.bf16.mxu0 0
      %1180 = vmatpush1.bf16.msra.mxu0 0
      %1181 = vmatprep.subr.bf16.mxu0 0
      %1182 = vmatpush1.bf16.msra.mxu0 0
      %1183 = vmatprep.subr.bf16.mxu0 0
      %1184 = vmatpush1.bf16.msra.mxu0 0
      %1185 = vmatprep.subr.bf16.mxu0 0
      %1186 = vmatpush1.bf16.msra.mxu0 0
      %1187 = vmatprep.subr.bf16.mxu0 0
      %1188 = vmatpush1.bf16.msra.mxu0 %v1171
      %1189 = vmatprep.subr.bf16.mxu0 0
      %1190 = vmatpush2.bf16.msra.mxu0 0
      %1191 = vmatprep.subr.bf16.mxu0 0
      %1192 = vmatpush2.bf16.msra.mxu0 0
      %1193 = vmatprep.subr.bf16.mxu0 0
      %1194 = vmatpush2.bf16.msra.mxu0 0
      %1195 = vmatprep.subr.bf16.mxu0 0
      %1196 = vmatpush2.bf16.msra.mxu0 0
      %1197 = vmatprep.subr.bf16.mxu0 0
      %1198 = vmatpush2.bf16.msra.mxu0 0
      %1199 = vmatprep.subr.bf16.mxu0 0
      %1200 = vmatpush2.bf16.msra.mxu0 0
      %1201 = vmatprep.subr.bf16.mxu0 0
      %1202 = vmatpush2.bf16.msra.mxu0 0
      %1203 = vmatprep.subr.bf16.mxu0 0
      %1204 = vmatpush2.bf16.msra.mxu0 0
      %1205 = vmatprep.mubr.bf16.mxu0 0
      %1206 = vmatmul.mubr.bf16.gmra.mxu0 %v1168
      %v1207 = vpop.f32.mrf.mxu0
      %v1208 = vadd.f32 0.0, %v1207
      %v1209 = vpop.f32.mrf.mxu0
      %v1210 = vpop.f32.mrf.mxu0
      %v1211 = vpop.f32.mrf.mxu0
      %1212 = vdwg.mxu0
      %v1213 = vadd.f32 %v1161, %v1208
      %v1214 = vpack.c.bf16 %v1067, %v1067
      %v1216 = vsel %vm632, %v1214, 0
      %v1219 = vsel %vm884, %v622, 0
      %1221 = vmatprep.subr.bf16.mxu0 0
      %1222 = vmatpush1.bf16.msra.mxu0 0
      %1223 = vmatprep.subr.bf16.mxu0 0
      %1224 = vmatpush1.bf16.msra.mxu0 0
      %1225 = vmatprep.subr.bf16.mxu0 0
      %1226 = vmatpush1.bf16.msra.mxu0 0
      %1227 = vmatprep.subr.bf16.mxu0 0
      %1228 = vmatpush1.bf16.msra.mxu0 0
      %1229 = vmatprep.subr.bf16.mxu0 0
      %1230 = vmatpush1.bf16.msra.mxu0 0
      %1231 = vmatprep.subr.bf16.mxu0 0
      %1232 = vmatpush1.bf16.msra.mxu0 0
      %1233 = vmatprep.subr.bf16.mxu0 0
      %1234 = vmatpush1.bf16.msra.mxu0 0
      %1235 = vmatprep.subr.bf16.mxu0 0
      %1236 = vmatpush1.bf16.msra.mxu0 %v1219
      %1237 = vmatprep.subr.bf16.mxu0 0
      %1238 = vmatpush2.bf16.msra.mxu0 0
      %1239 = vmatprep.subr.bf16.mxu0 0
      %1240 = vmatpush2.bf16.msra.mxu0 0
      %1241 = vmatprep.subr.bf16.mxu0 0
      %1242 = vmatpush2.bf16.msra.mxu0 0
      %1243 = vmatprep.subr.bf16.mxu0 0
      %1244 = vmatpush2.bf16.msra.mxu0 0
      %1245 = vmatprep.subr.bf16.mxu0 0
      %1246 = vmatpush2.bf16.msra.mxu0 0
      %1247 = vmatprep.subr.bf16.mxu0 0
      %1248 = vmatpush2.bf16.msra.mxu0 0
      %1249 = vmatprep.subr.bf16.mxu0 0
      %1250 = vmatpush2.bf16.msra.mxu0 0
      %1251 = vmatprep.subr.bf16.mxu0 0
      %1252 = vmatpush2.bf16.msra.mxu0 0
      %1253 = vmatprep.mubr.bf16.mxu0 0
      %1254 = vmatmul.mubr.bf16.gmra.mxu0 %v1216
      %v1255 = vpop.f32.mrf.mxu0
      %v1256 = vadd.f32 0.0, %v1255
      %v1257 = vpop.f32.mrf.mxu0
      %v1258 = vpop.f32.mrf.mxu0
      %v1259 = vpop.f32.mrf.mxu0
      %1260 = vdwg.mxu0
      %v1261 = vadd.f32 %v1213, %v1256
      %1262 = vst.msk [vmem:[#allocation2] sm:$0xff] %vm521, %v1261
      %v1263 = vld [vmem:[#allocation2] sm:$0xff]
      %v1264 = vadd.f32 %v518, %v1263
      %v1265 = vld [vmem:[%s6] sm:$0x1]
      %v1267 = vlaneseq
      %v1268 = vshrl.u32 %v1267, 7
      %v1269 = vsub.s32 0, %v1268
      %v1270 = vrot.slane %v1265, %v1269
      %v1272 = vadd.f32 %v1264, %v1270
      %v1273 = vld [vmem:[%s7] sm:$0x1]
      %v1274 = vld [vmem:[%s8] sm:$0x1]
      %v1275 = vsel %vm521, %v1272, 0.0
      %1276 = vadd.xlane.f32.xlu0 %v1275
      %v1277 = vpop.xlane.xlu0 %1276
      %v1278 = vmul.f32 %v1277, %v525
      %v1279 = vsub.f32 %v1272, %v1278
      %v1280 = vmul.f32 %v1279, %v1279
      %v1281 = vsel %vm521, %v1280, 0.0
      %1282 = vadd.xlane.f32.xlu0 %v1281
      %v1283 = vpop.xlane.xlu0 %1282
      %v1284 = vmul.f32 %v1283, %v525
      %v1285 = vadd.f32 %v1284, 1e-05
      %v1286 = vrsqrt.pop %v1285
      %v1287 = vmul.f32 %v1279, %v1286
      %v1289 = vlaneseq
      %v1290 = vshrl.u32 %v1289, 7
      %v1291 = vsub.s32 0, %v1290
      %v1292 = vrot.slane %v1273, %v1291
      %v1294 = vmul.f32 %v1287, %v1292
      %v1296 = vlaneseq
      %v1297 = vshrl.u32 %v1296, 7
      %v1298 = vsub.s32 0, %v1297
      %v1299 = vrot.slane %v1274, %v1298
      %v1301 = vadd.f32 %v1294, %v1299
      %v1302 = vpack.c.bf16 %v1301, %v1301
      %v1303 = vld [vmem:[%s9] sm:$0xf]
      %v1304 = vld [vmem:[%s9 + $0x4] sm:$0xf]
      %v1305 = vld [vmem:[%s9 + $0x8] sm:$0xf]
      %v1306 = vld [vmem:[%s9 + $0xc] sm:$0xf]
      %v1307 = vld [vmem:[%s10] sm:$0x1]
      %v1309 = vlaneseq
      %v1310 = vshrl.u32 %v1309, 7
      %v1311 = vsub.s32 0, %v1310
      %v1312 = vrot.slane %v1307, %v1311
      %v1318 = vunpack.c.l.b16 %v1303
      %v1319 = vunpack.c.l.b16 %v1304
      %v1320 = vunpack.c.l.b16 %v1305
      %v1321 = vunpack.c.l.b16 %v1306
      %v1322 = vpack.c.b16 %v1319, %v1318
      %v1323 = vpack.c.b16 %v1321, %v1320
      %v1327 = vsel %vm521, %v1302, 0
      %1329 = vmatprep.subr.bf16.mxu0 0
      %1330 = vmatpush1.bf16.msra.mxu0 0
      %1331 = vmatprep.subr.bf16.mxu0 0
      %1332 = vmatpush1.bf16.msra.mxu0 0
      %1333 = vmatprep.subr.bf16.mxu0 0
      %1334 = vmatpush1.bf16.msra.mxu0 0
      %1335 = vmatprep.subr.bf16.mxu0 0
      %1336 = vmatpush1.bf16.msra.mxu0 0
      %1337 = vmatprep.subr.bf16.mxu0 0
      %1338 = vmatpush1.bf16.msra.mxu0 0
      %1339 = vmatprep.subr.bf16.mxu0 0
      %1340 = vmatpush1.bf16.msra.mxu0 0
      %1341 = vmatprep.subr.bf16.mxu0 0
      %1342 = vmatpush1.bf16.msra.mxu0 %v1323
      %1343 = vmatprep.subr.bf16.mxu0 0
      %1344 = vmatpush1.bf16.msra.mxu0 %v1322
      %1345 = vmatprep.subr.bf16.mxu0 0
      %1346 = vmatpush2.bf16.msra.mxu0 0
      %1347 = vmatprep.subr.bf16.mxu0 0
      %1348 = vmatpush2.bf16.msra.mxu0 0
      %1349 = vmatprep.subr.bf16.mxu0 0
      %1350 = vmatpush2.bf16.msra.mxu0 0
      %1351 = vmatprep.subr.bf16.mxu0 0
      %1352 = vmatpush2.bf16.msra.mxu0 0
      %1353 = vmatprep.subr.bf16.mxu0 0
      %1354 = vmatpush2.bf16.msra.mxu0 0
      %1355 = vmatprep.subr.bf16.mxu0 0
      %1356 = vmatpush2.bf16.msra.mxu0 0
      %1357 = vmatprep.subr.bf16.mxu0 0
      %1358 = vmatpush2.bf16.msra.mxu0 0
      %1359 = vmatprep.subr.bf16.mxu0 0
      %1360 = vmatpush2.bf16.msra.mxu0 0
      %1361 = vmatprep.mubr.bf16.mxu0 0
      %1362 = vmatmul.mubr.bf16.gmra.mxu0 %v1327
      %v1363 = vpop.f32.mrf.mxu0
      %v1364 = vadd.f32 %v1312, %v1363
      %v1365 = vpop.f32.mrf.mxu0
      %v1366 = vpop.f32.mrf.mxu0
      %v1367 = vpop.f32.mrf.mxu0
      %1368 = vdwg.mxu0
      %v1369 = vmul.f32 %v1364, 0.5
      %v1370 = vmul.f32 %v1364, 0.044715
      %v1371 = vmul.f32 %v1370, %v1364
      %v1372 = vmul.f32 %v1371, %v1364
      %v1373 = vadd.f32 %v1364, %v1372
      %v1374 = vmul.f32 %v1373, 0.7978846
      %v1375 = vtanh.pop %v1374
      %v1376 = vadd.f32 %v1375, 1.0
      %v1377 = vmul.f32 %v1369, %v1376
      %v1378 = vpack.c.bf16 %v1377, %v1377
      %v1379 = vld [vmem:[%s11] sm:$0xf]
      %v1380 = vld [vmem:[%s11 + $0x4] sm:$0xf]
      %v1381 = vld [vmem:[%s11 + $0x8] sm:$0xf]
      %v1382 = vld [vmem:[%s11 + $0xc] sm:$0xf]
      %v1383 = vld [vmem:[%s11 + $0x10] sm:$0xf]
      %v1384 = vld [vmem:[%s11 + $0x14] sm:$0xf]
      %v1385 = vld [vmem:[%s11 + $0x18] sm:$0xf]
      %v1386 = vld [vmem:[%s11 + $0x1c] sm:$0xf]
      %v1387 = vld [vmem:[%s11 + $0x20] sm:$0xf]
      %v1388 = vld [vmem:[%s11 + $0x24] sm:$0xf]
      %v1389 = vld [vmem:[%s11 + $0x28] sm:$0xf]
      %v1390 = vld [vmem:[%s11 + $0x2c] sm:$0xf]
      %v1391 = vld [vmem:[%s11 + $0x30] sm:$0xf]
      %v1392 = vld [vmem:[%s11 + $0x34] sm:$0xf]
      %v1393 = vld [vmem:[%s11 + $0x38] sm:$0xf]
      %v1394 = vld [vmem:[%s11 + $0x3c] sm:$0xf]
      %v1395 = vld [vmem:[%s12] sm:$0x1]
      %v1397 = vlaneseq
      %v1398 = vshrl.u32 %v1397, 7
      %v1399 = vsub.s32 0, %v1398
      %v1400 = vrot.slane %v1395, %v1399
      %v1418 = vunpack.c.l.b16 %v1379
      %v1419 = vunpack.c.l.b16 %v1380
      %v1420 = vunpack.c.l.b16 %v1381
      %v1421 = vunpack.c.l.b16 %v1382
      %v1422 = vunpack.c.l.b16 %v1383
      %v1423 = vunpack.c.l.b16 %v1384
      %v1424 = vunpack.c.l.b16 %v1385
      %v1425 = vunpack.c.l.b16 %v1386
      %v1426 = vunpack.c.l.b16 %v1387
      %v1427 = vunpack.c.l.b16 %v1388
      %v1428 = vunpack.c.l.b16 %v1389
      %v1429 = vunpack.c.l.b16 %v1390
      %v1430 = vunpack.c.l.b16 %v1391
      %v1431 = vunpack.c.l.b16 %v1392
      %v1432 = vunpack.c.l.b16 %v1393
      %v1433 = vunpack.c.l.b16 %v1394
      %v1434 = vpack.c.b16 %v1419, %v1418
      %v1435 = vpack.c.b16 %v1421, %v1420
      %v1436 = vpack.c.b16 %v1423, %v1422
      %v1437 = vpack.c.b16 %v1425, %v1424
      %v1438 = vpack.c.b16 %v1427, %v1426
      %v1439 = vpack.c.b16 %v1429, %v1428
      %v1440 = vpack.c.b16 %v1431, %v1430
      %v1441 = vpack.c.b16 %v1433, %v1432
      %1450 = vmatprep.subr.bf16.mxu0 0
      %1451 = vmatpush1.bf16.msra.mxu0 %v1441
      %1452 = vmatprep.subr.bf16.mxu0 0
      %1453 = vmatpush1.bf16.msra.mxu0 %v1440
      %1454 = vmatprep.subr.bf16.mxu0 0
      %1455 = vmatpush1.bf16.msra.mxu0 %v1439
      %1456 = vmatprep.subr.bf16.mxu0 0
      %1457 = vmatpush1.bf16.msra.mxu0 %v1438
      %1458 = vmatprep.subr.bf16.mxu0 0
      %1459 = vmatpush1.bf16.msra.mxu0 %v1437
      %1460 = vmatprep.subr.bf16.mxu0 0
      %1461 = vmatpush1.bf16.msra.mxu0 %v1436
      %1462 = vmatprep.subr.bf16.mxu0 0
      %1463 = vmatpush1.bf16.msra.mxu0 %v1435
      %1464 = vmatprep.subr.bf16.mxu0 0
      %1465 = vmatpush1.bf16.msra.mxu0 %v1434
      %1466 = vmatprep.subr.bf16.mxu0 0
      %1467 = vmatpush2.bf16.msra.mxu0 0
      %1468 = vmatprep.subr.bf16.mxu0 0
      %1469 = vmatpush2.bf16.msra.mxu0 0
      %1470 = vmatprep.subr.bf16.mxu0 0
      %1471 = vmatpush2.bf16.msra.mxu0 0
      %1472 = vmatprep.subr.bf16.mxu0 0
      %1473 = vmatpush2.bf16.msra.mxu0 0
      %1474 = vmatprep.subr.bf16.mxu0 0
      %1475 = vmatpush2.bf16.msra.mxu0 0
      %1476 = vmatprep.subr.bf16.mxu0 0
      %1477 = vmatpush2.bf16.msra.mxu0 0
      %1478 = vmatprep.subr.bf16.mxu0 0
      %1479 = vmatpush2.bf16.msra.mxu0 0
      %1480 = vmatprep.subr.bf16.mxu0 0
      %1481 = vmatpush2.bf16.msra.mxu0 0
      %1482 = vmatprep.mubr.bf16.mxu0 0
      %1483 = vmatmul.mubr.bf16.gmra.mxu0 %v1378
      %v1484 = vpop.f32.mrf.mxu0
      %v1485 = vadd.f32 %v1400, %v1484
      %v1486 = vpop.f32.mrf.mxu0
      %v1487 = vpop.f32.mrf.mxu0
      %v1488 = vpop.f32.mrf.mxu0
      %1489 = vdwg.mxu0
      %v1490 = vadd.f32 %v1272, %v1485
      %1491 = vst.msk [vmem:[%s516] sm:$0xff] %vm521, %v1490
      %p1492 = scmp.lt.s32.totalorder %s27, 1
      %s1493 = scalar_select %p1492, %s27, 1
      %s1494 = smul.addr %s1493, 8
      %s1495 = scalar_lea.vmem %s16, %s1494
      // Predicated region
      $region85: #{gpt_forward.5} parent=83 // pred_check
        %p1496 = pneg %p386
      $region86: #{gpt_forward.5} parent=83 // pred_check_branch
        %1498 = sbr.rel (%p1496) target = $region88
      $region87: #{gpt_forward.5} parent=83 // pred_region
        _
      $region88: #{gpt_forward.5} parent=83 // pred_fallthru
        _
    $region84: #{gpt_forward.5} parent=5 // pred_fallthru
      _
    %p1499 = scmp.le.s32.totalorder 2, %s22
    // Predicated region
    $region89: #{gpt_forward.5} parent=5 // pred_check
      %p1500 = pneg %p1499
    $region90: #{gpt_forward.5} parent=5 // pred_check_branch
      %1502 = sbr.rel (%p1500) target = $region92
    $region91: #{gpt_forward.5} parent=5 // pred_region
      %s1503 = ssub.s32 %s22, 2
      // Predicated region
      $region93: #{gpt_forward.5} parent=91 // pred_check
        %p1504 = pneg %p392
      $region94: #{gpt_forward.5} parent=91 // pred_check_branch
        %1506 = sbr.rel (%p1504) target = $region96
      $region95: #{gpt_forward.5} parent=91 // pred_region
        %p1507 = scmp.lt.s32.totalorder %s28, 1
        %s1508 = scalar_select %p1507, %s28, 1
        %s1509 = smul.addr %s1508, 8
        %s1510 = scalar_lea.vmem %s16, %s1509
      $region96: #{gpt_forward.5} parent=91 // pred_fallthru
        _
    $region92: #{gpt_forward.5} parent=5 // pred_fallthru
      _
  $region6: #{gpt_forward.5} parent=0 // loop_footer
    %s26 = sadd.s32 1, %s22
  $region7: #{gpt_forward.5} parent=0 // loop_footer_branch
    %21 = sbr.rel target = $region3
  $region8: #{gpt_forward.5} parent=0 // loop_exit
    _

// kernel: gpt_forward.6
$region0: #{gpt_forward.6}
  #allocation0 [shape = 'u32[]', space=smem, size = 0x4, offset = 0x4, fixed_abs, tag = 'smem constant byte address 0x4 - core index']
  #allocation1 [shape = 'u32[144,128]{1,0:T(1,128)}', space=vmem, size = 0x12000, scoped, tag = 'internal scratch']
  #allocation2 [shape = 'f32[8,32]{1,0:T(8,128)}', space=vmem, size = 0x1000, scoped, tag = 'scratch operand']
  %s0 = inlined_call_operand.vmem [shape: f32[16,32], index: 0, kind: input, shape index: {}]
  %s1 = inlined_call_operand.vmem [shape: f32[1,32], index: 1, kind: input, shape index: {}]
  %s2 = inlined_call_operand.vmem [shape: f32[1,32], index: 2, kind: input, shape index: {}]
  %s3 = inlined_call_operand.vmem [shape: bf16[32,96], index: 3, kind: input, shape index: {}]
  %s4 = inlined_call_operand.vmem [shape: f32[1,96], index: 4, kind: input, shape index: {}]
  %s5 = inlined_call_operand.vmem [shape: bf16[4,8,32], index: 5, kind: input, shape index: {}]
  %s6 = inlined_call_operand.vmem [shape: f32[1,32], index: 6, kind: input, shape index: {}]
  %s7 = inlined_call_operand.vmem [shape: f32[1,32], index: 7, kind: input, shape index: {}]
  %s8 = inlined_call_operand.vmem [shape: f32[1,32], index: 8, kind: input, shape index: {}]
  %s9 = inlined_call_operand.vmem [shape: bf16[32,128], index: 9, kind: input, shape index: {}]
  %s10 = inlined_call_operand.vmem [shape: f32[1,128], index: 10, kind: input, shape index: {}]
  %s11 = inlined_call_operand.vmem [shape: bf16[128,32], index: 11, kind: input, shape index: {}]
  %s12 = inlined_call_operand.vmem [shape: f32[1,32], index: 12, kind: input, shape index: {}]
  %s13 = inlined_call_operand.vmem [shape: f32[1,32], index: 13, kind: input, shape index: {}]
  %s14 = inlined_call_operand.vmem [shape: f32[1,32], index: 14, kind: input, shape index: {}]
  %s15 = inlined_call_operand.vmem [shape: f32[8,8], index: 15, kind: input, shape index: {}]
  %s16 = inlined_call_operand.vmem [shape: f32[16,32], index: 16, kind: output, shape index: {}]
  %s17 = sld [smem:[#allocation0]]
  $region97: #{gpt_forward.6} parent=0
    _
  %s19 = ssub.s32 1, %s17
  %s20 = scalar_select 0, %s19, %s17
  loop: start=0, step=1, limit=4
  $region2: #{gpt_forward.6} parent=0 // loop_pre_header
    _
  $region3: #{gpt_forward.6} parent=0 // loop_header
    %s22 = sphi 0, %s26
    %p23 = scmp.ge.s32.totalorder %s22, 4
    %s32 = sphi 0, %s34
    %s35 = sphi 0, %s32
    %s36 = sphi 0, %s35
    %s52 = sphi 0, %s36
    %s56 = sphi 0, %s56
    %s58 = sphi 0, %s56
    %s59 = sphi 0, %s58
    %s73 = sphi 0, %s59
    %s77 = sphi 0, %s77
    %s79 = sphi 0, %s77
    %s80 = sphi 0, %s79
    %s94 = sphi 0, %s80
    %s98 = sphi 0, %s98
    %s100 = sphi 0, %s98
    %s101 = sphi 0, %s100
    %s115 = sphi 0, %s101
    %s119 = sphi 0, %s119
    %s121 = sphi 0, %s119
    %s122 = sphi 0, %s121
    %s136 = sphi 0, %s122
    %s140 = sphi 0, %s140
    %s142 = sphi 0, %s140
    %s143 = sphi 0, %s142
    %s157 = sphi 0, %s143
    %s161 = sphi 0, %s161
    %s163 = sphi 0, %s161
    %s164 = sphi 0, %s163
    %s178 = sphi 0, %s164
    %s182 = sphi 0, %s182
    %s184 = sphi 0, %s182
    %s185 = sphi 0, %s184
    %s199 = sphi 0, %s185
    %s203 = sphi 0, %s203
    %s205 = sphi 0, %s203
    %s206 = sphi 0, %s205
    %s220 = sphi 0, %s206
    %s224 = sphi 0, %s224
    %s226 = sphi 0, %s224
    %s227 = sphi 0, %s226
    %s241 = sphi 0, %s227
    %s245 = sphi 0, %s245
    %s247 = sphi 0, %s245
    %s248 = sphi 0, %s247
    %s262 = sphi 0, %s248
    %s266 = sphi 0, %s266
    %s268 = sphi 0, %s266
    %s269 = sphi 0, %s268
    %s283 = sphi 0, %s269
    %s287 = sphi 0, %s287
    %s289 = sphi 0, %s287
    %s290 = sphi 0, %s289
    %s304 = sphi 0, %s290
    %s308 = sphi 0, %s308
    %s310 = sphi 0, %s308
    %s311 = sphi 0, %s310
    %s325 = sphi 0, %s311
    %s329 = sphi 0, %s329
    %s331 = sphi 0, %s329
    %s332 = sphi 0, %s331
    %s346 = sphi 0, %s332
    %s350 = sphi 0, %s350
    %s352 = sphi 0, %s350
    %s353 = sphi 0, %s352
    %s367 = sphi 0, %s353
    %s373 = sphi 0, %s375
    %s376 = sphi 0, %s373
    %s377 = sphi 0, %s376
    %s393 = sphi 0, %s377
  $region4: #{gpt_forward.6} parent=0 // loop_header_branch
    %25 = sbr.rel (%p23) target = $region8
  $region5: #{gpt_forward.6} parent=0 // loop_body
    %s27 = ssub.s32 %s22, 1
    %s28 = ssub.s32 %s22, 2
    %s29 = sadd.s32 %s22, 1
    %s30 = ssub.s32 %s22, %s29
    %p31 = scmp.eq.s32.totalorder %s30, 0
    %s33 = sadd.s32 %s32, 1
    %s34 = scalar_select %p31, %s32, %s33
    %p37 = pneg %p31
    %p38 = scmp.eq.s32.totalorder %s22, 1
    %p39 = por %p37, %p38
    %p40 = scmp.ne.s32.totalorder %s32, %s35
    %p41 = scmp.eq.s32.totalorder %s22, 0
    %p42 = por %p40, %p41
    %p43 = scmp.ne.s32.totalorder %s32, %s35
    %p44 = scmp.eq.s32.totalorder %s27, 1
    %p45 = por %p43, %p44
    %p46 = scmp.ne.s32.totalorder %s35, %s36
    %p47 = scmp.eq.s32.totalorder %s27, 0
    %p48 = por %p46, %p47
    %p49 = scmp.ne.s32.totalorder %s35, %s36
    %p50 = scmp.eq.s32.totalorder %s28, 1
    %p51 = por %p49, %p50
    %p53 = scmp.ne.s32.totalorder %s36, %s52
    %p54 = scmp.eq.s32.totalorder %s28, 0
    %p55 = por %p53, %p54
    %s57 = sadd.s32 %s56, 1
    %p60 = scmp.eq.s32.totalorder %s22, 1
    %p61 = scmp.ne.s32.totalorder %s56, %s58
    %p62 = scmp.eq.s32.totalorder %s22, 0
    %p63 = por %p61, %p62
    %p64 = scmp.ne.s32.totalorder %s56, %s58
    %p65 = scmp.eq.s32.totalorder %s27, 1
    %p66 = por %p64, %p65
    %p67 = scmp.ne.s32.totalorder %s58, %s59
    %p68 = scmp.eq.s32.totalorder %s27, 0
    %p69 = por %p67, %p68
    %p70 = scmp.ne.s32.totalorder %s58, %s59
    %p71 = scmp.eq.s32.totalorder %s28, 1
    %p72 = por %p70, %p71
    %p74 = scmp.ne.s32.totalorder %s59, %s73
    %p75 = scmp.eq.s32.totalorder %s28, 0
    %p76 = por %p74, %p75
    %s78 = sadd.s32 %s77, 1
    %p81 = scmp.eq.s32.totalorder %s22, 1
    %p82 = scmp.ne.s32.totalorder %s77, %s79
    %p83 = scmp.eq.s32.totalorder %s22, 0
    %p84 = por %p82, %p83
    %p85 = scmp.ne.s32.totalorder %s77, %s79
    %p86 = scmp.eq.s32.totalorder %s27, 1
    %p87 = por %p85, %p86
    %p88 = scmp.ne.s32.totalorder %s79, %s80
    %p89 = scmp.eq.s32.totalorder %s27, 0
    %p90 = por %p88, %p89
    %p91 = scmp.ne.s32.totalorder %s79, %s80
    %p92 = scmp.eq.s32.totalorder %s28, 1
    %p93 = por %p91, %p92
    %p95 = scmp.ne.s32.totalorder %s80, %s94
    %p96 = scmp.eq.s32.totalorder %s28, 0
    %p97 = por %p95, %p96
    %s99 = sadd.s32 %s98, 1
    %p102 = scmp.eq.s32.totalorder %s22, 1
    %p103 = scmp.ne.s32.totalorder %s98, %s100
    %p104 = scmp.eq.s32.totalorder %s22, 0
    %p105 = por %p103, %p104
    %p106 = scmp.ne.s32.totalorder %s98, %s100
    %p107 = scmp.eq.s32.totalorder %s27, 1
    %p108 = por %p106, %p107
    %p109 = scmp.ne.s32.totalorder %s100, %s101
    %p110 = scmp.eq.s32.totalorder %s27, 0
    %p111 = por %p109, %p110
    %p112 = scmp.ne.s32.totalorder %s100, %s101
    %p113 = scmp.eq.s32.totalorder %s28, 1
    %p114 = por %p112, %p113
    %p116 = scmp.ne.s32.totalorder %s101, %s115
    %p117 = scmp.eq.s32.totalorder %s28, 0
    %p118 = por %p116, %p117
    %s120 = sadd.s32 %s119, 1
    %p123 = scmp.eq.s32.totalorder %s22, 1
    %p124 = scmp.ne.s32.totalorder %s119, %s121
    %p125 = scmp.eq.s32.totalorder %s22, 0
    %p126 = por %p124, %p125
    %p127 = scmp.ne.s32.totalorder %s119, %s121
    %p128 = scmp.eq.s32.totalorder %s27, 1
    %p129 = por %p127, %p128
    %p130 = scmp.ne.s32.totalorder %s121, %s122
    %p131 = scmp.eq.s32.totalorder %s27, 0
    %p132 = por %p130, %p131
    %p133 = scmp.ne.s32.totalorder %s121, %s122
    %p134 = scmp.eq.s32.totalorder %s28, 1
    %p135 = por %p133, %p134
    %p137 = scmp.ne.s32.totalorder %s122, %s136
    %p138 = scmp.eq.s32.totalorder %s28, 0
    %p139 = por %p137, %p138
    %s141 = sadd.s32 %s140, 1
    %p144 = scmp.eq.s32.totalorder %s22, 1
    %p145 = scmp.ne.s32.totalorder %s140, %s142
    %p146 = scmp.eq.s32.totalorder %s22, 0
    %p147 = por %p145, %p146
    %p148 = scmp.ne.s32.totalorder %s140, %s142
    %p149 = scmp.eq.s32.totalorder %s27, 1
    %p150 = por %p148, %p149
    %p151 = scmp.ne.s32.totalorder %s142, %s143
    %p152 = scmp.eq.s32.totalorder %s27, 0
    %p153 = por %p151, %p152
    %p154 = scmp.ne.s32.totalorder %s142, %s143
    %p155 = scmp.eq.s32.totalorder %s28, 1
    %p156 = por %p154, %p155
    %p158 = scmp.ne.s32.totalorder %s143, %s157
    %p159 = scmp.eq.s32.totalorder %s28, 0
    %p160 = por %p158, %p159
    %s162 = sadd.s32 %s161, 1
    %p165 = scmp.eq.s32.totalorder %s22, 1
    %p166 = scmp.ne.s32.totalorder %s161, %s163
    %p167 = scmp.eq.s32.totalorder %s22, 0
    %p168 = por %p166, %p167
    %p169 = scmp.ne.s32.totalorder %s161, %s163
    %p170 = scmp.eq.s32.totalorder %s27, 1
    %p171 = por %p169, %p170
    %p172 = scmp.ne.s32.totalorder %s163, %s164
    %p173 = scmp.eq.s32.totalorder %s27, 0
    %p174 = por %p172, %p173
    %p175 = scmp.ne.s32.totalorder %s163, %s164
    %p176 = scmp.eq.s32.totalorder %s28, 1
    %p177 = por %p175, %p176
    %p179 = scmp.ne.s32.totalorder %s164, %s178
    %p180 = scmp.eq.s32.totalorder %s28, 0
    %p181 = por %p179, %p180
    %s183 = sadd.s32 %s182, 1
    %p186 = scmp.eq.s32.totalorder %s22, 1
    %p187 = scmp.ne.s32.totalorder %s182, %s184
    %p188 = scmp.eq.s32.totalorder %s22, 0
    %p189 = por %p187, %p188
    %p190 = scmp.ne.s32.totalorder %s182, %s184
    %p191 = scmp.eq.s32.totalorder %s27, 1
    %p192 = por %p190, %p191
    %p193 = scmp.ne.s32.totalorder %s184, %s185
    %p194 = scmp.eq.s32.totalorder %s27, 0
    %p195 = por %p193, %p194
    %p196 = scmp.ne.s32.totalorder %s184, %s185
    %p197 = scmp.eq.s32.totalorder %s28, 1
    %p198 = por %p196, %p197
    %p200 = scmp.ne.s32.totalorder %s185, %s199
    %p201 = scmp.eq.s32.totalorder %s28, 0
    %p202 = por %p200, %p201
    %s204 = sadd.s32 %s203, 1
    %p207 = scmp.eq.s32.totalorder %s22, 1
    %p208 = scmp.ne.s32.totalorder %s203, %s205
    %p209 = scmp.eq.s32.totalorder %s22, 0
    %p210 = por %p208, %p209
    %p211 = scmp.ne.s32.totalorder %s203, %s205
    %p212 = scmp.eq.s32.totalorder %s27, 1
    %p213 = por %p211, %p212
    %p214 = scmp.ne.s32.totalorder %s205, %s206
    %p215 = scmp.eq.s32.totalorder %s27, 0
    %p216 = por %p214, %p215
    %p217 = scmp.ne.s32.totalorder %s205, %s206
    %p218 = scmp.eq.s32.totalorder %s28, 1
    %p219 = por %p217, %p218
    %p221 = scmp.ne.s32.totalorder %s206, %s220
    %p222 = scmp.eq.s32.totalorder %s28, 0
    %p223 = por %p221, %p222
    %s225 = sadd.s32 %s224, 1
    %p228 = scmp.eq.s32.totalorder %s22, 1
    %p229 = scmp.ne.s32.totalorder %s224, %s226
    %p230 = scmp.eq.s32.totalorder %s22, 0
    %p231 = por %p229, %p230
    %p232 = scmp.ne.s32.totalorder %s224, %s226
    %p233 = scmp.eq.s32.totalorder %s27, 1
    %p234 = por %p232, %p233
    %p235 = scmp.ne.s32.totalorder %s226, %s227
    %p236 = scmp.eq.s32.totalorder %s27, 0
    %p237 = por %p235, %p236
    %p238 = scmp.ne.s32.totalorder %s226, %s227
    %p239 = scmp.eq.s32.totalorder %s28, 1
    %p240 = por %p238, %p239
    %p242 = scmp.ne.s32.totalorder %s227, %s241
    %p243 = scmp.eq.s32.totalorder %s28, 0
    %p244 = por %p242, %p243
    %s246 = sadd.s32 %s245, 1
    %p249 = scmp.eq.s32.totalorder %s22, 1
    %p250 = scmp.ne.s32.totalorder %s245, %s247
    %p251 = scmp.eq.s32.totalorder %s22, 0
    %p252 = por %p250, %p251
    %p253 = scmp.ne.s32.totalorder %s245, %s247
    %p254 = scmp.eq.s32.totalorder %s27, 1
    %p255 = por %p253, %p254
    %p256 = scmp.ne.s32.totalorder %s247, %s248
    %p257 = scmp.eq.s32.totalorder %s27, 0
    %p258 = por %p256, %p257
    %p259 = scmp.ne.s32.totalorder %s247, %s248
    %p260 = scmp.eq.s32.totalorder %s28, 1
    %p261 = por %p259, %p260
    %p263 = scmp.ne.s32.totalorder %s248, %s262
    %p264 = scmp.eq.s32.totalorder %s28, 0
    %p265 = por %p263, %p264
    %s267 = sadd.s32 %s266, 1
    %p270 = scmp.eq.s32.totalorder %s22, 1
    %p271 = scmp.ne.s32.totalorder %s266, %s268
    %p272 = scmp.eq.s32.totalorder %s22, 0
    %p273 = por %p271, %p272
    %p274 = scmp.ne.s32.totalorder %s266, %s268
    %p275 = scmp.eq.s32.totalorder %s27, 1
    %p276 = por %p274, %p275
    %p277 = scmp.ne.s32.totalorder %s268, %s269
    %p278 = scmp.eq.s32.totalorder %s27, 0
    %p279 = por %p277, %p278
    %p280 = scmp.ne.s32.totalorder %s268, %s269
    %p281 = scmp.eq.s32.totalorder %s28, 1
    %p282 = por %p280, %p281
    %p284 = scmp.ne.s32.totalorder %s269, %s283
    %p285 = scmp.eq.s32.totalorder %s28, 0
    %p286 = por %p284, %p285
    %s288 = sadd.s32 %s287, 1
    %p291 = scmp.eq.s32.totalorder %s22, 1
    %p292 = scmp.ne.s32.totalorder %s287, %s289
    %p293 = scmp.eq.s32.totalorder %s22, 0
    %p294 = por %p292, %p293
    %p295 = scmp.ne.s32.totalorder %s287, %s289
    %p296 = scmp.eq.s32.totalorder %s27, 1
    %p297 = por %p295, %p296
    %p298 = scmp.ne.s32.totalorder %s289, %s290
    %p299 = scmp.eq.s32.totalorder %s27, 0
    %p300 = por %p298, %p299
    %p301 = scmp.ne.s32.totalorder %s289, %s290
    %p302 = scmp.eq.s32.totalorder %s28, 1
    %p303 = por %p301, %p302
    %p305 = scmp.ne.s32.totalorder %s290, %s304
    %p306 = scmp.eq.s32.totalorder %s28, 0
    %p307 = por %p305, %p306
    %s309 = sadd.s32 %s308, 1
    %p312 = scmp.eq.s32.totalorder %s22, 1
    %p313 = scmp.ne.s32.totalorder %s308, %s310
    %p314 = scmp.eq.s32.totalorder %s22, 0
    %p315 = por %p313, %p314
    %p316 = scmp.ne.s32.totalorder %s308, %s310
    %p317 = scmp.eq.s32.totalorder %s27, 1
    %p318 = por %p316, %p317
    %p319 = scmp.ne.s32.totalorder %s310, %s311
    %p320 = scmp.eq.s32.totalorder %s27, 0
    %p321 = por %p319, %p320
    %p322 = scmp.ne.s32.totalorder %s310, %s311
    %p323 = scmp.eq.s32.totalorder %s28, 1
    %p324 = por %p322, %p323
    %p326 = scmp.ne.s32.totalorder %s311, %s325
    %p327 = scmp.eq.s32.totalorder %s28, 0
    %p328 = por %p326, %p327
    %s330 = sadd.s32 %s329, 1
    %p333 = scmp.eq.s32.totalorder %s22, 1
    %p334 = scmp.ne.s32.totalorder %s329, %s331
    %p335 = scmp.eq.s32.totalorder %s22, 0
    %p336 = por %p334, %p335
    %p337 = scmp.ne.s32.totalorder %s329, %s331
    %p338 = scmp.eq.s32.totalorder %s27, 1
    %p339 = por %p337, %p338
    %p340 = scmp.ne.s32.totalorder %s331, %s332
    %p341 = scmp.eq.s32.totalorder %s27, 0
    %p342 = por %p340, %p341
    %p343 = scmp.ne.s32.totalorder %s331, %s332
    %p344 = scmp.eq.s32.totalorder %s28, 1
    %p345 = por %p343, %p344
    %p347 = scmp.ne.s32.totalorder %s332, %s346
    %p348 = scmp.eq.s32.totalorder %s28, 0
    %p349 = por %p347, %p348
    %s351 = sadd.s32 %s350, 1
    %p354 = scmp.eq.s32.totalorder %s22, 1
    %p355 = scmp.ne.s32.totalorder %s350, %s352
    %p356 = scmp.eq.s32.totalorder %s22, 0
    %p357 = por %p355, %p356
    %p358 = scmp.ne.s32.totalorder %s350, %s352
    %p359 = scmp.eq.s32.totalorder %s27, 1
    %p360 = por %p358, %p359
    %p361 = scmp.ne.s32.totalorder %s352, %s353
    %p362 = scmp.eq.s32.totalorder %s27, 0
    %p363 = por %p361, %p362
    %p364 = scmp.ne.s32.totalorder %s352, %s353
    %p365 = scmp.eq.s32.totalorder %s28, 1
    %p366 = por %p364, %p365
    %p368 = scmp.ne.s32.totalorder %s353, %s367
    %p369 = scmp.eq.s32.totalorder %s28, 0
    %p370 = por %p368, %p369
    %s371 = ssub.s32 %s22, %s29
    %p372 = scmp.eq.s32.totalorder %s371, 0
    %s374 = sadd.s32 %s373, 1
    %s375 = scalar_select %p372, %s373, %s374
    %p378 = pneg %p372
    %p379 = scmp.eq.s32.totalorder %s22, 1
    %p380 = por %p378, %p379
    %p381 = scmp.ne.s32.totalorder %s373, %s376
    %p382 = scmp.eq.s32.totalorder %s22, 0
    %p383 = por %p381, %p382
    %p384 = scmp.ne.s32.totalorder %s373, %s376
    %p385 = scmp.eq.s32.totalorder %s27, 1
    %p386 = por %p384, %p385
    %p387 = scmp.ne.s32.totalorder %s376, %s377
    %p388 = scmp.eq.s32.totalorder %s27, 0
    %p389 = por %p387, %p388
    %p390 = scmp.ne.s32.totalorder %s376, %s377
    %p391 = scmp.eq.s32.totalorder %s28, 1
    %p392 = por %p390, %p391
    %p394 = scmp.ne.s32.totalorder %s377, %s393
    %p395 = scmp.eq.s32.totalorder %s28, 0
    %p396 = por %p394, %p395
    %p397 = scmp.le.s32.totalorder 1, %s22
    %p398 = scmp.lt.s32.totalorder %s22, 3
    %p399 = pnand %p397, %p398
    %p400 = pneg %p399
    // Predicated region
    $region9: #{gpt_forward.6} parent=5 // pred_check
      _
    $region10: #{gpt_forward.6} parent=5 // pred_check_branch
      %402 = sbr.rel (%p399) target = $region12
    $region11: #{gpt_forward.6} parent=5 // pred_region
      %s403 = ssub.s32 %s22, 1
      // Predicated region
      $region13: #{gpt_forward.6} parent=11 // pred_check
        %p404 = pneg %p69
      $region14: #{gpt_forward.6} parent=11 // pred_check_branch
        %406 = sbr.rel (%p404) target = $region16
      $region15: #{gpt_forward.6} parent=11 // pred_region
        _
      $region16: #{gpt_forward.6} parent=11 // pred_fallthru
        _
      // Predicated region
      $region17: #{gpt_forward.6} parent=11 // pred_check
        %p407 = pneg %p90
      $region18: #{gpt_forward.6} parent=11 // pred_check_branch
        %409 = sbr.rel (%p407) target = $region20
      $region19: #{gpt_forward.6} parent=11 // pred_region
        _
      $region20: #{gpt_forward.6} parent=11 // pred_fallthru
        _
      // Predicated region
      $region21: #{gpt_forward.6} parent=11 // pred_check
        %p410 = pneg %p111
      $region22: #{gpt_forward.6} parent=11 // pred_check_branch
        %412 = sbr.rel (%p410) target = $region24
      $region23: #{gpt_forward.6} parent=11 // pred_region
        _
      $region24: #{gpt_forward.6} parent=11 // pred_fallthru
        _
      // Predicated region
      $region25: #{gpt_forward.6} parent=11 // pred_check
        %p413 = pneg %p132
      $region26: #{gpt_forward.6} parent=11 // pred_check_branch
        %415 = sbr.rel (%p413) target = $region28
      $region27: #{gpt_forward.6} parent=11 // pred_region
        _
      $region28: #{gpt_forward.6} parent=11 // pred_fallthru
        _
      // Predicated region
      $region29: #{gpt_forward.6} parent=11 // pred_check
        %p416 = pneg %p153
      $region30: #{gpt_forward.6} parent=11 // pred_check_branch
        %418 = sbr.rel (%p416) target = $region32
      $region31: #{gpt_forward.6} parent=11 // pred_region
        _
      $region32: #{gpt_forward.6} parent=11 // pred_fallthru
        _
      // Predicated region
      $region33: #{gpt_forward.6} parent=11 // pred_check
        %p419 = pneg %p174
      $region34: #{gpt_forward.6} parent=11 // pred_check_branch
        %421 = sbr.rel (%p419) target = $region36
      $region35: #{gpt_forward.6} parent=11 // pred_region
        _
      $region36: #{gpt_forward.6} parent=11 // pred_fallthru
        _
      // Predicated region
      $region37: #{gpt_forward.6} parent=11 // pred_check
        %p422 = pneg %p195
      $region38: #{gpt_forward.6} parent=11 // pred_check_branch
        %424 = sbr.rel (%p422) target = $region40
      $region39: #{gpt_forward.6} parent=11 // pred_region
        _
      $region40: #{gpt_forward.6} parent=11 // pred_fallthru
        _
      // Predicated region
      $region41: #{gpt_forward.6} parent=11 // pred_check
        %p425 = pneg %p216
      $region42: #{gpt_forward.6} parent=11 // pred_check_branch
        %427 = sbr.rel (%p425) target = $region44
      $region43: #{gpt_forward.6} parent=11 // pred_region
        _
      $region44: #{gpt_forward.6} parent=11 // pred_fallthru
        _
      // Predicated region
      $region45: #{gpt_forward.6} parent=11 // pred_check
        %p428 = pneg %p237
      $region46: #{gpt_forward.6} parent=11 // pred_check_branch
        %430 = sbr.rel (%p428) target = $region48
      $region47: #{gpt_forward.6} parent=11 // pred_region
        _
      $region48: #{gpt_forward.6} parent=11 // pred_fallthru
        _
      // Predicated region
      $region49: #{gpt_forward.6} parent=11 // pred_check
        %p431 = pneg %p258
      $region50: #{gpt_forward.6} parent=11 // pred_check_branch
        %433 = sbr.rel (%p431) target = $region52
      $region51: #{gpt_forward.6} parent=11 // pred_region
        _
      $region52: #{gpt_forward.6} parent=11 // pred_fallthru
        _
      // Predicated region
      $region53: #{gpt_forward.6} parent=11 // pred_check
        %p434 = pneg %p279
      $region54: #{gpt_forward.6} parent=11 // pred_check_branch
        %436 = sbr.rel (%p434) target = $region56
      $region55: #{gpt_forward.6} parent=11 // pred_region
        _
      $region56: #{gpt_forward.6} parent=11 // pred_fallthru
        _
      // Predicated region
      $region57: #{gpt_forward.6} parent=11 // pred_check
        %p437 = pneg %p300
      $region58: #{gpt_forward.6} parent=11 // pred_check_branch
        %439 = sbr.rel (%p437) target = $region60
      $region59: #{gpt_forward.6} parent=11 // pred_region
        _
      $region60: #{gpt_forward.6} parent=11 // pred_fallthru
        _
      // Predicated region
      $region61: #{gpt_forward.6} parent=11 // pred_check
        %p440 = pneg %p321
      $region62: #{gpt_forward.6} parent=11 // pred_check_branch
        %442 = sbr.rel (%p440) target = $region64
      $region63: #{gpt_forward.6} parent=11 // pred_region
        _
      $region64: #{gpt_forward.6} parent=11 // pred_fallthru
        _
      // Predicated region
      $region65: #{gpt_forward.6} parent=11 // pred_check
        %p443 = pneg %p342
      $region66: #{gpt_forward.6} parent=11 // pred_check_branch
        %445 = sbr.rel (%p443) target = $region68
      $region67: #{gpt_forward.6} parent=11 // pred_region
        _
      $region68: #{gpt_forward.6} parent=11 // pred_fallthru
        _
      // Predicated region
      $region69: #{gpt_forward.6} parent=11 // pred_check
        %p446 = pneg %p363
      $region70: #{gpt_forward.6} parent=11 // pred_check_branch
        %448 = sbr.rel (%p446) target = $region72
      $region71: #{gpt_forward.6} parent=11 // pred_region
        _
      $region72: #{gpt_forward.6} parent=11 // pred_fallthru
        _
    $region12: #{gpt_forward.6} parent=5 // pred_fallthru
      _
    %p449 = scmp.lt.s32.totalorder %s22, 2
    // Predicated region
    $region73: #{gpt_forward.6} parent=5 // pred_check
      %p450 = pneg %p449
    $region74: #{gpt_forward.6} parent=5 // pred_check_branch
      %452 = sbr.rel (%p450) target = $region76
    $region75: #{gpt_forward.6} parent=5 // pred_region
      // Predicated region
      $region77: #{gpt_forward.6} parent=75 // pred_check
        %p453 = pneg %p42
      $region78: #{gpt_forward.6} parent=75 // pred_check_branch
        %455 = sbr.rel (%p453) target = $region80
      $region79: #{gpt_forward.6} parent=75 // pred_region
        %p456 = scmp.lt.s32.totalorder %s22, 1
        %s457 = scalar_select %p456, %s22, 1
        %s458 = smul.addr %s457, 8
        %s459 = scalar_lea.vmem %s0, %s458
      $region80: #{gpt_forward.6} parent=75 // pred_fallthru
        _
    $region76: #{gpt_forward.6} parent=5 // pred_fallthru
      _
    %p460 = scmp.le.s32.totalorder 1, %s22
    %p461 = scmp.lt.s32.totalorder %s22, 3
    %p462 = pnand %p460, %p461
    %p463 = pneg %p462
    // Predicated region
    $region81: #{gpt_forward.6} parent=5 // pred_check
      _
    $region82: #{gpt_forward.6} parent=5 // pred_check_branch
      %465 = sbr.rel (%p462) target = $region84
    $region83: #{gpt_forward.6} parent=5 // pred_region
      %s466 = ssub.s32 %s22, 1
      %p467 = scmp.lt.s32.totalorder %s27, 1
      %s468 = scalar_select %p467, %s27, 1
      %s469 = smul.addr %s468, 8
      %s470 = scalar_lea.vmem %s0, %s469
      %p471 = pneg %p48
      %p472 = pneg %p45
      %p473 = pneg %p69
      %p474 = pneg %p66
      %p475 = pneg %p90
      %p476 = pneg %p87
      %p477 = pneg %p111
      %p478 = pneg %p108
      %p479 = pneg %p132
      %p480 = pneg %p129
      %p481 = pneg %p153
      %p482 = pneg %p150
      %p483 = pneg %p174
      %p484 = pneg %p171
      %p485 = pneg %p195
      %p486 = pneg %p192
      %p487 = pneg %p216
      %p488 = pneg %p213
      %p489 = pneg %p237
      %p490 = pneg %p234
      %p491 = pneg %p258
      %p492 = pneg %p255
      %p493 = pneg %p279
      %p494 = pneg %p276
      %p495 = pneg %p300
      %p496 = pneg %p297
      %p497 = pneg %p321
      %p498 = pneg %p318
      %p499 = pneg %p342
      %p500 = pneg %p339
      %p501 = pneg %p363
      %p502 = pneg %p360
      %p503 = pneg %p389
      %p504 = pneg %p386
      %p505 = scmp.lt.s32.totalorder %s27, 1
      %s506 = scalar_select %p505, %s27, 1
      %s507 = smul.addr %s506, 8
      %s508 = scalar_lea.vmem %s16, %s507
      %p509 = scmp.lt.s32.totalorder %s27, 1
      %s510 = scalar_select %p509, %s27, 1
      %s511 = smul.addr %s510, 8
      %s512 = scalar_lea.vmem %s0, %s511
      %p513 = scmp.lt.s32.totalorder %s27, 1
      %s514 = scalar_select %p513, %s27, 1
      %s515 = smul.addr %s514, 8
      %s516 = scalar_lea.vmem %s16, %s515
      %v518 = vld [vmem:[%s512] sm:$0xff]
      %v519 = vld [vmem:[%s1] sm:$0x1]
      %v520 = vld [vmem:[%s2] sm:$0x1]
      %vm521 = vcmask 261120
      %v522 = vsel %vm521, %v518, 0.0
      %523 = vadd.xlane.f32.xlu0 %v522
      %v524 = vpop.xlane.xlu0 %523
      %v525 = vrcp.pop 32.0
      %v526 = vmul.f32 %v524, %v525
      %v527 = vsub.f32 %v518, %v526
      %v528 = vmul.f32 %v527, %v527
      %v529 = vsel %vm521, %v528, 0.0
      %530 = vadd.xlane.f32.xlu0 %v529
      %v531 = vpop.xlane.xlu0 %530
      %v532 = vmul.f32 %v531, %v525
      %v533 = vadd.f32 %v532, 1e-05
      %v534 = vrsqrt.pop %v533
      %v535 = vmul.f32 %v527, %v534
      %v537 = vlaneseq
      %v538 = vshrl.u32 %v537, 7
      %v539 = vsub.s32 0, %v538
      %v540 = vrot.slane %v519, %v539
      %v542 = vmul.f32 %v535, %v540
      %v544 = vlaneseq
      %v545 = vshrl.u32 %v544, 7
      %v546 = vsub.s32 0, %v545
      %v547 = vrot.slane %v520, %v546
      %v549 = vadd.f32 %v542, %v547
      %v550 = vpack.c.bf16 %v549, %v549
      %v551 = vld [vmem:[%s3] sm:$0xf]
      %v552 = vld [vmem:[%s3 + $0x4] sm:$0xf]
      %v553 = vld [vmem:[%s3 + $0x8] sm:$0xf]
      %v554 = vld [vmem:[%s3 + $0xc] sm:$0xf]
      %v555 = vld [vmem:[%s4] sm:$0x1]
      %v557 = vlaneseq
      %v558 = vshrl.u32 %v557, 7
      %v559 = vsub.s32 0, %v558
      %v560 = vrot.slane %v555, %v559
      %v566 = vunpack.c.l.b16 %v551
      %v567 = vunpack.c.l.b16 %v552
      %v568 = vunpack.c.l.b16 %v553
      %v569 = vunpack.c.l.b16 %v554
      %v570 = vpack.c.b16 %v567, %v566
      %v571 = vpack.c.b16 %v569, %v568
      %v575 = vsel %vm521, %v550, 0
      %577 = vmatprep.subr.bf16.mxu0 0
      %578 = vmatpush1.bf16.msra.mxu0 0
      %579 = vmatprep.subr.bf16.mxu0 0
      %580 = vmatpush1.bf16.msra.mxu0 0
      %581 = vmatprep.subr.bf16.mxu0 0
      %582 = vmatpush1.bf16.msra.mxu0 0
      %583 = vmatprep.subr.bf16.mxu0 0
      %584 = vmatpush1.bf16.msra.mxu0 0
      %585 = vmatprep.subr.bf16.mxu0 0
      %586 = vmatpush1.bf16.msra.mxu0 0
      %587 = vmatprep.subr.bf16.mxu0 0
      %588 = vmatpush1.bf16.msra.mxu0 0
      %589 = vmatprep.subr.bf16.mxu0 0
      %590 = vmatpush1.bf16.msra.mxu0 %v571
      %591 = vmatprep.subr.bf16.mxu0 0
      %592 = vmatpush1.bf16.msra.mxu0 %v570
      %593 = vmatprep.subr.bf16.mxu0 0
      %594 = vmatpush2.bf16.msra.mxu0 0
      %595 = vmatprep.subr.bf16.mxu0 0
      %596 = vmatpush2.bf16.msra.mxu0 0
      %597 = vmatprep.subr.bf16.mxu0 0
      %598 = vmatpush2.bf16.msra.mxu0 0
      %599 = vmatprep.subr.bf16.mxu0 0
      %600 = vmatpush2.bf16.msra.mxu0 0
      %601 = vmatprep.subr.bf16.mxu0 0
      %602 = vmatpush2.bf16.msra.mxu0 0
      %603 = vmatprep.subr.bf16.mxu0 0
      %604 = vmatpush2.bf16.msra.mxu0 0
      %605 = vmatprep.subr.bf16.mxu0 0
      %606 = vmatpush2.bf16.msra.mxu0 0
      %607 = vmatprep.subr.bf16.mxu0 0
      %608 = vmatpush2.bf16.msra.mxu0 0
      %609 = vmatprep.mubr.bf16.mxu0 0
      %610 = vmatmul.mubr.bf16.gmra.mxu0 %v575
      %v611 = vpop.f32.mrf.mxu0
      %v612 = vadd.f32 %v560, %v611
      %v613 = vpop.f32.mrf.mxu0
      %v614 = vpop.f32.mrf.mxu0
      %v615 = vpop.f32.mrf.mxu0
      %616 = vdwg.mxu0
      %v617 = vpack.c.bf16 %v612, %v612
      %v618 = vld [vmem:[%s15] sm:$0xff]
      %v619 = vld [vmem:[%s5] sm:$0xf]
      %v620 = vld [vmem:[%s5 + $0x4] sm:$0xf]
      %v621 = vld [vmem:[%s5 + $0x8] sm:$0xf]
      %v622 = vld [vmem:[%s5 + $0xc] sm:$0xf]
      %624 = vrot.lane.b32.xlu0 %v617, 120
      %v625 = vpop.permute.xlu0 %624
      %626 = vrot.lane.b32.xlu0 %v617, 112
      %v627 = vpop.permute.xlu0 %626
      %628 = vrot.lane.b32.xlu0 %v617, 104
      %v629 = vpop.permute.xlu0 %628
      %630 = vrot.lane.b32.xlu0 %v617, 96
      %v631 = vpop.permute.xlu0 %630
      %vm632 = vcmask 64512
      %v634 = vsel %vm632, %v617, 0
      %v637 = vsel %vm632, %v631, 0
      %639 = vmatprep.subr.bf16.mxu0 0
      %640 = vmatpush1.bf16.xpose.msra.mxu0 0
      %641 = vmatprep.subr.bf16.mxu0 0
      %642 = vmatpush1.bf16.xpose.msra.mxu0 0
      %643 = vmatprep.subr.bf16.mxu0 0
      %644 = vmatpush1.bf16.xpose.msra.mxu0 0
      %645 = vmatprep.subr.bf16.mxu0 0
      %646 = vmatpush1.bf16.xpose.msra.mxu0 0
      %647 = vmatprep.subr.bf16.mxu0 0
      %648 = vmatpush1.bf16.xpose.msra.mxu0 0
      %649 = vmatprep.subr.bf16.mxu0 0
      %650 = vmatpush1.bf16.xpose.msra.mxu0 0
      %651 = vmatprep.subr.bf16.mxu0 0
      %652 = vmatpush1.bf16.xpose.msra.mxu0 0
      %653 = vmatprep.subr.bf16.mxu0 0
      %654 = vmatpush1.bf16.xpose.msra.mxu0 %v637
      %655 = vmatprep.subr.bf16.mxu0 0
      %656 = vmatpush2.bf16.xpose.msra.mxu0 0
      %657 = vmatprep.subr.bf16.mxu0 0
      %658 = vmatpush2.bf16.xpose.msra.mxu0 0
      %659 = vmatprep.subr.bf16.mxu0 0
      %660 = vmatpush2.bf16.xpose.msra.mxu0 0
      %661 = vmatprep.subr.bf16.mxu0 0
      %662 = vmatpush2.bf16.xpose.msra.mxu0 0
      %663 = vmatprep.subr.bf16.mxu0 0
      %664 = vmatpush2.bf16.xpose.msra.mxu0 0
      %665 = vmatprep.subr.bf16.mxu0 0
      %666 = vmatpush2.bf16.xpose.msra.mxu0 0
      %667 = vmatprep.subr.bf16.mxu0 0
      %668 = vmatpush2.bf16.xpose.msra.mxu0 0
      %669 = vmatprep.subr.bf16.mxu0 0
      %670 = vmatpush2.bf16.xpose.msra.mxu0 0
      %671 = vmatprep.mubr.bf16.mxu0 0
      %672 = vmatmul.mubr.bf16.gmra.mxu0 %v634
      %v673 = vpop.f32.mrf.mxu0
      %v674 = vadd.f32 0.0, %v673
      %v675 = vpop.f32.mrf.mxu0
      %v676 = vpop.f32.mrf.mxu0
      %v677 = vpop.f32.mrf.mxu0
      %678 = vdwg.mxu0
      %679 = vrot.lane.b32.xlu0 %v625, 96
      %v680 = vpop.permute.xlu0 %679
      %v682 = vsel %vm632, %v625, 0
      %v685 = vsel %vm632, %v680, 0
      %687 = vmatprep.subr.bf16.mxu0 0
      %688 = vmatpush1.bf16.xpose.msra.mxu0 0
      %689 = vmatprep.subr.bf16.mxu0 0
      %690 = vmatpush1.bf16.xpose.msra.mxu0 0
      %691 = vmatprep.subr.bf16.mxu0 0
      %692 = vmatpush1.bf16.xpose.msra.mxu0 0
      %693 = vmatprep.subr.bf16.mxu0 0
      %694 = vmatpush1.bf16.xpose.msra.mxu0 0
      %695 = vmatprep.subr.bf16.mxu0 0
      %696 = vmatpush1.bf16.xpose.msra.mxu0 0
      %697 = vmatprep.subr.bf16.mxu0 0
      %698 = vmatpush1.bf16.xpose.msra.mxu0 0
      %699 = vmatprep.subr.bf16.mxu0 0
      %700 = vmatpush1.bf16.xpose.msra.mxu0 0
      %701 = vmatprep.subr.bf16.mxu0 0
      %702 = vmatpush1.bf16.xpose.msra.mxu0 %v685
      %703 = vmatprep.subr.bf16.mxu0 0
      %704 = vmatpush2.bf16.xpose.msra.mxu0 0
      %705 = vmatprep.subr.bf16.mxu0 0
      %706 = vmatpush2.bf16.xpose.msra.mxu0 0
      %707 = vmatprep.subr.bf16.mxu0 0
      %708 = vmatpush2.bf16.xpose.msra.mxu0 0
      %709 = vmatprep.subr.bf16.mxu0 0
      %710 = vmatpush2.bf16.xpose.msra.mxu0 0
      %711 = vmatprep.subr.bf16.mxu0 0
      %712 = vmatpush2.bf16.xpose.msra.mxu0 0
      %713 = vmatprep.subr.bf16.mxu0 0
      %714 = vmatpush2.bf16.xpose.msra.mxu0 0
      %715 = vmatprep.subr.bf16.mxu0 0
      %716 = vmatpush2.bf16.xpose.msra.mxu0 0
      %717 = vmatprep.subr.bf16.mxu0 0
      %718 = vmatpush2.bf16.xpose.msra.mxu0 0
      %719 = vmatprep.mubr.bf16.mxu0 0
      %720 = vmatmul.mubr.bf16.gmra.mxu0 %v682
      %v721 = vpop.f32.mrf.mxu0
      %v722 = vadd.f32 0.0, %v721
      %v723 = vpop.f32.mrf.mxu0
      %v724 = vpop.f32.mrf.mxu0
      %v725 = vpop.f32.mrf.mxu0
      %726 = vdwg.mxu0
      %727 = vrot.lane.b32.xlu0 %v627, 96
      %v728 = vpop.permute.xlu0 %727
      %v730 = vsel %vm632, %v627, 0
      %v733 = vsel %vm632, %v728, 0
      %735 = vmatprep.subr.bf16.mxu0 0
      %736 = vmatpush1.bf16.xpose.msra.mxu0 0
      %737 = vmatprep.subr.bf16.mxu0 0
      %738 = vmatpush1.bf16.xpose.msra.mxu0 0
      %739 = vmatprep.subr.bf16.mxu0 0
      %740 = vmatpush1.bf16.xpose.msra.mxu0 0
      %741 = vmatprep.subr.bf16.mxu0 0
      %742 = vmatpush1.bf16.xpose.msra.mxu0 0
      %743 = vmatprep.subr.bf16.mxu0 0
      %744 = vmatpush1.bf16.xpose.msra.mxu0 0
      %745 = vmatprep.subr.bf16.mxu0 0
      %746 = vmatpush1.bf16.xpose.msra.mxu0 0
      %747 = vmatprep.subr.bf16.mxu0 0
      %748 = vmatpush1.bf16.xpose.msra.mxu0 0
      %749 = vmatprep.subr.bf16.mxu0 0
      %750 = vmatpush1.bf16.xpose.msra.mxu0 %v733
      %751 = vmatprep.subr.bf16.mxu0 0
      %752 = vmatpush2.bf16.xpose.msra.mxu0 0
      %753 = vmatprep.subr.bf16.mxu0 0
      %754 = vmatpush2.bf16.xpose.msra.mxu0 0
      %755 = vmatprep.subr.bf16.mxu0 0
      %756 = vmatpush2.bf16.xpose.msra.mxu0 0
      %757 = vmatprep.subr.bf16.mxu0 0
      %758 = vmatpush2.bf16.xpose.msra.mxu0 0
      %759 = vmatprep.subr.bf16.mxu0 0
      %760 = vmatpush2.bf16.xpose.msra.mxu0 0
      %761 = vmatprep.subr.bf16.mxu0 0
      %762 = vmatpush2.bf16.xpose.msra.mxu0 0
      %763 = vmatprep.subr.bf16.mxu0 0
      %764 = vmatpush2.bf16.xpose.msra.mxu0 0
      %765 = vmatprep.subr.bf16.mxu0 0
      %766 = vmatpush2.bf16.xpose.msra.mxu0 0
      %767 = vmatprep.mubr.bf16.mxu0 0
      %768 = vmatmul.mubr.bf16.gmra.mxu0 %v730
      %v769 = vpop.f32.mrf.mxu0
      %v770 = vadd.f32 0.0, %v769
      %v771 = vpop.f32.mrf.mxu0
      %v772 = vpop.f32.mrf.mxu0
      %v773 = vpop.f32.mrf.mxu0
      %774 = vdwg.mxu0
      %775 = vrot.lane.b32.xlu0 %v629, 96
      %v776 = vpop.permute.xlu0 %775
      %v778 = vsel %vm632, %v629, 0
      %v781 = vsel %vm632, %v776, 0
      %783 = vmatprep.subr.bf16.mxu0 0
      %784 = vmatpush1.bf16.xpose.msra.mxu0 0
      %785 = vmatprep.subr.bf16.mxu0 0
      %786 = vmatpush1.bf16.xpose.msra.mxu0 0
      %787 = vmatprep.subr.bf16.mxu0 0
      %788 = vmatpush1.bf16.xpose.msra.mxu0 0
      %789 = vmatprep.subr.bf16.mxu0 0
      %790 = vmatpush1.bf16.xpose.msra.mxu0 0
      %791 = vmatprep.subr.bf16.mxu0 0
      %792 = vmatpush1.bf16.xpose.msra.mxu0 0
      %793 = vmatprep.subr.bf16.mxu0 0
      %794 = vmatpush1.bf16.xpose.msra.mxu0 0
      %795 = vmatprep.subr.bf16.mxu0 0
      %796 = vmatpush1.bf16.xpose.msra.mxu0 0
      %797 = vmatprep.subr.bf16.mxu0 0
      %798 = vmatpush1.bf16.xpose.msra.mxu0 %v781
      %799 = vmatprep.subr.bf16.mxu0 0
      %800 = vmatpush2.bf16.xpose.msra.mxu0 0
      %801 = vmatprep.subr.bf16.mxu0 0
      %802 = vmatpush2.bf16.xpose.msra.mxu0 0
      %803 = vmatprep.subr.bf16.mxu0 0
      %804 = vmatpush2.bf16.xpose.msra.mxu0 0
      %805 = vmatprep.subr.bf16.mxu0 0
      %806 = vmatpush2.bf16.xpose.msra.mxu0 0
      %807 = vmatprep.subr.bf16.mxu0 0
      %808 = vmatpush2.bf16.xpose.msra.mxu0 0
      %809 = vmatprep.subr.bf16.mxu0 0
      %810 = vmatpush2.bf16.xpose.msra.mxu0 0
      %811 = vmatprep.subr.bf16.mxu0 0
      %812 = vmatpush2.bf16.xpose.msra.mxu0 0
      %813 = vmatprep.subr.bf16.mxu0 0
      %814 = vmatpush2.bf16.xpose.msra.mxu0 0
      %815 = vmatprep.mubr.bf16.mxu0 0
      %816 = vmatmul.mubr.bf16.gmra.mxu0 %v778
      %v817 = vpop.f32.mrf.mxu0
      %v818 = vadd.f32 0.0, %v817
      %v819 = vpop.f32.mrf.mxu0
      %v820 = vpop.f32.mrf.mxu0
      %v821 = vpop.f32.mrf.mxu0
      %822 = vdwg.mxu0
      %v823 = vmul.f32 %v674, 0.35355338
      %v824 = vmul.f32 %v722, 0.35355338
      %v825 = vmul.f32 %v770, 0.35355338
      %v826 = vmul.f32 %v818, 0.35355338
      %v827 = vadd.f32 %v823, %v618
      %v828 = vadd.f32 %v824, %v618
      %v829 = vadd.f32 %v825, %v618
      %v830 = vadd.f32 %v826, %v618
      %v831 = vsel %vm632, %v827, -inf
      %832 = vmax.xlane.f32.xlu0 %v831
      %v833 = vpop.xlane.xlu0 %832
      %v834 = vsel %vm632, %v828, -inf
      %835 = vmax.xlane.f32.xlu0 %v834
      %v836 = vpop.xlane.xlu0 %835
      %v837 = vsel %vm632, %v829, -inf
      %838 = vmax.xlane.f32.xlu0 %v837
      %v839 = vpop.xlane.xlu0 %838
      %v840 = vsel %vm632, %v830, -inf
      %841 = vmax.xlane.f32.xlu0 %v840
      %v842 = vpop.xlane.xlu0 %841
      %v843 = vsub.f32 %v827, %v833
      %v844 = vsub.f32 %v828, %v836
      %v845 = vsub.f32 %v829, %v839
      %v846 = vsub.f32 %v830, %v842
      %v847 = vmul.f32 %v843, 1.442695
      %v848 = vpow.pop %v847
      %v849 = vmul.f32 %v844, 1.442695
      %v850 = vpow.pop %v849
      %v851 = vmul.f32 %v845, 1.442695
      %v852 = vpow.pop %v851
      %v853 = vmul.f32 %v846, 1.442695
      %v854 = vpow.pop %v853
      %v855 = vsel %vm632, %v848, 0.0
      %856 = vadd.xlane.f32.xlu0 %v855
      %v857 = vpop.xlane.xlu0 %856
      %v858 = vsel %vm632, %v850, 0.0
      %859 = vadd.xlane.f32.xlu0 %v858
      %v860 = vpop.xlane.xlu0 %859
      %v861 = vsel %vm632, %v852, 0.0
      %862 = vadd.xlane.f32.xlu0 %v861
      %v863 = vpop.xlane.xlu0 %862
      %v864 = vsel %vm632, %v854, 0.0
      %865 = vadd.xlane.f32.xlu0 %v864
      %v866 = vpop.xlane.xlu0 %865
      %v867 = vrcp.pop %v857
      %v868 = vrcp.pop %v860
      %v869 = vrcp.pop %v863
      %v870 = vrcp.pop %v866
      %v871 = vmul.f32 %v848, %v867
      %v872 = vmul.f32 %v850, %v868
      %v873 = vmul.f32 %v852, %v869
      %v874 = vmul.f32 %v854, %v870
      %v875 = vpack.c.bf16 %v871, %v871
      %v876 = vpack.c.bf16 %v872, %v872
      %v877 = vpack.c.bf16 %v873, %v873
      %v878 = vpack.c.bf16 %v874, %v874
      %879 = vrot.lane.b32.xlu0 %v617, 64
      %v880 = vpop.permute.xlu0 %879
      %v882 = vsel %vm632, %v875, 0
      %vm884 = vcmask 1043456
      %v886 = vsel %vm884, %v880, 0
      %888 = vmatprep.subr.bf16.mxu0 0
      %889 = vmatpush1.bf16.msra.mxu0 0
      %890 = vmatprep.subr.bf16.mxu0 0
      %891 = vmatpush1.bf16.msra.mxu0 0
      %892 = vmatprep.subr.bf16.mxu0 0
      %893 = vmatpush1.bf16.msra.mxu0 0
      %894 = vmatprep.subr.bf16.mxu0 0
      %895 = vmatpush1.bf16.msra.mxu0 0
      %896 = vmatprep.subr.bf16.mxu0 0
      %897 = vmatpush1.bf16.msra.mxu0 0
      %898 = vmatprep.subr.bf16.mxu0 0
      %899 = vmatpush1.bf16.msra.mxu0 0
      %900 = vmatprep.subr.bf16.mxu0 0
      %901 = vmatpush1.bf16.msra.mxu0 0
      %902 = vmatprep.subr.bf16.mxu0 0
      %903 = vmatpush1.bf16.msra.mxu0 %v886
      %904 = vmatprep.subr.bf16.mxu0 0
      %905 = vmatpush2.bf16.msra.mxu0 0
      %906 = vmatprep.subr.bf16.mxu0 0
      %907 = vmatpush2.bf16.msra.mxu0 0
      %908 = vmatprep.subr.bf16.mxu0 0
      %909 = vmatpush2.bf16.msra.mxu0 0
      %910 = vmatprep.subr.bf16.mxu0 0
      %911 = vmatpush2.bf16.msra.mxu0 0
      %912 = vmatprep.subr.bf16.mxu0 0
      %913 = vmatpush2.bf16.msra.mxu0 0
      %914 = vmatprep.subr.bf16.mxu0 0
      %915 = vmatpush2.bf16.msra.mxu0 0
      %916 = vmatprep.subr.bf16.mxu0 0
      %917 = vmatpush2.bf16.msra.mxu0 0
      %918 = vmatprep.subr.bf16.mxu0 0
      %919 = vmatpush2.bf16.msra.mxu0 0
      %920 = vmatprep.mubr.bf16.mxu0 0
      %921 = vmatmul.mubr.bf16.gmra.mxu0 %v882
      %v922 = vpop.f32.mrf.mxu0
      %v923 = vadd.f32 0.0, %v922
      %v924 = vpop.f32.mrf.mxu0
      %v925 = vpop.f32.mrf.mxu0
      %v926 = vpop.f32.mrf.mxu0
      %927 = vdwg.mxu0
      %928 = vrot.lane.b32.xlu0 %v625, 64
      %v929 = vpop.permute.xlu0 %928
      %v931 = vsel %vm632, %v876, 0
      %v934 = vsel %vm884, %v929, 0
      %936 = vmatprep.subr.bf16.mxu0 0
      %937 = vmatpush1.bf16.msra.mxu0 0
      %938 = vmatprep.subr.bf16.mxu0 0
      %939 = vmatpush1.bf16.msra.mxu0 0
      %940 = vmatprep.subr.bf16.mxu0 0
      %941 = vmatpush1.bf16.msra.mxu0 0
      %942 = vmatprep.subr.bf16.mxu0 0
      %943 = vmatpush1.bf16.msra.mxu0 0
      %944 = vmatprep.subr.bf16.mxu0 0
      %945 = vmatpush1.bf16.msra.mxu0 0
      %946 = vmatprep.subr.bf16.mxu0 0
      %947 = vmatpush1.bf16.msra.mxu0 0
      %948 = vmatprep.subr.bf16.mxu0 0
      %949 = vmatpush1.bf16.msra.mxu0 0
      %950 = vmatprep.subr.bf16.mxu0 0
      %951 = vmatpush1.bf16.msra.mxu0 %v934
      %952 = vmatprep.subr.bf16.mxu0 0
      %953 = vmatpush2.bf16.msra.mxu0 0
      %954 = vmatprep.subr.bf16.mxu0 0
      %955 = vmatpush2.bf16.msra.mxu0 0
      %956 = vmatprep.subr.bf16.mxu0 0
      %957 = vmatpush2.bf16.msra.mxu0 0
      %958 = vmatprep.subr.bf16.mxu0 0
      %959 = vmatpush2.bf16.msra.mxu0 0
      %960 = vmatprep.subr.bf16.mxu0 0
      %961 = vmatpush2.bf16.msra.mxu0 0
      %962 = vmatprep.subr.bf16.mxu0 0
      %963 = vmatpush2.bf16.msra.mxu0 0
      %964 = vmatprep.subr.bf16.mxu0 0
      %965 = vmatpush2.bf16.msra.mxu0 0
      %966 = vmatprep.subr.bf16.mxu0 0
      %967 = vmatpush2.bf16.msra.mxu0 0
      %968 = vmatprep.mubr.bf16.mxu0 0
      %969 = vmatmul.mubr.bf16.gmra.mxu0 %v931
      %v970 = vpop.f32.mrf.mxu0
      %v971 = vadd.f32 0.0, %v970
      %v972 = vpop.f32.mrf.mxu0
      %v973 = vpop.f32.mrf.mxu0
      %v974 = vpop.f32.mrf.mxu0
      %975 = vdwg.mxu0
      %976 = vrot.lane.b32.xlu0 %v627, 64
      %v977 = vpop.permute.xlu0 %976
      %v979 = vsel %vm632, %v877, 0
      %v982 = vsel %vm884, %v977, 0
      %984 = vmatprep.subr.bf16.mxu0 0
      %985 = vmatpush1.bf16.msra.mxu0 0
      %986 = vmatprep.subr.bf16.mxu0 0
      %987 = vmatpush1.bf16.msra.mxu0 0
      %988 = vmatprep.subr.bf16.mxu0 0
      %989 = vmatpush1.bf16.msra.mxu0 0
      %990 = vmatprep.subr.bf16.mxu0 0
      %991 = vmatpush1.bf16.msra.mxu0 0
      %992 = vmatprep.subr.bf16.mxu0 0
      %993 = vmatpush1.bf16.msra.mxu0 0
      %994 = vmatprep.subr.bf16.mxu0 0
      %995 = vmatpush1.bf16.msra.mxu0 0
      %996 = vmatprep.subr.bf16.mxu0 0
      %997 = vmatpush1.bf16.msra.mxu0 0
      %998 = vmatprep.subr.bf16.mxu0 0
      %999 = vmatpush1.bf16.msra.mxu0 %v982
      %1000 = vmatprep.subr.bf16.mxu0 0
      %1001 = vmatpush2.bf16.msra.mxu0 0
      %1002 = vmatprep.subr.bf16.mxu0 0
      %1003 = vmatpush2.bf16.msra.mxu0 0
      %1004 = vmatprep.subr.bf16.mxu0 0
      %1005 = vmatpush2.bf16.msra.mxu0 0
      %1006 = vmatprep.subr.bf16.mxu0 0
      %1007 = vmatpush2.bf16.msra.mxu0 0
      %1008 = vmatprep.subr.bf16.mxu0 0
      %1009 = vmatpush2.bf16.msra.mxu0 0
      %1010 = vmatprep.subr.bf16.mxu0 0
      %1011 = vmatpush2.bf16.msra.mxu0 0
      %1012 = vmatprep.subr.bf16.mxu0 0
      %1013 = vmatpush2.bf16.msra.mxu0 0
      %1014 = vmatprep.subr.bf16.mxu0 0
      %1015 = vmatpush2.bf16.msra.mxu0 0
      %1016 = vmatprep.mubr.bf16.mxu0 0
      %1017 = vmatmul.mubr.bf16.gmra.mxu0 %v979
      %v1018 = vpop.f32.mrf.mxu0
      %v1019 = vadd.f32 0.0, %v1018
      %v1020 = vpop.f32.mrf.mxu0
      %v1021 = vpop.f32.mrf.mxu0
      %v1022 = vpop.f32.mrf.mxu0
      %1023 = vdwg.mxu0
      %1024 = vrot.lane.b32.xlu0 %v629, 64
      %v1025 = vpop.permute.xlu0 %1024
      %v1027 = vsel %vm632, %v878, 0
      %v1030 = vsel %vm884, %v1025, 0
      %1032 = vmatprep.subr.bf16.mxu0 0
      %1033 = vmatpush1.bf16.msra.mxu0 0
      %1034 = vmatprep.subr.bf16.mxu0 0
      %1035 = vmatpush1.bf16.msra.mxu0 0
      %1036 = vmatprep.subr.bf16.mxu0 0
      %1037 = vmatpush1.bf16.msra.mxu0 0
      %1038 = vmatprep.subr.bf16.mxu0 0
      %1039 = vmatpush1.bf16.msra.mxu0 0
      %1040 = vmatprep.subr.bf16.mxu0 0
      %1041 = vmatpush1.bf16.msra.mxu0 0
      %1042 = vmatprep.subr.bf16.mxu0 0
      %1043 = vmatpush1.bf16.msra.mxu0 0
      %1044 = vmatprep.subr.bf16.mxu0 0
      %1045 = vmatpush1.bf16.msra.mxu0 0
      %1046 = vmatprep.subr.bf16.mxu0 0
      %1047 = vmatpush1.bf16.msra.mxu0 %v1030
      %1048 = vmatprep.subr.bf16.mxu0 0
      %1049 = vmatpush2.bf16.msra.mxu0 0
      %1050 = vmatprep.subr.bf16.mxu0 0
      %1051 = vmatpush2.bf16.msra.mxu0 0
      %1052 = vmatprep.subr.bf16.mxu0 0
      %1053 = vmatpush2.bf16.msra.mxu0 0
      %1054 = vmatprep.subr.bf16.mxu0 0
      %1055 = vmatpush2.bf16.msra.mxu0 0
      %1056 = vmatprep.subr.bf16.mxu0 0
      %1057 = vmatpush2.bf16.msra.mxu0 0
      %1058 = vmatprep.subr.bf16.mxu0 0
      %1059 = vmatpush2.bf16.msra.mxu0 0
      %1060 = vmatprep.subr.bf16.mxu0 0
      %1061 = vmatpush2.bf16.msra.mxu0 0
      %1062 = vmatprep.subr.bf16.mxu0 0
      %1063 = vmatpush2.bf16.msra.mxu0 0
      %1064 = vmatprep.mubr.bf16.mxu0 0
      %1065 = vmatmul.mubr.bf16.gmra.mxu0 %v1027
      %v1066 = vpop.f32.mrf.mxu0
      %v1067 = vadd.f32 0.0, %v1066
      %v1068 = vpop.f32.mrf.mxu0
      %v1069 = vpop.f32.mrf.mxu0
      %v1070 = vpop.f32.mrf.mxu0
      %1071 = vdwg.mxu0
      %v1072 = vpack.c.bf16 %v923, %v923
      %v1073 = vpack.c.bf16 %v971, %v971
      %v1075 = vsel %vm632, %v1073, 0
      %v1078 = vsel %vm884, %v620, 0
      %1080 = vmatprep.subr.bf16.mxu0 0
      %1081 = vmatpush1.bf16.msra.mxu0 0
      %1082 = vmatprep.subr.bf16.mxu0 0
      %1083 = vmatpush1.bf16.msra.mxu0 0
      %1084 = vmatprep.subr.bf16.mxu0 0
      %1085 = vmatpush1.bf16.msra.mxu0 0
      %1086 = vmatprep.subr.bf16.mxu0 0
      %1087 = vmatpush1.bf16.msra.mxu0 0
      %1088 = vmatprep.subr.bf16.mxu0 0
      %1089 = vmatpush1.bf16.msra.mxu0 0
      %1090 = vmatprep.subr.bf16.mxu0 0
      %1091 = vmatpush1.bf16.msra.mxu0 0
      %1092 = vmatprep.subr.bf16.mxu0 0
      %1093 = vmatpush1.bf16.msra.mxu0 0
      %1094 = vmatprep.subr.bf16.mxu0 0
      %1095 = vmatpush1.bf16.msra.mxu0 %v1078
      %1096 = vmatprep.subr.bf16.mxu0 0
      %1097 = vmatpush2.bf16.msra.mxu0 0
      %1098 = vmatprep.subr.bf16.mxu0 0
      %1099 = vmatpush2.bf16.msra.mxu0 0
      %1100 = vmatprep.subr.bf16.mxu0 0
      %1101 = vmatpush2.bf16.msra.mxu0 0
      %1102 = vmatprep.subr.bf16.mxu0 0
      %1103 = vmatpush2.bf16.msra.mxu0 0
      %1104 = vmatprep.subr.bf16.mxu0 0
      %1105 = vmatpush2.bf16.msra.mxu0 0
      %1106 = vmatprep.subr.bf16.mxu0 0
      %1107 = vmatpush2.bf16.msra.mxu0 0
      %1108 = vmatprep.subr.bf16.mxu0 0
      %1109 = vmatpush2.bf16.msra.mxu0 0
      %1110 = vmatprep.subr.bf16.mxu0 0
      %1111 = vmatpush2.bf16.msra.mxu0 0
      %1112 = vmatprep.mubr.bf16.mxu0 0
      %1113 = vmatmul.mubr.bf16.gmra.mxu0 %v1075
      %v1114 = vpop.f32.mrf.mxu0
      %v1115 = vadd.f32 0.0, %v1114
      %v1116 = vpop.f32.mrf.mxu0
      %v1117 = vpop.f32.mrf.mxu0
      %v1118 = vpop.f32.mrf.mxu0
      %1119 = vdwg.mxu0
      %v1121 = vsel %vm632, %v1072, 0
      %v1124 = vsel %vm884, %v619, 0
      %1126 = vmatprep.subr.bf16.mxu0 0
      %1127 = vmatpush1.bf16.msra.mxu0 0
      %1128 = vmatprep.subr.bf16.mxu0 0
      %1129 = vmatpush1.bf16.msra.mxu0 0
      %1130 = vmatprep.subr.bf16.mxu0 0
      %1131 = vmatpush1.bf16.msra.mxu0 0
      %1132 = vmatprep.subr.bf16.mxu0 0
      %1133 = vmatpush1.bf16.msra.mxu0 0
      %1134 = vmatprep.subr.bf16.mxu0 0
      %1135 = vmatpush1.bf16.msra.mxu0 0
      %1136 = vmatprep.subr.bf16.mxu0 0
      %1137 = vmatpush1.bf16.msra.mxu0 0
      %1138 = vmatprep.subr.bf16.mxu0 0
      %1139 = vmatpush1.bf16.msra.mxu0 0
      %1140 = vmatprep.subr.bf16.mxu0 0
      %1141 = vmatpush1.bf16.msra.mxu0 %v1124
      %1142 = vmatprep.subr.bf16.mxu0 0
      %1143 = vmatpush2.bf16.msra.mxu0 0
      %1144 = vmatprep.subr.bf16.mxu0 0
      %1145 = vmatpush2.bf16.msra.mxu0 0
      %1146 = vmatprep.subr.bf16.mxu0 0
      %1147 = vmatpush2.bf16.msra.mxu0 0
      %1148 = vmatprep.subr.bf16.mxu0 0
      %1149 = vmatpush2.bf16.msra.mxu0 0
      %1150 = vmatprep.subr.bf16.mxu0 0
      %1151 = vmatpush2.bf16.msra.mxu0 0
      %1152 = vmatprep.subr.bf16.mxu0 0
      %1153 = vmatpush2.bf16.msra.mxu0 0
      %1154 = vmatprep.subr.bf16.mxu0 0
      %1155 = vmatpush2.bf16.msra.mxu0 0
      %1156 = vmatprep.subr.bf16.mxu0 0
      %1157 = vmatpush2.bf16.msra.mxu0 0
      %1158 = vmatprep.mubr.bf16.mxu0 0
      %1159 = vmatmul.mubr.bf16.gmra.mxu0 %v1121
      %v1160 = vpop.f32.mrf.mxu0
      %v1161 = vadd.f32 %v1115, %v1160
      %v1162 = vpop.f32.mrf.mxu0
      %v1163 = vpop.f32.mrf.mxu0
      %v1164 = vpop.f32.mrf.mxu0
      %1165 = vdwg.mxu0
      %v1166 = vpack.c.bf16 %v1019, %v1019
      %v1168 = vsel %vm632, %v1166, 0
      %v1171 = vsel %vm884, %v621, 0
      %1173 = vmatprep.subr.bf16.mxu0 0
      %1174 = vmatpush1.bf16.msra.mxu0 0
      %1175 = vmatprep.subr.bf16.mxu0 0
      %1176 = vmatpush1.bf16.msra.mxu0 0
      %1177 = vmatprep.subr.bf16.mxu0 0
      %1178 = vmatpush1.bf16.msra.mxu0 0
      %1179 = vmatprep.subr.bf16.mxu0 0
      %1180 = vmatpush1.bf16.msra.mxu0 0
      %1181 = vmatprep.subr.bf16.mxu0 0
      %1182 = vmatpush1.bf16.msra.mxu0 0
      %1183 = vmatprep.subr.bf16.mxu0 0
      %1184 = vmatpush1.bf16.msra.mxu0 0
      %1185 = vmatprep.subr.bf16.mxu0 0
      %1186 = vmatpush1.bf16.msra.mxu0 0
      %1187 = vmatprep.subr.bf16.mxu0 0
      %1188 = vmatpush1.bf16.msra.mxu0 %v1171
      %1189 = vmatprep.subr.bf16.mxu0 0
      %1190 = vmatpush2.bf16.msra.mxu0 0
      %1191 = vmatprep.subr.bf16.mxu0 0
      %1192 = vmatpush2.bf16.msra.mxu0 0
      %1193 = vmatprep.subr.bf16.mxu0 0
      %1194 = vmatpush2.bf16.msra.mxu0 0
      %1195 = vmatprep.subr.bf16.mxu0 0
      %1196 = vmatpush2.bf16.msra.mxu0 0
      %1197 = vmatprep.subr.bf16.mxu0 0
      %1198 = vmatpush2.bf16.msra.mxu0 0
      %1199 = vmatprep.subr.bf16.mxu0 0
      %1200 = vmatpush2.bf16.msra.mxu0 0
      %1201 = vmatprep.subr.bf16.mxu0 0
      %1202 = vmatpush2.bf16.msra.mxu0 0
      %1203 = vmatprep.subr.bf16.mxu0 0
      %1204 = vmatpush2.bf16.msra.mxu0 0
      %1205 = vmatprep.mubr.bf16.mxu0 0
      %1206 = vmatmul.mubr.bf16.gmra.mxu0 %v1168
      %v1207 = vpop.f32.mrf.mxu0
      %v1208 = vadd.f32 0.0, %v1207
      %v1209 = vpop.f32.mrf.mxu0
      %v1210 = vpop.f32.mrf.mxu0
      %v1211 = vpop.f32.mrf.mxu0
      %1212 = vdwg.mxu0
      %v1213 = vadd.f32 %v1161, %v1208
      %v1214 = vpack.c.bf16 %v1067, %v1067
      %v1216 = vsel %vm632, %v1214, 0
      %v1219 = vsel %vm884, %v622, 0
      %1221 = vmatprep.subr.bf16.mxu0 0
      %1222 = vmatpush1.bf16.msra.mxu0 0
      %1223 = vmatprep.subr.bf16.mxu0 0
      %1224 = vmatpush1.bf16.msra.mxu0 0
      %1225 = vmatprep.subr.bf16.mxu0 0
      %1226 = vmatpush1.bf16.msra.mxu0 0
      %1227 = vmatprep.subr.bf16.mxu0 0
      %1228 = vmatpush1.bf16.msra.mxu0 0
      %1229 = vmatprep.subr.bf16.mxu0 0
      %1230 = vmatpush1.bf16.msra.mxu0 0
      %1231 = vmatprep.subr.bf16.mxu0 0
      %1232 = vmatpush1.bf16.msra.mxu0 0
      %1233 = vmatprep.subr.bf16.mxu0 0
      %1234 = vmatpush1.bf16.msra.mxu0 0
      %1235 = vmatprep.subr.bf16.mxu0 0
      %1236 = vmatpush1.bf16.msra.mxu0 %v1219
      %1237 = vmatprep.subr.bf16.mxu0 0
      %1238 = vmatpush2.bf16.msra.mxu0 0
      %1239 = vmatprep.subr.bf16.mxu0 0
      %1240 = vmatpush2.bf16.msra.mxu0 0
      %1241 = vmatprep.subr.bf16.mxu0 0
      %1242 = vmatpush2.bf16.msra.mxu0 0
      %1243 = vmatprep.subr.bf16.mxu0 0
      %1244 = vmatpush2.bf16.msra.mxu0 0
      %1245 = vmatprep.subr.bf16.mxu0 0
      %1246 = vmatpush2.bf16.msra.mxu0 0
      %1247 = vmatprep.subr.bf16.mxu0 0
      %1248 = vmatpush2.bf16.msra.mxu0 0
      %1249 = vmatprep.subr.bf16.mxu0 0
      %1250 = vmatpush2.bf16.msra.mxu0 0
      %1251 = vmatprep.subr.bf16.mxu0 0
      %1252 = vmatpush2.bf16.msra.mxu0 0
      %1253 = vmatprep.mubr.bf16.mxu0 0
      %1254 = vmatmul.mubr.bf16.gmra.mxu0 %v1216
      %v1255 = vpop.f32.mrf.mxu0
      %v1256 = vadd.f32 0.0, %v1255
      %v1257 = vpop.f32.mrf.mxu0
      %v1258 = vpop.f32.mrf.mxu0
      %v1259 = vpop.f32.mrf.mxu0
      %1260 = vdwg.mxu0
      %v1261 = vadd.f32 %v1213, %v1256
      %1262 = vst.msk [vmem:[#allocation2] sm:$0xff] %vm521, %v1261
      %v1263 = vld [vmem:[#allocation2] sm:$0xff]
      %v1264 = vadd.f32 %v518, %v1263
      %v1265 = vld [vmem:[%s6] sm:$0x1]
      %v1267 = vlaneseq
      %v1268 = vshrl.u32 %v1267, 7
      %v1269 = vsub.s32 0, %v1268
      %v1270 = vrot.slane %v1265, %v1269
      %v1272 = vadd.f32 %v1264, %v1270
      %v1273 = vld [vmem:[%s7] sm:$0x1]
      %v1274 = vld [vmem:[%s8] sm:$0x1]
      %v1275 = vsel %vm521, %v1272, 0.0
      %1276 = vadd.xlane.f32.xlu0 %v1275
      %v1277 = vpop.xlane.xlu0 %1276
      %v1278 = vmul.f32 %v1277, %v525
      %v1279 = vsub.f32 %v1272, %v1278
      %v1280 = vmul.f32 %v1279, %v1279
      %v1281 = vsel %vm521, %v1280, 0.0
      %1282 = vadd.xlane.f32.xlu0 %v1281
      %v1283 = vpop.xlane.xlu0 %1282
      %v1284 = vmul.f32 %v1283, %v525
      %v1285 = vadd.f32 %v1284, 1e-05
      %v1286 = vrsqrt.pop %v1285
      %v1287 = vmul.f32 %v1279, %v1286
      %v1289 = vlaneseq
      %v1290 = vshrl.u32 %v1289, 7
      %v1291 = vsub.s32 0, %v1290
      %v1292 = vrot.slane %v1273, %v1291
      %v1294 = vmul.f32 %v1287, %v1292
      %v1296 = vlaneseq
      %v1297 = vshrl.u32 %v1296, 7
      %v1298 = vsub.s32 0, %v1297
      %v1299 = vrot.slane %v1274, %v1298
      %v1301 = vadd.f32 %v1294, %v1299
      %v1302 = vpack.c.bf16 %v1301, %v1301
      %v1303 = vld [vmem:[%s9] sm:$0xf]
      %v1304 = vld [vmem:[%s9 + $0x4] sm:$0xf]
      %v1305 = vld [vmem:[%s9 + $0x8] sm:$0xf]
      %v1306 = vld [vmem:[%s9 + $0xc] sm:$0xf]
      %v1307 = vld [vmem:[%s10] sm:$0x1]
      %v1309 = vlaneseq
      %v1310 = vshrl.u32 %v1309, 7
      %v1311 = vsub.s32 0, %v1310
      %v1312 = vrot.slane %v1307, %v1311
      %v1318 = vunpack.c.l.b16 %v1303
      %v1319 = vunpack.c.l.b16 %v1304
      %v1320 = vunpack.c.l.b16 %v1305
      %v1321 = vunpack.c.l.b16 %v1306
      %v1322 = vpack.c.b16 %v1319, %v1318
      %v1323 = vpack.c.b16 %v1321, %v1320
      %v1327 = vsel %vm521, %v1302, 0
      %1329 = vmatprep.subr.bf16.mxu0 0
      %1330 = vmatpush1.bf16.msra.mxu0 0
      %1331 = vmatprep.subr.bf16.mxu0 0
      %1332 = vmatpush1.bf16.msra.mxu0 0
      %1333 = vmatprep.subr.bf16.mxu0 0
      %1334 = vmatpush1.bf16.msra.mxu0 0
      %1335 = vmatprep.subr.bf16.mxu0 0
      %1336 = vmatpush1.bf16.msra.mxu0 0
      %1337 = vmatprep.subr.bf16.mxu0 0
      %1338 = vmatpush1.bf16.msra.mxu0 0
      %1339 = vmatprep.subr.bf16.mxu0 0
      %1340 = vmatpush1.bf16.msra.mxu0 0
      %1341 = vmatprep.subr.bf16.mxu0 0
      %1342 = vmatpush1.bf16.msra.mxu0 %v1323
      %1343 = vmatprep.subr.bf16.mxu0 0
      %1344 = vmatpush1.bf16.msra.mxu0 %v1322
      %1345 = vmatprep.subr.bf16.mxu0 0
      %1346 = vmatpush2.bf16.msra.mxu0 0
      %1347 = vmatprep.subr.bf16.mxu0 0
      %1348 = vmatpush2.bf16.msra.mxu0 0
      %1349 = vmatprep.subr.bf16.mxu0 0
      %1350 = vmatpush2.bf16.msra.mxu0 0
      %1351 = vmatprep.subr.bf16.mxu0 0
      %1352 = vmatpush2.bf16.msra.mxu0 0
      %1353 = vmatprep.subr.bf16.mxu0 0
      %1354 = vmatpush2.bf16.msra.mxu0 0
      %1355 = vmatprep.subr.bf16.mxu0 0
      %1356 = vmatpush2.bf16.msra.mxu0 0
      %1357 = vmatprep.subr.bf16.mxu0 0
      %1358 = vmatpush2.bf16.msra.mxu0 0
      %1359 = vmatprep.subr.bf16.mxu0 0
      %1360 = vmatpush2.bf16.msra.mxu0 0
      %1361 = vmatprep.mubr.bf16.mxu0 0
      %1362 = vmatmul.mubr.bf16.gmra.mxu0 %v1327
      %v1363 = vpop.f32.mrf.mxu0
      %v1364 = vadd.f32 %v1312, %v1363
      %v1365 = vpop.f32.mrf.mxu0
      %v1366 = vpop.f32.mrf.mxu0
      %v1367 = vpop.f32.mrf.mxu0
      %1368 = vdwg.mxu0
      %v1369 = vmul.f32 %v1364, 0.5
      %v1370 = vmul.f32 %v1364, 0.044715
      %v1371 = vmul.f32 %v1370, %v1364
      %v1372 = vmul.f32 %v1371, %v1364
      %v1373 = vadd.f32 %v1364, %v1372
      %v1374 = vmul.f32 %v1373, 0.7978846
      %v1375 = vtanh.pop %v1374
      %v1376 = vadd.f32 %v1375, 1.0
      %v1377 = vmul.f32 %v1369, %v1376
      %v1378 = vpack.c.bf16 %v1377, %v1377
      %v1379 = vld [vmem:[%s11] sm:$0xf]
      %v1380 = vld [vmem:[%s11 + $0x4] sm:$0xf]
      %v1381 = vld [vmem:[%s11 + $0x8] sm:$0xf]
      %v1382 = vld [vmem:[%s11 + $0xc] sm:$0xf]
      %v1383 = vld [vmem:[%s11 + $0x10] sm:$0xf]
      %v1384 = vld [vmem:[%s11 + $0x14] sm:$0xf]
      %v1385 = vld [vmem:[%s11 + $0x18] sm:$0xf]
      %v1386 = vld [vmem:[%s11 + $0x1c] sm:$0xf]
      %v1387 = vld [vmem:[%s11 + $0x20] sm:$0xf]
      %v1388 = vld [vmem:[%s11 + $0x24] sm:$0xf]
      %v1389 = vld [vmem:[%s11 + $0x28] sm:$0xf]
      %v1390 = vld [vmem:[%s11 + $0x2c] sm:$0xf]
      %v1391 = vld [vmem:[%s11 + $0x30] sm:$0xf]
      %v1392 = vld [vmem:[%s11 + $0x34] sm:$0xf]
      %v1393 = vld [vmem:[%s11 + $0x38] sm:$0xf]
      %v1394 = vld [vmem:[%s11 + $0x3c] sm:$0xf]
      %v1395 = vld [vmem:[%s12] sm:$0x1]
      %v1397 = vlaneseq
      %v1398 = vshrl.u32 %v1397, 7
      %v1399 = vsub.s32 0, %v1398
      %v1400 = vrot.slane %v1395, %v1399
      %v1418 = vunpack.c.l.b16 %v1379
      %v1419 = vunpack.c.l.b16 %v1380
      %v1420 = vunpack.c.l.b16 %v1381
      %v1421 = vunpack.c.l.b16 %v1382
      %v1422 = vunpack.c.l.b16 %v1383
      %v1423 = vunpack.c.l.b16 %v1384
      %v1424 = vunpack.c.l.b16 %v1385
      %v1425 = vunpack.c.l.b16 %v1386
      %v1426 = vunpack.c.l.b16 %v1387
      %v1427 = vunpack.c.l.b16 %v1388
      %v1428 = vunpack.c.l.b16 %v1389
      %v1429 = vunpack.c.l.b16 %v1390
      %v1430 = vunpack.c.l.b16 %v1391
      %v1431 = vunpack.c.l.b16 %v1392
      %v1432 = vunpack.c.l.b16 %v1393
      %v1433 = vunpack.c.l.b16 %v1394
      %v1434 = vpack.c.b16 %v1419, %v1418
      %v1435 = vpack.c.b16 %v1421, %v1420
      %v1436 = vpack.c.b16 %v1423, %v1422
      %v1437 = vpack.c.b16 %v1425, %v1424
      %v1438 = vpack.c.b16 %v1427, %v1426
      %v1439 = vpack.c.b16 %v1429, %v1428
      %v1440 = vpack.c.b16 %v1431, %v1430
      %v1441 = vpack.c.b16 %v1433, %v1432
      %1450 = vmatprep.subr.bf16.mxu0 0
      %1451 = vmatpush1.bf16.msra.mxu0 %v1441
      %1452 = vmatprep.subr.bf16.mxu0 0
      %1453 = vmatpush1.bf16.msra.mxu0 %v1440
      %1454 = vmatprep.subr.bf16.mxu0 0
      %1455 = vmatpush1.bf16.msra.mxu0 %v1439
      %1456 = vmatprep.subr.bf16.mxu0 0
      %1457 = vmatpush1.bf16.msra.mxu0 %v1438
      %1458 = vmatprep.subr.bf16.mxu0 0
      %1459 = vmatpush1.bf16.msra.mxu0 %v1437
      %1460 = vmatprep.subr.bf16.mxu0 0
      %1461 = vmatpush1.bf16.msra.mxu0 %v1436
      %1462 = vmatprep.subr.bf16.mxu0 0
      %1463 = vmatpush1.bf16.msra.mxu0 %v1435
      %1464 = vmatprep.subr.bf16.mxu0 0
      %1465 = vmatpush1.bf16.msra.mxu0 %v1434
      %1466 = vmatprep.subr.bf16.mxu0 0
      %1467 = vmatpush2.bf16.msra.mxu0 0
      %1468 = vmatprep.subr.bf16.mxu0 0
      %1469 = vmatpush2.bf16.msra.mxu0 0
      %1470 = vmatprep.subr.bf16.mxu0 0
      %1471 = vmatpush2.bf16.msra.mxu0 0
      %1472 = vmatprep.subr.bf16.mxu0 0
      %1473 = vmatpush2.bf16.msra.mxu0 0
      %1474 = vmatprep.subr.bf16.mxu0 0
      %1475 = vmatpush2.bf16.msra.mxu0 0
      %1476 = vmatprep.subr.bf16.mxu0 0
      %1477 = vmatpush2.bf16.msra.mxu0 0
      %1478 = vmatprep.subr.bf16.mxu0 0
      %1479 = vmatpush2.bf16.msra.mxu0 0
      %1480 = vmatprep.subr.bf16.mxu0 0
      %1481 = vmatpush2.bf16.msra.mxu0 0
      %1482 = vmatprep.mubr.bf16.mxu0 0
      %1483 = vmatmul.mubr.bf16.gmra.mxu0 %v1378
      %v1484 = vpop.f32.mrf.mxu0
      %v1485 = vadd.f32 %v1400, %v1484
      %v1486 = vpop.f32.mrf.mxu0
      %v1487 = vpop.f32.mrf.mxu0
      %v1488 = vpop.f32.mrf.mxu0
      %1489 = vdwg.mxu0
      %v1490 = vadd.f32 %v1272, %v1485
      %v1491 = vld [vmem:[%s13] sm:$0x1]
      %v1492 = vld [vmem:[%s14] sm:$0x1]
      %v1493 = vsel %vm521, %v1490, 0.0
      %1494 = vadd.xlane.f32.xlu0 %v1493
      %v1495 = vpop.xlane.xlu0 %1494
      %v1496 = vmul.f32 %v1495, %v525
      %v1497 = vsub.f32 %v1490, %v1496
      %v1498 = vmul.f32 %v1497, %v1497
      %v1499 = vsel %vm521, %v1498, 0.0
      %1500 = vadd.xlane.f32.xlu0 %v1499
      %v1501 = vpop.xlane.xlu0 %1500
      %v1502 = vmul.f32 %v1501, %v525
      %v1503 = vadd.f32 %v1502, 1e-05
      %v1504 = vrsqrt.pop %v1503
      %v1505 = vmul.f32 %v1497, %v1504
      %v1507 = vlaneseq
      %v1508 = vshrl.u32 %v1507, 7
      %v1509 = vsub.s32 0, %v1508
      %v1510 = vrot.slane %v1491, %v1509
      %v1512 = vmul.f32 %v1505, %v1510
      %v1514 = vlaneseq
      %v1515 = vshrl.u32 %v1514, 7
      %v1516 = vsub.s32 0, %v1515
      %v1517 = vrot.slane %v1492, %v1516
      %v1519 = vadd.f32 %v1512, %v1517
      %1520 = vst.msk [vmem:[%s516] sm:$0xff] %vm521, %v1519
      %p1521 = scmp.lt.s32.totalorder %s27, 1
      %s1522 = scalar_select %p1521, %s27, 1
      %s1523 = smul.addr %s1522, 8
      %s1524 = scalar_lea.vmem %s16, %s1523
      // Predicated region
      $region85: #{gpt_forward.6} parent=83 // pred_check
        %p1525 = pneg %p386
      $region86: #{gpt_forward.6} parent=83 // pred_check_branch
        %1527 = sbr.rel (%p1525) target = $region88
      $region87: #{gpt_forward.6} parent=83 // pred_region
        _
      $region88: #{gpt_forward.6} parent=83 // pred_fallthru
        _
    $region84: #{gpt_forward.6} parent=5 // pred_fallthru
      _
    %p1528 = scmp.le.s32.totalorder 2, %s22
    // Predicated region
    $region89: #{gpt_forward.6} parent=5 // pred_check
      %p1529 = pneg %p1528
    $region90: #{gpt_forward.6} parent=5 // pred_check_branch
      %1531 = sbr.rel (%p1529) target = $region92
    $region91: #{gpt_forward.6} parent=5 // pred_region
      %s1532 = ssub.s32 %s22, 2
      // Predicated region
      $region93: #{gpt_forward.6} parent=91 // pred_check
        %p1533 = pneg %p392
      $region94: #{gpt_forward.6} parent=91 // pred_check_branch
        %1535 = sbr.rel (%p1533) target = $region96
      $region95: #{gpt_forward.6} parent=91 // pred_region
        %p1536 = scmp.lt.s32.totalorder %s28, 1
        %s1537 = scalar_select %p1536, %s28, 1
        %s1538 = smul.addr %s1537, 8
        %s1539 = scalar_lea.vmem %s16, %s1538
      $region96: #{gpt_forward.6} parent=91 // pred_fallthru
        _
    $region92: #{gpt_forward.6} parent=5 // pred_fallthru
      _
  $region6: #{gpt_forward.6} parent=0 // loop_footer
    %s26 = sadd.s32 1, %s22
  $region7: #{gpt_forward.6} parent=0 // loop_footer_branch
    %21 = sbr.rel target = $region3
  $region8: #{gpt_forward.6} parent=0 // loop_exit
    _

// kernel: gpt_forward.7
$region0: #{gpt_forward.7}
  #allocation0 [shape = 'u32[]', space=smem, size = 0x4, offset = 0x4, fixed_abs, tag = 'smem constant byte address 0x4 - core index']
  #allocation1 [shape = 'u32[144,128]{1,0:T(1,128)}', space=vmem, size = 0x12000, scoped, tag = 'internal scratch']
  %s0 = inlined_call_operand.vmem [shape: f32[16,32], index: 0, kind: input, shape index: {}]
  %s1 = inlined_call_operand.vmem [shape: bf16[32,16], index: 1, kind: input, shape index: {}]
  %s2 = inlined_call_operand.hbm [shape: f32[16,16], index: 2, kind: output, shape index: {}]
  %s3 = sld [smem:[#allocation0]]
  $region41: #{gpt_forward.7} parent=0
    _
  %s5 = ssub.s32 1, %s3
  %s6 = scalar_select 0, %s5, %s3
  $region1: #{gpt_forward.7} parent=0
    #allocation2 [shape = 'u8[8192]{0}', space=vmem, size = 0x2000, scoped, tag = 'output window, operand 0']
    #allocation3 [shape = 's32[2]{0}', space=sflag, size = 0x8, scoped, tag = 'scoped memory for gpt_forward.7']
    %7 = vsyncpa [#allocation3], 0
    %s8 = scalar_lea.sflag [#allocation3], 1
    %9 = vsyncpa %s8, 0
    loop: start=0, step=1, limit=4
    $region2: #{gpt_forward.7} parent=1 // loop_pre_header
      _
    $region3: #{gpt_forward.7} parent=1 // loop_header
      %s11 = sphi 0, %s15
      %p12 = scmp.ge.s32.totalorder %s11, 4
      %s18 = sphi 0, %s30
      %s19 = sphi 0, %s26
      %s20 = sphi 0, %s18
      %s21 = sphi 0, %s19
      %s22 = sphi 0, %s20
      %s23 = sphi 0, %s21
      %s33 = sphi 0, %s35
      %s36 = sphi 0, %s33
      %s37 = sphi 0, %s36
      %s53 = sphi 0, %s37
      %s59 = sphi 0, %s61
      %s62 = sphi 0, %s59
      %s63 = sphi 0, %s62
      %s79 = sphi 0, %s63
      %s87 = sphi 0, %s89
      %s90 = sphi 0, %s87
      %s91 = sphi 0, %s90
      %s107 = sphi 0, %s91
    $region4: #{gpt_forward.7} parent=1 // loop_header_branch
      %14 = sbr.rel (%p12) target = $region8
    $region5: #{gpt_forward.7} parent=1 // loop_body
      %s16 = ssub.s32 %s11, 1
      %s17 = ssub.s32 %s11, 2
      %s24 = sadd.s32 1, %s19
      %p25 = scmp.ge.s32.totalorder %s24, 2
      %s26 = scalar_select %p25, 0, %s24
      %s27 = sadd.s32 1, %s18
      %s28 = scalar_select %p25, %s27, %s18
      %p29 = scmp.ge.s32.totalorder %s28, 1
      %s30 = scalar_select %p29, 0, %s28
      %s31 = ssub.s32 %s19, %s26
      %p32 = scmp.eq.s32.totalorder %s31, 0
      %s34 = sadd.s32 %s33, 1
      %s35 = scalar_select %p32, %s33, %s34
      %p38 = pneg %p32
      %p39 = scmp.eq.s32.totalorder %s11, 1
      %p40 = por %p38, %p39
      %p41 = scmp.ne.s32.totalorder %s33, %s36
      %p42 = scmp.eq.s32.totalorder %s11, 0
      %p43 = por %p41, %p42
      %p44 = scmp.ne.s32.totalorder %s33, %s36
      %p45 = scmp.eq.s32.totalorder %s16, 1
      %p46 = por %p44, %p45
      %p47 = scmp.ne.s32.totalorder %s36, %s37
      %p48 = scmp.eq.s32.totalorder %s16, 0
      %p49 = por %p47, %p48
      %p50 = scmp.ne.s32.totalorder %s36, %s37
      %p51 = scmp.eq.s32.totalorder %s17, 1
      %p52 = por %p50, %p51
      %p54 = scmp.ne.s32.totalorder %s37, %s53
      %p55 = scmp.eq.s32.totalorder %s17, 0
      %p56 = por %p54, %p55
      %s57 = ssub.s32 %s18, %s30
      %p58 = scmp.eq.s32.totalorder %s57, 0
      %s60 = sadd.s32 %s59, 1
      %s61 = scalar_select %p58, %s59, %s60
      %p64 = pneg %p58
      %p65 = scmp.eq.s32.totalorder %s11, 1
      %p66 = por %p64, %p65
      %p67 = scmp.ne.s32.totalorder %s59, %s62
      %p68 = scmp.eq.s32.totalorder %s11, 0
      %p69 = por %p67, %p68
      %p70 = scmp.ne.s32.totalorder %s59, %s62
      %p71 = scmp.eq.s32.totalorder %s16, 1
      %p72 = por %p70, %p71
      %p73 = scmp.ne.s32.totalorder %s62, %s63
      %p74 = scmp.eq.s32.totalorder %s16, 0
      %p75 = por %p73, %p74
      %p76 = scmp.ne.s32.totalorder %s62, %s63
      %p77 = scmp.eq.s32.totalorder %s17, 1
      %p78 = por %p76, %p77
      %p80 = scmp.ne.s32.totalorder %s63, %s79
      %p81 = scmp.eq.s32.totalorder %s17, 0
      %p82 = por %p80, %p81
      %s83 = ssub.s32 %s19, %s26
      %s84 = ssub.s32 %s18, %s30
      %s85 = sor.u32 %s83, %s84
      %p86 = scmp.eq.s32.totalorder %s85, 0
      %s88 = sadd.s32 %s87, 1
      %s89 = scalar_select %p86, %s87, %s88
      %p92 = pneg %p86
      %p93 = scmp.eq.s32.totalorder %s11, 1
      %p94 = por %p92, %p93
      %p95 = scmp.ne.s32.totalorder %s87, %s90
      %p96 = scmp.eq.s32.totalorder %s11, 0
      %p97 = por %p95, %p96
      %p98 = scmp.ne.s32.totalorder %s87, %s90
      %p99 = scmp.eq.s32.totalorder %s16, 1
      %p100 = por %p98, %p99
      %p101 = scmp.ne.s32.totalorder %s90, %s91
      %p102 = scmp.eq.s32.totalorder %s16, 0
      %p103 = por %p101, %p102
      %p104 = scmp.ne.s32.totalorder %s90, %s91
      %p105 = scmp.eq.s32.totalorder %s17, 1
      %p106 = por %p104, %p105
      %p108 = scmp.ne.s32.totalorder %s91, %s107
      %p109 = scmp.eq.s32.totalorder %s17, 0
      %p110 = por %p108, %p109
      %p111 = scmp.le.s32.totalorder 1, %s11
      %p112 = scmp.lt.s32.totalorder %s11, 3
      %p113 = pnand %p111, %p112
      %p114 = pneg %p113
      // Predicated region
      $region9: #{gpt_forward.7} parent=5 // pred_check
        _
      $region10: #{gpt_forward.7} parent=5 // pred_check_branch
        %116 = sbr.rel (%p113) target = $region12
      $region11: #{gpt_forward.7} parent=5 // pred_region
        %s117 = ssub.s32 %s11, 1
        // Predicated region
        $region13: #{gpt_forward.7} parent=11 // pred_check
          %p118 = pneg %p75
        $region14: #{gpt_forward.7} parent=11 // pred_check_branch
          %120 = sbr.rel (%p118) target = $region16
        $region15: #{gpt_forward.7} parent=11 // pred_region
          %p121 = scmp.lt.s32.totalorder %s20, 0
          %s122 = scalar_select %p121, %s20, 0
          %s123 = smul.addr %s122, 4
          %s124 = scalar_lea.vmem %s1, %s123
        $region16: #{gpt_forward.7} parent=11 // pred_fallthru
          _
      $region12: #{gpt_forward.7} parent=5 // pred_fallthru
        _
      %p125 = scmp.lt.s32.totalorder %s11, 2
      // Predicated region
      $region17: #{gpt_forward.7} parent=5 // pred_check
        %p126 = pneg %p125
      $region18: #{gpt_forward.7} parent=5 // pred_check_branch
        %128 = sbr.rel (%p126) target = $region20
      $region19: #{gpt_forward.7} parent=5 // pred_region
        // Predicated region
        $region21: #{gpt_forward.7} parent=19 // pred_check
          %p129 = pneg %p43
        $region22: #{gpt_forward.7} parent=19 // pred_check_branch
          %131 = sbr.rel (%p129) target = $region24
        $region23: #{gpt_forward.7} parent=19 // pred_region
          %p132 = scmp.lt.s32.totalorder %s19, 1
          %s133 = scalar_select %p132, %s19, 1
          %s134 = smul.addr %s133, 8
          %s135 = scalar_lea.vmem %s0, %s134
        $region24: #{gpt_forward.7} parent=19 // pred_fallthru
          _
      $region20: #{gpt_forward.7} parent=5 // pred_fallthru
        _
      %p136 = scmp.le.s32.totalorder 1, %s11
      %p137 = scmp.lt.s32.totalorder %s11, 3
      %p138 = pnand %p136, %p137
      %p139 = pneg %p138
      // Predicated region
      $region25: #{gpt_forward.7} parent=5 // pred_check
        _
      $region26: #{gpt_forward.7} parent=5 // pred_check_branch
        %141 = sbr.rel (%p138) target = $region28
      $region27: #{gpt_forward.7} parent=5 // pred_region
        %s142 = ssub.s32 %s11, 1
        %p143 = scmp.lt.s32.totalorder %s21, 1
        %s144 = scalar_select %p143, %s21, 1
        %s145 = smul.addr %s144, 8
        %s146 = scalar_lea.vmem %s0, %s145
        %p147 = pneg %p49
        %p148 = pneg %p46
        %p149 = scmp.lt.s32.totalorder %s20, 0
        %s150 = scalar_select %p149, %s20, 0
        %s151 = smul.addr %s150, 4
        %s152 = scalar_lea.vmem %s1, %s151
        %p153 = pneg %p75
        %p154 = pneg %p72
        %p155 = pneg %p103
        %p156 = pneg %p100
        %s157 = sand.u32 %s90, 1
        %s158 = scalar_lea.sflag [#allocation3], %s157
        %s159 = sand.u32 %s90, 1
        %s160 = smul.addr %s159, 8
        %s161 = scalar_lea.vmem [#allocation2], %s160
        %p162 = scmp.lt.s32.totalorder %s21, 1
        %s163 = scalar_select %p162, %s21, 1
        %s164 = smul.addr %s163, 8
        %s165 = scalar_lea.vmem %s0, %s164
        %p166 = scmp.lt.s32.totalorder %s20, 0
        %s167 = scalar_select %p166, %s20, 0
        %s168 = smul.addr %s167, 4
        %s169 = scalar_lea.vmem %s1, %s168
        %v171 = vld [vmem:[%s165] sm:$0xff]
        %v172 = vpack.c.bf16 %v171, %v171
        %v173 = vld [vmem:[%s169] sm:$0xf]
        %v174 = vld [vmem:[%s169 + $0x4] sm:$0xf]
        %v175 = vld [vmem:[%s169 + $0x8] sm:$0xf]
        %v176 = vld [vmem:[%s169 + $0xc] sm:$0xf]
        %v181 = vunpack.c.l.b16 %v173
        %v182 = vunpack.c.l.b16 %v174
        %v183 = vunpack.c.l.b16 %v175
        %v184 = vunpack.c.l.b16 %v176
        %v185 = vpack.c.b16 %v182, %v181
        %v186 = vpack.c.b16 %v184, %v183
        %vm189 = vcmask 261120
        %v191 = vsel %vm189, %v172, 0
        %193 = vmatprep.subr.bf16.mxu0 0
        %194 = vmatpush1.bf16.msra.mxu0 0
        %195 = vmatprep.subr.bf16.mxu0 0
        %196 = vmatpush1.bf16.msra.mxu0 0
        %197 = vmatprep.subr.bf16.mxu0 0
        %198 = vmatpush1.bf16.msra.mxu0 0
        %199 = vmatprep.subr.bf16.mxu0 0
        %200 = vmatpush1.bf16.msra.mxu0 0
        %201 = vmatprep.subr.bf16.mxu0 0
        %202 = vmatpush1.bf16.msra.mxu0 0
        %203 = vmatprep.subr.bf16.mxu0 0
        %204 = vmatpush1.bf16.msra.mxu0 0
        %205 = vmatprep.subr.bf16.mxu0 0
        %206 = vmatpush1.bf16.msra.mxu0 %v186
        %207 = vmatprep.subr.bf16.mxu0 0
        %208 = vmatpush1.bf16.msra.mxu0 %v185
        %209 = vmatprep.subr.bf16.mxu0 0
        %210 = vmatpush2.bf16.msra.mxu0 0
        %211 = vmatprep.subr.bf16.mxu0 0
        %212 = vmatpush2.bf16.msra.mxu0 0
        %213 = vmatprep.subr.bf16.mxu0 0
        %214 = vmatpush2.bf16.msra.mxu0 0
        %215 = vmatprep.subr.bf16.mxu0 0
        %216 = vmatpush2.bf16.msra.mxu0 0
        %217 = vmatprep.subr.bf16.mxu0 0
        %218 = vmatpush2.bf16.msra.mxu0 0
        %219 = vmatprep.subr.bf16.mxu0 0
        %220 = vmatpush2.bf16.msra.mxu0 0
        %221 = vmatprep.subr.bf16.mxu0 0
        %222 = vmatpush2.bf16.msra.mxu0 0
        %223 = vmatprep.subr.bf16.mxu0 0
        %224 = vmatpush2.bf16.msra.mxu0 0
        %225 = vmatprep.mubr.bf16.mxu0 0
        %226 = vmatmul.mubr.bf16.gmra.mxu0 %v191
        %v227 = vpop.f32.mrf.mxu0
        %v228 = vadd.f32 0.0, %v227
        %v229 = vpop.f32.mrf.mxu0
        %v230 = vpop.f32.mrf.mxu0
        %v231 = vpop.f32.mrf.mxu0
        %232 = vdwg.mxu0
        %vm233 = vcmask 130048
        %234 = vst.msk [vmem:[%s161] sm:$0xff] %vm233, %v228
        %s235 = sand.u32 %s90, 1
        %s236 = scalar_lea.sflag [#allocation3], %s235
        %s237 = sand.u32 %s90, 1
        %s238 = smul.addr %s237, 8
        %s239 = scalar_lea.vmem [#allocation2], %s238
        // Predicated region
        $region29: #{gpt_forward.7} parent=27 // pred_check
          %p240 = pneg %p100
        $region30: #{gpt_forward.7} parent=27 // pred_check_branch
          %242 = sbr.rel (%p240) target = $region32
        $region31: #{gpt_forward.7} parent=27 // pred_region
          %s244 = ssub.s32 128, 128
          %245 = vsyncadd %s236, %s244
          %s246 = sadd.s32 %s20, %s21
          %s247 = smul.addr %s246, 128
          %s248 = scalar_lea.hbm %s2, %s247
          %s250 = sshll.u32 %s239, 4
          %s251 = int_to_ptr.vmem [resolvable:$true] %s250
          %253 = dma.vmem_to_hbm [thread:$0]  %s251, 128, %s248, %s236
        $region32: #{gpt_forward.7} parent=27 // pred_fallthru
          _
      $region28: #{gpt_forward.7} parent=5 // pred_fallthru
        _
      %p254 = scmp.le.s32.totalorder 2, %s11
      // Predicated region
      $region33: #{gpt_forward.7} parent=5 // pred_check
        %p255 = pneg %p254
      $region34: #{gpt_forward.7} parent=5 // pred_check_branch
        %257 = sbr.rel (%p255) target = $region36
      $region35: #{gpt_forward.7} parent=5 // pred_region
        %s258 = ssub.s32 %s11, 2
        // Predicated region
        $region37: #{gpt_forward.7} parent=35 // pred_check
          %p259 = pneg %p106
        $region38: #{gpt_forward.7} parent=35 // pred_check_branch
          %261 = sbr.rel (%p259) target = $region40
        $region39: #{gpt_forward.7} parent=35 // pred_region
          %s262 = sand.u32 %s91, 1
          %s263 = scalar_lea.sflag [#allocation3], %s262
          %s264 = sand.u32 %s91, 1
          %s265 = smul.addr %s264, 8
          %s266 = scalar_lea.vmem [#allocation2], %s265
          %267 = dma.done %s263, 128
        $region40: #{gpt_forward.7} parent=35 // pred_fallthru
          _
      $region36: #{gpt_forward.7} parent=5 // pred_fallthru
        _
    $region6: #{gpt_forward.7} parent=1 // loop_footer
      %s15 = sadd.s32 1, %s11
    $region7: #{gpt_forward.7} parent=1 // loop_footer_branch
      %10 = sbr.rel target = $region3
    $region8: #{gpt_forward.7} parent=1 // loop_exit
      _
    %268 = vsyncpa [#allocation3], 1
    %s269 = scalar_lea.sflag [#allocation3], 1
    %270 = vsyncpa %s269, 1

// kernel: gpt_forward.4
$region0: #{gpt_forward.4}
  #allocation0 [shape = 'u32[]', space=smem, size = 0x4, offset = 0x4, fixed_abs, tag = 'smem constant byte address 0x4 - core index']
  #allocation1 [shape = 'u32[144,128]{1,0:T(1,128)}', space=vmem, size = 0x12000, scoped, tag = 'internal scratch']
  %s0 = inlined_call_operand.vmem [shape: f32[16,16], index: 0, kind: input, shape index: {}]
  %s1 = inlined_call_operand.vmem [shape: f32[16,32], index: 1, kind: input, shape index: {}]
  %s2 = inlined_call_operand.vmem [shape: f32[1,32], index: 2, kind: input, shape index: {}]
  %s3 = inlined_call_operand.vmem [shape: f32[8,32], index: 3, kind: input, shape index: {}]
  %s4 = inlined_call_operand.vmem [shape: f32[16,32], index: 4, kind: output, shape index: {}]
  %s5 = sld [smem:[#allocation0]]
  $region49: #{gpt_forward.4} parent=0
    _
  %s7 = ssub.s32 1, %s5
  %s8 = scalar_select 0, %s7, %s5
  loop: start=0, step=1, limit=4
  $region2: #{gpt_forward.4} parent=0 // loop_pre_header
    _
  $region3: #{gpt_forward.4} parent=0 // loop_header
    %s10 = sphi 0, %s14
    %p11 = scmp.ge.s32.totalorder %s10, 4
    %s20 = sphi 0, %s22
    %s23 = sphi 0, %s20
    %s24 = sphi 0, %s23
    %s40 = sphi 0, %s24
    %s44 = sphi 0, %s44
    %s46 = sphi 0, %s44
    %s47 = sphi 0, %s46
    %s61 = sphi 0, %s47
    %s65 = sphi 0, %s65
    %s67 = sphi 0, %s65
    %s68 = sphi 0, %s67
    %s82 = sphi 0, %s68
    %s86 = sphi 0, %s86
    %s88 = sphi 0, %s86
    %s89 = sphi 0, %s88
    %s103 = sphi 0, %s89
    %s109 = sphi 0, %s111
    %s112 = sphi 0, %s109
    %s113 = sphi 0, %s112
    %s129 = sphi 0, %s113
  $region4: #{gpt_forward.4} parent=0 // loop_header_branch
    %13 = sbr.rel (%p11) target = $region8
  $region5: #{gpt_forward.4} parent=0 // loop_body
    %s15 = ssub.s32 %s10, 1
    %s16 = ssub.s32 %s10, 2
    %s17 = sadd.s32 %s10, 1
    %s18 = ssub.s32 %s10, %s17
    %p19 = scmp.eq.s32.totalorder %s18, 0
    %s21 = sadd.s32 %s20, 1
    %s22 = scalar_select %p19, %s20, %s21
    %p25 = pneg %p19
    %p26 = scmp.eq.s32.totalorder %s10, 1
    %p27 = por %p25, %p26
    %p28 = scmp.ne.s32.totalorder %s20, %s23
    %p29 = scmp.eq.s32.totalorder %s10, 0
    %p30 = por %p28, %p29
    %p31 = scmp.ne.s32.totalorder %s20, %s23
    %p32 = scmp.eq.s32.totalorder %s15, 1
    %p33 = por %p31, %p32
    %p34 = scmp.ne.s32.totalorder %s23, %s24
    %p35 = scmp.eq.s32.totalorder %s15, 0
    %p36 = por %p34, %p35
    %p37 = scmp.ne.s32.totalorder %s23, %s24
    %p38 = scmp.eq.s32.totalorder %s16, 1
    %p39 = por %p37, %p38
    %p41 = scmp.ne.s32.totalorder %s24, %s40
    %p42 = scmp.eq.s32.totalorder %s16, 0
    %p43 = por %p41, %p42
    %s45 = sadd.s32 %s44, 1
    %p48 = scmp.eq.s32.totalorder %s10, 1
    %p49 = scmp.ne.s32.totalorder %s44, %s46
    %p50 = scmp.eq.s32.totalorder %s10, 0
    %p51 = por %p49, %p50
    %p52 = scmp.ne.s32.totalorder %s44, %s46
    %p53 = scmp.eq.s32.totalorder %s15, 1
    %p54 = por %p52, %p53
    %p55 = scmp.ne.s32.totalorder %s46, %s47
    %p56 = scmp.eq.s32.totalorder %s15, 0
    %p57 = por %p55, %p56
    %p58 = scmp.ne.s32.totalorder %s46, %s47
    %p59 = scmp.eq.s32.totalorder %s16, 1
    %p60 = por %p58, %p59
    %p62 = scmp.ne.s32.totalorder %s47, %s61
    %p63 = scmp.eq.s32.totalorder %s16, 0
    %p64 = por %p62, %p63
    %s66 = sadd.s32 %s65, 1
    %p69 = scmp.eq.s32.totalorder %s10, 1
    %p70 = scmp.ne.s32.totalorder %s65, %s67
    %p71 = scmp.eq.s32.totalorder %s10, 0
    %p72 = por %p70, %p71
    %p73 = scmp.ne.s32.totalorder %s65, %s67
    %p74 = scmp.eq.s32.totalorder %s15, 1
    %p75 = por %p73, %p74
    %p76 = scmp.ne.s32.totalorder %s67, %s68
    %p77 = scmp.eq.s32.totalorder %s15, 0
    %p78 = por %p76, %p77
    %p79 = scmp.ne.s32.totalorder %s67, %s68
    %p80 = scmp.eq.s32.totalorder %s16, 1
    %p81 = por %p79, %p80
    %p83 = scmp.ne.s32.totalorder %s68, %s82
    %p84 = scmp.eq.s32.totalorder %s16, 0
    %p85 = por %p83, %p84
    %s87 = sadd.s32 %s86, 1
    %p90 = scmp.eq.s32.totalorder %s10, 1
    %p91 = scmp.ne.s32.totalorder %s86, %s88
    %p92 = scmp.eq.s32.totalorder %s10, 0
    %p93 = por %p91, %p92
    %p94 = scmp.ne.s32.totalorder %s86, %s88
    %p95 = scmp.eq.s32.totalorder %s15, 1
    %p96 = por %p94, %p95
    %p97 = scmp.ne.s32.totalorder %s88, %s89
    %p98 = scmp.eq.s32.totalorder %s15, 0
    %p99 = por %p97, %p98
    %p100 = scmp.ne.s32.totalorder %s88, %s89
    %p101 = scmp.eq.s32.totalorder %s16, 1
    %p102 = por %p100, %p101
    %p104 = scmp.ne.s32.totalorder %s89, %s103
    %p105 = scmp.eq.s32.totalorder %s16, 0
    %p106 = por %p104, %p105
    %s107 = ssub.s32 %s10, %s17
    %p108 = scmp.eq.s32.totalorder %s107, 0
    %s110 = sadd.s32 %s109, 1
    %s111 = scalar_select %p108, %s109, %s110
    %p114 = pneg %p108
    %p115 = scmp.eq.s32.totalorder %s10, 1
    %p116 = por %p114, %p115
    %p117 = scmp.ne.s32.totalorder %s109, %s112
    %p118 = scmp.eq.s32.totalorder %s10, 0
    %p119 = por %p117, %p118
    %p120 = scmp.ne.s32.totalorder %s109, %s112
    %p121 = scmp.eq.s32.totalorder %s15, 1
    %p122 = por %p120, %p121
    %p123 = scmp.ne.s32.totalorder %s112, %s113
    %p124 = scmp.eq.s32.totalorder %s15, 0
    %p125 = por %p123, %p124
    %p126 = scmp.ne.s32.totalorder %s112, %s113
    %p127 = scmp.eq.s32.totalorder %s16, 1
    %p128 = por %p126, %p127
    %p130 = scmp.ne.s32.totalorder %s113, %s129
    %p131 = scmp.eq.s32.totalorder %s16, 0
    %p132 = por %p130, %p131
    %p133 = scmp.le.s32.totalorder 1, %s10
    %p134 = scmp.lt.s32.totalorder %s10, 3
    %p135 = pnand %p133, %p134
    %p136 = pneg %p135
    // Predicated region
    $region9: #{gpt_forward.4} parent=5 // pred_check
      _
    $region10: #{gpt_forward.4} parent=5 // pred_check_branch
      %138 = sbr.rel (%p135) target = $region12
    $region11: #{gpt_forward.4} parent=5 // pred_region
      %s139 = ssub.s32 %s10, 1
      // Predicated region
      $region13: #{gpt_forward.4} parent=11 // pred_check
        %p140 = pneg %p57
      $region14: #{gpt_forward.4} parent=11 // pred_check_branch
        %142 = sbr.rel (%p140) target = $region16
      $region15: #{gpt_forward.4} parent=11 // pred_region
        _
      $region16: #{gpt_forward.4} parent=11 // pred_fallthru
        _
      // Predicated region
      $region17: #{gpt_forward.4} parent=11 // pred_check
        %p143 = pneg %p78
      $region18: #{gpt_forward.4} parent=11 // pred_check_branch
        %145 = sbr.rel (%p143) target = $region20
      $region19: #{gpt_forward.4} parent=11 // pred_region
        _
      $region20: #{gpt_forward.4} parent=11 // pred_fallthru
        _
      // Predicated region
      $region21: #{gpt_forward.4} parent=11 // pred_check
        %p146 = pneg %p99
      $region22: #{gpt_forward.4} parent=11 // pred_check_branch
        %148 = sbr.rel (%p146) target = $region24
      $region23: #{gpt_forward.4} parent=11 // pred_region
        _
      $region24: #{gpt_forward.4} parent=11 // pred_fallthru
        _
    $region12: #{gpt_forward.4} parent=5 // pred_fallthru
      _
    %p149 = scmp.lt.s32.totalorder %s10, 2
    // Predicated region
    $region25: #{gpt_forward.4} parent=5 // pred_check
      %p150 = pneg %p149
    $region26: #{gpt_forward.4} parent=5 // pred_check_branch
      %152 = sbr.rel (%p150) target = $region28
    $region27: #{gpt_forward.4} parent=5 // pred_region
      // Predicated region
      $region29: #{gpt_forward.4} parent=27 // pred_check
        %p153 = pneg %p30
      $region30: #{gpt_forward.4} parent=27 // pred_check_branch
        %155 = sbr.rel (%p153) target = $region32
      $region31: #{gpt_forward.4} parent=27 // pred_region
        %p156 = scmp.lt.s32.totalorder %s10, 1
        %s157 = scalar_select %p156, %s10, 1
        %s158 = smul.addr %s157, 8
        %s159 = scalar_lea.vmem %s0, %s158
      $region32: #{gpt_forward.4} parent=27 // pred_fallthru
        _
    $region28: #{gpt_forward.4} parent=5 // pred_fallthru
      _
    %p160 = scmp.le.s32.totalorder 1, %s10
    %p161 = scmp.lt.s32.totalorder %s10, 3
    %p162 = pnand %p160, %p161
    %p163 = pneg %p162
    // Predicated region
    $region33: #{gpt_forward.4} parent=5 // pred_check
      _
    $region34: #{gpt_forward.4} parent=5 // pred_check_branch
      %165 = sbr.rel (%p162) target = $region36
    $region35: #{gpt_forward.4} parent=5 // pred_region
      %s166 = ssub.s32 %s10, 1
      %p167 = scmp.lt.s32.totalorder %s15, 1
      %s168 = scalar_select %p167, %s15, 1
      %s169 = smul.addr %s168, 8
      %s170 = scalar_lea.vmem %s0, %s169
      %p171 = pneg %p36
      %p172 = pneg %p33
      %p173 = pneg %p57
      %p174 = pneg %p54
      %p175 = pneg %p78
      %p176 = pneg %p75
      %p177 = pneg %p99
      %p178 = pneg %p96
      %p179 = pneg %p125
      %p180 = pneg %p122
      %p181 = scmp.lt.s32.totalorder %s15, 1
      %s182 = scalar_select %p181, %s15, 1
      %s183 = smul.addr %s182, 8
      %s184 = scalar_lea.vmem %s4, %s183
      %p185 = scmp.lt.s32.totalorder %s15, 1
      %s186 = scalar_select %p185, %s15, 1
      %s187 = smul.addr %s186, 8
      %s188 = scalar_lea.vmem %s0, %s187
      %p189 = scmp.lt.s32.totalorder %s15, 1
      %s190 = scalar_select %p189, %s15, 1
      %s191 = smul.addr %s190, 8
      %s192 = scalar_lea.vmem %s4, %s191
      %v193 = vld [vmem:[%s188] sm:$0xff]
      %v194 = vld [vmem:[%s1] sm:$0xff]
      %v195 = vld [vmem:[%s1 + $0x8] sm:$0xff]
      %v196 = vld [vmem:[%s2] sm:$0x1]
      %v198 = vlaneseq
      %v199 = vshrl.u32 %v198, 7
      %v200 = vsub.s32 0, %v199
      %v201 = vrot.slane %v196, %v200
      %vm203 = vcmask 130048
      %v205 = vsel %vm203, %v193, 0
      %207 = vmatprep.subr.mxu0 0.0
      %208 = vmatpush1.msra.mxu0 0.0
      %209 = vmatprep.subr.mxu0 0.0
      %210 = vmatpush1.msra.mxu0 0.0
      %211 = vmatprep.subr.mxu0 0.0
      %212 = vmatpush1.msra.mxu0 0.0
      %213 = vmatprep.subr.mxu0 0.0
      %214 = vmatpush1.msra.mxu0 0.0
      %215 = vmatprep.subr.mxu0 0.0
      %216 = vmatpush1.msra.mxu0 0.0
      %217 = vmatprep.subr.mxu0 0.0
      %218 = vmatpush1.msra.mxu0 0.0
      %219 = vmatprep.subr.mxu0 0.0
      %220 = vmatpush1.msra.mxu0 0.0
      %221 = vmatprep.subr.mxu0 0.0
      %222 = vmatpush1.msra.mxu0 0.0
      %223 = vmatprep.subr.mxu0 0.0
      %224 = vmatpush1.msra.mxu0 0.0
      %225 = vmatprep.subr.mxu0 0.0
      %226 = vmatpush1.msra.mxu0 0.0
      %227 = vmatprep.subr.mxu0 0.0
      %228 = vmatpush1.msra.mxu0 0.0
      %229 = vmatprep.subr.mxu0 0.0
      %230 = vmatpush1.msra.mxu0 0.0
      %231 = vmatprep.subr.mxu0 0.0
      %232 = vmatpush1.msra.mxu0 0.0
      %233 = vmatprep.subr.mxu0 0.0
      %234 = vmatpush1.msra.mxu0 0.0
      %235 = vmatprep.subr.mxu0 0.0
      %236 = vmatpush1.msra.mxu0 %v195
      %237 = vmatprep.subr.mxu0 0.0
      %238 = vmatpush1.msra.mxu0 %v194
      %239 = vmatprep.subr.mxu0 0.0
      %240 = vmatpush2.msra.mxu0 0.0
      %241 = vmatprep.subr.mxu0 0.0
      %242 = vmatpush2.msra.mxu0 0.0
      %243 = vmatprep.subr.mxu0 0.0
      %244 = vmatpush2.msra.mxu0 0.0
      %245 = vmatprep.subr.mxu0 0.0
      %246 = vmatpush2.msra.mxu0 0.0
      %247 = vmatprep.subr.mxu0 0.0
      %248 = vmatpush2.msra.mxu0 0.0
      %249 = vmatprep.subr.mxu0 0.0
      %250 = vmatpush2.msra.mxu0 0.0
      %251 = vmatprep.subr.mxu0 0.0
      %252 = vmatpush2.msra.mxu0 0.0
      %253 = vmatprep.subr.mxu0 0.0
      %254 = vmatpush2.msra.mxu0 0.0
      %255 = vmatprep.subr.mxu0 0.0
      %256 = vmatpush2.msra.mxu0 0.0
      %257 = vmatprep.subr.mxu0 0.0
      %258 = vmatpush2.msra.mxu0 0.0
      %259 = vmatprep.subr.mxu0 0.0
      %260 = vmatpush2.msra.mxu0 0.0
      %261 = vmatprep.subr.mxu0 0.0
      %262 = vmatpush2.msra.mxu0 0.0
      %263 = vmatprep.subr.mxu0 0.0
      %264 = vmatpush2.msra.mxu0 0.0
      %265 = vmatprep.subr.mxu0 0.0
      %266 = vmatpush2.msra.mxu0 0.0
      %267 = vmatprep.subr.mxu0 0.0
      %268 = vmatpush2.msra.mxu0 0.0
      %269 = vmatprep.subr.mxu0 0.0
      %270 = vmatpush2.msra.mxu0 0.0
      %271 = vmatprep.mubr.f32.mxu0 0.0
      %272 = vmatmul.mubr.f32.gmra.mxu0 %v205
      %v273 = vpop.f32.mrf.mxu0
      %v274 = vadd.f32 %v201, %v273
      %v275 = vpop.f32.mrf.mxu0
      %276 = vdwg.mxu0
      %v277 = vld [vmem:[%s3] sm:$0xff]
      %v278 = vadd.f32 %v274, %v277
      %vm279 = vcmask 261120
      %280 = vst.msk [vmem:[%s192] sm:$0xff] %vm279, %v278
      %p281 = scmp.lt.s32.totalorder %s15, 1
      %s282 = scalar_select %p281, %s15, 1
      %s283 = smul.addr %s282, 8
      %s284 = scalar_lea.vmem %s4, %s283
      // Predicated region
      $region37: #{gpt_forward.4} parent=35 // pred_check
        %p285 = pneg %p122
      $region38: #{gpt_forward.4} parent=35 // pred_check_branch
        %287 = sbr.rel (%p285) target = $region40
      $region39: #{gpt_forward.4} parent=35 // pred_region
        _
      $region40: #{gpt_forward.4} parent=35 // pred_fallthru
        _
    $region36: #{gpt_forward.4} parent=5 // pred_fallthru
      _
    %p288 = scmp.le.s32.totalorder 2, %s10
    // Predicated region
    $region41: #{gpt_forward.4} parent=5 // pred_check
      %p289 = pneg %p288
    $region42: #{gpt_forward.4} parent=5 // pred_check_branch
      %291 = sbr.rel (%p289) target = $region44
    $region43: #{gpt_forward.4} parent=5 // pred_region
      %s292 = ssub.s32 %s10, 2
      // Predicated region
      $region45: #{gpt_forward.4} parent=43 // pred_check
        %p293 = pneg %p128
      $region46: #{gpt_forward.4} parent=43 // pred_check_branch
        %295 = sbr.rel (%p293) target = $region48
      $region47: #{gpt_forward.4} parent=43 // pred_region
        %p296 = scmp.lt.s32.totalorder %s16, 1
        %s297 = scalar_select %p296, %s16, 1
        %s298 = smul.addr %s297, 8
        %s299 = scalar_lea.vmem %s4, %s298
      $region48: #{gpt_forward.4} parent=43 // pred_fallthru
        _
    $region44: #{gpt_forward.4} parent=5 // pred_fallthru
      _
  $region6: #{gpt_forward.4} parent=0 // loop_footer
    %s14 = sadd.s32 1, %s10
  $region7: #{gpt_forward.4} parent=0 // loop_footer_branch
    %9 = sbr.rel target = $region3
  $region8: #{gpt_forward.4} parent=0 // loop_exit
    _

// kernel: gpt_forward.7
$region0: #{gpt_forward.7}
  #allocation0 [shape = 'u32[]', space=smem, size = 0x4, offset = 0x4, fixed_abs, tag = 'smem constant byte address 0x4 - core index']
  #allocation1 [shape = 'u32[144,128]{1,0:T(1,128)}', space=vmem, size = 0x12000, scoped, tag = 'internal scratch']
  %s0 = inlined_call_operand.vmem [shape: f32[16,32], index: 0, kind: input, shape index: {}]
  %s1 = inlined_call_operand.vmem [shape: bf16[32,16], index: 1, kind: input, shape index: {}]
  %s2 = inlined_call_operand.hbm [shape: f32[16,16], index: 2, kind: output, shape index: {}]
  %s3 = sld [smem:[#allocation0]]
  $region41: #{gpt_forward.7} parent=0
    _
  %s5 = ssub.s32 1, %s3
  %s6 = scalar_select 0, %s5, %s3
  $region1: #{gpt_forward.7} parent=0
    #allocation2 [shape = 'u8[8192]{0}', space=vmem, size = 0x2000, scoped, tag = 'output window, operand 0']
    #allocation3 [shape = 's32[2]{0}', space=sflag, size = 0x8, scoped, tag = 'scoped memory for gpt_forward.7']
    %7 = vsyncpa [#allocation3], 0
    %s8 = scalar_lea.sflag [#allocation3], 1
    %9 = vsyncpa %s8, 0
    loop: start=0, step=1, limit=4
    $region2: #{gpt_forward.7} parent=1 // loop_pre_header
      _
    $region3: #{gpt_forward.7} parent=1 // loop_header
      %s11 = sphi 0, %s15
      %p12 = scmp.ge.s32.totalorder %s11, 4
      %s18 = sphi 0, %s30
      %s19 = sphi 0, %s26
      %s20 = sphi 0, %s18
      %s21 = sphi 0, %s19
      %s22 = sphi 0, %s20
      %s23 = sphi 0, %s21
      %s33 = sphi 0, %s35
      %s36 = sphi 0, %s33
      %s37 = sphi 0, %s36
      %s53 = sphi 0, %s37
      %s59 = sphi 0, %s61
      %s62 = sphi 0, %s59
      %s63 = sphi 0, %s62
      %s79 = sphi 0, %s63
      %s87 = sphi 0, %s89
      %s90 = sphi 0, %s87
      %s91 = sphi 0, %s90
      %s107 = sphi 0, %s91
    $region4: #{gpt_forward.7} parent=1 // loop_header_branch
      %14 = sbr.rel (%p12) target = $region8
    $region5: #{gpt_forward.7} parent=1 // loop_body
      %s16 = ssub.s32 %s11, 1
      %s17 = ssub.s32 %s11, 2
      %s24 = sadd.s32 1, %s19
      %p25 = scmp.ge.s32.totalorder %s24, 2
      %s26 = scalar_select %p25, 0, %s24
      %s27 = sadd.s32 1, %s18
      %s28 = scalar_select %p25, %s27, %s18
      %p29 = scmp.ge.s32.totalorder %s28, 1
      %s30 = scalar_select %p29, 0, %s28
      %s31 = ssub.s32 %s19, %s26
      %p32 = scmp.eq.s32.totalorder %s31, 0
      %s34 = sadd.s32 %s33, 1
      %s35 = scalar_select %p32, %s33, %s34
      %p38 = pneg %p32
      %p39 = scmp.eq.s32.totalorder %s11, 1
      %p40 = por %p38, %p39
      %p41 = scmp.ne.s32.totalorder %s33, %s36
      %p42 = scmp.eq.s32.totalorder %s11, 0
      %p43 = por %p41, %p42
      %p44 = scmp.ne.s32.totalorder %s33, %s36
      %p45 = scmp.eq.s32.totalorder %s16, 1
      %p46 = por %p44, %p45
      %p47 = scmp.ne.s32.totalorder %s36, %s37
      %p48 = scmp.eq.s32.totalorder %s16, 0
      %p49 = por %p47, %p48
      %p50 = scmp.ne.s32.totalorder %s36, %s37
      %p51 = scmp.eq.s32.totalorder %s17, 1
      %p52 = por %p50, %p51
      %p54 = scmp.ne.s32.totalorder %s37, %s53
      %p55 = scmp.eq.s32.totalorder %s17, 0
      %p56 = por %p54, %p55
      %s57 = ssub.s32 %s18, %s30
      %p58 = scmp.eq.s32.totalorder %s57, 0
      %s60 = sadd.s32 %s59, 1
      %s61 = scalar_select %p58, %s59, %s60
      %p64 = pneg %p58
      %p65 = scmp.eq.s32.totalorder %s11, 1
      %p66 = por %p64, %p65
      %p67 = scmp.ne.s32.totalorder %s59, %s62
      %p68 = scmp.eq.s32.totalorder %s11, 0
      %p69 = por %p67, %p68
      %p70 = scmp.ne.s32.totalorder %s59, %s62
      %p71 = scmp.eq.s32.totalorder %s16, 1
      %p72 = por %p70, %p71
      %p73 = scmp.ne.s32.totalorder %s62, %s63
      %p74 = scmp.eq.s32.totalorder %s16, 0
      %p75 = por %p73, %p74
      %p76 = scmp.ne.s32.totalorder %s62, %s63
      %p77 = scmp.eq.s32.totalorder %s17, 1
      %p78 = por %p76, %p77
      %p80 = scmp.ne.s32.totalorder %s63, %s79
      %p81 = scmp.eq.s32.totalorder %s17, 0
      %p82 = por %p80, %p81
      %s83 = ssub.s32 %s19, %s26
      %s84 = ssub.s32 %s18, %s30
      %s85 = sor.u32 %s83, %s84
      %p86 = scmp.eq.s32.totalorder %s85, 0
      %s88 = sadd.s32 %s87, 1
      %s89 = scalar_select %p86, %s87, %s88
      %p92 = pneg %p86
      %p93 = scmp.eq.s32.totalorder %s11, 1
      %p94 = por %p92, %p93
      %p95 = scmp.ne.s32.totalorder %s87, %s90
      %p96 = scmp.eq.s32.totalorder %s11, 0
      %p97 = por %p95, %p96
      %p98 = scmp.ne.s32.totalorder %s87, %s90
      %p99 = scmp.eq.s32.totalorder %s16, 1
      %p100 = por %p98, %p99
      %p101 = scmp.ne.s32.totalorder %s90, %s91
      %p102 = scmp.eq.s32.totalorder %s16, 0
      %p103 = por %p101, %p102
      %p104 = scmp.ne.s32.totalorder %s90, %s91
      %p105 = scmp.eq.s32.totalorder %s17, 1
      %p106 = por %p104, %p105
      %p108 = scmp.ne.s32.totalorder %s91, %s107
      %p109 = scmp.eq.s32.totalorder %s17, 0
      %p110 = por %p108, %p109
      %p111 = scmp.le.s32.totalorder 1, %s11
      %p112 = scmp.lt.s32.totalorder %s11, 3
      %p113 = pnand %p111, %p112
      %p114 = pneg %p113
      // Predicated region
      $region9: #{gpt_forward.7} parent=5 // pred_check
        _
      $region10: #{gpt_forward.7} parent=5 // pred_check_branch
        %116 = sbr.rel (%p113) target = $region12
      $region11: #{gpt_forward.7} parent=5 // pred_region
        %s117 = ssub.s32 %s11, 1
        // Predicated region
        $region13: #{gpt_forward.7} parent=11 // pred_check
          %p118 = pneg %p75
        $region14: #{gpt_forward.7} parent=11 // pred_check_branch
          %120 = sbr.rel (%p118) target = $region16
        $region15: #{gpt_forward.7} parent=11 // pred_region
          %p121 = scmp.lt.s32.totalorder %s20, 0
          %s122 = scalar_select %p121, %s20, 0
          %s123 = smul.addr %s122, 4
          %s124 = scalar_lea.vmem %s1, %s123
        $region16: #{gpt_forward.7} parent=11 // pred_fallthru
          _
      $region12: #{gpt_forward.7} parent=5 // pred_fallthru
        _
      %p125 = scmp.lt.s32.totalorder %s11, 2
      // Predicated region
      $region17: #{gpt_forward.7} parent=5 // pred_check
        %p126 = pneg %p125
      $region18: #{gpt_forward.7} parent=5 // pred_check_branch
        %128 = sbr.rel (%p126) target = $region20
      $region19: #{gpt_forward.7} parent=5 // pred_region
        // Predicated region
        $region21: #{gpt_forward.7} parent=19 // pred_check
          %p129 = pneg %p43
        $region22: #{gpt_forward.7} parent=19 // pred_check_branch
          %131 = sbr.rel (%p129) target = $region24
        $region23: #{gpt_forward.7} parent=19 // pred_region
          %p132 = scmp.lt.s32.totalorder %s19, 1
          %s133 = scalar_select %p132, %s19, 1
          %s134 = smul.addr %s133, 8
          %s135 = scalar_lea.vmem %s0, %s134
        $region24: #{gpt_forward.7} parent=19 // pred_fallthru
          _
      $region20: #{gpt_forward.7} parent=5 // pred_fallthru
        _
      %p136 = scmp.le.s32.totalorder 1, %s11
      %p137 = scmp.lt.s32.totalorder %s11, 3
      %p138 = pnand %p136, %p137
      %p139 = pneg %p138
      // Predicated region
      $region25: #{gpt_forward.7} parent=5 // pred_check
        _
      $region26: #{gpt_forward.7} parent=5 // pred_check_branch
        %141 = sbr.rel (%p138) target = $region28
      $region27: #{gpt_forward.7} parent=5 // pred_region
        %s142 = ssub.s32 %s11, 1
        %p143 = scmp.lt.s32.totalorder %s21, 1
        %s144 = scalar_select %p143, %s21, 1
        %s145 = smul.addr %s144, 8
        %s146 = scalar_lea.vmem %s0, %s145
        %p147 = pneg %p49
        %p148 = pneg %p46
        %p149 = scmp.lt.s32.totalorder %s20, 0
        %s150 = scalar_select %p149, %s20, 0
        %s151 = smul.addr %s150, 4
        %s152 = scalar_lea.vmem %s1, %s151
        %p153 = pneg %p75
        %p154 = pneg %p72
        %p155 = pneg %p103
        %p156 = pneg %p100
        %s157 = sand.u32 %s90, 1
        %s158 = scalar_lea.sflag [#allocation3], %s157
        %s159 = sand.u32 %s90, 1
        %s160 = smul.addr %s159, 8
        %s161 = scalar_lea.vmem [#allocation2], %s160
        %p162 = scmp.lt.s32.totalorder %s21, 1
        %s163 = scalar_select %p162, %s21, 1
        %s164 = smul.addr %s163, 8
        %s165 = scalar_lea.vmem %s0, %s164
        %p166 = scmp.lt.s32.totalorder %s20, 0
        %s167 = scalar_select %p166, %s20, 0
        %s168 = smul.addr %s167, 4
        %s169 = scalar_lea.vmem %s1, %s168
        %v171 = vld [vmem:[%s165] sm:$0xff]
        %v172 = vpack.c.bf16 %v171, %v171
        %v173 = vld [vmem:[%s169] sm:$0xf]
        %v174 = vld [vmem:[%s169 + $0x4] sm:$0xf]
        %v175 = vld [vmem:[%s169 + $0x8] sm:$0xf]
        %v176 = vld [vmem:[%s169 + $0xc] sm:$0xf]
        %v181 = vunpack.c.l.b16 %v173
        %v182 = vunpack.c.l.b16 %v174
        %v183 = vunpack.c.l.b16 %v175
        %v184 = vunpack.c.l.b16 %v176
        %v185 = vpack.c.b16 %v182, %v181
        %v186 = vpack.c.b16 %v184, %v183
        %vm189 = vcmask 261120
        %v191 = vsel %vm189, %v172, 0
        %193 = vmatprep.subr.bf16.mxu0 0
        %194 = vmatpush1.bf16.msra.mxu0 0
        %195 = vmatprep.subr.bf16.mxu0 0
        %196 = vmatpush1.bf16.msra.mxu0 0
        %197 = vmatprep.subr.bf16.mxu0 0
        %198 = vmatpush1.bf16.msra.mxu0 0
        %199 = vmatprep.subr.bf16.mxu0 0
        %200 = vmatpush1.bf16.msra.mxu0 0
        %201 = vmatprep.subr.bf16.mxu0 0
        %202 = vmatpush1.bf16.msra.mxu0 0
        %203 = vmatprep.subr.bf16.mxu0 0
        %204 = vmatpush1.bf16.msra.mxu0 0
        %205 = vmatprep.subr.bf16.mxu0 0
        %206 = vmatpush1.bf16.msra.mxu0 %v186
        %207 = vmatprep.subr.bf16.mxu0 0
        %208 = vmatpush1.bf16.msra.mxu0 %v185
        %209 = vmatprep.subr.bf16.mxu0 0
        %210 = vmatpush2.bf16.msra.mxu0 0
        %211 = vmatprep.subr.bf16.mxu0 0
        %212 = vmatpush2.bf16.msra.mxu0 0
        %213 = vmatprep.subr.bf16.mxu0 0
        %214 = vmatpush2.bf16.msra.mxu0 0
        %215 = vmatprep.subr.bf16.mxu0 0
        %216 = vmatpush2.bf16.msra.mxu0 0
        %217 = vmatprep.subr.bf16.mxu0 0
        %218 = vmatpush2.bf16.msra.mxu0 0
        %219 = vmatprep.subr.bf16.mxu0 0
        %220 = vmatpush2.bf16.msra.mxu0 0
        %221 = vmatprep.subr.bf16.mxu0 0
        %222 = vmatpush2.bf16.msra.mxu0 0
        %223 = vmatprep.subr.bf16.mxu0 0
        %224 = vmatpush2.bf16.msra.mxu0 0
        %225 = vmatprep.mubr.bf16.mxu0 0
        %226 = vmatmul.mubr.bf16.gmra.mxu0 %v191
        %v227 = vpop.f32.mrf.mxu0
        %v228 = vadd.f32 0.0, %v227
        %v229 = vpop.f32.mrf.mxu0
        %v230 = vpop.f32.mrf.mxu0
        %v231 = vpop.f32.mrf.mxu0
        %232 = vdwg.mxu0
        %vm233 = vcmask 130048
        %234 = vst.msk [vmem:[%s161] sm:$0xff] %vm233, %v228
        %s235 = sand.u32 %s90, 1
        %s236 = scalar_lea.sflag [#allocation3], %s235
        %s237 = sand.u32 %s90, 1
        %s238 = smul.addr %s237, 8
        %s239 = scalar_lea.vmem [#allocation2], %s238
        // Predicated region
        $region29: #{gpt_forward.7} parent=27 // pred_check
          %p240 = pneg %p100
        $region30: #{gpt_forward.7} parent=27 // pred_check_branch
          %242 = sbr.rel (%p240) target = $region32
        $region31: #{gpt_forward.7} parent=27 // pred_region
          %s244 = ssub.s32 128, 128
          %245 = vsyncadd %s236, %s244
          %s246 = sadd.s32 %s20, %s21
          %s247 = smul.addr %s246, 128
          %s248 = scalar_lea.hbm %s2, %s247
          %s250 = sshll.u32 %s239, 4
          %s251 = int_to_ptr.vmem [resolvable:$true] %s250
          %253 = dma.vmem_to_hbm [thread:$0]  %s251, 128, %s248, %s236
        $region32: #{gpt_forward.7} parent=27 // pred_fallthru
          _
      $region28: #{gpt_forward.7} parent=5 // pred_fallthru
        _
      %p254 = scmp.le.s32.totalorder 2, %s11
      // Predicated region
      $region33: #{gpt_forward.7} parent=5 // pred_check
        %p255 = pneg %p254
      $region34: #{gpt_forward.7} parent=5 // pred_check_branch
        %257 = sbr.rel (%p255) target = $region36
      $region35: #{gpt_forward.7} parent=5 // pred_region
        %s258 = ssub.s32 %s11, 2
        // Predicated region
        $region37: #{gpt_forward.7} parent=35 // pred_check
          %p259 = pneg %p106
        $region38: #{gpt_forward.7} parent=35 // pred_check_branch
          %261 = sbr.rel (%p259) target = $region40
        $region39: #{gpt_forward.7} parent=35 // pred_region
          %s262 = sand.u32 %s91, 1
          %s263 = scalar_lea.sflag [#allocation3], %s262
          %s264 = sand.u32 %s91, 1
          %s265 = smul.addr %s264, 8
          %s266 = scalar_lea.vmem [#allocation2], %s265
          %267 = dma.done %s263, 128
        $region40: #{gpt_forward.7} parent=35 // pred_fallthru
          _
      $region36: #{gpt_forward.7} parent=5 // pred_fallthru
        _
    $region6: #{gpt_forward.7} parent=1 // loop_footer
      %s15 = sadd.s32 1, %s11
    $region7: #{gpt_forward.7} parent=1 // loop_footer_branch
      %10 = sbr.rel target = $region3
    $region8: #{gpt_forward.7} parent=1 // loop_exit
      _
    %268 = vsyncpa [#allocation3], 1
    %s269 = scalar_lea.sflag [#allocation3], 1
    %270 = vsyncpa %s269, 1

// kernel: gpt_forward.6
$region0: #{gpt_forward.6}
  #allocation0 [shape = 'u32[]', space=smem, size = 0x4, offset = 0x4, fixed_abs, tag = 'smem constant byte address 0x4 - core index']
  #allocation1 [shape = 'u32[144,128]{1,0:T(1,128)}', space=vmem, size = 0x12000, scoped, tag = 'internal scratch']
  #allocation2 [shape = 'f32[8,32]{1,0:T(8,128)}', space=vmem, size = 0x1000, scoped, tag = 'scratch operand']
  %s0 = inlined_call_operand.vmem [shape: f32[16,32], index: 0, kind: input, shape index: {}]
  %s1 = inlined_call_operand.vmem [shape: f32[1,32], index: 1, kind: input, shape index: {}]
  %s2 = inlined_call_operand.vmem [shape: f32[1,32], index: 2, kind: input, shape index: {}]
  %s3 = inlined_call_operand.vmem [shape: bf16[32,96], index: 3, kind: input, shape index: {}]
  %s4 = inlined_call_operand.vmem [shape: f32[1,96], index: 4, kind: input, shape index: {}]
  %s5 = inlined_call_operand.vmem [shape: bf16[4,8,32], index: 5, kind: input, shape index: {}]
  %s6 = inlined_call_operand.vmem [shape: f32[1,32], index: 6, kind: input, shape index: {}]
  %s7 = inlined_call_operand.vmem [shape: f32[1,32], index: 7, kind: input, shape index: {}]
  %s8 = inlined_call_operand.vmem [shape: f32[1,32], index: 8, kind: input, shape index: {}]
  %s9 = inlined_call_operand.vmem [shape: bf16[32,128], index: 9, kind: input, shape index: {}]
  %s10 = inlined_call_operand.vmem [shape: f32[1,128], index: 10, kind: input, shape index: {}]
  %s11 = inlined_call_operand.vmem [shape: bf16[128,32], index: 11, kind: input, shape index: {}]
  %s12 = inlined_call_operand.vmem [shape: f32[1,32], index: 12, kind: input, shape index: {}]
  %s13 = inlined_call_operand.vmem [shape: f32[1,32], index: 13, kind: input, shape index: {}]
  %s14 = inlined_call_operand.vmem [shape: f32[1,32], index: 14, kind: input, shape index: {}]
  %s15 = inlined_call_operand.vmem [shape: f32[8,8], index: 15, kind: input, shape index: {}]
  %s16 = inlined_call_operand.vmem [shape: f32[16,32], index: 16, kind: output, shape index: {}]
  %s17 = sld [smem:[#allocation0]]
  $region97: #{gpt_forward.6} parent=0
    _
  %s19 = ssub.s32 1, %s17
  %s20 = scalar_select 0, %s19, %s17
  loop: start=0, step=1, limit=4
  $region2: #{gpt_forward.6} parent=0 // loop_pre_header
    _
  $region3: #{gpt_forward.6} parent=0 // loop_header
    %s22 = sphi 0, %s26
    %p23 = scmp.ge.s32.totalorder %s22, 4
    %s32 = sphi 0, %s34
    %s35 = sphi 0, %s32
    %s36 = sphi 0, %s35
    %s52 = sphi 0, %s36
    %s56 = sphi 0, %s56
    %s58 = sphi 0, %s56
    %s59 = sphi 0, %s58
    %s73 = sphi 0, %s59
    %s77 = sphi 0, %s77
    %s79 = sphi 0, %s77
    %s80 = sphi 0, %s79
    %s94 = sphi 0, %s80
    %s98 = sphi 0, %s98
    %s100 = sphi 0, %s98
    %s101 = sphi 0, %s100
    %s115 = sphi 0, %s101
    %s119 = sphi 0, %s119
    %s121 = sphi 0, %s119
    %s122 = sphi 0, %s121
    %s136 = sphi 0, %s122
    %s140 = sphi 0, %s140
    %s142 = sphi 0, %s140
    %s143 = sphi 0, %s142
    %s157 = sphi 0, %s143
    %s161 = sphi 0, %s161
    %s163 = sphi 0, %s161
    %s164 = sphi 0, %s163
    %s178 = sphi 0, %s164
    %s182 = sphi 0, %s182
    %s184 = sphi 0, %s182
    %s185 = sphi 0, %s184
    %s199 = sphi 0, %s185
    %s203 = sphi 0, %s203
    %s205 = sphi 0, %s203
    %s206 = sphi 0, %s205
    %s220 = sphi 0, %s206
    %s224 = sphi 0, %s224
    %s226 = sphi 0, %s224
    %s227 = sphi 0, %s226
    %s241 = sphi 0, %s227
    %s245 = sphi 0, %s245
    %s247 = sphi 0, %s245
    %s248 = sphi 0, %s247
    %s262 = sphi 0, %s248
    %s266 = sphi 0, %s266
    %s268 = sphi 0, %s266
    %s269 = sphi 0, %s268
    %s283 = sphi 0, %s269
    %s287 = sphi 0, %s287
    %s289 = sphi 0, %s287
    %s290 = sphi 0, %s289
    %s304 = sphi 0, %s290
    %s308 = sphi 0, %s308
    %s310 = sphi 0, %s308
    %s311 = sphi 0, %s310
    %s325 = sphi 0, %s311
    %s329 = sphi 0, %s329
    %s331 = sphi 0, %s329
    %s332 = sphi 0, %s331
    %s346 = sphi 0, %s332
    %s350 = sphi 0, %s350
    %s352 = sphi 0, %s350
    %s353 = sphi 0, %s352
    %s367 = sphi 0, %s353
    %s373 = sphi 0, %s375
    %s376 = sphi 0, %s373
    %s377 = sphi 0, %s376
    %s393 = sphi 0, %s377
  $region4: #{gpt_forward.6} parent=0 // loop_header_branch
    %25 = sbr.rel (%p23) target = $region8
  $region5: #{gpt_forward.6} parent=0 // loop_body
    %s27 = ssub.s32 %s22, 1
    %s28 = ssub.s32 %s22, 2
    %s29 = sadd.s32 %s22, 1
    %s30 = ssub.s32 %s22, %s29
    %p31 = scmp.eq.s32.totalorder %s30, 0
    %s33 = sadd.s32 %s32, 1
    %s34 = scalar_select %p31, %s32, %s33
    %p37 = pneg %p31
    %p38 = scmp.eq.s32.totalorder %s22, 1
    %p39 = por %p37, %p38
    %p40 = scmp.ne.s32.totalorder %s32, %s35
    %p41 = scmp.eq.s32.totalorder %s22, 0
    %p42 = por %p40, %p41
    %p43 = scmp.ne.s32.totalorder %s32, %s35
    %p44 = scmp.eq.s32.totalorder %s27, 1
    %p45 = por %p43, %p44
    %p46 = scmp.ne.s32.totalorder %s35, %s36
    %p47 = scmp.eq.s32.totalorder %s27, 0
    %p48 = por %p46, %p47
    %p49 = scmp.ne.s32.totalorder %s35, %s36
    %p50 = scmp.eq.s32.totalorder %s28, 1
    %p51 = por %p49, %p50
    %p53 = scmp.ne.s32.totalorder %s36, %s52
    %p54 = scmp.eq.s32.totalorder %s28, 0
    %p55 = por %p53, %p54
    %s57 = sadd.s32 %s56, 1
    %p60 = scmp.eq.s32.totalorder %s22, 1
    %p61 = scmp.ne.s32.totalorder %s56, %s58
    %p62 = scmp.eq.s32.totalorder %s22, 0
    %p63 = por %p61, %p62
    %p64 = scmp.ne.s32.totalorder %s56, %s58
    %p65 = scmp.eq.s32.totalorder %s27, 1
    %p66 = por %p64, %p65
    %p67 = scmp.ne.s32.totalorder %s58, %s59
    %p68 = scmp.eq.s32.totalorder %s27, 0
    %p69 = por %p67, %p68
    %p70 = scmp.ne.s32.totalorder %s58, %s59
    %p71 = scmp.eq.s32.totalorder %s28, 1
    %p72 = por %p70, %p71
    %p74 = scmp.ne.s32.totalorder %s59, %s73
    %p75 = scmp.eq.s32.totalorder %s28, 0
    %p76 = por %p74, %p75
    %s78 = sadd.s32 %s77, 1
    %p81 = scmp.eq.s32.totalorder %s22, 1
    %p82 = scmp.ne.s32.totalorder %s77, %s79
    %p83 = scmp.eq.s32.totalorder %s22, 0
    %p84 = por %p82, %p83
    %p85 = scmp.ne.s32.totalorder %s77, %s79
    %p86 = scmp.eq.s32.totalorder %s27, 1
    %p87 = por %p85, %p86
    %p88 = scmp.ne.s32.totalorder %s79, %s80
    %p89 = scmp.eq.s32.totalorder %s27, 0
    %p90 = por %p88, %p89
    %p91 = scmp.ne.s32.totalorder %s79, %s80
    %p92 = scmp.eq.s32.totalorder %s28, 1
    %p93 = por %p91, %p92
    %p95 = scmp.ne.s32.totalorder %s80, %s94
    %p96 = scmp.eq.s32.totalorder %s28, 0
    %p97 = por %p95, %p96
    %s99 = sadd.s32 %s98, 1
    %p102 = scmp.eq.s32.totalorder %s22, 1
    %p103 = scmp.ne.s32.totalorder %s98, %s100
    %p104 = scmp.eq.s32.totalorder %s22, 0
    %p105 = por %p103, %p104
    %p106 = scmp.ne.s32.totalorder %s98, %s100
    %p107 = scmp.eq.s32.totalorder %s27, 1
    %p108 = por %p106, %p107
    %p109 = scmp.ne.s32.totalorder %s100, %s101
    %p110 = scmp.eq.s32.totalorder %s27, 0
    %p111 = por %p109, %p110
    %p112 = scmp.ne.s32.totalorder %s100, %s101
    %p113 = scmp.eq.s32.totalorder %s28, 1
    %p114 = por %p112, %p113
    %p116 = scmp.ne.s32.totalorder %s101, %s115
    %p117 = scmp.eq.s32.totalorder %s28, 0
    %p118 = por %p116, %p117
    %s120 = sadd.s32 %s119, 1
    %p123 = scmp.eq.s32.totalorder %s22, 1
    %p124 = scmp.ne.s32.totalorder %s119, %s121
    %p125 = scmp.eq.s32.totalorder %s22, 0
    %p126 = por %p124, %p125
    %p127 = scmp.ne.s32.totalorder %s119, %s121
    %p128 = scmp.eq.s32.totalorder %s27, 1
    %p129 = por %p127, %p128
    %p130 = scmp.ne.s32.totalorder %s121, %s122
    %p131 = scmp.eq.s32.totalorder %s27, 0
    %p132 = por %p130, %p131
    %p133 = scmp.ne.s32.totalorder %s121, %s122
    %p134 = scmp.eq.s32.totalorder %s28, 1
    %p135 = por %p133, %p134
    %p137 = scmp.ne.s32.totalorder %s122, %s136
    %p138 = scmp.eq.s32.totalorder %s28, 0
    %p139 = por %p137, %p138
    %s141 = sadd.s32 %s140, 1
    %p144 = scmp.eq.s32.totalorder %s22, 1
    %p145 = scmp.ne.s32.totalorder %s140, %s142
    %p146 = scmp.eq.s32.totalorder %s22, 0
    %p147 = por %p145, %p146
    %p148 = scmp.ne.s32.totalorder %s140, %s142
    %p149 = scmp.eq.s32.totalorder %s27, 1
    %p150 = por %p148, %p149
    %p151 = scmp.ne.s32.totalorder %s142, %s143
    %p152 = scmp.eq.s32.totalorder %s27, 0
    %p153 = por %p151, %p152
    %p154 = scmp.ne.s32.totalorder %s142, %s143
    %p155 = scmp.eq.s32.totalorder %s28, 1
    %p156 = por %p154, %p155
    %p158 = scmp.ne.s32.totalorder %s143, %s157
    %p159 = scmp.eq.s32.totalorder %s28, 0
    %p160 = por %p158, %p159
    %s162 = sadd.s32 %s161, 1
    %p165 = scmp.eq.s32.totalorder %s22, 1
    %p166 = scmp.ne.s32.totalorder %s161, %s163
    %p167 = scmp.eq.s32.totalorder %s22, 0
    %p168 = por %p166, %p167
    %p169 = scmp.ne.s32.totalorder %s161, %s163
    %p170 = scmp.eq.s32.totalorder %s27, 1
    %p171 = por %p169, %p170
    %p172 = scmp.ne.s32.totalorder %s163, %s164
    %p173 = scmp.eq.s32.totalorder %s27, 0
    %p174 = por %p172, %p173
    %p175 = scmp.ne.s32.totalorder %s163, %s164
    %p176 = scmp.eq.s32.totalorder %s28, 1
    %p177 = por %p175, %p176
    %p179 = scmp.ne.s32.totalorder %s164, %s178
    %p180 = scmp.eq.s32.totalorder %s28, 0
    %p181 = por %p179, %p180
    %s183 = sadd.s32 %s182, 1
    %p186 = scmp.eq.s32.totalorder %s22, 1
    %p187 = scmp.ne.s32.totalorder %s182, %s184
    %p188 = scmp.eq.s32.totalorder %s22, 0
    %p189 = por %p187, %p188
    %p190 = scmp.ne.s32.totalorder %s182, %s184
    %p191 = scmp.eq.s32.totalorder %s27, 1
    %p192 = por %p190, %p191
    %p193 = scmp.ne.s32.totalorder %s184, %s185
    %p194 = scmp.eq.s32.totalorder %s27, 0
    %p195 = por %p193, %p194
    %p196 = scmp.ne.s32.totalorder %s184, %s185
    %p197 = scmp.eq.s32.totalorder %s28, 1
    %p198 = por %p196, %p197
    %p200 = scmp.ne.s32.totalorder %s185, %s199
    %p201 = scmp.eq.s32.totalorder %s28, 0
    %p202 = por %p200, %p201
    %s204 = sadd.s32 %s203, 1
    %p207 = scmp.eq.s32.totalorder %s22, 1
    %p208 = scmp.ne.s32.totalorder %s203, %s205
    %p209 = scmp.eq.s32.totalorder %s22, 0
    %p210 = por %p208, %p209
    %p211 = scmp.ne.s32.totalorder %s203, %s205
    %p212 = scmp.eq.s32.totalorder %s27, 1
    %p213 = por %p211, %p212
    %p214 = scmp.ne.s32.totalorder %s205, %s206
    %p215 = scmp.eq.s32.totalorder %s27, 0
    %p216 = por %p214, %p215
    %p217 = scmp.ne.s32.totalorder %s205, %s206
    %p218 = scmp.eq.s32.totalorder %s28, 1
    %p219 = por %p217, %p218
    %p221 = scmp.ne.s32.totalorder %s206, %s220
    %p222 = scmp.eq.s32.totalorder %s28, 0
    %p223 = por %p221, %p222
    %s225 = sadd.s32 %s224, 1
    %p228 = scmp.eq.s32.totalorder %s22, 1
    %p229 = scmp.ne.s32.totalorder %s224, %s226
    %p230 = scmp.eq.s32.totalorder %s22, 0
    %p231 = por %p229, %p230
    %p232 = scmp.ne.s32.totalorder %s224, %s226
    %p233 = scmp.eq.s32.totalorder %s27, 1
    %p234 = por %p232, %p233
    %p235 = scmp.ne.s32.totalorder %s226, %s227
    %p236 = scmp.eq.s32.totalorder %s27, 0
    %p237 = por %p235, %p236
    %p238 = scmp.ne.s32.totalorder %s226, %s227
    %p239 = scmp.eq.s32.totalorder %s28, 1
    %p240 = por %p238, %p239
    %p242 = scmp.ne.s32.totalorder %s227, %s241
    %p243 = scmp.eq.s32.totalorder %s28, 0
    %p244 = por %p242, %p243
    %s246 = sadd.s32 %s245, 1
    %p249 = scmp.eq.s32.totalorder %s22, 1
    %p250 = scmp.ne.s32.totalorder %s245, %s247
    %p251 = scmp.eq.s32.totalorder %s22, 0
    %p252 = por %p250, %p251
    %p253 = scmp.ne.s32.totalorder %s245, %s247
    %p254 = scmp.eq.s32.totalorder %s27, 1
    %p255 = por %p253, %p254
    %p256 = scmp.ne.s32.totalorder %s247, %s248
    %p257 = scmp.eq.s32.totalorder %s27, 0
    %p258 = por %p256, %p257
    %p259 = scmp.ne.s32.totalorder %s247, %s248
    %p260 = scmp.eq.s32.totalorder %s28, 1
    %p261 = por %p259, %p260
    %p263 = scmp.ne.s32.totalorder %s248, %s262
    %p264 = scmp.eq.s32.totalorder %s28, 0
    %p265 = por %p263, %p264
    %s267 = sadd.s32 %s266, 1
    %p270 = scmp.eq.s32.totalorder %s22, 1
    %p271 = scmp.ne.s32.totalorder %s266, %s268
    %p272 = scmp.eq.s32.totalorder %s22, 0
    %p273 = por %p271, %p272
    %p274 = scmp.ne.s32.totalorder %s266, %s268
    %p275 = scmp.eq.s32.totalorder %s27, 1
    %p276 = por %p274, %p275
    %p277 = scmp.ne.s32.totalorder %s268, %s269
    %p278 = scmp.eq.s32.totalorder %s27, 0
    %p279 = por %p277, %p278
    %p280 = scmp.ne.s32.totalorder %s268, %s269
    %p281 = scmp.eq.s32.totalorder %s28, 1
    %p282 = por %p280, %p281
    %p284 = scmp.ne.s32.totalorder %s269, %s283
    %p285 = scmp.eq.s32.totalorder %s28, 0
    %p286 = por %p284, %p285
    %s288 = sadd.s32 %s287, 1
    %p291 = scmp.eq.s32.totalorder %s22, 1
    %p292 = scmp.ne.s32.totalorder %s287, %s289
    %p293 = scmp.eq.s32.totalorder %s22, 0
    %p294 = por %p292, %p293
    %p295 = scmp.ne.s32.totalorder %s287, %s289
    %p296 = scmp.eq.s32.totalorder %s27, 1
    %p297 = por %p295, %p296
    %p298 = scmp.ne.s32.totalorder %s289, %s290
    %p299 = scmp.eq.s32.totalorder %s27, 0
    %p300 = por %p298, %p299
    %p301 = scmp.ne.s32.totalorder %s289, %s290
    %p302 = scmp.eq.s32.totalorder %s28, 1
    %p303 = por %p301, %p302
    %p305 = scmp.ne.s32.totalorder %s290, %s304
    %p306 = scmp.eq.s32.totalorder %s28, 0
    %p307 = por %p305, %p306
    %s309 = sadd.s32 %s308, 1
    %p312 = scmp.eq.s32.totalorder %s22, 1
    %p313 = scmp.ne.s32.totalorder %s308, %s310
    %p314 = scmp.eq.s32.totalorder %s22, 0
    %p315 = por %p313, %p314
    %p316 = scmp.ne.s32.totalorder %s308, %s310
    %p317 = scmp.eq.s32.totalorder %s27, 1
    %p318 = por %p316, %p317
    %p319 = scmp.ne.s32.totalorder %s310, %s311
    %p320 = scmp.eq.s32.totalorder %s27, 0
    %p321 = por %p319, %p320
    %p322 = scmp.ne.s32.totalorder %s310, %s311
    %p323 = scmp.eq.s32.totalorder %s28, 1
    %p324 = por %p322, %p323
    %p326 = scmp.ne.s32.totalorder %s311, %s325
    %p327 = scmp.eq.s32.totalorder %s28, 0
    %p328 = por %p326, %p327
    %s330 = sadd.s32 %s329, 1
    %p333 = scmp.eq.s32.totalorder %s22, 1
    %p334 = scmp.ne.s32.totalorder %s329, %s331
    %p335 = scmp.eq.s32.totalorder %s22, 0
    %p336 = por %p334, %p335
    %p337 = scmp.ne.s32.totalorder %s329, %s331
    %p338 = scmp.eq.s32.totalorder %s27, 1
    %p339 = por %p337, %p338
    %p340 = scmp.ne.s32.totalorder %s331, %s332
    %p341 = scmp.eq.s32.totalorder %s27, 0
    %p342 = por %p340, %p341
    %p343 = scmp.ne.s32.totalorder %s331, %s332
    %p344 = scmp.eq.s32.totalorder %s28, 1
    %p345 = por %p343, %p344
    %p347 = scmp.ne.s32.totalorder %s332, %s346
    %p348 = scmp.eq.s32.totalorder %s28, 0
    %p349 = por %p347, %p348
    %s351 = sadd.s32 %s350, 1
    %p354 = scmp.eq.s32.totalorder %s22, 1
    %p355 = scmp.ne.s32.totalorder %s350, %s352
    %p356 = scmp.eq.s32.totalorder %s22, 0
    %p357 = por %p355, %p356
    %p358 = scmp.ne.s32.totalorder %s350, %s352
    %p359 = scmp.eq.s32.totalorder %s27, 1
    %p360 = por %p358, %p359
    %p361 = scmp.ne.s32.totalorder %s352, %s353
    %p362 = scmp.eq.s32.totalorder %s27, 0
    %p363 = por %p361, %p362
    %p364 = scmp.ne.s32.totalorder %s352, %s353
    %p365 = scmp.eq.s32.totalorder %s28, 1
    %p366 = por %p364, %p365
    %p368 = scmp.ne.s32.totalorder %s353, %s367
    %p369 = scmp.eq.s32.totalorder %s28, 0
    %p370 = por %p368, %p369
    %s371 = ssub.s32 %s22, %s29
    %p372 = scmp.eq.s32.totalorder %s371, 0
    %s374 = sadd.s32 %s373, 1
    %s375 = scalar_select %p372, %s373, %s374
    %p378 = pneg %p372
    %p379 = scmp.eq.s32.totalorder %s22, 1
    %p380 = por %p378, %p379
    %p381 = scmp.ne.s32.totalorder %s373, %s376
    %p382 = scmp.eq.s32.totalorder %s22, 0
    %p383 = por %p381, %p382
    %p384 = scmp.ne.s32.totalorder %s373, %s376
    %p385 = scmp.eq.s32.totalorder %s27, 1
    %p386 = por %p384, %p385
    %p387 = scmp.ne.s32.totalorder %s376, %s377
    %p388 = scmp.eq.s32.totalorder %s27, 0
    %p389 = por %p387, %p388
    %p390 = scmp.ne.s32.totalorder %s376, %s377
    %p391 = scmp.eq.s32.totalorder %s28, 1
    %p392 = por %p390, %p391
    %p394 = scmp.ne.s32.totalorder %s377, %s393
    %p395 = scmp.eq.s32.totalorder %s28, 0
    %p396 = por %p394, %p395
    %p397 = scmp.le.s32.totalorder 1, %s22
    %p398 = scmp.lt.s32.totalorder %s22, 3
    %p399 = pnand %p397, %p398
    %p400 = pneg %p399
    // Predicated region
    $region9: #{gpt_forward.6} parent=5 // pred_check
      _
    $region10: #{gpt_forward.6} parent=5 // pred_check_branch
      %402 = sbr.rel (%p399) target = $region12
    $region11: #{gpt_forward.6} parent=5 // pred_region
      %s403 = ssub.s32 %s22, 1
      // Predicated region
      $region13: #{gpt_forward.6} parent=11 // pred_check
        %p404 = pneg %p69
      $region14: #{gpt_forward.6} parent=11 // pred_check_branch
        %406 = sbr.rel (%p404) target = $region16
      $region15: #{gpt_forward.6} parent=11 // pred_region
        _
      $region16: #{gpt_forward.6} parent=11 // pred_fallthru
        _
      // Predicated region
      $region17: #{gpt_forward.6} parent=11 // pred_check
        %p407 = pneg %p90
      $region18: #{gpt_forward.6} parent=11 // pred_check_branch
        %409 = sbr.rel (%p407) target = $region20
      $region19: #{gpt_forward.6} parent=11 // pred_region
        _
      $region20: #{gpt_forward.6} parent=11 // pred_fallthru
        _
      // Predicated region
      $region21: #{gpt_forward.6} parent=11 // pred_check
        %p410 = pneg %p111
      $region22: #{gpt_forward.6} parent=11 // pred_check_branch
        %412 = sbr.rel (%p410) target = $region24
      $region23: #{gpt_forward.6} parent=11 // pred_region
        _
      $region24: #{gpt_forward.6} parent=11 // pred_fallthru
        _
      // Predicated region
      $region25: #{gpt_forward.6} parent=11 // pred_check
        %p413 = pneg %p132
      $region26: #{gpt_forward.6} parent=11 // pred_check_branch
        %415 = sbr.rel (%p413) target = $region28
      $region27: #{gpt_forward.6} parent=11 // pred_region
        _
      $region28: #{gpt_forward.6} parent=11 // pred_fallthru
        _
      // Predicated region
      $region29: #{gpt_forward.6} parent=11 // pred_check
        %p416 = pneg %p153
      $region30: #{gpt_forward.6} parent=11 // pred_check_branch
        %418 = sbr.rel (%p416) target = $region32
      $region31: #{gpt_forward.6} parent=11 // pred_region
        _
      $region32: #{gpt_forward.6} parent=11 // pred_fallthru
        _
      // Predicated region
      $region33: #{gpt_forward.6} parent=11 // pred_check
        %p419 = pneg %p174
      $region34: #{gpt_forward.6} parent=11 // pred_check_branch
        %421 = sbr.rel (%p419) target = $region36
      $region35: #{gpt_forward.6} parent=11 // pred_region
        _
      $region36: #{gpt_forward.6} parent=11 // pred_fallthru
        _
      // Predicated region
      $region37: #{gpt_forward.6} parent=11 // pred_check
        %p422 = pneg %p195
      $region38: #{gpt_forward.6} parent=11 // pred_check_branch
        %424 = sbr.rel (%p422) target = $region40
      $region39: #{gpt_forward.6} parent=11 // pred_region
        _
      $region40: #{gpt_forward.6} parent=11 // pred_fallthru
        _
      // Predicated region
      $region41: #{gpt_forward.6} parent=11 // pred_check
        %p425 = pneg %p216
      $region42: #{gpt_forward.6} parent=11 // pred_check_branch
        %427 = sbr.rel (%p425) target = $region44
      $region43: #{gpt_forward.6} parent=11 // pred_region
        _
      $region44: #{gpt_forward.6} parent=11 // pred_fallthru
        _
      // Predicated region
      $region45: #{gpt_forward.6} parent=11 // pred_check
        %p428 = pneg %p237
      $region46: #{gpt_forward.6} parent=11 // pred_check_branch
        %430 = sbr.rel (%p428) target = $region48
      $region47: #{gpt_forward.6} parent=11 // pred_region
        _
      $region48: #{gpt_forward.6} parent=11 // pred_fallthru
        _
      // Predicated region
      $region49: #{gpt_forward.6} parent=11 // pred_check
        %p431 = pneg %p258
      $region50: #{gpt_forward.6} parent=11 // pred_check_branch
        %433 = sbr.rel (%p431) target = $region52
      $region51: #{gpt_forward.6} parent=11 // pred_region
        _
      $region52: #{gpt_forward.6} parent=11 // pred_fallthru
        _
      // Predicated region
      $region53: #{gpt_forward.6} parent=11 // pred_check
        %p434 = pneg %p279
      $region54: #{gpt_forward.6} parent=11 // pred_check_branch
        %436 = sbr.rel (%p434) target = $region56
      $region55: #{gpt_forward.6} parent=11 // pred_region
        _
      $region56: #{gpt_forward.6} parent=11 // pred_fallthru
        _
      // Predicated region
      $region57: #{gpt_forward.6} parent=11 // pred_check
        %p437 = pneg %p300
      $region58: #{gpt_forward.6} parent=11 // pred_check_branch
        %439 = sbr.rel (%p437) target = $region60
      $region59: #{gpt_forward.6} parent=11 // pred_region
        _
      $region60: #{gpt_forward.6} parent=11 // pred_fallthru
        _
      // Predicated region
      $region61: #{gpt_forward.6} parent=11 // pred_check
        %p440 = pneg %p321
      $region62: #{gpt_forward.6} parent=11 // pred_check_branch
        %442 = sbr.rel (%p440) target = $region64
      $region63: #{gpt_forward.6} parent=11 // pred_region
        _
      $region64: #{gpt_forward.6} parent=11 // pred_fallthru
        _
      // Predicated region
      $region65: #{gpt_forward.6} parent=11 // pred_check
        %p443 = pneg %p342
      $region66: #{gpt_forward.6} parent=11 // pred_check_branch
        %445 = sbr.rel (%p443) target = $region68
      $region67: #{gpt_forward.6} parent=11 // pred_region
        _
      $region68: #{gpt_forward.6} parent=11 // pred_fallthru
        _
      // Predicated region
      $region69: #{gpt_forward.6} parent=11 // pred_check
        %p446 = pneg %p363
      $region70: #{gpt_forward.6} parent=11 // pred_check_branch
        %448 = sbr.rel (%p446) target = $region72
      $region71: #{gpt_forward.6} parent=11 // pred_region
        _
      $region72: #{gpt_forward.6} parent=11 // pred_fallthru
        _
    $region12: #{gpt_forward.6} parent=5 // pred_fallthru
      _
    %p449 = scmp.lt.s32.totalorder %s22, 2
    // Predicated region
    $region73: #{gpt_forward.6} parent=5 // pred_check
      %p450 = pneg %p449
    $region74: #{gpt_forward.6} parent=5 // pred_check_branch
      %452 = sbr.rel (%p450) target = $region76
    $region75: #{gpt_forward.6} parent=5 // pred_region
      // Predicated region
      $region77: #{gpt_forward.6} parent=75 // pred_check
        %p453 = pneg %p42
      $region78: #{gpt_forward.6} parent=75 // pred_check_branch
        %455 = sbr.rel (%p453) target = $region80
      $region79: #{gpt_forward.6} parent=75 // pred_region
        %p456 = scmp.lt.s32.totalorder %s22, 1
        %s457 = scalar_select %p456, %s22, 1
        %s458 = smul.addr %s457, 8
        %s459 = scalar_lea.vmem %s0, %s458
      $region80: #{gpt_forward.6} parent=75 // pred_fallthru
        _
    $region76: #{gpt_forward.6} parent=5 // pred_fallthru
      _
    %p460 = scmp.le.s32.totalorder 1, %s22
    %p461 = scmp.lt.s32.totalorder %s22, 3
    %p462 = pnand %p460, %p461
    %p463 = pneg %p462
    // Predicated region
    $region81: #{gpt_forward.6} parent=5 // pred_check
      _
    $region82: #{gpt_forward.6} parent=5 // pred_check_branch
      %465 = sbr.rel (%p462) target = $region84
    $region83: #{gpt_forward.6} parent=5 // pred_region
      %s466 = ssub.s32 %s22, 1
      %p467 = scmp.lt.s32.totalorder %s27, 1
      %s468 = scalar_select %p467, %s27, 1
      %s469 = smul.addr %s468, 8
      %s470 = scalar_lea.vmem %s0, %s469
      %p471 = pneg %p48
      %p472 = pneg %p45
      %p473 = pneg %p69
      %p474 = pneg %p66
      %p475 = pneg %p90
      %p476 = pneg %p87
      %p477 = pneg %p111
      %p478 = pneg %p108
      %p479 = pneg %p132
      %p480 = pneg %p129
      %p481 = pneg %p153
      %p482 = pneg %p150
      %p483 = pneg %p174
      %p484 = pneg %p171
      %p485 = pneg %p195
      %p486 = pneg %p192
      %p487 = pneg %p216
      %p488 = pneg %p213
      %p489 = pneg %p237
      %p490 = pneg %p234
      %p491 = pneg %p258
      %p492 = pneg %p255
      %p493 = pneg %p279
      %p494 = pneg %p276
      %p495 = pneg %p300
      %p496 = pneg %p297
      %p497 = pneg %p321
      %p498 = pneg %p318
      %p499 = pneg %p342
      %p500 = pneg %p339
      %p501 = pneg %p363
      %p502 = pneg %p360
      %p503 = pneg %p389
      %p504 = pneg %p386
      %p505 = scmp.lt.s32.totalorder %s27, 1
      %s506 = scalar_select %p505, %s27, 1
      %s507 = smul.addr %s506, 8
      %s508 = scalar_lea.vmem %s16, %s507
      %p509 = scmp.lt.s32.totalorder %s27, 1
      %s510 = scalar_select %p509, %s27, 1
      %s511 = smul.addr %s510, 8
      %s512 = scalar_lea.vmem %s0, %s511
      %p513 = scmp.lt.s32.totalorder %s27, 1
      %s514 = scalar_select %p513, %s27, 1
      %s515 = smul.addr %s514, 8
      %s516 = scalar_lea.vmem %s16, %s515
      %v518 = vld [vmem:[%s512] sm:$0xff]
      %v519 = vld [vmem:[%s1] sm:$0x1]
      %v520 = vld [vmem:[%s2] sm:$0x1]
      %vm521 = vcmask 261120
      %v522 = vsel %vm521, %v518, 0.0
      %523 = vadd.xlane.f32.xlu0 %v522
      %v524 = vpop.xlane.xlu0 %523
      %v525 = vrcp.pop 32.0
      %v526 = vmul.f32 %v524, %v525
      %v527 = vsub.f32 %v518, %v526
      %v528 = vmul.f32 %v527, %v527
      %v529 = vsel %vm521, %v528, 0.0
      %530 = vadd.xlane.f32.xlu0 %v529
      %v531 = vpop.xlane.xlu0 %530
      %v532 = vmul.f32 %v531, %v525
      %v533 = vadd.f32 %v532, 1e-05
      %v534 = vrsqrt.pop %v533
      %v535 = vmul.f32 %v527, %v534
      %v537 = vlaneseq
      %v538 = vshrl.u32 %v537, 7
      %v539 = vsub.s32 0, %v538
      %v540 = vrot.slane %v519, %v539
      %v542 = vmul.f32 %v535, %v540
      %v544 = vlaneseq
      %v545 = vshrl.u32 %v544, 7
      %v546 = vsub.s32 0, %v545
      %v547 = vrot.slane %v520, %v546
      %v549 = vadd.f32 %v542, %v547
      %v550 = vpack.c.bf16 %v549, %v549
      %v551 = vld [vmem:[%s3] sm:$0xf]
      %v552 = vld [vmem:[%s3 + $0x4] sm:$0xf]
      %v553 = vld [vmem:[%s3 + $0x8] sm:$0xf]
      %v554 = vld [vmem:[%s3 + $0xc] sm:$0xf]
      %v555 = vld [vmem:[%s4] sm:$0x1]
      %v557 = vlaneseq
      %v558 = vshrl.u32 %v557, 7
      %v559 = vsub.s32 0, %v558
      %v560 = vrot.slane %v555, %v559
      %v566 = vunpack.c.l.b16 %v551
      %v567 = vunpack.c.l.b16 %v552
      %v568 = vunpack.c.l.b16 %v553
      %v569 = vunpack.c.l.b16 %v554
      %v570 = vpack.c.b16 %v567, %v566
      %v571 = vpack.c.b16 %v569, %v568
      %v575 = vsel %vm521, %v550, 0
      %577 = vmatprep.subr.bf16.mxu0 0
      %578 = vmatpush1.bf16.msra.mxu0 0
      %579 = vmatprep.subr.bf16.mxu0 0
      %580 = vmatpush1.bf16.msra.mxu0 0
      %581 = vmatprep.subr.bf16.mxu0 0
      %582 = vmatpush1.bf16.msra.mxu0 0
      %583 = vmatprep.subr.bf16.mxu0 0
      %584 = vmatpush1.bf16.msra.mxu0 0
      %585 = vmatprep.subr.bf16.mxu0 0
      %586 = vmatpush1.bf16.msra.mxu0 0
      %587 = vmatprep.subr.bf16.mxu0 0
      %588 = vmatpush1.bf16.msra.mxu0 0
      %589 = vmatprep.subr.bf16.mxu0 0
      %590 = vmatpush1.bf16.msra.mxu0 %v571
      %591 = vmatprep.subr.bf16.mxu0 0
      %592 = vmatpush1.bf16.msra.mxu0 %v570
      %593 = vmatprep.subr.bf16.mxu0 0
      %594 = vmatpush2.bf16.msra.mxu0 0
      %595 = vmatprep.subr.bf16.mxu0 0
      %596 = vmatpush2.bf16.msra.mxu0 0
      %597 = vmatprep.subr.bf16.mxu0 0
      %598 = vmatpush2.bf16.msra.mxu0 0
      %599 = vmatprep.subr.bf16.mxu0 0
      %600 = vmatpush2.bf16.msra.mxu0 0
      %601 = vmatprep.subr.bf16.mxu0 0
      %602 = vmatpush2.bf16.msra.mxu0 0
      %603 = vmatprep.subr.bf16.mxu0 0
      %604 = vmatpush2.bf16.msra.mxu0 0
      %605 = vmatprep.subr.bf16.mxu0 0
      %606 = vmatpush2.bf16.msra.mxu0 0
      %607 = vmatprep.subr.bf16.mxu0 0
      %608 = vmatpush2.bf16.msra.mxu0 0
      %609 = vmatprep.mubr.bf16.mxu0 0
      %610 = vmatmul.mubr.bf16.gmra.mxu0 %v575
      %v611 = vpop.f32.mrf.mxu0
      %v612 = vadd.f32 %v560, %v611
      %v613 = vpop.f32.mrf.mxu0
      %v614 = vpop.f32.mrf.mxu0
      %v615 = vpop.f32.mrf.mxu0
      %616 = vdwg.mxu0
      %v617 = vpack.c.bf16 %v612, %v612
      %v618 = vld [vmem:[%s15] sm:$0xff]
      %v619 = vld [vmem:[%s5] sm:$0xf]
      %v620 = vld [vmem:[%s5 + $0x4] sm:$0xf]
      %v621 = vld [vmem:[%s5 + $0x8] sm:$0xf]
      %v622 = vld [vmem:[%s5 + $0xc] sm:$0xf]
      %624 = vrot.lane.b32.xlu0 %v617, 120
      %v625 = vpop.permute.xlu0 %624
      %626 = vrot.lane.b32.xlu0 %v617, 112
      %v627 = vpop.permute.xlu0 %626
      %628 = vrot.lane.b32.xlu0 %v617, 104
      %v629 = vpop.permute.xlu0 %628
      %630 = vrot.lane.b32.xlu0 %v617, 96
      %v631 = vpop.permute.xlu0 %630
      %vm632 = vcmask 64512
      %v634 = vsel %vm632, %v617, 0
      %v637 = vsel %vm632, %v631, 0
      %639 = vmatprep.subr.bf16.mxu0 0
      %640 = vmatpush1.bf16.xpose.msra.mxu0 0
      %641 = vmatprep.subr.bf16.mxu0 0
      %642 = vmatpush1.bf16.xpose.msra.mxu0 0
      %643 = vmatprep.subr.bf16.mxu0 0
      %644 = vmatpush1.bf16.xpose.msra.mxu0 0
      %645 = vmatprep.subr.bf16.mxu0 0
      %646 = vmatpush1.bf16.xpose.msra.mxu0 0
      %647 = vmatprep.subr.bf16.mxu0 0
      %648 = vmatpush1.bf16.xpose.msra.mxu0 0
      %649 = vmatprep.subr.bf16.mxu0 0
      %650 = vmatpush1.bf16.xpose.msra.mxu0 0
      %651 = vmatprep.subr.bf16.mxu0 0
      %652 = vmatpush1.bf16.xpose.msra.mxu0 0
      %653 = vmatprep.subr.bf16.mxu0 0
      %654 = vmatpush1.bf16.xpose.msra.mxu0 %v637
      %655 = vmatprep.subr.bf16.mxu0 0
      %656 = vmatpush2.bf16.xpose.msra.mxu0 0
      %657 = vmatprep.subr.bf16.mxu0 0
      %658 = vmatpush2.bf16.xpose.msra.mxu0 0
      %659 = vmatprep.subr.bf16.mxu0 0
      %660 = vmatpush2.bf16.xpose.msra.mxu0 0
      %661 = vmatprep.subr.bf16.mxu0 0
      %662 = vmatpush2.bf16.xpose.msra.mxu0 0
      %663 = vmatprep.subr.bf16.mxu0 0
      %664 = vmatpush2.bf16.xpose.msra.mxu0 0
      %665 = vmatprep.subr.bf16.mxu0 0
      %666 = vmatpush2.bf16.xpose.msra.mxu0 0
      %667 = vmatprep.subr.bf16.mxu0 0
      %668 = vmatpush2.bf16.xpose.msra.mxu0 0
      %669 = vmatprep.subr.bf16.mxu0 0
      %670 = vmatpush2.bf16.xpose.msra.mxu0 0
      %671 = vmatprep.mubr.bf16.mxu0 0
      %672 = vmatmul.mubr.bf16.gmra.mxu0 %v634
      %v673 = vpop.f32.mrf.mxu0
      %v674 = vadd.f32 0.0, %v673
      %v675 = vpop.f32.mrf.mxu0
      %v676 = vpop.f32.mrf.mxu0
      %v677 = vpop.f32.mrf.mxu0
      %678 = vdwg.mxu0
      %679 = vrot.lane.b32.xlu0 %v625, 96
      %v680 = vpop.permute.xlu0 %679
      %v682 = vsel %vm632, %v625, 0
      %v685 = vsel %vm632, %v680, 0
      %687 = vmatprep.subr.bf16.mxu0 0
      %688 = vmatpush1.bf16.xpose.msra.mxu0 0
      %689 = vmatprep.subr.bf16.mxu0 0
      %690 = vmatpush1.bf16.xpose.msra.mxu0 0
      %691 = vmatprep.subr.bf16.mxu0 0
      %692 = vmatpush1.bf16.xpose.msra.mxu0 0
      %693 = vmatprep.subr.bf16.mxu0 0
      %694 = vmatpush1.bf16.xpose.msra.mxu0 0
      %695 = vmatprep.subr.bf16.mxu0 0
      %696 = vmatpush1.bf16.xpose.msra.mxu0 0
      %697 = vmatprep.subr.bf16.mxu0 0
      %698 = vmatpush1.bf16.xpose.msra.mxu0 0
      %699 = vmatprep.subr.bf16.mxu0 0
      %700 = vmatpush1.bf16.xpose.msra.mxu0 0
      %701 = vmatprep.subr.bf16.mxu0 0
      %702 = vmatpush1.bf16.xpose.msra.mxu0 %v685
      %703 = vmatprep.subr.bf16.mxu0 0
      %704 = vmatpush2.bf16.xpose.msra.mxu0 0
      %705 = vmatprep.subr.bf16.mxu0 0
      %706 = vmatpush2.bf16.xpose.msra.mxu0 0
      %707 = vmatprep.subr.bf16.mxu0 0
      %708 = vmatpush2.bf16.xpose.msra.mxu0 0
      %709 = vmatprep.subr.bf16.mxu0 0
      %710 = vmatpush2.bf16.xpose.msra.mxu0 0
      %711 = vmatprep.subr.bf16.mxu0 0
      %712 = vmatpush2.bf16.xpose.msra.mxu0 0
      %713 = vmatprep.subr.bf16.mxu0 0
      %714 = vmatpush2.bf16.xpose.msra.mxu0 0
      %715 = vmatprep.subr.bf16.mxu0 0
      %716 = vmatpush2.bf16.xpose.msra.mxu0 0
      %717 = vmatprep.subr.bf16.mxu0 0
      %718 = vmatpush2.bf16.xpose.msra.mxu0 0
      %719 = vmatprep.mubr.bf16.mxu0 0
      %720 = vmatmul.mubr.bf16.gmra.mxu0 %v682
      %v721 = vpop.f32.mrf.mxu0
      %v722 = vadd.f32 0.0, %v721
      %v723 = vpop.f32.mrf.mxu0
      %v724 = vpop.f32.mrf.mxu0
      %v725 = vpop.f32.mrf.mxu0
      %726 = vdwg.mxu0
      %727 = vrot.lane.b32.xlu0 %v627, 96
      %v728 = vpop.permute.xlu0 %727
      %v730 = vsel %vm632, %v627, 0
      %v733 = vsel %vm632, %v728, 0
      %735 = vmatprep.subr.bf16.mxu0 0
      %736 = vmatpush1.bf16.xpose.msra.mxu0 0
      %737 = vmatprep.subr.bf16.mxu0 0
      %738 = vmatpush1.bf16.xpose.msra.mxu0 0
      %739 = vmatprep.subr.bf16.mxu0 0
      %740 = vmatpush1.bf16.xpose.msra.mxu0 0
      %741 = vmatprep.subr.bf16.mxu0 0
      %742 = vmatpush1.bf16.xpose.msra.mxu0 0
      %743 = vmatprep.subr.bf16.mxu0 0
      %744 = vmatpush1.bf16.xpose.msra.mxu0 0
      %745 = vmatprep.subr.bf16.mxu0 0
      %746 = vmatpush1.bf16.xpose.msra.mxu0 0
      %747 = vmatprep.subr.bf16.mxu0 0
      %748 = vmatpush1.bf16.xpose.msra.mxu0 0
      %749 = vmatprep.subr.bf16.mxu0 0
      %750 = vmatpush1.bf16.xpose.msra.mxu0 %v733
      %751 = vmatprep.subr.bf16.mxu0 0
      %752 = vmatpush2.bf16.xpose.msra.mxu0 0
      %753 = vmatprep.subr.bf16.mxu0 0
      %754 = vmatpush2.bf16.xpose.msra.mxu0 0
      %755 = vmatprep.subr.bf16.mxu0 0
      %756 = vmatpush2.bf16.xpose.msra.mxu0 0
      %757 = vmatprep.subr.bf16.mxu0 0
      %758 = vmatpush2.bf16.xpose.msra.mxu0 0
      %759 = vmatprep.subr.bf16.mxu0 0
      %760 = vmatpush2.bf16.xpose.msra.mxu0 0
      %761 = vmatprep.subr.bf16.mxu0 0
      %762 = vmatpush2.bf16.xpose.msra.mxu0 0
      %763 = vmatprep.subr.bf16.mxu0 0
      %764 = vmatpush2.bf16.xpose.msra.mxu0 0
      %765 = vmatprep.subr.bf16.mxu0 0
      %766 = vmatpush2.bf16.xpose.msra.mxu0 0
      %767 = vmatprep.mubr.bf16.mxu0 0
      %768 = vmatmul.mubr.bf16.gmra.mxu0 %v730
      %v769 = vpop.f32.mrf.mxu0
      %v770 = vadd.f32 0.0, %v769
      %v771 = vpop.f32.mrf.mxu0
      %v772 = vpop.f32.mrf.mxu0
      %v773 = vpop.f32.mrf.mxu0
      %774 = vdwg.mxu0
      %775 = vrot.lane.b32.xlu0 %v629, 96
      %v776 = vpop.permute.xlu0 %775
      %v778 = vsel %vm632, %v629, 0
      %v781 = vsel %vm632, %v776, 0
      %783 = vmatprep.subr.bf16.mxu0 0
      %784 = vmatpush1.bf16.xpose.msra.mxu0 0
      %785 = vmatprep.subr.bf16.mxu0 0
      %786 = vmatpush1.bf16.xpose.msra.mxu0 0
      %787 = vmatprep.subr.bf16.mxu0 0
      %788 = vmatpush1.bf16.xpose.msra.mxu0 0
      %789 = vmatprep.subr.bf16.mxu0 0
      %790 = vmatpush1.bf16.xpose.msra.mxu0 0
      %791 = vmatprep.subr.bf16.mxu0 0
      %792 = vmatpush1.bf16.xpose.msra.mxu0 0
      %793 = vmatprep.subr.bf16.mxu0 0
      %794 = vmatpush1.bf16.xpose.msra.mxu0 0
      %795 = vmatprep.subr.bf16.mxu0 0
      %796 = vmatpush1.bf16.xpose.msra.mxu0 0
      %797 = vmatprep.subr.bf16.mxu0 0
      %798 = vmatpush1.bf16.xpose.msra.mxu0 %v781
      %799 = vmatprep.subr.bf16.mxu0 0
      %800 = vmatpush2.bf16.xpose.msra.mxu0 0
      %801 = vmatprep.subr.bf16.mxu0 0
      %802 = vmatpush2.bf16.xpose.msra.mxu0 0
      %803 = vmatprep.subr.bf16.mxu0 0
      %804 = vmatpush2.bf16.xpose.msra.mxu0 0
      %805 = vmatprep.subr.bf16.mxu0 0
      %806 = vmatpush2.bf16.xpose.msra.mxu0 0
      %807 = vmatprep.subr.bf16.mxu0 0
      %808 = vmatpush2.bf16.xpose.msra.mxu0 0
      %809 = vmatprep.subr.bf16.mxu0 0
      %810 = vmatpush2.bf16.xpose.msra.mxu0 0
      %811 = vmatprep.subr.bf16.mxu0 0
      %812 = vmatpush2.bf16.xpose.msra.mxu0 0
      %813 = vmatprep.subr.bf16.mxu0 0
      %814 = vmatpush2.bf16.xpose.msra.mxu0 0
      %815 = vmatprep.mubr.bf16.mxu0 0
      %816 = vmatmul.mubr.bf16.gmra.mxu0 %v778
      %v817 = vpop.f32.mrf.mxu0
      %v818 = vadd.f32 0.0, %v817
      %v819 = vpop.f32.mrf.mxu0
      %v820 = vpop.f32.mrf.mxu0
      %v821 = vpop.f32.mrf.mxu0
      %822 = vdwg.mxu0
      %v823 = vmul.f32 %v674, 0.35355338
      %v824 = vmul.f32 %v722, 0.35355338
      %v825 = vmul.f32 %v770, 0.35355338
      %v826 = vmul.f32 %v818, 0.35355338
      %v827 = vadd.f32 %v823, %v618
      %v828 = vadd.f32 %v824, %v618
      %v829 = vadd.f32 %v825, %v618
      %v830 = vadd.f32 %v826, %v618
      %v831 = vsel %vm632, %v827, -inf
      %832 = vmax.xlane.f32.xlu0 %v831
      %v833 = vpop.xlane.xlu0 %832
      %v834 = vsel %vm632, %v828, -inf
      %835 = vmax.xlane.f32.xlu0 %v834
      %v836 = vpop.xlane.xlu0 %835
      %v837 = vsel %vm632, %v829, -inf
      %838 = vmax.xlane.f32.xlu0 %v837
      %v839 = vpop.xlane.xlu0 %838
      %v840 = vsel %vm632, %v830, -inf
      %841 = vmax.xlane.f32.xlu0 %v840
      %v842 = vpop.xlane.xlu0 %841
      %v843 = vsub.f32 %v827, %v833
      %v844 = vsub.f32 %v828, %v836
      %v845 = vsub.f32 %v829, %v839
      %v846 = vsub.f32 %v830, %v842
      %v847 = vmul.f32 %v843, 1.442695
      %v848 = vpow.pop %v847
      %v849 = vmul.f32 %v844, 1.442695
      %v850 = vpow.pop %v849
      %v851 = vmul.f32 %v845, 1.442695
      %v852 = vpow.pop %v851
      %v853 = vmul.f32 %v846, 1.442695
      %v854 = vpow.pop %v853
      %v855 = vsel %vm632, %v848, 0.0
      %856 = vadd.xlane.f32.xlu0 %v855
      %v857 = vpop.xlane.xlu0 %856
      %v858 = vsel %vm632, %v850, 0.0
      %859 = vadd.xlane.f32.xlu0 %v858
      %v860 = vpop.xlane.xlu0 %859
      %v861 = vsel %vm632, %v852, 0.0
      %862 = vadd.xlane.f32.xlu0 %v861
      %v863 = vpop.xlane.xlu0 %862
      %v864 = vsel %vm632, %v854, 0.0
      %865 = vadd.xlane.f32.xlu0 %v864
      %v866 = vpop.xlane.xlu0 %865
      %v867 = vrcp.pop %v857
      %v868 = vrcp.pop %v860
      %v869 = vrcp.pop %v863
      %v870 = vrcp.pop %v866
      %v871 = vmul.f32 %v848, %v867
      %v872 = vmul.f32 %v850, %v868
      %v873 = vmul.f32 %v852, %v869
      %v874 = vmul.f32 %v854, %v870
      %v875 = vpack.c.bf16 %v871, %v871
      %v876 = vpack.c.bf16 %v872, %v872
      %v877 = vpack.c.bf16 %v873, %v873
      %v878 = vpack.c.bf16 %v874, %v874
      %879 = vrot.lane.b32.xlu0 %v617, 64
      %v880 = vpop.permute.xlu0 %879
      %v882 = vsel %vm632, %v875, 0
      %vm884 = vcmask 1043456
      %v886 = vsel %vm884, %v880, 0
      %888 = vmatprep.subr.bf16.mxu0 0
      %889 = vmatpush1.bf16.msra.mxu0 0
      %890 = vmatprep.subr.bf16.mxu0 0
      %891 = vmatpush1.bf16.msra.mxu0 0
      %892 = vmatprep.subr.bf16.mxu0 0
      %893 = vmatpush1.bf16.msra.mxu0 0
      %894 = vmatprep.subr.bf16.mxu0 0
      %895 = vmatpush1.bf16.msra.mxu0 0
      %896 = vmatprep.subr.bf16.mxu0 0
      %897 = vmatpush1.bf16.msra.mxu0 0
      %898 = vmatprep.subr.bf16.mxu0 0
      %899 = vmatpush1.bf16.msra.mxu0 0
      %900 = vmatprep.subr.bf16.mxu0 0
      %901 = vmatpush1.bf16.msra.mxu0 0
      %902 = vmatprep.subr.bf16.mxu0 0
      %903 = vmatpush1.bf16.msra.mxu0 %v886
      %904 = vmatprep.subr.bf16.mxu0 0
      %905 = vmatpush2.bf16.msra.mxu0 0
      %906 = vmatprep.subr.bf16.mxu0 0
      %907 = vmatpush2.bf16.msra.mxu0 0
      %908 = vmatprep.subr.bf16.mxu0 0
      %909 = vmatpush2.bf16.msra.mxu0 0
      %910 = vmatprep.subr.bf16.mxu0 0
      %911 = vmatpush2.bf16.msra.mxu0 0
      %912 = vmatprep.subr.bf16.mxu0 0
      %913 = vmatpush2.bf16.msra.mxu0 0
      %914 = vmatprep.subr.bf16.mxu0 0
      %915 = vmatpush2.bf16.msra.mxu0 0
      %916 = vmatprep.subr.bf16.mxu0 0
      %917 = vmatpush2.bf16.msra.mxu0 0
      %918 = vmatprep.subr.bf16.mxu0 0
      %919 = vmatpush2.bf16.msra.mxu0 0
      %920 = vmatprep.mubr.bf16.mxu0 0
      %921 = vmatmul.mubr.bf16.gmra.mxu0 %v882
      %v922 = vpop.f32.mrf.mxu0
      %v923 = vadd.f32 0.0, %v922
      %v924 = vpop.f32.mrf.mxu0
      %v925 = vpop.f32.mrf.mxu0
      %v926 = vpop.f32.mrf.mxu0
      %927 = vdwg.mxu0
      %928 = vrot.lane.b32.xlu0 %v625, 64
      %v929 = vpop.permute.xlu0 %928
      %v931 = vsel %vm632, %v876, 0
      %v934 = vsel %vm884, %v929, 0
      %936 = vmatprep.subr.bf16.mxu0 0
      %937 = vmatpush1.bf16.msra.mxu0 0
      %938 = vmatprep.subr.bf16.mxu0 0
      %939 = vmatpush1.bf16.msra.mxu0 0
      %940 = vmatprep.subr.bf16.mxu0 0
      %941 = vmatpush1.bf16.msra.mxu0 0
      %942 = vmatprep.subr.bf16.mxu0 0
      %943 = vmatpush1.bf16.msra.mxu0 0
      %944 = vmatprep.subr.bf16.mxu0 0
      %945 = vmatpush1.bf16.msra.mxu0 0
      %946 = vmatprep.subr.bf16.mxu0 0
      %947 = vmatpush1.bf16.msra.mxu0 0
      %948 = vmatprep.subr.bf16.mxu0 0
      %949 = vmatpush1.bf16.msra.mxu0 0
      %950 = vmatprep.subr.bf16.mxu0 0
      %951 = vmatpush1.bf16.msra.mxu0 %v934
      %952 = vmatprep.subr.bf16.mxu0 0
      %953 = vmatpush2.bf16.msra.mxu0 0
      %954 = vmatprep.subr.bf16.mxu0 0
      %955 = vmatpush2.bf16.msra.mxu0 0
      %956 = vmatprep.subr.bf16.mxu0 0
      %957 = vmatpush2.bf16.msra.mxu0 0
      %958 = vmatprep.subr.bf16.mxu0 0
      %959 = vmatpush2.bf16.msra.mxu0 0
      %960 = vmatprep.subr.bf16.mxu0 0
      %961 = vmatpush2.bf16.msra.mxu0 0
      %962 = vmatprep.subr.bf16.mxu0 0
      %963 = vmatpush2.bf16.msra.mxu0 0
      %964 = vmatprep.subr.bf16.mxu0 0
      %965 = vmatpush2.bf16.msra.mxu0 0
      %966 = vmatprep.subr.bf16.mxu0 0
      %967 = vmatpush2.bf16.msra.mxu0 0
      %968 = vmatprep.mubr.bf16.mxu0 0
      %969 = vmatmul.mubr.bf16.gmra.mxu0 %v931
      %v970 = vpop.f32.mrf.mxu0
      %v971 = vadd.f32 0.0, %v970
      %v972 = vpop.f32.mrf.mxu0
      %v973 = vpop.f32.mrf.mxu0
      %v974 = vpop.f32.mrf.mxu0
      %975 = vdwg.mxu0
      %976 = vrot.lane.b32.xlu0 %v627, 64
      %v977 = vpop.permute.xlu0 %976
      %v979 = vsel %vm632, %v877, 0
      %v982 = vsel %vm884, %v977, 0
      %984 = vmatprep.subr.bf16.mxu0 0
      %985 = vmatpush1.bf16.msra.mxu0 0
      %986 = vmatprep.subr.bf16.mxu0 0
      %987 = vmatpush1.bf16.msra.mxu0 0
      %988 = vmatprep.subr.bf16.mxu0 0
      %989 = vmatpush1.bf16.msra.mxu0 0
      %990 = vmatprep.subr.bf16.mxu0 0
      %991 = vmatpush1.bf16.msra.mxu0 0
      %992 = vmatprep.subr.bf16.mxu0 0
      %993 = vmatpush1.bf16.msra.mxu0 0
      %994 = vmatprep.subr.bf16.mxu0 0
      %995 = vmatpush1.bf16.msra.mxu0 0
      %996 = vmatprep.subr.bf16.mxu0 0
      %997 = vmatpush1.bf16.msra.mxu0 0
      %998 = vmatprep.subr.bf16.mxu0 0
      %999 = vmatpush1.bf16.msra.mxu0 %v982
      %1000 = vmatprep.subr.bf16.mxu0 0
      %1001 = vmatpush2.bf16.msra.mxu0 0
      %1002 = vmatprep.subr.bf16.mxu0 0
      %1003 = vmatpush2.bf16.msra.mxu0 0
      %1004 = vmatprep.subr.bf16.mxu0 0
      %1005 = vmatpush2.bf16.msra.mxu0 0
      %1006 = vmatprep.subr.bf16.mxu0 0
      %1007 = vmatpush2.bf16.msra.mxu0 0
      %1008 = vmatprep.subr.bf16.mxu0 0
      %1009 = vmatpush2.bf16.msra.mxu0 0
      %1010 = vmatprep.subr.bf16.mxu0 0
      %1011 = vmatpush2.bf16.msra.mxu0 0
      %1012 = vmatprep.subr.bf16.mxu0 0
      %1013 = vmatpush2.bf16.msra.mxu0 0
      %1014 = vmatprep.subr.bf16.mxu0 0
      %1015 = vmatpush2.bf16.msra.mxu0 0
      %1016 = vmatprep.mubr.bf16.mxu0 0
      %1017 = vmatmul.mubr.bf16.gmra.mxu0 %v979
      %v1018 = vpop.f32.mrf.mxu0
      %v1019 = vadd.f32 0.0, %v1018
      %v1020 = vpop.f32.mrf.mxu0
      %v1021 = vpop.f32.mrf.mxu0
      %v1022 = vpop.f32.mrf.mxu0
      %1023 = vdwg.mxu0
      %1024 = vrot.lane.b32.xlu0 %v629, 64
      %v1025 = vpop.permute.xlu0 %1024
      %v1027 = vsel %vm632, %v878, 0
      %v1030 = vsel %vm884, %v1025, 0
      %1032 = vmatprep.subr.bf16.mxu0 0
      %1033 = vmatpush1.bf16.msra.mxu0 0
      %1034 = vmatprep.subr.bf16.mxu0 0
      %1035 = vmatpush1.bf16.msra.mxu0 0
      %1036 = vmatprep.subr.bf16.mxu0 0
      %1037 = vmatpush1.bf16.msra.mxu0 0
      %1038 = vmatprep.subr.bf16.mxu0 0
      %1039 = vmatpush1.bf16.msra.mxu0 0
      %1040 = vmatprep.subr.bf16.mxu0 0
      %1041 = vmatpush1.bf16.msra.mxu0 0
      %1042 = vmatprep.subr.bf16.mxu0 0
      %1043 = vmatpush1.bf16.msra.mxu0 0
      %1044 = vmatprep.subr.bf16.mxu0 0
      %1045 = vmatpush1.bf16.msra.mxu0 0
      %1046 = vmatprep.subr.bf16.mxu0 0
      %1047 = vmatpush1.bf16.msra.mxu0 %v1030
      %1048 = vmatprep.subr.bf16.mxu0 0
      %1049 = vmatpush2.bf16.msra.mxu0 0
      %1050 = vmatprep.subr.bf16.mxu0 0
      %1051 = vmatpush2.bf16.msra.mxu0 0
      %1052 = vmatprep.subr.bf16.mxu0 0
      %1053 = vmatpush2.bf16.msra.mxu0 0
      %1054 = vmatprep.subr.bf16.mxu0 0
      %1055 = vmatpush2.bf16.msra.mxu0 0
      %1056 = vmatprep.subr.bf16.mxu0 0
      %1057 = vmatpush2.bf16.msra.mxu0 0
      %1058 = vmatprep.subr.bf16.mxu0 0
      %1059 = vmatpush2.bf16.msra.mxu0 0
      %1060 = vmatprep.subr.bf16.mxu0 0
      %1061 = vmatpush2.bf16.msra.mxu0 0
      %1062 = vmatprep.subr.bf16.mxu0 0
      %1063 = vmatpush2.bf16.msra.mxu0 0
      %1064 = vmatprep.mubr.bf16.mxu0 0
      %1065 = vmatmul.mubr.bf16.gmra.mxu0 %v1027
      %v1066 = vpop.f32.mrf.mxu0
      %v1067 = vadd.f32 0.0, %v1066
      %v1068 = vpop.f32.mrf.mxu0
      %v1069 = vpop.f32.mrf.mxu0
      %v1070 = vpop.f32.mrf.mxu0
      %1071 = vdwg.mxu0
      %v1072 = vpack.c.bf16 %v923, %v923
      %v1073 = vpack.c.bf16 %v971, %v971
      %v1075 = vsel %vm632, %v1073, 0
      %v1078 = vsel %vm884, %v620, 0
      %1080 = vmatprep.subr.bf16.mxu0 0
      %1081 = vmatpush1.bf16.msra.mxu0 0
      %1082 = vmatprep.subr.bf16.mxu0 0
      %1083 = vmatpush1.bf16.msra.mxu0 0
      %1084 = vmatprep.subr.bf16.mxu0 0
      %1085 = vmatpush1.bf16.msra.mxu0 0
      %1086 = vmatprep.subr.bf16.mxu0 0
      %1087 = vmatpush1.bf16.msra.mxu0 0
      %1088 = vmatprep.subr.bf16.mxu0 0
      %1089 = vmatpush1.bf16.msra.mxu0 0
      %1090 = vmatprep.subr.bf16.mxu0 0
      %1091 = vmatpush1.bf16.msra.mxu0 0
      %1092 = vmatprep.subr.bf16.mxu0 0
      %1093 = vmatpush1.bf16.msra.mxu0 0
      %1094 = vmatprep.subr.bf16.mxu0 0
      %1095 = vmatpush1.bf16.msra.mxu0 %v1078
      %1096 = vmatprep.subr.bf16.mxu0 0
      %1097 = vmatpush2.bf16.msra.mxu0 0
      %1098 = vmatprep.subr.bf16.mxu0 0
      %1099 = vmatpush2.bf16.msra.mxu0 0
      %1100 = vmatprep.subr.bf16.mxu0 0
      %1101 = vmatpush2.bf16.msra.mxu0 0
      %1102 = vmatprep.subr.bf16.mxu0 0
      %1103 = vmatpush2.bf16.msra.mxu0 0
      %1104 = vmatprep.subr.bf16.mxu0 0
      %1105 = vmatpush2.bf16.msra.mxu0 0
      %1106 = vmatprep.subr.bf16.mxu0 0
      %1107 = vmatpush2.bf16.msra.mxu0 0
      %1108 = vmatprep.subr.bf16.mxu0 0
      %1109 = vmatpush2.bf16.msra.mxu0 0
      %1110 = vmatprep.subr.bf16.mxu0 0
      %1111 = vmatpush2.bf16.msra.mxu0 0
      %1112 = vmatprep.mubr.bf16.mxu0 0
      %1113 = vmatmul.mubr.bf16.gmra.mxu0 %v1075
      %v1114 = vpop.f32.mrf.mxu0
      %v1115 = vadd.f32 0.0, %v1114
      %v1116 = vpop.f32.mrf.mxu0
      %v1117 = vpop.f32.mrf.mxu0
      %v1118 = vpop.f32.mrf.mxu0
      %1119 = vdwg.mxu0
      %v1121 = vsel %vm632, %v1072, 0
      %v1124 = vsel %vm884, %v619, 0
      %1126 = vmatprep.subr.bf16.mxu0 0
      %1127 = vmatpush1.bf16.msra.mxu0 0
      %1128 = vmatprep.subr.bf16.mxu0 0
      %1129 = vmatpush1.bf16.msra.mxu0 0
      %1130 = vmatprep.subr.bf16.mxu0 0
      %1131 = vmatpush1.bf16.msra.mxu0 0
      %1132 = vmatprep.subr.bf16.mxu0 0
      %1133 = vmatpush1.bf16.msra.mxu0 0
      %1134 = vmatprep.subr.bf16.mxu0 0
      %1135 = vmatpush1.bf16.msra.mxu0 0
      %1136 = vmatprep.subr.bf16.mxu0 0
      %1137 = vmatpush1.bf16.msra.mxu0 0
      %1138 = vmatprep.subr.bf16.mxu0 0
      %1139 = vmatpush1.bf16.msra.mxu0 0
      %1140 = vmatprep.subr.bf16.mxu0 0
      %1141 = vmatpush1.bf16.msra.mxu0 %v1124
      %1142 = vmatprep.subr.bf16.mxu0 0
      %1143 = vmatpush2.bf16.msra.mxu0 0
      %1144 = vmatprep.subr.bf16.mxu0 0
      %1145 = vmatpush2.bf16.msra.mxu0 0
      %1146 = vmatprep.subr.bf16.mxu0 0
      %1147 = vmatpush2.bf16.msra.mxu0 0
      %1148 = vmatprep.subr.bf16.mxu0 0
      %1149 = vmatpush2.bf16.msra.mxu0 0
      %1150 = vmatprep.subr.bf16.mxu0 0
      %1151 = vmatpush2.bf16.msra.mxu0 0
      %1152 = vmatprep.subr.bf16.mxu0 0
      %1153 = vmatpush2.bf16.msra.mxu0 0
      %1154 = vmatprep.subr.bf16.mxu0 0
      %1155 = vmatpush2.bf16.msra.mxu0 0
      %1156 = vmatprep.subr.bf16.mxu0 0
      %1157 = vmatpush2.bf16.msra.mxu0 0
      %1158 = vmatprep.mubr.bf16.mxu0 0
      %1159 = vmatmul.mubr.bf16.gmra.mxu0 %v1121
      %v1160 = vpop.f32.mrf.mxu0
      %v1161 = vadd.f32 %v1115, %v1160
      %v1162 = vpop.f32.mrf.mxu0
      %v1163 = vpop.f32.mrf.mxu0
      %v1164 = vpop.f32.mrf.mxu0
      %1165 = vdwg.mxu0
      %v1166 = vpack.c.bf16 %v1019, %v1019
      %v1168 = vsel %vm632, %v1166, 0
      %v1171 = vsel %vm884, %v621, 0
      %1173 = vmatprep.subr.bf16.mxu0 0
      %1174 = vmatpush1.bf16.msra.mxu0 0
      %1175 = vmatprep.subr.bf16.mxu0 0
      %1176 = vmatpush1.bf16.msra.mxu0 0
      %1177 = vmatprep.subr.bf16.mxu0 0
      %1178 = vmatpush1.bf16.msra.mxu0 0
      %1179 = vmatprep.subr.bf16.mxu0 0
      %1180 = vmatpush1.bf16.msra.mxu0 0
      %1181 = vmatprep.subr.bf16.mxu0 0
      %1182 = vmatpush1.bf16.msra.mxu0 0
      %1183 = vmatprep.subr.bf16.mxu0 0
      %1184 = vmatpush1.bf16.msra.mxu0 0
      %1185 = vmatprep.subr.bf16.mxu0 0
      %1186 = vmatpush1.bf16.msra.mxu0 0
      %1187 = vmatprep.subr.bf16.mxu0 0
      %1188 = vmatpush1.bf16.msra.mxu0 %v1171
      %1189 = vmatprep.subr.bf16.mxu0 0
      %1190 = vmatpush2.bf16.msra.mxu0 0
      %1191 = vmatprep.subr.bf16.mxu0 0
      %1192 = vmatpush2.bf16.msra.mxu0 0
      %1193 = vmatprep.subr.bf16.mxu0 0
      %1194 = vmatpush2.bf16.msra.mxu0 0
      %1195 = vmatprep.subr.bf16.mxu0 0
      %1196 = vmatpush2.bf16.msra.mxu0 0
      %1197 = vmatprep.subr.bf16.mxu0 0
      %1198 = vmatpush2.bf16.msra.mxu0 0
      %1199 = vmatprep.subr.bf16.mxu0 0
      %1200 = vmatpush2.bf16.msra.mxu0 0
      %1201 = vmatprep.subr.bf16.mxu0 0
      %1202 = vmatpush2.bf16.msra.mxu0 0
      %1203 = vmatprep.subr.bf16.mxu0 0
      %1204 = vmatpush2.bf16.msra.mxu0 0
      %1205 = vmatprep.mubr.bf16.mxu0 0
      %1206 = vmatmul.mubr.bf16.gmra.mxu0 %v1168
      %v1207 = vpop.f32.mrf.mxu0
      %v1208 = vadd.f32 0.0, %v1207
      %v1209 = vpop.f32.mrf.mxu0
      %v1210 = vpop.f32.mrf.mxu0
      %v1211 = vpop.f32.mrf.mxu0
      %1212 = vdwg.mxu0
      %v1213 = vadd.f32 %v1161, %v1208
      %v1214 = vpack.c.bf16 %v1067, %v1067
      %v1216 = vsel %vm632, %v1214, 0
      %v1219 = vsel %vm884, %v622, 0
      %1221 = vmatprep.subr.bf16.mxu0 0
      %1222 = vmatpush1.bf16.msra.mxu0 0
      %1223 = vmatprep.subr.bf16.mxu0 0
      %1224 = vmatpush1.bf16.msra.mxu0 0
      %1225 = vmatprep.subr.bf16.mxu0 0
      %1226 = vmatpush1.bf16.msra.mxu0 0
      %1227 = vmatprep.subr.bf16.mxu0 0
      %1228 = vmatpush1.bf16.msra.mxu0 0
      %1229 = vmatprep.subr.bf16.mxu0 0
      %1230 = vmatpush1.bf16.msra.mxu0 0
      %1231 = vmatprep.subr.bf16.mxu0 0
      %1232 = vmatpush1.bf16.msra.mxu0 0
      %1233 = vmatprep.subr.bf16.mxu0 0
      %1234 = vmatpush1.bf16.msra.mxu0 0
      %1235 = vmatprep.subr.bf16.mxu0 0
      %1236 = vmatpush1.bf16.msra.mxu0 %v1219
      %1237 = vmatprep.subr.bf16.mxu0 0
      %1238 = vmatpush2.bf16.msra.mxu0 0
      %1239 = vmatprep.subr.bf16.mxu0 0
      %1240 = vmatpush2.bf16.msra.mxu0 0
      %1241 = vmatprep.subr.bf16.mxu0 0
      %1242 = vmatpush2.bf16.msra.mxu0 0
      %1243 = vmatprep.subr.bf16.mxu0 0
      %1244 = vmatpush2.bf16.msra.mxu0 0
      %1245 = vmatprep.subr.bf16.mxu0 0
      %1246 = vmatpush2.bf16.msra.mxu0 0
      %1247 = vmatprep.subr.bf16.mxu0 0
      %1248 = vmatpush2.bf16.msra.mxu0 0
      %1249 = vmatprep.subr.bf16.mxu0 0
      %1250 = vmatpush2.bf16.msra.mxu0 0
      %1251 = vmatprep.subr.bf16.mxu0 0
      %1252 = vmatpush2.bf16.msra.mxu0 0
      %1253 = vmatprep.mubr.bf16.mxu0 0
      %1254 = vmatmul.mubr.bf16.gmra.mxu0 %v1216
      %v1255 = vpop.f32.mrf.mxu0
      %v1256 = vadd.f32 0.0, %v1255
      %v1257 = vpop.f32.mrf.mxu0
      %v1258 = vpop.f32.mrf.mxu0
      %v1259 = vpop.f32.mrf.mxu0
      %1260 = vdwg.mxu0
      %v1261 = vadd.f32 %v1213, %v1256
      %1262 = vst.msk [vmem:[#allocation2] sm:$0xff] %vm521, %v1261
      %v1263 = vld [vmem:[#allocation2] sm:$0xff]
      %v1264 = vadd.f32 %v518, %v1263
      %v1265 = vld [vmem:[%s6] sm:$0x1]
      %v1267 = vlaneseq
      %v1268 = vshrl.u32 %v1267, 7
      %v1269 = vsub.s32 0, %v1268
      %v1270 = vrot.slane %v1265, %v1269
      %v1272 = vadd.f32 %v1264, %v1270
      %v1273 = vld [vmem:[%s7] sm:$0x1]
      %v1274 = vld [vmem:[%s8] sm:$0x1]
      %v1275 = vsel %vm521, %v1272, 0.0
      %1276 = vadd.xlane.f32.xlu0 %v1275
      %v1277 = vpop.xlane.xlu0 %1276
      %v1278 = vmul.f32 %v1277, %v525
      %v1279 = vsub.f32 %v1272, %v1278
      %v1280 = vmul.f32 %v1279, %v1279
      %v1281 = vsel %vm521, %v1280, 0.0
      %1282 = vadd.xlane.f32.xlu0 %v1281
      %v1283 = vpop.xlane.xlu0 %1282
      %v1284 = vmul.f32 %v1283, %v525
      %v1285 = vadd.f32 %v1284, 1e-05
      %v1286 = vrsqrt.pop %v1285
      %v1287 = vmul.f32 %v1279, %v1286
      %v1289 = vlaneseq
      %v1290 = vshrl.u32 %v1289, 7
      %v1291 = vsub.s32 0, %v1290
      %v1292 = vrot.slane %v1273, %v1291
      %v1294 = vmul.f32 %v1287, %v1292
      %v1296 = vlaneseq
      %v1297 = vshrl.u32 %v1296, 7
      %v1298 = vsub.s32 0, %v1297
      %v1299 = vrot.slane %v1274, %v1298
      %v1301 = vadd.f32 %v1294, %v1299
      %v1302 = vpack.c.bf16 %v1301, %v1301
      %v1303 = vld [vmem:[%s9] sm:$0xf]
      %v1304 = vld [vmem:[%s9 + $0x4] sm:$0xf]
      %v1305 = vld [vmem:[%s9 + $0x8] sm:$0xf]
      %v1306 = vld [vmem:[%s9 + $0xc] sm:$0xf]
      %v1307 = vld [vmem:[%s10] sm:$0x1]
      %v1309 = vlaneseq
      %v1310 = vshrl.u32 %v1309, 7
      %v1311 = vsub.s32 0, %v1310
      %v1312 = vrot.slane %v1307, %v1311
      %v1318 = vunpack.c.l.b16 %v1303
      %v1319 = vunpack.c.l.b16 %v1304
      %v1320 = vunpack.c.l.b16 %v1305
      %v1321 = vunpack.c.l.b16 %v1306
      %v1322 = vpack.c.b16 %v1319, %v1318
      %v1323 = vpack.c.b16 %v1321, %v1320
      %v1327 = vsel %vm521, %v1302, 0
      %1329 = vmatprep.subr.bf16.mxu0 0
      %1330 = vmatpush1.bf16.msra.mxu0 0
      %1331 = vmatprep.subr.bf16.mxu0 0
      %1332 = vmatpush1.bf16.msra.mxu0 0
      %1333 = vmatprep.subr.bf16.mxu0 0
      %1334 = vmatpush1.bf16.msra.mxu0 0
      %1335 = vmatprep.subr.bf16.mxu0 0
      %1336 = vmatpush1.bf16.msra.mxu0 0
      %1337 = vmatprep.subr.bf16.mxu0 0
      %1338 = vmatpush1.bf16.msra.mxu0 0
      %1339 = vmatprep.subr.bf16.mxu0 0
      %1340 = vmatpush1.bf16.msra.mxu0 0
      %1341 = vmatprep.subr.bf16.mxu0 0
      %1342 = vmatpush1.bf16.msra.mxu0 %v1323
      %1343 = vmatprep.subr.bf16.mxu0 0
      %1344 = vmatpush1.bf16.msra.mxu0 %v1322
      %1345 = vmatprep.subr.bf16.mxu0 0
      %1346 = vmatpush2.bf16.msra.mxu0 0
      %1347 = vmatprep.subr.bf16.mxu0 0
      %1348 = vmatpush2.bf16.msra.mxu0 0
      %1349 = vmatprep.subr.bf16.mxu0 0
      %1350 = vmatpush2.bf16.msra.mxu0 0
      %1351 = vmatprep.subr.bf16.mxu0 0
      %1352 = vmatpush2.bf16.msra.mxu0 0
      %1353 = vmatprep.subr.bf16.mxu0 0
      %1354 = vmatpush2.bf16.msra.mxu0 0
      %1355 = vmatprep.subr.bf16.mxu0 0
      %1356 = vmatpush2.bf16.msra.mxu0 0
      %1357 = vmatprep.subr.bf16.mxu0 0
      %1358 = vmatpush2.bf16.msra.mxu0 0
      %1359 = vmatprep.subr.bf16.mxu0 0
      %1360 = vmatpush2.bf16.msra.mxu0 0
      %1361 = vmatprep.mubr.bf16.mxu0 0
      %1362 = vmatmul.mubr.bf16.gmra.mxu0 %v1327
      %v1363 = vpop.f32.mrf.mxu0
      %v1364 = vadd.f32 %v1312, %v1363
      %v1365 = vpop.f32.mrf.mxu0
      %v1366 = vpop.f32.mrf.mxu0
      %v1367 = vpop.f32.mrf.mxu0
      %1368 = vdwg.mxu0
      %v1369 = vmul.f32 %v1364, 0.5
      %v1370 = vmul.f32 %v1364, 0.044715
      %v1371 = vmul.f32 %v1370, %v1364
      %v1372 = vmul.f32 %v1371, %v1364
      %v1373 = vadd.f32 %v1364, %v1372
      %v1374 = vmul.f32 %v1373, 0.7978846
      %v1375 = vtanh.pop %v1374
      %v1376 = vadd.f32 %v1375, 1.0
      %v1377 = vmul.f32 %v1369, %v1376
      %v1378 = vpack.c.bf16 %v1377, %v1377
      %v1379 = vld [vmem:[%s11] sm:$0xf]
      %v1380 = vld [vmem:[%s11 + $0x4] sm:$0xf]
      %v1381 = vld [vmem:[%s11 + $0x8] sm:$0xf]
      %v1382 = vld [vmem:[%s11 + $0xc] sm:$0xf]
      %v1383 = vld [vmem:[%s11 + $0x10] sm:$0xf]
      %v1384 = vld [vmem:[%s11 + $0x14] sm:$0xf]
      %v1385 = vld [vmem:[%s11 + $0x18] sm:$0xf]
      %v1386 = vld [vmem:[%s11 + $0x1c] sm:$0xf]
      %v1387 = vld [vmem:[%s11 + $0x20] sm:$0xf]
      %v1388 = vld [vmem:[%s11 + $0x24] sm:$0xf]
      %v1389 = vld [vmem:[%s11 + $0x28] sm:$0xf]
      %v1390 = vld [vmem:[%s11 + $0x2c] sm:$0xf]
      %v1391 = vld [vmem:[%s11 + $0x30] sm:$0xf]
      %v1392 = vld [vmem:[%s11 + $0x34] sm:$0xf]
      %v1393 = vld [vmem:[%s11 + $0x38] sm:$0xf]
      %v1394 = vld [vmem:[%s11 + $0x3c] sm:$0xf]
      %v1395 = vld [vmem:[%s12] sm:$0x1]
      %v1397 = vlaneseq
      %v1398 = vshrl.u32 %v1397, 7
      %v1399 = vsub.s32 0, %v1398
      %v1400 = vrot.slane %v1395, %v1399
      %v1418 = vunpack.c.l.b16 %v1379
      %v1419 = vunpack.c.l.b16 %v1380
      %v1420 = vunpack.c.l.b16 %v1381
      %v1421 = vunpack.c.l.b16 %v1382
      %v1422 = vunpack.c.l.b16 %v1383
      %v1423 = vunpack.c.l.b16 %v1384
      %v1424 = vunpack.c.l.b16 %v1385
      %v1425 = vunpack.c.l.b16 %v1386
      %v1426 = vunpack.c.l.b16 %v1387
      %v1427 = vunpack.c.l.b16 %v1388
      %v1428 = vunpack.c.l.b16 %v1389
      %v1429 = vunpack.c.l.b16 %v1390
      %v1430 = vunpack.c.l.b16 %v1391
      %v1431 = vunpack.c.l.b16 %v1392
      %v1432 = vunpack.c.l.b16 %v1393
      %v1433 = vunpack.c.l.b16 %v1394
      %v1434 = vpack.c.b16 %v1419, %v1418
      %v1435 = vpack.c.b16 %v1421, %v1420
      %v1436 = vpack.c.b16 %v1423, %v1422
      %v1437 = vpack.c.b16 %v1425, %v1424
      %v1438 = vpack.c.b16 %v1427, %v1426
      %v1439 = vpack.c.b16 %v1429, %v1428
      %v1440 = vpack.c.b16 %v1431, %v1430
      %v1441 = vpack.c.b16 %v1433, %v1432
      %1450 = vmatprep.subr.bf16.mxu0 0
      %1451 = vmatpush1.bf16.msra.mxu0 %v1441
      %1452 = vmatprep.subr.bf16.mxu0 0
      %1453 = vmatpush1.bf16.msra.mxu0 %v1440
      %1454 = vmatprep.subr.bf16.mxu0 0
      %1455 = vmatpush1.bf16.msra.mxu0 %v1439
      %1456 = vmatprep.subr.bf16.mxu0 0
      %1457 = vmatpush1.bf16.msra.mxu0 %v1438
      %1458 = vmatprep.subr.bf16.mxu0 0
      %1459 = vmatpush1.bf16.msra.mxu0 %v1437
      %1460 = vmatprep.subr.bf16.mxu0 0
      %1461 = vmatpush1.bf16.msra.mxu0 %v1436
      %1462 = vmatprep.subr.bf16.mxu0 0
      %1463 = vmatpush1.bf16.msra.mxu0 %v1435
      %1464 = vmatprep.subr.bf16.mxu0 0
      %1465 = vmatpush1.bf16.msra.mxu0 %v1434
      %1466 = vmatprep.subr.bf16.mxu0 0
      %1467 = vmatpush2.bf16.msra.mxu0 0
      %1468 = vmatprep.subr.bf16.mxu0 0
      %1469 = vmatpush2.bf16.msra.mxu0 0
      %1470 = vmatprep.subr.bf16.mxu0 0
      %1471 = vmatpush2.bf16.msra.mxu0 0
      %1472 = vmatprep.subr.bf16.mxu0 0
      %1473 = vmatpush2.bf16.msra.mxu0 0
      %1474 = vmatprep.subr.bf16.mxu0 0
      %1475 = vmatpush2.bf16.msra.mxu0 0
      %1476 = vmatprep.subr.bf16.mxu0 0
      %1477 = vmatpush2.bf16.msra.mxu0 0
      %1478 = vmatprep.subr.bf16.mxu0 0
      %1479 = vmatpush2.bf16.msra.mxu0 0
      %1480 = vmatprep.subr.bf16.mxu0 0
      %1481 = vmatpush2.bf16.msra.mxu0 0
      %1482 = vmatprep.mubr.bf16.mxu0 0
      %1483 = vmatmul.mubr.bf16.gmra.mxu0 %v1378
      %v1484 = vpop.f32.mrf.mxu0
      %v1485 = vadd.f32 %v1400, %v1484
      %v1486 = vpop.f32.mrf.mxu0
      %v1487 = vpop.f32.mrf.mxu0
      %v1488 = vpop.f32.mrf.mxu0
      %1489 = vdwg.mxu0
      %v1490 = vadd.f32 %v1272, %v1485
      %v1491 = vld [vmem:[%s13] sm:$0x1]
      %v1492 = vld [vmem:[%s14] sm:$0x1]
      %v1493 = vsel %vm521, %v1490, 0.0
      %1494 = vadd.xlane.f32.xlu0 %v1493
      %v1495 = vpop.xlane.xlu0 %1494
      %v1496 = vmul.f32 %v1495, %v525
      %v1497 = vsub.f32 %v1490, %v1496
      %v1498 = vmul.f32 %v1497, %v1497
      %v1499 = vsel %vm521, %v1498, 0.0
      %1500 = vadd.xlane.f32.xlu0 %v1499
      %v1501 = vpop.xlane.xlu0 %1500
      %v1502 = vmul.f32 %v1501, %v525
      %v1503 = vadd.f32 %v1502, 1e-05
      %v1504 = vrsqrt.pop %v1503
      %v1505 = vmul.f32 %v1497, %v1504
      %v1507 = vlaneseq
      %v1508 = vshrl.u32 %v1507, 7
      %v1509 = vsub.s32 0, %v1508
      %v1510 = vrot.slane %v1491, %v1509
      %v1512 = vmul.f32 %v1505, %v1510
      %v1514 = vlaneseq
      %v1515 = vshrl.u32 %v1514, 7
      %v1516 = vsub.s32 0, %v1515
      %v1517 = vrot.slane %v1492, %v1516
      %v1519 = vadd.f32 %v1512, %v1517
      %1520 = vst.msk [vmem:[%s516] sm:$0xff] %vm521, %v1519
      %p1521 = scmp.lt.s32.totalorder %s27, 1
      %s1522 = scalar_select %p1521, %s27, 1
      %s1523 = smul.addr %s1522, 8
      %s1524 = scalar_lea.vmem %s16, %s1523
      // Predicated region
      $region85: #{gpt_forward.6} parent=83 // pred_check
        %p1525 = pneg %p386
      $region86: #{gpt_forward.6} parent=83 // pred_check_branch
        %1527 = sbr.rel (%p1525) target = $region88
      $region87: #{gpt_forward.6} parent=83 // pred_region
        _
      $region88: #{gpt_forward.6} parent=83 // pred_fallthru
        _
    $region84: #{gpt_forward.6} parent=5 // pred_fallthru
      _
    %p1528 = scmp.le.s32.totalorder 2, %s22
    // Predicated region
    $region89: #{gpt_forward.6} parent=5 // pred_check
      %p1529 = pneg %p1528
    $region90: #{gpt_forward.6} parent=5 // pred_check_branch
      %1531 = sbr.rel (%p1529) target = $region92
    $region91: #{gpt_forward.6} parent=5 // pred_region
      %s1532 = ssub.s32 %s22, 2
      // Predicated region
      $region93: #{gpt_forward.6} parent=91 // pred_check
        %p1533 = pneg %p392
      $region94: #{gpt_forward.6} parent=91 // pred_check_branch
        %1535 = sbr.rel (%p1533) target = $region96
      $region95: #{gpt_forward.6} parent=91 // pred_region
        %p1536 = scmp.lt.s32.totalorder %s28, 1
        %s1537 = scalar_select %p1536, %s28, 1
        %s1538 = smul.addr %s1537, 8
        %s1539 = scalar_lea.vmem %s16, %s1538
      $region96: #{gpt_forward.6} parent=91 // pred_fallthru
        _
    $region92: #{gpt_forward.6} parent=5 // pred_fallthru
      _
  $region6: #{gpt_forward.6} parent=0 // loop_footer
    %s26 = sadd.s32 1, %s22
  $region7: #{gpt_forward.6} parent=0 // loop_footer_branch
    %21 = sbr.rel target = $region3
  $region8: #{gpt_forward.6} parent=0 // loop_exit
    _

// kernel: gpt_forward.5
$region0: #{gpt_forward.5}
  #allocation0 [shape = 'u32[]', space=smem, size = 0x4, offset = 0x4, fixed_abs, tag = 'smem constant byte address 0x4 - core index']
  #allocation1 [shape = 'u32[144,128]{1,0:T(1,128)}', space=vmem, size = 0x12000, scoped, tag = 'internal scratch']
  #allocation2 [shape = 'f32[8,32]{1,0:T(8,128)}', space=vmem, size = 0x1000, scoped, tag = 'scratch operand']
  %s0 = inlined_call_operand.vmem [shape: f32[16,32], index: 0, kind: input, shape index: {}]
  %s1 = inlined_call_operand.vmem [shape: f32[1,32], index: 1, kind: input, shape index: {}]
  %s2 = inlined_call_operand.vmem [shape: f32[1,32], index: 2, kind: input, shape index: {}]
  %s3 = inlined_call_operand.vmem [shape: bf16[32,96], index: 3, kind: input, shape index: {}]
  %s4 = inlined_call_operand.vmem [shape: f32[1,96], index: 4, kind: input, shape index: {}]
  %s5 = inlined_call_operand.vmem [shape: bf16[4,8,32], index: 5, kind: input, shape index: {}]
  %s6 = inlined_call_operand.vmem [shape: f32[1,32], index: 6, kind: input, shape index: {}]
  %s7 = inlined_call_operand.vmem [shape: f32[1,32], index: 7, kind: input, shape index: {}]
  %s8 = inlined_call_operand.vmem [shape: f32[1,32], index: 8, kind: input, shape index: {}]
  %s9 = inlined_call_operand.vmem [shape: bf16[32,128], index: 9, kind: input, shape index: {}]
  %s10 = inlined_call_operand.vmem [shape: f32[1,128], index: 10, kind: input, shape index: {}]
  %s11 = inlined_call_operand.vmem [shape: bf16[128,32], index: 11, kind: input, shape index: {}]
  %s12 = inlined_call_operand.vmem [shape: f32[1,32], index: 12, kind: input, shape index: {}]
  %s13 = inlined_call_operand.vmem [shape: f32[1,32], index: 13, kind: input, shape index: {}]
  %s14 = inlined_call_operand.vmem [shape: f32[1,32], index: 14, kind: input, shape index: {}]
  %s15 = inlined_call_operand.vmem [shape: f32[8,8], index: 15, kind: input, shape index: {}]
  %s16 = inlined_call_operand.vmem [shape: f32[16,32], index: 16, kind: output, shape index: {}]
  %s17 = sld [smem:[#allocation0]]
  $region97: #{gpt_forward.5} parent=0
    _
  %s19 = ssub.s32 1, %s17
  %s20 = scalar_select 0, %s19, %s17
  loop: start=0, step=1, limit=4
  $region2: #{gpt_forward.5} parent=0 // loop_pre_header
    _
  $region3: #{gpt_forward.5} parent=0 // loop_header
    %s22 = sphi 0, %s26
    %p23 = scmp.ge.s32.totalorder %s22, 4
    %s32 = sphi 0, %s34
    %s35 = sphi 0, %s32
    %s36 = sphi 0, %s35
    %s52 = sphi 0, %s36
    %s56 = sphi 0, %s56
    %s58 = sphi 0, %s56
    %s59 = sphi 0, %s58
    %s73 = sphi 0, %s59
    %s77 = sphi 0, %s77
    %s79 = sphi 0, %s77
    %s80 = sphi 0, %s79
    %s94 = sphi 0, %s80
    %s98 = sphi 0, %s98
    %s100 = sphi 0, %s98
    %s101 = sphi 0, %s100
    %s115 = sphi 0, %s101
    %s119 = sphi 0, %s119
    %s121 = sphi 0, %s119
    %s122 = sphi 0, %s121
    %s136 = sphi 0, %s122
    %s140 = sphi 0, %s140
    %s142 = sphi 0, %s140
    %s143 = sphi 0, %s142
    %s157 = sphi 0, %s143
    %s161 = sphi 0, %s161
    %s163 = sphi 0, %s161
    %s164 = sphi 0, %s163
    %s178 = sphi 0, %s164
    %s182 = sphi 0, %s182
    %s184 = sphi 0, %s182
    %s185 = sphi 0, %s184
    %s199 = sphi 0, %s185
    %s203 = sphi 0, %s203
    %s205 = sphi 0, %s203
    %s206 = sphi 0, %s205
    %s220 = sphi 0, %s206
    %s224 = sphi 0, %s224
    %s226 = sphi 0, %s224
    %s227 = sphi 0, %s226
    %s241 = sphi 0, %s227
    %s245 = sphi 0, %s245
    %s247 = sphi 0, %s245
    %s248 = sphi 0, %s247
    %s262 = sphi 0, %s248
    %s266 = sphi 0, %s266
    %s268 = sphi 0, %s266
    %s269 = sphi 0, %s268
    %s283 = sphi 0, %s269
    %s287 = sphi 0, %s287
    %s289 = sphi 0, %s287
    %s290 = sphi 0, %s289
    %s304 = sphi 0, %s290
    %s308 = sphi 0, %s308
    %s310 = sphi 0, %s308
    %s311 = sphi 0, %s310
    %s325 = sphi 0, %s311
    %s329 = sphi 0, %s329
    %s331 = sphi 0, %s329
    %s332 = sphi 0, %s331
    %s346 = sphi 0, %s332
    %s350 = sphi 0, %s350
    %s352 = sphi 0, %s350
    %s353 = sphi 0, %s352
    %s367 = sphi 0, %s353
    %s373 = sphi 0, %s375
    %s376 = sphi 0, %s373
    %s377 = sphi 0, %s376
    %s393 = sphi 0, %s377
  $region4: #{gpt_forward.5} parent=0 // loop_header_branch
    %25 = sbr.rel (%p23) target = $region8
  $region5: #{gpt_forward.5} parent=0 // loop_body
    %s27 = ssub.s32 %s22, 1
    %s28 = ssub.s32 %s22, 2
    %s29 = sadd.s32 %s22, 1
    %s30 = ssub.s32 %s22, %s29
    %p31 = scmp.eq.s32.totalorder %s30, 0
    %s33 = sadd.s32 %s32, 1
    %s34 = scalar_select %p31, %s32, %s33
    %p37 = pneg %p31
    %p38 = scmp.eq.s32.totalorder %s22, 1
    %p39 = por %p37, %p38
    %p40 = scmp.ne.s32.totalorder %s32, %s35
    %p41 = scmp.eq.s32.totalorder %s22, 0
    %p42 = por %p40, %p41
    %p43 = scmp.ne.s32.totalorder %s32, %s35
    %p44 = scmp.eq.s32.totalorder %s27, 1
    %p45 = por %p43, %p44
    %p46 = scmp.ne.s32.totalorder %s35, %s36
    %p47 = scmp.eq.s32.totalorder %s27, 0
    %p48 = por %p46, %p47
    %p49 = scmp.ne.s32.totalorder %s35, %s36
    %p50 = scmp.eq.s32.totalorder %s28, 1
    %p51 = por %p49, %p50
    %p53 = scmp.ne.s32.totalorder %s36, %s52
    %p54 = scmp.eq.s32.totalorder %s28, 0
    %p55 = por %p53, %p54
    %s57 = sadd.s32 %s56, 1
    %p60 = scmp.eq.s32.totalorder %s22, 1
    %p61 = scmp.ne.s32.totalorder %s56, %s58
    %p62 = scmp.eq.s32.totalorder %s22, 0
    %p63 = por %p61, %p62
    %p64 = scmp.ne.s32.totalorder %s56, %s58
    %p65 = scmp.eq.s32.totalorder %s27, 1
    %p66 = por %p64, %p65
    %p67 = scmp.ne.s32.totalorder %s58, %s59
    %p68 = scmp.eq.s32.totalorder %s27, 0
    %p69 = por %p67, %p68
    %p70 = scmp.ne.s32.totalorder %s58, %s59
    %p71 = scmp.eq.s32.totalorder %s28, 1
    %p72 = por %p70, %p71
    %p74 = scmp.ne.s32.totalorder %s59, %s73
    %p75 = scmp.eq.s32.totalorder %s28, 0
    %p76 = por %p74, %p75
    %s78 = sadd.s32 %s77, 1
    %p81 = scmp.eq.s32.totalorder %s22, 1
    %p82 = scmp.ne.s32.totalorder %s77, %s79
    %p83 = scmp.eq.s32.totalorder %s22, 0
    %p84 = por %p82, %p83
    %p85 = scmp.ne.s32.totalorder %s77, %s79
    %p86 = scmp.eq.s32.totalorder %s27, 1
    %p87 = por %p85, %p86
    %p88 = scmp.ne.s32.totalorder %s79, %s80
    %p89 = scmp.eq.s32.totalorder %s27, 0
    %p90 = por %p88, %p89
    %p91 = scmp.ne.s32.totalorder %s79, %s80
    %p92 = scmp.eq.s32.totalorder %s28, 1
    %p93 = por %p91, %p92
    %p95 = scmp.ne.s32.totalorder %s80, %s94
    %p96 = scmp.eq.s32.totalorder %s28, 0
    %p97 = por %p95, %p96
    %s99 = sadd.s32 %s98, 1
    %p102 = scmp.eq.s32.totalorder %s22, 1
    %p103 = scmp.ne.s32.totalorder %s98, %s100
    %p104 = scmp.eq.s32.totalorder %s22, 0
    %p105 = por %p103, %p104
    %p106 = scmp.ne.s32.totalorder %s98, %s100
    %p107 = scmp.eq.s32.totalorder %s27, 1
    %p108 = por %p106, %p107
    %p109 = scmp.ne.s32.totalorder %s100, %s101
    %p110 = scmp.eq.s32.totalorder %s27, 0
    %p111 = por %p109, %p110
    %p112 = scmp.ne.s32.totalorder %s100, %s101
    %p113 = scmp.eq.s32.totalorder %s28, 1
    %p114 = por %p112, %p113
    %p116 = scmp.ne.s32.totalorder %s101, %s115
    %p117 = scmp.eq.s32.totalorder %s28, 0
    %p118 = por %p116, %p117
    %s120 = sadd.s32 %s119, 1
    %p123 = scmp.eq.s32.totalorder %s22, 1
    %p124 = scmp.ne.s32.totalorder %s119, %s121
    %p125 = scmp.eq.s32.totalorder %s22, 0
    %p126 = por %p124, %p125
    %p127 = scmp.ne.s32.totalorder %s119, %s121
    %p128 = scmp.eq.s32.totalorder %s27, 1
    %p129 = por %p127, %p128
    %p130 = scmp.ne.s32.totalorder %s121, %s122
    %p131 = scmp.eq.s32.totalorder %s27, 0
    %p132 = por %p130, %p131
    %p133 = scmp.ne.s32.totalorder %s121, %s122
    %p134 = scmp.eq.s32.totalorder %s28, 1
    %p135 = por %p133, %p134
    %p137 = scmp.ne.s32.totalorder %s122, %s136
    %p138 = scmp.eq.s32.totalorder %s28, 0
    %p139 = por %p137, %p138
    %s141 = sadd.s32 %s140, 1
    %p144 = scmp.eq.s32.totalorder %s22, 1
    %p145 = scmp.ne.s32.totalorder %s140, %s142
    %p146 = scmp.eq.s32.totalorder %s22, 0
    %p147 = por %p145, %p146
    %p148 = scmp.ne.s32.totalorder %s140, %s142
    %p149 = scmp.eq.s32.totalorder %s27, 1
    %p150 = por %p148, %p149
    %p151 = scmp.ne.s32.totalorder %s142, %s143
    %p152 = scmp.eq.s32.totalorder %s27, 0
    %p153 = por %p151, %p152
    %p154 = scmp.ne.s32.totalorder %s142, %s143
    %p155 = scmp.eq.s32.totalorder %s28, 1
    %p156 = por %p154, %p155
    %p158 = scmp.ne.s32.totalorder %s143, %s157
    %p159 = scmp.eq.s32.totalorder %s28, 0
    %p160 = por %p158, %p159
    %s162 = sadd.s32 %s161, 1
    %p165 = scmp.eq.s32.totalorder %s22, 1
    %p166 = scmp.ne.s32.totalorder %s161, %s163
    %p167 = scmp.eq.s32.totalorder %s22, 0
    %p168 = por %p166, %p167
    %p169 = scmp.ne.s32.totalorder %s161, %s163
    %p170 = scmp.eq.s32.totalorder %s27, 1
    %p171 = por %p169, %p170
    %p172 = scmp.ne.s32.totalorder %s163, %s164
    %p173 = scmp.eq.s32.totalorder %s27, 0
    %p174 = por %p172, %p173
    %p175 = scmp.ne.s32.totalorder %s163, %s164
    %p176 = scmp.eq.s32.totalorder %s28, 1
    %p177 = por %p175, %p176
    %p179 = scmp.ne.s32.totalorder %s164, %s178
    %p180 = scmp.eq.s32.totalorder %s28, 0
    %p181 = por %p179, %p180
    %s183 = sadd.s32 %s182, 1
    %p186 = scmp.eq.s32.totalorder %s22, 1
    %p187 = scmp.ne.s32.totalorder %s182, %s184
    %p188 = scmp.eq.s32.totalorder %s22, 0
    %p189 = por %p187, %p188
    %p190 = scmp.ne.s32.totalorder %s182, %s184
    %p191 = scmp.eq.s32.totalorder %s27, 1
    %p192 = por %p190, %p191
    %p193 = scmp.ne.s32.totalorder %s184, %s185
    %p194 = scmp.eq.s32.totalorder %s27, 0
    %p195 = por %p193, %p194
    %p196 = scmp.ne.s32.totalorder %s184, %s185
    %p197 = scmp.eq.s32.totalorder %s28, 1
    %p198 = por %p196, %p197
    %p200 = scmp.ne.s32.totalorder %s185, %s199
    %p201 = scmp.eq.s32.totalorder %s28, 0
    %p202 = por %p200, %p201
    %s204 = sadd.s32 %s203, 1
    %p207 = scmp.eq.s32.totalorder %s22, 1
    %p208 = scmp.ne.s32.totalorder %s203, %s205
    %p209 = scmp.eq.s32.totalorder %s22, 0
    %p210 = por %p208, %p209
    %p211 = scmp.ne.s32.totalorder %s203, %s205
    %p212 = scmp.eq.s32.totalorder %s27, 1
    %p213 = por %p211, %p212
    %p214 = scmp.ne.s32.totalorder %s205, %s206
    %p215 = scmp.eq.s32.totalorder %s27, 0
    %p216 = por %p214, %p215
    %p217 = scmp.ne.s32.totalorder %s205, %s206
    %p218 = scmp.eq.s32.totalorder %s28, 1
    %p219 = por %p217, %p218
    %p221 = scmp.ne.s32.totalorder %s206, %s220
    %p222 = scmp.eq.s32.totalorder %s28, 0
    %p223 = por %p221, %p222
    %s225 = sadd.s32 %s224, 1
    %p228 = scmp.eq.s32.totalorder %s22, 1
    %p229 = scmp.ne.s32.totalorder %s224, %s226
    %p230 = scmp.eq.s32.totalorder %s22, 0
    %p231 = por %p229, %p230
    %p232 = scmp.ne.s32.totalorder %s224, %s226
    %p233 = scmp.eq.s32.totalorder %s27, 1
    %p234 = por %p232, %p233
    %p235 = scmp.ne.s32.totalorder %s226, %s227
    %p236 = scmp.eq.s32.totalorder %s27, 0
    %p237 = por %p235, %p236
    %p238 = scmp.ne.s32.totalorder %s226, %s227
    %p239 = scmp.eq.s32.totalorder %s28, 1
    %p240 = por %p238, %p239
    %p242 = scmp.ne.s32.totalorder %s227, %s241
    %p243 = scmp.eq.s32.totalorder %s28, 0
    %p244 = por %p242, %p243
    %s246 = sadd.s32 %s245, 1
    %p249 = scmp.eq.s32.totalorder %s22, 1
    %p250 = scmp.ne.s32.totalorder %s245, %s247
    %p251 = scmp.eq.s32.totalorder %s22, 0
    %p252 = por %p250, %p251
    %p253 = scmp.ne.s32.totalorder %s245, %s247
    %p254 = scmp.eq.s32.totalorder %s27, 1
    %p255 = por %p253, %p254
    %p256 = scmp.ne.s32.totalorder %s247, %s248
    %p257 = scmp.eq.s32.totalorder %s27, 0
    %p258 = por %p256, %p257
    %p259 = scmp.ne.s32.totalorder %s247, %s248
    %p260 = scmp.eq.s32.totalorder %s28, 1
    %p261 = por %p259, %p260
    %p263 = scmp.ne.s32.totalorder %s248, %s262
    %p264 = scmp.eq.s32.totalorder %s28, 0
    %p265 = por %p263, %p264
    %s267 = sadd.s32 %s266, 1
    %p270 = scmp.eq.s32.totalorder %s22, 1
    %p271 = scmp.ne.s32.totalorder %s266, %s268
    %p272 = scmp.eq.s32.totalorder %s22, 0
    %p273 = por %p271, %p272
    %p274 = scmp.ne.s32.totalorder %s266, %s268
    %p275 = scmp.eq.s32.totalorder %s27, 1
    %p276 = por %p274, %p275
    %p277 = scmp.ne.s32.totalorder %s268, %s269
    %p278 = scmp.eq.s32.totalorder %s27, 0
    %p279 = por %p277, %p278
    %p280 = scmp.ne.s32.totalorder %s268, %s269
    %p281 = scmp.eq.s32.totalorder %s28, 1
    %p282 = por %p280, %p281
    %p284 = scmp.ne.s32.totalorder %s269, %s283
    %p285 = scmp.eq.s32.totalorder %s28, 0
    %p286 = por %p284, %p285
    %s288 = sadd.s32 %s287, 1
    %p291 = scmp.eq.s32.totalorder %s22, 1
    %p292 = scmp.ne.s32.totalorder %s287, %s289
    %p293 = scmp.eq.s32.totalorder %s22, 0
    %p294 = por %p292, %p293
    %p295 = scmp.ne.s32.totalorder %s287, %s289
    %p296 = scmp.eq.s32.totalorder %s27, 1
    %p297 = por %p295, %p296
    %p298 = scmp.ne.s32.totalorder %s289, %s290
    %p299 = scmp.eq.s32.totalorder %s27, 0
    %p300 = por %p298, %p299
    %p301 = scmp.ne.s32.totalorder %s289, %s290
    %p302 = scmp.eq.s32.totalorder %s28, 1
    %p303 = por %p301, %p302
    %p305 = scmp.ne.s32.totalorder %s290, %s304
    %p306 = scmp.eq.s32.totalorder %s28, 0
    %p307 = por %p305, %p306
    %s309 = sadd.s32 %s308, 1
    %p312 = scmp.eq.s32.totalorder %s22, 1
    %p313 = scmp.ne.s32.totalorder %s308, %s310
    %p314 = scmp.eq.s32.totalorder %s22, 0
    %p315 = por %p313, %p314
    %p316 = scmp.ne.s32.totalorder %s308, %s310
    %p317 = scmp.eq.s32.totalorder %s27, 1
    %p318 = por %p316, %p317
    %p319 = scmp.ne.s32.totalorder %s310, %s311
    %p320 = scmp.eq.s32.totalorder %s27, 0
    %p321 = por %p319, %p320
    %p322 = scmp.ne.s32.totalorder %s310, %s311
    %p323 = scmp.eq.s32.totalorder %s28, 1
    %p324 = por %p322, %p323
    %p326 = scmp.ne.s32.totalorder %s311, %s325
    %p327 = scmp.eq.s32.totalorder %s28, 0
    %p328 = por %p326, %p327
    %s330 = sadd.s32 %s329, 1
    %p333 = scmp.eq.s32.totalorder %s22, 1
    %p334 = scmp.ne.s32.totalorder %s329, %s331
    %p335 = scmp.eq.s32.totalorder %s22, 0
    %p336 = por %p334, %p335
    %p337 = scmp.ne.s32.totalorder %s329, %s331
    %p338 = scmp.eq.s32.totalorder %s27, 1
    %p339 = por %p337, %p338
    %p340 = scmp.ne.s32.totalorder %s331, %s332
    %p341 = scmp.eq.s32.totalorder %s27, 0
    %p342 = por %p340, %p341
    %p343 = scmp.ne.s32.totalorder %s331, %s332
    %p344 = scmp.eq.s32.totalorder %s28, 1
    %p345 = por %p343, %p344
    %p347 = scmp.ne.s32.totalorder %s332, %s346
    %p348 = scmp.eq.s32.totalorder %s28, 0
    %p349 = por %p347, %p348
    %s351 = sadd.s32 %s350, 1
    %p354 = scmp.eq.s32.totalorder %s22, 1
    %p355 = scmp.ne.s32.totalorder %s350, %s352
    %p356 = scmp.eq.s32.totalorder %s22, 0
    %p357 = por %p355, %p356
    %p358 = scmp.ne.s32.totalorder %s350, %s352
    %p359 = scmp.eq.s32.totalorder %s27, 1
    %p360 = por %p358, %p359
    %p361 = scmp.ne.s32.totalorder %s352, %s353
    %p362 = scmp.eq.s32.totalorder %s27, 0
    %p363 = por %p361, %p362
    %p364 = scmp.ne.s32.totalorder %s352, %s353
    %p365 = scmp.eq.s32.totalorder %s28, 1
    %p366 = por %p364, %p365
    %p368 = scmp.ne.s32.totalorder %s353, %s367
    %p369 = scmp.eq.s32.totalorder %s28, 0
    %p370 = por %p368, %p369
    %s371 = ssub.s32 %s22, %s29
    %p372 = scmp.eq.s32.totalorder %s371, 0
    %s374 = sadd.s32 %s373, 1
    %s375 = scalar_select %p372, %s373, %s374
    %p378 = pneg %p372
    %p379 = scmp.eq.s32.totalorder %s22, 1
    %p380 = por %p378, %p379
    %p381 = scmp.ne.s32.totalorder %s373, %s376
    %p382 = scmp.eq.s32.totalorder %s22, 0
    %p383 = por %p381, %p382
    %p384 = scmp.ne.s32.totalorder %s373, %s376
    %p385 = scmp.eq.s32.totalorder %s27, 1
    %p386 = por %p384, %p385
    %p387 = scmp.ne.s32.totalorder %s376, %s377
    %p388 = scmp.eq.s32.totalorder %s27, 0
    %p389 = por %p387, %p388
    %p390 = scmp.ne.s32.totalorder %s376, %s377
    %p391 = scmp.eq.s32.totalorder %s28, 1
    %p392 = por %p390, %p391
    %p394 = scmp.ne.s32.totalorder %s377, %s393
    %p395 = scmp.eq.s32.totalorder %s28, 0
    %p396 = por %p394, %p395
    %p397 = scmp.le.s32.totalorder 1, %s22
    %p398 = scmp.lt.s32.totalorder %s22, 3
    %p399 = pnand %p397, %p398
    %p400 = pneg %p399
    // Predicated region
    $region9: #{gpt_forward.5} parent=5 // pred_check
      _
    $region10: #{gpt_forward.5} parent=5 // pred_check_branch
      %402 = sbr.rel (%p399) target = $region12
    $region11: #{gpt_forward.5} parent=5 // pred_region
      %s403 = ssub.s32 %s22, 1
      // Predicated region
      $region13: #{gpt_forward.5} parent=11 // pred_check
        %p404 = pneg %p69
      $region14: #{gpt_forward.5} parent=11 // pred_check_branch
        %406 = sbr.rel (%p404) target = $region16
      $region15: #{gpt_forward.5} parent=11 // pred_region
        _
      $region16: #{gpt_forward.5} parent=11 // pred_fallthru
        _
      // Predicated region
      $region17: #{gpt_forward.5} parent=11 // pred_check
        %p407 = pneg %p90
      $region18: #{gpt_forward.5} parent=11 // pred_check_branch
        %409 = sbr.rel (%p407) target = $region20
      $region19: #{gpt_forward.5} parent=11 // pred_region
        _
      $region20: #{gpt_forward.5} parent=11 // pred_fallthru
        _
      // Predicated region
      $region21: #{gpt_forward.5} parent=11 // pred_check
        %p410 = pneg %p111
      $region22: #{gpt_forward.5} parent=11 // pred_check_branch
        %412 = sbr.rel (%p410) target = $region24
      $region23: #{gpt_forward.5} parent=11 // pred_region
        _
      $region24: #{gpt_forward.5} parent=11 // pred_fallthru
        _
      // Predicated region
      $region25: #{gpt_forward.5} parent=11 // pred_check
        %p413 = pneg %p132
      $region26: #{gpt_forward.5} parent=11 // pred_check_branch
        %415 = sbr.rel (%p413) target = $region28
      $region27: #{gpt_forward.5} parent=11 // pred_region
        _
      $region28: #{gpt_forward.5} parent=11 // pred_fallthru
        _
      // Predicated region
      $region29: #{gpt_forward.5} parent=11 // pred_check
        %p416 = pneg %p153
      $region30: #{gpt_forward.5} parent=11 // pred_check_branch
        %418 = sbr.rel (%p416) target = $region32
      $region31: #{gpt_forward.5} parent=11 // pred_region
        _
      $region32: #{gpt_forward.5} parent=11 // pred_fallthru
        _
      // Predicated region
      $region33: #{gpt_forward.5} parent=11 // pred_check
        %p419 = pneg %p174
      $region34: #{gpt_forward.5} parent=11 // pred_check_branch
        %421 = sbr.rel (%p419) target = $region36
      $region35: #{gpt_forward.5} parent=11 // pred_region
        _
      $region36: #{gpt_forward.5} parent=11 // pred_fallthru
        _
      // Predicated region
      $region37: #{gpt_forward.5} parent=11 // pred_check
        %p422 = pneg %p195
      $region38: #{gpt_forward.5} parent=11 // pred_check_branch
        %424 = sbr.rel (%p422) target = $region40
      $region39: #{gpt_forward.5} parent=11 // pred_region
        _
      $region40: #{gpt_forward.5} parent=11 // pred_fallthru
        _
      // Predicated region
      $region41: #{gpt_forward.5} parent=11 // pred_check
        %p425 = pneg %p216
      $region42: #{gpt_forward.5} parent=11 // pred_check_branch
        %427 = sbr.rel (%p425) target = $region44
      $region43: #{gpt_forward.5} parent=11 // pred_region
        _
      $region44: #{gpt_forward.5} parent=11 // pred_fallthru
        _
      // Predicated region
      $region45: #{gpt_forward.5} parent=11 // pred_check
        %p428 = pneg %p237
      $region46: #{gpt_forward.5} parent=11 // pred_check_branch
        %430 = sbr.rel (%p428) target = $region48
      $region47: #{gpt_forward.5} parent=11 // pred_region
        _
      $region48: #{gpt_forward.5} parent=11 // pred_fallthru
        _
      // Predicated region
      $region49: #{gpt_forward.5} parent=11 // pred_check
        %p431 = pneg %p258
      $region50: #{gpt_forward.5} parent=11 // pred_check_branch
        %433 = sbr.rel (%p431) target = $region52
      $region51: #{gpt_forward.5} parent=11 // pred_region
        _
      $region52: #{gpt_forward.5} parent=11 // pred_fallthru
        _
      // Predicated region
      $region53: #{gpt_forward.5} parent=11 // pred_check
        %p434 = pneg %p279
      $region54: #{gpt_forward.5} parent=11 // pred_check_branch
        %436 = sbr.rel (%p434) target = $region56
      $region55: #{gpt_forward.5} parent=11 // pred_region
        _
      $region56: #{gpt_forward.5} parent=11 // pred_fallthru
        _
      // Predicated region
      $region57: #{gpt_forward.5} parent=11 // pred_check
        %p437 = pneg %p300
      $region58: #{gpt_forward.5} parent=11 // pred_check_branch
        %439 = sbr.rel (%p437) target = $region60
      $region59: #{gpt_forward.5} parent=11 // pred_region
        _
      $region60: #{gpt_forward.5} parent=11 // pred_fallthru
        _
      // Predicated region
      $region61: #{gpt_forward.5} parent=11 // pred_check
        %p440 = pneg %p321
      $region62: #{gpt_forward.5} parent=11 // pred_check_branch
        %442 = sbr.rel (%p440) target = $region64
      $region63: #{gpt_forward.5} parent=11 // pred_region
        _
      $region64: #{gpt_forward.5} parent=11 // pred_fallthru
        _
      // Predicated region
      $region65: #{gpt_forward.5} parent=11 // pred_check
        %p443 = pneg %p342
      $region66: #{gpt_forward.5} parent=11 // pred_check_branch
        %445 = sbr.rel (%p443) target = $region68
      $region67: #{gpt_forward.5} parent=11 // pred_region
        _
      $region68: #{gpt_forward.5} parent=11 // pred_fallthru
        _
      // Predicated region
      $region69: #{gpt_forward.5} parent=11 // pred_check
        %p446 = pneg %p363
      $region70: #{gpt_forward.5} parent=11 // pred_check_branch
        %448 = sbr.rel (%p446) target = $region72
      $region71: #{gpt_forward.5} parent=11 // pred_region
        _
      $region72: #{gpt_forward.5} parent=11 // pred_fallthru
        _
    $region12: #{gpt_forward.5} parent=5 // pred_fallthru
      _
    %p449 = scmp.lt.s32.totalorder %s22, 2
    // Predicated region
    $region73: #{gpt_forward.5} parent=5 // pred_check
      %p450 = pneg %p449
    $region74: #{gpt_forward.5} parent=5 // pred_check_branch
      %452 = sbr.rel (%p450) target = $region76
    $region75: #{gpt_forward.5} parent=5 // pred_region
      // Predicated region
      $region77: #{gpt_forward.5} parent=75 // pred_check
        %p453 = pneg %p42
      $region78: #{gpt_forward.5} parent=75 // pred_check_branch
        %455 = sbr.rel (%p453) target = $region80
      $region79: #{gpt_forward.5} parent=75 // pred_region
        %p456 = scmp.lt.s32.totalorder %s22, 1
        %s457 = scalar_select %p456, %s22, 1
        %s458 = smul.addr %s457, 8
        %s459 = scalar_lea.vmem %s0, %s458
      $region80: #{gpt_forward.5} parent=75 // pred_fallthru
        _
    $region76: #{gpt_forward.5} parent=5 // pred_fallthru
      _
    %p460 = scmp.le.s32.totalorder 1, %s22
    %p461 = scmp.lt.s32.totalorder %s22, 3
    %p462 = pnand %p460, %p461
    %p463 = pneg %p462
    // Predicated region
    $region81: #{gpt_forward.5} parent=5 // pred_check
      _
    $region82: #{gpt_forward.5} parent=5 // pred_check_branch
      %465 = sbr.rel (%p462) target = $region84
    $region83: #{gpt_forward.5} parent=5 // pred_region
      %s466 = ssub.s32 %s22, 1
      %p467 = scmp.lt.s32.totalorder %s27, 1
      %s468 = scalar_select %p467, %s27, 1
      %s469 = smul.addr %s468, 8
      %s470 = scalar_lea.vmem %s0, %s469
      %p471 = pneg %p48
      %p472 = pneg %p45
      %p473 = pneg %p69
      %p474 = pneg %p66
      %p475 = pneg %p90
      %p476 = pneg %p87
      %p477 = pneg %p111
      %p478 = pneg %p108
      %p479 = pneg %p132
      %p480 = pneg %p129
      %p481 = pneg %p153
      %p482 = pneg %p150
      %p483 = pneg %p174
      %p484 = pneg %p171
      %p485 = pneg %p195
      %p486 = pneg %p192
      %p487 = pneg %p216
      %p488 = pneg %p213
      %p489 = pneg %p237
      %p490 = pneg %p234
      %p491 = pneg %p258
      %p492 = pneg %p255
      %p493 = pneg %p279
      %p494 = pneg %p276
      %p495 = pneg %p300
      %p496 = pneg %p297
      %p497 = pneg %p321
      %p498 = pneg %p318
      %p499 = pneg %p342
      %p500 = pneg %p339
      %p501 = pneg %p363
      %p502 = pneg %p360
      %p503 = pneg %p389
      %p504 = pneg %p386
      %p505 = scmp.lt.s32.totalorder %s27, 1
      %s506 = scalar_select %p505, %s27, 1
      %s507 = smul.addr %s506, 8
      %s508 = scalar_lea.vmem %s16, %s507
      %p509 = scmp.lt.s32.totalorder %s27, 1
      %s510 = scalar_select %p509, %s27, 1
      %s511 = smul.addr %s510, 8
      %s512 = scalar_lea.vmem %s0, %s511
      %p513 = scmp.lt.s32.totalorder %s27, 1
      %s514 = scalar_select %p513, %s27, 1
      %s515 = smul.addr %s514, 8
      %s516 = scalar_lea.vmem %s16, %s515
      %v518 = vld [vmem:[%s512] sm:$0xff]
      %v519 = vld [vmem:[%s1] sm:$0x1]
      %v520 = vld [vmem:[%s2] sm:$0x1]
      %vm521 = vcmask 261120
      %v522 = vsel %vm521, %v518, 0.0
      %523 = vadd.xlane.f32.xlu0 %v522
      %v524 = vpop.xlane.xlu0 %523
      %v525 = vrcp.pop 32.0
      %v526 = vmul.f32 %v524, %v525
      %v527 = vsub.f32 %v518, %v526
      %v528 = vmul.f32 %v527, %v527
      %v529 = vsel %vm521, %v528, 0.0
      %530 = vadd.xlane.f32.xlu0 %v529
      %v531 = vpop.xlane.xlu0 %530
      %v532 = vmul.f32 %v531, %v525
      %v533 = vadd.f32 %v532, 1e-05
      %v534 = vrsqrt.pop %v533
      %v535 = vmul.f32 %v527, %v534
      %v537 = vlaneseq
      %v538 = vshrl.u32 %v537, 7
      %v539 = vsub.s32 0, %v538
      %v540 = vrot.slane %v519, %v539
      %v542 = vmul.f32 %v535, %v540
      %v544 = vlaneseq
      %v545 = vshrl.u32 %v544, 7
      %v546 = vsub.s32 0, %v545
      %v547 = vrot.slane %v520, %v546
      %v549 = vadd.f32 %v542, %v547
      %v550 = vpack.c.bf16 %v549, %v549
      %v551 = vld [vmem:[%s3] sm:$0xf]
      %v552 = vld [vmem:[%s3 + $0x4] sm:$0xf]
      %v553 = vld [vmem:[%s3 + $0x8] sm:$0xf]
      %v554 = vld [vmem:[%s3 + $0xc] sm:$0xf]
      %v555 = vld [vmem:[%s4] sm:$0x1]
      %v557 = vlaneseq
      %v558 = vshrl.u32 %v557, 7
      %v559 = vsub.s32 0, %v558
      %v560 = vrot.slane %v555, %v559
      %v566 = vunpack.c.l.b16 %v551
      %v567 = vunpack.c.l.b16 %v552
      %v568 = vunpack.c.l.b16 %v553
      %v569 = vunpack.c.l.b16 %v554
      %v570 = vpack.c.b16 %v567, %v566
      %v571 = vpack.c.b16 %v569, %v568
      %v575 = vsel %vm521, %v550, 0
      %577 = vmatprep.subr.bf16.mxu0 0
      %578 = vmatpush1.bf16.msra.mxu0 0
      %579 = vmatprep.subr.bf16.mxu0 0
      %580 = vmatpush1.bf16.msra.mxu0 0
      %581 = vmatprep.subr.bf16.mxu0 0
      %582 = vmatpush1.bf16.msra.mxu0 0
      %583 = vmatprep.subr.bf16.mxu0 0
      %584 = vmatpush1.bf16.msra.mxu0 0
      %585 = vmatprep.subr.bf16.mxu0 0
      %586 = vmatpush1.bf16.msra.mxu0 0
      %587 = vmatprep.subr.bf16.mxu0 0
      %588 = vmatpush1.bf16.msra.mxu0 0
      %589 = vmatprep.subr.bf16.mxu0 0
      %590 = vmatpush1.bf16.msra.mxu0 %v571
      %591 = vmatprep.subr.bf16.mxu0 0
      %592 = vmatpush1.bf16.msra.mxu0 %v570
      %593 = vmatprep.subr.bf16.mxu0 0
      %594 = vmatpush2.bf16.msra.mxu0 0
      %595 = vmatprep.subr.bf16.mxu0 0
      %596 = vmatpush2.bf16.msra.mxu0 0
      %597 = vmatprep.subr.bf16.mxu0 0
      %598 = vmatpush2.bf16.msra.mxu0 0
      %599 = vmatprep.subr.bf16.mxu0 0
      %600 = vmatpush2.bf16.msra.mxu0 0
      %601 = vmatprep.subr.bf16.mxu0 0
      %602 = vmatpush2.bf16.msra.mxu0 0
      %603 = vmatprep.subr.bf16.mxu0 0
      %604 = vmatpush2.bf16.msra.mxu0 0
      %605 = vmatprep.subr.bf16.mxu0 0
      %606 = vmatpush2.bf16.msra.mxu0 0
      %607 = vmatprep.subr.bf16.mxu0 0
      %608 = vmatpush2.bf16.msra.mxu0 0
      %609 = vmatprep.mubr.bf16.mxu0 0
      %610 = vmatmul.mubr.bf16.gmra.mxu0 %v575
      %v611 = vpop.f32.mrf.mxu0
      %v612 = vadd.f32 %v560, %v611
      %v613 = vpop.f32.mrf.mxu0
      %v614 = vpop.f32.mrf.mxu0
      %v615 = vpop.f32.mrf.mxu0
      %616 = vdwg.mxu0
      %v617 = vpack.c.bf16 %v612, %v612
      %v618 = vld [vmem:[%s15] sm:$0xff]
      %v619 = vld [vmem:[%s5] sm:$0xf]
      %v620 = vld [vmem:[%s5 + $0x4] sm:$0xf]
      %v621 = vld [vmem:[%s5 + $0x8] sm:$0xf]
      %v622 = vld [vmem:[%s5 + $0xc] sm:$0xf]
      %624 = vrot.lane.b32.xlu0 %v617, 120
      %v625 = vpop.permute.xlu0 %624
      %626 = vrot.lane.b32.xlu0 %v617, 112
      %v627 = vpop.permute.xlu0 %626
      %628 = vrot.lane.b32.xlu0 %v617, 104
      %v629 = vpop.permute.xlu0 %628
      %630 = vrot.lane.b32.xlu0 %v617, 96
      %v631 = vpop.permute.xlu0 %630
      %vm632 = vcmask 64512
      %v634 = vsel %vm632, %v617, 0
      %v637 = vsel %vm632, %v631, 0
      %639 = vmatprep.subr.bf16.mxu0 0
      %640 = vmatpush1.bf16.xpose.msra.mxu0 0
      %641 = vmatprep.subr.bf16.mxu0 0
      %642 = vmatpush1.bf16.xpose.msra.mxu0 0
      %643 = vmatprep.subr.bf16.mxu0 0
      %644 = vmatpush1.bf16.xpose.msra.mxu0 0
      %645 = vmatprep.subr.bf16.mxu0 0
      %646 = vmatpush1.bf16.xpose.msra.mxu0 0
      %647 = vmatprep.subr.bf16.mxu0 0
      %648 = vmatpush1.bf16.xpose.msra.mxu0 0
      %649 = vmatprep.subr.bf16.mxu0 0
      %650 = vmatpush1.bf16.xpose.msra.mxu0 0
      %651 = vmatprep.subr.bf16.mxu0 0
      %652 = vmatpush1.bf16.xpose.msra.mxu0 0
      %653 = vmatprep.subr.bf16.mxu0 0
      %654 = vmatpush1.bf16.xpose.msra.mxu0 %v637
      %655 = vmatprep.subr.bf16.mxu0 0
      %656 = vmatpush2.bf16.xpose.msra.mxu0 0
      %657 = vmatprep.subr.bf16.mxu0 0
      %658 = vmatpush2.bf16.xpose.msra.mxu0 0
      %659 = vmatprep.subr.bf16.mxu0 0
      %660 = vmatpush2.bf16.xpose.msra.mxu0 0
      %661 = vmatprep.subr.bf16.mxu0 0
      %662 = vmatpush2.bf16.xpose.msra.mxu0 0
      %663 = vmatprep.subr.bf16.mxu0 0
      %664 = vmatpush2.bf16.xpose.msra.mxu0 0
      %665 = vmatprep.subr.bf16.mxu0 0
      %666 = vmatpush2.bf16.xpose.msra.mxu0 0
      %667 = vmatprep.subr.bf16.mxu0 0
      %668 = vmatpush2.bf16.xpose.msra.mxu0 0
      %669 = vmatprep.subr.bf16.mxu0 0
      %670 = vmatpush2.bf16.xpose.msra.mxu0 0
      %671 = vmatprep.mubr.bf16.mxu0 0
      %672 = vmatmul.mubr.bf16.gmra.mxu0 %v634
      %v673 = vpop.f32.mrf.mxu0
      %v674 = vadd.f32 0.0, %v673
      %v675 = vpop.f32.mrf.mxu0
      %v676 = vpop.f32.mrf.mxu0
      %v677 = vpop.f32.mrf.mxu0
      %678 = vdwg.mxu0
      %679 = vrot.lane.b32.xlu0 %v625, 96
      %v680 = vpop.permute.xlu0 %679
      %v682 = vsel %vm632, %v625, 0
      %v685 = vsel %vm632, %v680, 0
      %687 = vmatprep.subr.bf16.mxu0 0
      %688 = vmatpush1.bf16.xpose.msra.mxu0 0
      %689 = vmatprep.subr.bf16.mxu0 0
      %690 = vmatpush1.bf16.xpose.msra.mxu0 0
      %691 = vmatprep.subr.bf16.mxu0 0
      %692 = vmatpush1.bf16.xpose.msra.mxu0 0
      %693 = vmatprep.subr.bf16.mxu0 0
      %694 = vmatpush1.bf16.xpose.msra.mxu0 0
      %695 = vmatprep.subr.bf16.mxu0 0
      %696 = vmatpush1.bf16.xpose.msra.mxu0 0
      %697 = vmatprep.subr.bf16.mxu0 0
      %698 = vmatpush1.bf16.xpose.msra.mxu0 0
      %699 = vmatprep.subr.bf16.mxu0 0
      %700 = vmatpush1.bf16.xpose.msra.mxu0 0
      %701 = vmatprep.subr.bf16.mxu0 0
      %702 = vmatpush1.bf16.xpose.msra.mxu0 %v685
      %703 = vmatprep.subr.bf16.mxu0 0
      %704 = vmatpush2.bf16.xpose.msra.mxu0 0
      %705 = vmatprep.subr.bf16.mxu0 0
      %706 = vmatpush2.bf16.xpose.msra.mxu0 0
      %707 = vmatprep.subr.bf16.mxu0 0
      %708 = vmatpush2.bf16.xpose.msra.mxu0 0
      %709 = vmatprep.subr.bf16.mxu0 0
      %710 = vmatpush2.bf16.xpose.msra.mxu0 0
      %711 = vmatprep.subr.bf16.mxu0 0
      %712 = vmatpush2.bf16.xpose.msra.mxu0 0
      %713 = vmatprep.subr.bf16.mxu0 0
      %714 = vmatpush2.bf16.xpose.msra.mxu0 0
      %715 = vmatprep.subr.bf16.mxu0 0
      %716 = vmatpush2.bf16.xpose.msra.mxu0 0
      %717 = vmatprep.subr.bf16.mxu0 0
      %718 = vmatpush2.bf16.xpose.msra.mxu0 0
      %719 = vmatprep.mubr.bf16.mxu0 0
      %720 = vmatmul.mubr.bf16.gmra.mxu0 %v682
      %v721 = vpop.f32.mrf.mxu0
      %v722 = vadd.f32 0.0, %v721
      %v723 = vpop.f32.mrf.mxu0
      %v724 = vpop.f32.mrf.mxu0
      %v725 = vpop.f32.mrf.mxu0
      %726 = vdwg.mxu0
      %727 = vrot.lane.b32.xlu0 %v627, 96
      %v728 = vpop.permute.xlu0 %727
      %v730 = vsel %vm632, %v627, 0
      %v733 = vsel %vm632, %v728, 0
      %735 = vmatprep.subr.bf16.mxu0 0
      %736 = vmatpush1.bf16.xpose.msra.mxu0 0
      %737 = vmatprep.subr.bf16.mxu0 0
      %738 = vmatpush1.bf16.xpose.msra.mxu0 0
      %739 = vmatprep.subr.bf16.mxu0 0
      %740 = vmatpush1.bf16.xpose.msra.mxu0 0
      %741 = vmatprep.subr.bf16.mxu0 0
      %742 = vmatpush1.bf16.xpose.msra.mxu0 0
      %743 = vmatprep.subr.bf16.mxu0 0
      %744 = vmatpush1.bf16.xpose.msra.mxu0 0
      %745 = vmatprep.subr.bf16.mxu0 0
      %746 = vmatpush1.bf16.xpose.msra.mxu0 0
      %747 = vmatprep.subr.bf16.mxu0 0
      %748 = vmatpush1.bf16.xpose.msra.mxu0 0
      %749 = vmatprep.subr.bf16.mxu0 0
      %750 = vmatpush1.bf16.xpose.msra.mxu0 %v733
      %751 = vmatprep.subr.bf16.mxu0 0
      %752 = vmatpush2.bf16.xpose.msra.mxu0 0
      %753 = vmatprep.subr.bf16.mxu0 0
      %754 = vmatpush2.bf16.xpose.msra.mxu0 0
      %755 = vmatprep.subr.bf16.mxu0 0
      %756 = vmatpush2.bf16.xpose.msra.mxu0 0
      %757 = vmatprep.subr.bf16.mxu0 0
      %758 = vmatpush2.bf16.xpose.msra.mxu0 0
      %759 = vmatprep.subr.bf16.mxu0 0
      %760 = vmatpush2.bf16.xpose.msra.mxu0 0
      %761 = vmatprep.subr.bf16.mxu0 0
      %762 = vmatpush2.bf16.xpose.msra.mxu0 0
      %763 = vmatprep.subr.bf16.mxu0 0
      %764 = vmatpush2.bf16.xpose.msra.mxu0 0
      %765 = vmatprep.subr.bf16.mxu0 0
      %766 = vmatpush2.bf16.xpose.msra.mxu0 0
      %767 = vmatprep.mubr.bf16.mxu0 0
      %768 = vmatmul.mubr.bf16.gmra.mxu0 %v730
      %v769 = vpop.f32.mrf.mxu0
      %v770 = vadd.f32 0.0, %v769
      %v771 = vpop.f32.mrf.mxu0
      %v772 = vpop.f32.mrf.mxu0
      %v773 = vpop.f32.mrf.mxu0
      %774 = vdwg.mxu0
      %775 = vrot.lane.b32.xlu0 %v629, 96
      %v776 = vpop.permute.xlu0 %775
      %v778 = vsel %vm632, %v629, 0
      %v781 = vsel %vm632, %v776, 0
      %783 = vmatprep.subr.bf16.mxu0 0
      %784 = vmatpush1.bf16.xpose.msra.mxu0 0
      %785 = vmatprep.subr.bf16.mxu0 0
      %786 = vmatpush1.bf16.xpose.msra.mxu0 0
      %787 = vmatprep.subr.bf16.mxu0 0
      %788 = vmatpush1.bf16.xpose.msra.mxu0 0
      %789 = vmatprep.subr.bf16.mxu0 0
      %790 = vmatpush1.bf16.xpose.msra.mxu0 0
      %791 = vmatprep.subr.bf16.mxu0 0
      %792 = vmatpush1.bf16.xpose.msra.mxu0 0
      %793 = vmatprep.subr.bf16.mxu0 0
      %794 = vmatpush1.bf16.xpose.msra.mxu0 0
      %795 = vmatprep.subr.bf16.mxu0 0
      %796 = vmatpush1.bf16.xpose.msra.mxu0 0
      %797 = vmatprep.subr.bf16.mxu0 0
      %798 = vmatpush1.bf16.xpose.msra.mxu0 %v781
      %799 = vmatprep.subr.bf16.mxu0 0
      %800 = vmatpush2.bf16.xpose.msra.mxu0 0
      %801 = vmatprep.subr.bf16.mxu0 0
      %802 = vmatpush2.bf16.xpose.msra.mxu0 0
      %803 = vmatprep.subr.bf16.mxu0 0
      %804 = vmatpush2.bf16.xpose.msra.mxu0 0
      %805 = vmatprep.subr.bf16.mxu0 0
      %806 = vmatpush2.bf16.xpose.msra.mxu0 0
      %807 = vmatprep.subr.bf16.mxu0 0
      %808 = vmatpush2.bf16.xpose.msra.mxu0 0
      %809 = vmatprep.subr.bf16.mxu0 0
      %810 = vmatpush2.bf16.xpose.msra.mxu0 0
      %811 = vmatprep.subr.bf16.mxu0 0
      %812 = vmatpush2.bf16.xpose.msra.mxu0 0
      %813 = vmatprep.subr.bf16.mxu0 0
      %814 = vmatpush2.bf16.xpose.msra.mxu0 0
      %815 = vmatprep.mubr.bf16.mxu0 0
      %816 = vmatmul.mubr.bf16.gmra.mxu0 %v778
      %v817 = vpop.f32.mrf.mxu0
      %v818 = vadd.f32 0.0, %v817
      %v819 = vpop.f32.mrf.mxu0
      %v820 = vpop.f32.mrf.mxu0
      %v821 = vpop.f32.mrf.mxu0
      %822 = vdwg.mxu0
      %v823 = vmul.f32 %v674, 0.35355338
      %v824 = vmul.f32 %v722, 0.35355338
      %v825 = vmul.f32 %v770, 0.35355338
      %v826 = vmul.f32 %v818, 0.35355338
      %v827 = vadd.f32 %v823, %v618
      %v828 = vadd.f32 %v824, %v618
      %v829 = vadd.f32 %v825, %v618
      %v830 = vadd.f32 %v826, %v618
      %v831 = vsel %vm632, %v827, -inf
      %832 = vmax.xlane.f32.xlu0 %v831
      %v833 = vpop.xlane.xlu0 %832
      %v834 = vsel %vm632, %v828, -inf
      %835 = vmax.xlane.f32.xlu0 %v834
      %v836 = vpop.xlane.xlu0 %835
      %v837 = vsel %vm632, %v829, -inf
      %838 = vmax.xlane.f32.xlu0 %v837
      %v839 = vpop.xlane.xlu0 %838
      %v840 = vsel %vm632, %v830, -inf
      %841 = vmax.xlane.f32.xlu0 %v840
      %v842 = vpop.xlane.xlu0 %841
      %v843 = vsub.f32 %v827, %v833
      %v844 = vsub.f32 %v828, %v836
      %v845 = vsub.f32 %v829, %v839
      %v846 = vsub.f32 %v830, %v842
      %v847 = vmul.f32 %v843, 1.442695
      %v848 = vpow.pop %v847
      %v849 = vmul.f32 %v844, 1.442695
      %v850 = vpow.pop %v849
      %v851 = vmul.f32 %v845, 1.442695
      %v852 = vpow.pop %v851
      %v853 = vmul.f32 %v846, 1.442695
      %v854 = vpow.pop %v853
      %v855 = vsel %vm632, %v848, 0.0
      %856 = vadd.xlane.f32.xlu0 %v855
      %v857 = vpop.xlane.xlu0 %856
      %v858 = vsel %vm632, %v850, 0.0
      %859 = vadd.xlane.f32.xlu0 %v858
      %v860 = vpop.xlane.xlu0 %859
      %v861 = vsel %vm632, %v852, 0.0
      %862 = vadd.xlane.f32.xlu0 %v861
      %v863 = vpop.xlane.xlu0 %862
      %v864 = vsel %vm632, %v854, 0.0
      %865 = vadd.xlane.f32.xlu0 %v864
      %v866 = vpop.xlane.xlu0 %865
      %v867 = vrcp.pop %v857
      %v868 = vrcp.pop %v860
      %v869 = vrcp.pop %v863
      %v870 = vrcp.pop %v866
      %v871 = vmul.f32 %v848, %v867
      %v872 = vmul.f32 %v850, %v868
      %v873 = vmul.f32 %v852, %v869
      %v874 = vmul.f32 %v854, %v870
      %v875 = vpack.c.bf16 %v871, %v871
      %v876 = vpack.c.bf16 %v872, %v872
      %v877 = vpack.c.bf16 %v873, %v873
      %v878 = vpack.c.bf16 %v874, %v874
      %879 = vrot.lane.b32.xlu0 %v617, 64
      %v880 = vpop.permute.xlu0 %879
      %v882 = vsel %vm632, %v875, 0
      %vm884 = vcmask 1043456
      %v886 = vsel %vm884, %v880, 0
      %888 = vmatprep.subr.bf16.mxu0 0
      %889 = vmatpush1.bf16.msra.mxu0 0
      %890 = vmatprep.subr.bf16.mxu0 0
      %891 = vmatpush1.bf16.msra.mxu0 0
      %892 = vmatprep.subr.bf16.mxu0 0
      %893 = vmatpush1.bf16.msra.mxu0 0
      %894 = vmatprep.subr.bf16.mxu0 0
      %895 = vmatpush1.bf16.msra.mxu0 0
      %896 = vmatprep.subr.bf16.mxu0 0
      %897 = vmatpush1.bf16.msra.mxu0 0
      %898 = vmatprep.subr.bf16.mxu0 0
      %899 = vmatpush1.bf16.msra.mxu0 0
      %900 = vmatprep.subr.bf16.mxu0 0
      %901 = vmatpush1.bf16.msra.mxu0 0
      %902 = vmatprep.subr.bf16.mxu0 0
      %903 = vmatpush1.bf16.msra.mxu0 %v886
      %904 = vmatprep.subr.bf16.mxu0 0
      %905 = vmatpush2.bf16.msra.mxu0 0
      %906 = vmatprep.subr.bf16.mxu0 0
      %907 = vmatpush2.bf16.msra.mxu0 0
      %908 = vmatprep.subr.bf16.mxu0 0
      %909 = vmatpush2.bf16.msra.mxu0 0
      %910 = vmatprep.subr.bf16.mxu0 0
      %911 = vmatpush2.bf16.msra.mxu0 0
      %912 = vmatprep.subr.bf16.mxu0 0
      %913 = vmatpush2.bf16.msra.mxu0 0
      %914 = vmatprep.subr.bf16.mxu0 0
      %915 = vmatpush2.bf16.msra.mxu0 0
      %916 = vmatprep.subr.bf16.mxu0 0
      %917 = vmatpush2.bf16.msra.mxu0 0
      %918 = vmatprep.subr.bf16.mxu0 0
      %919 = vmatpush2.bf16.msra.mxu0 0
      %920 = vmatprep.mubr.bf16.mxu0 0
      %921 = vmatmul.mubr.bf16.gmra.mxu0 %v882
      %v922 = vpop.f32.mrf.mxu0
      %v923 = vadd.f32 0.0, %v922
      %v924 = vpop.f32.mrf.mxu0
      %v925 = vpop.f32.mrf.mxu0
      %v926 = vpop.f32.mrf.mxu0
      %927 = vdwg.mxu0
      %928 = vrot.lane.b32.xlu0 %v625, 64
      %v929 = vpop.permute.xlu0 %928
      %v931 = vsel %vm632, %v876, 0
      %v934 = vsel %vm884, %v929, 0
      %936 = vmatprep.subr.bf16.mxu0 0
      %937 = vmatpush1.bf16.msra.mxu0 0
      %938 = vmatprep.subr.bf16.mxu0 0
      %939 = vmatpush1.bf16.msra.mxu0 0
      %940 = vmatprep.subr.bf16.mxu0 0
      %941 = vmatpush1.bf16.msra.mxu0 0
      %942 = vmatprep.subr.bf16.mxu0 0
      %943 = vmatpush1.bf16.msra.mxu0 0
      %944 = vmatprep.subr.bf16.mxu0 0
      %945 = vmatpush1.bf16.msra.mxu0 0
      %946 = vmatprep.subr.bf16.mxu0 0
      %947 = vmatpush1.bf16.msra.mxu0 0
      %948 = vmatprep.subr.bf16.mxu0 0
      %949 = vmatpush1.bf16.msra.mxu0 0
      %950 = vmatprep.subr.bf16.mxu0 0
      %951 = vmatpush1.bf16.msra.mxu0 %v934
      %952 = vmatprep.subr.bf16.mxu0 0
      %953 = vmatpush2.bf16.msra.mxu0 0
      %954 = vmatprep.subr.bf16.mxu0 0
      %955 = vmatpush2.bf16.msra.mxu0 0
      %956 = vmatprep.subr.bf16.mxu0 0
      %957 = vmatpush2.bf16.msra.mxu0 0
      %958 = vmatprep.subr.bf16.mxu0 0
      %959 = vmatpush2.bf16.msra.mxu0 0
      %960 = vmatprep.subr.bf16.mxu0 0
      %961 = vmatpush2.bf16.msra.mxu0 0
      %962 = vmatprep.subr.bf16.mxu0 0
      %963 = vmatpush2.bf16.msra.mxu0 0
      %964 = vmatprep.subr.bf16.mxu0 0
      %965 = vmatpush2.bf16.msra.mxu0 0
      %966 = vmatprep.subr.bf16.mxu0 0
      %967 = vmatpush2.bf16.msra.mxu0 0
      %968 = vmatprep.mubr.bf16.mxu0 0
      %969 = vmatmul.mubr.bf16.gmra.mxu0 %v931
      %v970 = vpop.f32.mrf.mxu0
      %v971 = vadd.f32 0.0, %v970
      %v972 = vpop.f32.mrf.mxu0
      %v973 = vpop.f32.mrf.mxu0
      %v974 = vpop.f32.mrf.mxu0
      %975 = vdwg.mxu0
      %976 = vrot.lane.b32.xlu0 %v627, 64
      %v977 = vpop.permute.xlu0 %976
      %v979 = vsel %vm632, %v877, 0
      %v982 = vsel %vm884, %v977, 0
      %984 = vmatprep.subr.bf16.mxu0 0
      %985 = vmatpush1.bf16.msra.mxu0 0
      %986 = vmatprep.subr.bf16.mxu0 0
      %987 = vmatpush1.bf16.msra.mxu0 0
      %988 = vmatprep.subr.bf16.mxu0 0
      %989 = vmatpush1.bf16.msra.mxu0 0
      %990 = vmatprep.subr.bf16.mxu0 0
      %991 = vmatpush1.bf16.msra.mxu0 0
      %992 = vmatprep.subr.bf16.mxu0 0
      %993 = vmatpush1.bf16.msra.mxu0 0
      %994 = vmatprep.subr.bf16.mxu0 0
      %995 = vmatpush1.bf16.msra.mxu0 0
      %996 = vmatprep.subr.bf16.mxu0 0
      %997 = vmatpush1.bf16.msra.mxu0 0
      %998 = vmatprep.subr.bf16.mxu0 0
      %999 = vmatpush1.bf16.msra.mxu0 %v982
      %1000 = vmatprep.subr.bf16.mxu0 0
      %1001 = vmatpush2.bf16.msra.mxu0 0
      %1002 = vmatprep.subr.bf16.mxu0 0
      %1003 = vmatpush2.bf16.msra.mxu0 0
      %1004 = vmatprep.subr.bf16.mxu0 0
      %1005 = vmatpush2.bf16.msra.mxu0 0
      %1006 = vmatprep.subr.bf16.mxu0 0
      %1007 = vmatpush2.bf16.msra.mxu0 0
      %1008 = vmatprep.subr.bf16.mxu0 0
      %1009 = vmatpush2.bf16.msra.mxu0 0
      %1010 = vmatprep.subr.bf16.mxu0 0
      %1011 = vmatpush2.bf16.msra.mxu0 0
      %1012 = vmatprep.subr.bf16.mxu0 0
      %1013 = vmatpush2.bf16.msra.mxu0 0
      %1014 = vmatprep.subr.bf16.mxu0 0
      %1015 = vmatpush2.bf16.msra.mxu0 0
      %1016 = vmatprep.mubr.bf16.mxu0 0
      %1017 = vmatmul.mubr.bf16.gmra.mxu0 %v979
      %v1018 = vpop.f32.mrf.mxu0
      %v1019 = vadd.f32 0.0, %v1018
      %v1020 = vpop.f32.mrf.mxu0
      %v1021 = vpop.f32.mrf.mxu0
      %v1022 = vpop.f32.mrf.mxu0
      %1023 = vdwg.mxu0
      %1024 = vrot.lane.b32.xlu0 %v629, 64
      %v1025 = vpop.permute.xlu0 %1024
      %v1027 = vsel %vm632, %v878, 0
      %v1030 = vsel %vm884, %v1025, 0
      %1032 = vmatprep.subr.bf16.mxu0 0
      %1033 = vmatpush1.bf16.msra.mxu0 0
      %1034 = vmatprep.subr.bf16.mxu0 0
      %1035 = vmatpush1.bf16.msra.mxu0 0
      %1036 = vmatprep.subr.bf16.mxu0 0
      %1037 = vmatpush1.bf16.msra.mxu0 0
      %1038 = vmatprep.subr.bf16.mxu0 0
      %1039 = vmatpush1.bf16.msra.mxu0 0
      %1040 = vmatprep.subr.bf16.mxu0 0
      %1041 = vmatpush1.bf16.msra.mxu0 0
      %1042 = vmatprep.subr.bf16.mxu0 0
      %1043 = vmatpush1.bf16.msra.mxu0 0
      %1044 = vmatprep.subr.bf16.mxu0 0
      %1045 = vmatpush1.bf16.msra.mxu0 0
      %1046 = vmatprep.subr.bf16.mxu0 0
      %1047 = vmatpush1.bf16.msra.mxu0 %v1030
      %1048 = vmatprep.subr.bf16.mxu0 0
      %1049 = vmatpush2.bf16.msra.mxu0 0
      %1050 = vmatprep.subr.bf16.mxu0 0
      %1051 = vmatpush2.bf16.msra.mxu0 0
      %1052 = vmatprep.subr.bf16.mxu0 0
      %1053 = vmatpush2.bf16.msra.mxu0 0
      %1054 = vmatprep.subr.bf16.mxu0 0
      %1055 = vmatpush2.bf16.msra.mxu0 0
      %1056 = vmatprep.subr.bf16.mxu0 0
      %1057 = vmatpush2.bf16.msra.mxu0 0
      %1058 = vmatprep.subr.bf16.mxu0 0
      %1059 = vmatpush2.bf16.msra.mxu0 0
      %1060 = vmatprep.subr.bf16.mxu0 0
      %1061 = vmatpush2.bf16.msra.mxu0 0
      %1062 = vmatprep.subr.bf16.mxu0 0
      %1063 = vmatpush2.bf16.msra.mxu0 0
      %1064 = vmatprep.mubr.bf16.mxu0 0
      %1065 = vmatmul.mubr.bf16.gmra.mxu0 %v1027
      %v1066 = vpop.f32.mrf.mxu0
      %v1067 = vadd.f32 0.0, %v1066
      %v1068 = vpop.f32.mrf.mxu0
      %v1069 = vpop.f32.mrf.mxu0
      %v1070 = vpop.f32.mrf.mxu0
      %1071 = vdwg.mxu0
      %v1072 = vpack.c.bf16 %v923, %v923
      %v1073 = vpack.c.bf16 %v971, %v971
      %v1075 = vsel %vm632, %v1073, 0
      %v1078 = vsel %vm884, %v620, 0
      %1080 = vmatprep.subr.bf16.mxu0 0
      %1081 = vmatpush1.bf16.msra.mxu0 0
      %1082 = vmatprep.subr.bf16.mxu0 0
      %1083 = vmatpush1.bf16.msra.mxu0 0
      %1084 = vmatprep.subr.bf16.mxu0 0
      %1085 = vmatpush1.bf16.msra.mxu0 0
      %1086 = vmatprep.subr.bf16.mxu0 0
      %1087 = vmatpush1.bf16.msra.mxu0 0
      %1088 = vmatprep.subr.bf16.mxu0 0
      %1089 = vmatpush1.bf16.msra.mxu0 0
      %1090 = vmatprep.subr.bf16.mxu0 0
      %1091 = vmatpush1.bf16.msra.mxu0 0
      %1092 = vmatprep.subr.bf16.mxu0 0
      %1093 = vmatpush1.bf16.msra.mxu0 0
      %1094 = vmatprep.subr.bf16.mxu0 0
      %1095 = vmatpush1.bf16.msra.mxu0 %v1078
      %1096 = vmatprep.subr.bf16.mxu0 0
      %1097 = vmatpush2.bf16.msra.mxu0 0
      %1098 = vmatprep.subr.bf16.mxu0 0
      %1099 = vmatpush2.bf16.msra.mxu0 0
      %1100 = vmatprep.subr.bf16.mxu0 0
      %1101 = vmatpush2.bf16.msra.mxu0 0
      %1102 = vmatprep.subr.bf16.mxu0 0
      %1103 = vmatpush2.bf16.msra.mxu0 0
      %1104 = vmatprep.subr.bf16.mxu0 0
      %1105 = vmatpush2.bf16.msra.mxu0 0
      %1106 = vmatprep.subr.bf16.mxu0 0
      %1107 = vmatpush2.bf16.msra.mxu0 0
      %1108 = vmatprep.subr.bf16.mxu0 0
      %1109 = vmatpush2.bf16.msra.mxu0 0
      %1110 = vmatprep.subr.bf16.mxu0 0
      %1111 = vmatpush2.bf16.msra.mxu0 0
      %1112 = vmatprep.mubr.bf16.mxu0 0
      %1113 = vmatmul.mubr.bf16.gmra.mxu0 %v1075
      %v1114 = vpop.f32.mrf.mxu0
      %v1115 = vadd.f32 0.0, %v1114
      %v1116 = vpop.f32.mrf.mxu0
      %v1117 = vpop.f32.mrf.mxu0
      %v1118 = vpop.f32.mrf.mxu0
      %1119 = vdwg.mxu0
      %v1121 = vsel %vm632, %v1072, 0
      %v1124 = vsel %vm884, %v619, 0
      %1126 = vmatprep.subr.bf16.mxu0 0
      %1127 = vmatpush1.bf16.msra.mxu0 0
      %1128 = vmatprep.subr.bf16.mxu0 0
      %1129 = vmatpush1.bf16.msra.mxu0 0
      %1130 = vmatprep.subr.bf16.mxu0 0
      %1131 = vmatpush1.bf16.msra.mxu0 0
      %1132 = vmatprep.subr.bf16.mxu0 0
      %1133 = vmatpush1.bf16.msra.mxu0 0
      %1134 = vmatprep.subr.bf16.mxu0 0
      %1135 = vmatpush1.bf16.msra.mxu0 0
      %1136 = vmatprep.subr.bf16.mxu0 0
      %1137 = vmatpush1.bf16.msra.mxu0 0
      %1138 = vmatprep.subr.bf16.mxu0 0
      %1139 = vmatpush1.bf16.msra.mxu0 0
      %1140 = vmatprep.subr.bf16.mxu0 0
      %1141 = vmatpush1.bf16.msra.mxu0 %v1124
      %1142 = vmatprep.subr.bf16.mxu0 0
      %1143 = vmatpush2.bf16.msra.mxu0 0
      %1144 = vmatprep.subr.bf16.mxu0 0
      %1145 = vmatpush2.bf16.msra.mxu0 0
      %1146 = vmatprep.subr.bf16.mxu0 0
      %1147 = vmatpush2.bf16.msra.mxu0 0
      %1148 = vmatprep.subr.bf16.mxu0 0
      %1149 = vmatpush2.bf16.msra.mxu0 0
      %1150 = vmatprep.subr.bf16.mxu0 0
      %1151 = vmatpush2.bf16.msra.mxu0 0
      %1152 = vmatprep.subr.bf16.mxu0 0
      %1153 = vmatpush2.bf16.msra.mxu0 0
      %1154 = vmatprep.subr.bf16.mxu0 0
      %1155 = vmatpush2.bf16.msra.mxu0 0
      %1156 = vmatprep.subr.bf16.mxu0 0
      %1157 = vmatpush2.bf16.msra.mxu0 0
      %1158 = vmatprep.mubr.bf16.mxu0 0
      %1159 = vmatmul.mubr.bf16.gmra.mxu0 %v1121
      %v1160 = vpop.f32.mrf.mxu0
      %v1161 = vadd.f32 %v1115, %v1160
      %v1162 = vpop.f32.mrf.mxu0
      %v1163 = vpop.f32.mrf.mxu0
      %v1164 = vpop.f32.mrf.mxu0
      %1165 = vdwg.mxu0
      %v1166 = vpack.c.bf16 %v1019, %v1019
      %v1168 = vsel %vm632, %v1166, 0
      %v1171 = vsel %vm884, %v621, 0
      %1173 = vmatprep.subr.bf16.mxu0 0
      %1174 = vmatpush1.bf16.msra.mxu0 0
      %1175 = vmatprep.subr.bf16.mxu0 0
      %1176 = vmatpush1.bf16.msra.mxu0 0
      %1177 = vmatprep.subr.bf16.mxu0 0
      %1178 = vmatpush1.bf16.msra.mxu0 0
      %1179 = vmatprep.subr.bf16.mxu0 0
      %1180 = vmatpush1.bf16.msra.mxu0 0
      %1181 = vmatprep.subr.bf16.mxu0 0
      %1182 = vmatpush1.bf16.msra.mxu0 0
      %1183 = vmatprep.subr.bf16.mxu0 0
      %1184 = vmatpush1.bf16.msra.mxu0 0
      %1185 = vmatprep.subr.bf16.mxu0 0
      %1186 = vmatpush1.bf16.msra.mxu0 0
      %1187 = vmatprep.subr.bf16.mxu0 0
      %1188 = vmatpush1.bf16.msra.mxu0 %v1171
      %1189 = vmatprep.subr.bf16.mxu0 0
      %1190 = vmatpush2.bf16.msra.mxu0 0
      %1191 = vmatprep.subr.bf16.mxu0 0
      %1192 = vmatpush2.bf16.msra.mxu0 0
      %1193 = vmatprep.subr.bf16.mxu0 0
      %1194 = vmatpush2.bf16.msra.mxu0 0
      %1195 = vmatprep.subr.bf16.mxu0 0
      %1196 = vmatpush2.bf16.msra.mxu0 0
      %1197 = vmatprep.subr.bf16.mxu0 0
      %1198 = vmatpush2.bf16.msra.mxu0 0
      %1199 = vmatprep.subr.bf16.mxu0 0
      %1200 = vmatpush2.bf16.msra.mxu0 0
      %1201 = vmatprep.subr.bf16.mxu0 0
      %1202 = vmatpush2.bf16.msra.mxu0 0
      %1203 = vmatprep.subr.bf16.mxu0 0
      %1204 = vmatpush2.bf16.msra.mxu0 0
      %1205 = vmatprep.mubr.bf16.mxu0 0
      %1206 = vmatmul.mubr.bf16.gmra.mxu0 %v1168
      %v1207 = vpop.f32.mrf.mxu0
      %v1208 = vadd.f32 0.0, %v1207
      %v1209 = vpop.f32.mrf.mxu0
      %v1210 = vpop.f32.mrf.mxu0
      %v1211 = vpop.f32.mrf.mxu0
      %1212 = vdwg.mxu0
      %v1213 = vadd.f32 %v1161, %v1208
      %v1214 = vpack.c.bf16 %v1067, %v1067
      %v1216 = vsel %vm632, %v1214, 0
      %v1219 = vsel %vm884, %v622, 0
      %1221 = vmatprep.subr.bf16.mxu0 0
      %1222 = vmatpush1.bf16.msra.mxu0 0
      %1223 = vmatprep.subr.bf16.mxu0 0
      %1224 = vmatpush1.bf16.msra.mxu0 0
      %1225 = vmatprep.subr.bf16.mxu0 0
      %1226 = vmatpush1.bf16.msra.mxu0 0
      %1227 = vmatprep.subr.bf16.mxu0 0
      %1228 = vmatpush1.bf16.msra.mxu0 0
      %1229 = vmatprep.subr.bf16.mxu0 0
      %1230 = vmatpush1.bf16.msra.mxu0 0
      %1231 = vmatprep.subr.bf16.mxu0 0
      %1232 = vmatpush1.bf16.msra.mxu0 0
      %1233 = vmatprep.subr.bf16.mxu0 0
      %1234 = vmatpush1.bf16.msra.mxu0 0
      %1235 = vmatprep.subr.bf16.mxu0 0
      %1236 = vmatpush1.bf16.msra.mxu0 %v1219
      %1237 = vmatprep.subr.bf16.mxu0 0
      %1238 = vmatpush2.bf16.msra.mxu0 0
      %1239 = vmatprep.subr.bf16.mxu0 0
      %1240 = vmatpush2.bf16.msra.mxu0 0
      %1241 = vmatprep.subr.bf16.mxu0 0
      %1242 = vmatpush2.bf16.msra.mxu0 0
      %1243 = vmatprep.subr.bf16.mxu0 0
      %1244 = vmatpush2.bf16.msra.mxu0 0
      %1245 = vmatprep.subr.bf16.mxu0 0
      %1246 = vmatpush2.bf16.msra.mxu0 0
      %1247 = vmatprep.subr.bf16.mxu0 0
      %1248 = vmatpush2.bf16.msra.mxu0 0
      %1249 = vmatprep.subr.bf16.mxu0 0
      %1250 = vmatpush2.bf16.msra.mxu0 0
      %1251 = vmatprep.subr.bf16.mxu0 0
      %1252 = vmatpush2.bf16.msra.mxu0 0
      %1253 = vmatprep.mubr.bf16.mxu0 0
      %1254 = vmatmul.mubr.bf16.gmra.mxu0 %v1216
      %v1255 = vpop.f32.mrf.mxu0
      %v1256 = vadd.f32 0.0, %v1255
      %v1257 = vpop.f32.mrf.mxu0
      %v1258 = vpop.f32.mrf.mxu0
      %v1259 = vpop.f32.mrf.mxu0
      %1260 = vdwg.mxu0
      %v1261 = vadd.f32 %v1213, %v1256
      %1262 = vst.msk [vmem:[#allocation2] sm:$0xff] %vm521, %v1261
      %v1263 = vld [vmem:[#allocation2] sm:$0xff]
      %v1264 = vadd.f32 %v518, %v1263
      %v1265 = vld [vmem:[%s6] sm:$0x1]
      %v1267 = vlaneseq
      %v1268 = vshrl.u32 %v1267, 7
      %v1269 = vsub.s32 0, %v1268
      %v1270 = vrot.slane %v1265, %v1269
      %v1272 = vadd.f32 %v1264, %v1270
      %v1273 = vld [vmem:[%s7] sm:$0x1]
      %v1274 = vld [vmem:[%s8] sm:$0x1]
      %v1275 = vsel %vm521, %v1272, 0.0
      %1276 = vadd.xlane.f32.xlu0 %v1275
      %v1277 = vpop.xlane.xlu0 %1276
      %v1278 = vmul.f32 %v1277, %v525
      %v1279 = vsub.f32 %v1272, %v1278
      %v1280 = vmul.f32 %v1279, %v1279
      %v1281 = vsel %vm521, %v1280, 0.0
      %1282 = vadd.xlane.f32.xlu0 %v1281
      %v1283 = vpop.xlane.xlu0 %1282
      %v1284 = vmul.f32 %v1283, %v525
      %v1285 = vadd.f32 %v1284, 1e-05
      %v1286 = vrsqrt.pop %v1285
      %v1287 = vmul.f32 %v1279, %v1286
      %v1289 = vlaneseq
      %v1290 = vshrl.u32 %v1289, 7
      %v1291 = vsub.s32 0, %v1290
      %v1292 = vrot.slane %v1273, %v1291
      %v1294 = vmul.f32 %v1287, %v1292
      %v1296 = vlaneseq
      %v1297 = vshrl.u32 %v1296, 7
      %v1298 = vsub.s32 0, %v1297
      %v1299 = vrot.slane %v1274, %v1298
      %v1301 = vadd.f32 %v1294, %v1299
      %v1302 = vpack.c.bf16 %v1301, %v1301
      %v1303 = vld [vmem:[%s9] sm:$0xf]
      %v1304 = vld [vmem:[%s9 + $0x4] sm:$0xf]
      %v1305 = vld [vmem:[%s9 + $0x8] sm:$0xf]
      %v1306 = vld [vmem:[%s9 + $0xc] sm:$0xf]
      %v1307 = vld [vmem:[%s10] sm:$0x1]
      %v1309 = vlaneseq
      %v1310 = vshrl.u32 %v1309, 7
      %v1311 = vsub.s32 0, %v1310
      %v1312 = vrot.slane %v1307, %v1311
      %v1318 = vunpack.c.l.b16 %v1303
      %v1319 = vunpack.c.l.b16 %v1304
      %v1320 = vunpack.c.l.b16 %v1305
      %v1321 = vunpack.c.l.b16 %v1306
      %v1322 = vpack.c.b16 %v1319, %v1318
      %v1323 = vpack.c.b16 %v1321, %v1320
      %v1327 = vsel %vm521, %v1302, 0
      %1329 = vmatprep.subr.bf16.mxu0 0
      %1330 = vmatpush1.bf16.msra.mxu0 0
      %1331 = vmatprep.subr.bf16.mxu0 0
      %1332 = vmatpush1.bf16.msra.mxu0 0
      %1333 = vmatprep.subr.bf16.mxu0 0
      %1334 = vmatpush1.bf16.msra.mxu0 0
      %1335 = vmatprep.subr.bf16.mxu0 0
      %1336 = vmatpush1.bf16.msra.mxu0 0
      %1337 = vmatprep.subr.bf16.mxu0 0
      %1338 = vmatpush1.bf16.msra.mxu0 0
      %1339 = vmatprep.subr.bf16.mxu0 0
      %1340 = vmatpush1.bf16.msra.mxu0 0
      %1341 = vmatprep.subr.bf16.mxu0 0
      %1342 = vmatpush1.bf16.msra.mxu0 %v1323
      %1343 = vmatprep.subr.bf16.mxu0 0
      %1344 = vmatpush1.bf16.msra.mxu0 %v1322
      %1345 = vmatprep.subr.bf16.mxu0 0
      %1346 = vmatpush2.bf16.msra.mxu0 0
      %1347 = vmatprep.subr.bf16.mxu0 0
      %1348 = vmatpush2.bf16.msra.mxu0 0
      %1349 = vmatprep.subr.bf16.mxu0 0
      %1350 = vmatpush2.bf16.msra.mxu0 0
      %1351 = vmatprep.subr.bf16.mxu0 0
      %1352 = vmatpush2.bf16.msra.mxu0 0
      %1353 = vmatprep.subr.bf16.mxu0 0
      %1354 = vmatpush2.bf16.msra.mxu0 0
      %1355 = vmatprep.subr.bf16.mxu0 0
      %1356 = vmatpush2.bf16.msra.mxu0 0
      %1357 = vmatprep.subr.bf16.mxu0 0
      %1358 = vmatpush2.bf16.msra.mxu0 0
      %1359 = vmatprep.subr.bf16.mxu0 0
      %1360 = vmatpush2.bf16.msra.mxu0 0
      %1361 = vmatprep.mubr.bf16.mxu0 0
      %1362 = vmatmul.mubr.bf16.gmra.mxu0 %v1327
      %v1363 = vpop.f32.mrf.mxu0
      %v1364 = vadd.f32 %v1312, %v1363
      %v1365 = vpop.f32.mrf.mxu0
      %v1366 = vpop.f32.mrf.mxu0
      %v1367 = vpop.f32.mrf.mxu0
      %1368 = vdwg.mxu0
      %v1369 = vmul.f32 %v1364, 0.5
      %v1370 = vmul.f32 %v1364, 0.044715
      %v1371 = vmul.f32 %v1370, %v1364
      %v1372 = vmul.f32 %v1371, %v1364
      %v1373 = vadd.f32 %v1364, %v1372
      %v1374 = vmul.f32 %v1373, 0.7978846
      %v1375 = vtanh.pop %v1374
      %v1376 = vadd.f32 %v1375, 1.0
      %v1377 = vmul.f32 %v1369, %v1376
      %v1378 = vpack.c.bf16 %v1377, %v1377
      %v1379 = vld [vmem:[%s11] sm:$0xf]
      %v1380 = vld [vmem:[%s11 + $0x4] sm:$0xf]
      %v1381 = vld [vmem:[%s11 + $0x8] sm:$0xf]
      %v1382 = vld [vmem:[%s11 + $0xc] sm:$0xf]
      %v1383 = vld [vmem:[%s11 + $0x10] sm:$0xf]
      %v1384 = vld [vmem:[%s11 + $0x14] sm:$0xf]
      %v1385 = vld [vmem:[%s11 + $0x18] sm:$0xf]
      %v1386 = vld [vmem:[%s11 + $0x1c] sm:$0xf]
      %v1387 = vld [vmem:[%s11 + $0x20] sm:$0xf]
      %v1388 = vld [vmem:[%s11 + $0x24] sm:$0xf]
      %v1389 = vld [vmem:[%s11 + $0x28] sm:$0xf]
      %v1390 = vld [vmem:[%s11 + $0x2c] sm:$0xf]
      %v1391 = vld [vmem:[%s11 + $0x30] sm:$0xf]
      %v1392 = vld [vmem:[%s11 + $0x34] sm:$0xf]
      %v1393 = vld [vmem:[%s11 + $0x38] sm:$0xf]
      %v1394 = vld [vmem:[%s11 + $0x3c] sm:$0xf]
      %v1395 = vld [vmem:[%s12] sm:$0x1]
      %v1397 = vlaneseq
      %v1398 = vshrl.u32 %v1397, 7
      %v1399 = vsub.s32 0, %v1398
      %v1400 = vrot.slane %v1395, %v1399
      %v1418 = vunpack.c.l.b16 %v1379
      %v1419 = vunpack.c.l.b16 %v1380
      %v1420 = vunpack.c.l.b16 %v1381
      %v1421 = vunpack.c.l.b16 %v1382
      %v1422 = vunpack.c.l.b16 %v1383
      %v1423 = vunpack.c.l.b16 %v1384
      %v1424 = vunpack.c.l.b16 %v1385
      %v1425 = vunpack.c.l.b16 %v1386
      %v1426 = vunpack.c.l.b16 %v1387
      %v1427 = vunpack.c.l.b16 %v1388
      %v1428 = vunpack.c.l.b16 %v1389
      %v1429 = vunpack.c.l.b16 %v1390
      %v1430 = vunpack.c.l.b16 %v1391
      %v1431 = vunpack.c.l.b16 %v1392
      %v1432 = vunpack.c.l.b16 %v1393
      %v1433 = vunpack.c.l.b16 %v1394
      %v1434 = vpack.c.b16 %v1419, %v1418
      %v1435 = vpack.c.b16 %v1421, %v1420
      %v1436 = vpack.c.b16 %v1423, %v1422
      %v1437 = vpack.c.b16 %v1425, %v1424
      %v1438 = vpack.c.b16 %v1427, %v1426
      %v1439 = vpack.c.b16 %v1429, %v1428
      %v1440 = vpack.c.b16 %v1431, %v1430
      %v1441 = vpack.c.b16 %v1433, %v1432
      %1450 = vmatprep.subr.bf16.mxu0 0
      %1451 = vmatpush1.bf16.msra.mxu0 %v1441
      %1452 = vmatprep.subr.bf16.mxu0 0
      %1453 = vmatpush1.bf16.msra.mxu0 %v1440
      %1454 = vmatprep.subr.bf16.mxu0 0
      %1455 = vmatpush1.bf16.msra.mxu0 %v1439
      %1456 = vmatprep.subr.bf16.mxu0 0
      %1457 = vmatpush1.bf16.msra.mxu0 %v1438
      %1458 = vmatprep.subr.bf16.mxu0 0
      %1459 = vmatpush1.bf16.msra.mxu0 %v1437
      %1460 = vmatprep.subr.bf16.mxu0 0
      %1461 = vmatpush1.bf16.msra.mxu0 %v1436
      %1462 = vmatprep.subr.bf16.mxu0 0
      %1463 = vmatpush1.bf16.msra.mxu0 %v1435
      %1464 = vmatprep.subr.bf16.mxu0 0
      %1465 = vmatpush1.bf16.msra.mxu0 %v1434
      %1466 = vmatprep.subr.bf16.mxu0 0
      %1467 = vmatpush2.bf16.msra.mxu0 0
      %1468 = vmatprep.subr.bf16.mxu0 0
      %1469 = vmatpush2.bf16.msra.mxu0 0
      %1470 = vmatprep.subr.bf16.mxu0 0
      %1471 = vmatpush2.bf16.msra.mxu0 0
      %1472 = vmatprep.subr.bf16.mxu0 0
      %1473 = vmatpush2.bf16.msra.mxu0 0
      %1474 = vmatprep.subr.bf16.mxu0 0
      %1475 = vmatpush2.bf16.msra.mxu0 0
      %1476 = vmatprep.subr.bf16.mxu0 0
      %1477 = vmatpush2.bf16.msra.mxu0 0
      %1478 = vmatprep.subr.bf16.mxu0 0
      %1479 = vmatpush2.bf16.msra.mxu0 0
      %1480 = vmatprep.subr.bf16.mxu0 0
      %1481 = vmatpush2.bf16.msra.mxu0 0
      %1482 = vmatprep.mubr.bf16.mxu0 0
      %1483 = vmatmul.mubr.bf16.gmra.mxu0 %v1378
      %v1484 = vpop.f32.mrf.mxu0
      %v1485 = vadd.f32 %v1400, %v1484
      %v1486 = vpop.f32.mrf.mxu0
      %v1487 = vpop.f32.mrf.mxu0
      %v1488 = vpop.f32.mrf.mxu0
      %1489 = vdwg.mxu0
      %v1490 = vadd.f32 %v1272, %v1485
      %1491 = vst.msk [vmem:[%s516] sm:$0xff] %vm521, %v1490
      %p1492 = scmp.lt.s32.totalorder %s27, 1
      %s1493 = scalar_select %p1492, %s27, 1
      %s1494 = smul.addr %s1493, 8
      %s1495 = scalar_lea.vmem %s16, %s1494
      // Predicated region
      $region85: #{gpt_forward.5} parent=83 // pred_check
        %p1496 = pneg %p386
      $region86: #{gpt_forward.5} parent=83 // pred_check_branch
        %1498 = sbr.rel (%p1496) target = $region88
      $region87: #{gpt_forward.5} parent=83 // pred_region
        _
      $region88: #{gpt_forward.5} parent=83 // pred_fallthru
        _
    $region84: #{gpt_forward.5} parent=5 // pred_fallthru
      _
    %p1499 = scmp.le.s32.totalorder 2, %s22
    // Predicated region
    $region89: #{gpt_forward.5} parent=5 // pred_check
      %p1500 = pneg %p1499
    $region90: #{gpt_forward.5} parent=5 // pred_check_branch
      %1502 = sbr.rel (%p1500) target = $region92
    $region91: #{gpt_forward.5} parent=5 // pred_region
      %s1503 = ssub.s32 %s22, 2
      // Predicated region
      $region93: #{gpt_forward.5} parent=91 // pred_check
        %p1504 = pneg %p392
      $region94: #{gpt_forward.5} parent=91 // pred_check_branch
        %1506 = sbr.rel (%p1504) target = $region96
      $region95: #{gpt_forward.5} parent=91 // pred_region
        %p1507 = scmp.lt.s32.totalorder %s28, 1
        %s1508 = scalar_select %p1507, %s28, 1
        %s1509 = smul.addr %s1508, 8
        %s1510 = scalar_lea.vmem %s16, %s1509
      $region96: #{gpt_forward.5} parent=91 // pred_fallthru
        _
    $region92: #{gpt_forward.5} parent=5 // pred_fallthru
      _
  $region6: #{gpt_forward.5} parent=0 // loop_footer
    %s26 = sadd.s32 1, %s22
  $region7: #{gpt_forward.5} parent=0 // loop_footer_branch
    %21 = sbr.rel target = $region3
  $region8: #{gpt_forward.5} parent=0 // loop_exit
    _

</llo_original>
